<compile_context>
chip_gen: v7x
topology: tpu7x:2x2x1
jax: 0.10.0
libtpu: 0.0.40
codegen_flags: <defaults>
</compile_context>

<pallas_src>
import functools

import numpy as np
import jax
import jax.numpy as jnp
from jax.experimental import pallas as pl
from jax.experimental.pallas import tpu as pltpu

NEG_SLOPE = 0.2


def _res_block_kernel(xp_ref, w1_ref, w2_ref, b1_ref, b2_ref, mask_ref,
                      out_ref, h1p_ref, *, H, Wp, KH, KW, PH, PW, lead, slope):
    """One image per grid step.

    Flat spatial layout: padded-image position (r, c) lives at flat index
    lead + r*Wp + c  (Wp = W + 2*PW).  The matmul output domain is
    m = h*Wp + wq, h in [0,H), wq in [0,Wp); columns wq in [PW, PW+W) are the
    real conv outputs, the rest are halo garbage (masked for the staged
    intermediate, sliced off in the wrapper for the final output).

    xp_ref  : [L, Cp]         bf16  flat zero-padded input
    w*_ref  : [KH*KW, Cp, Cp] bf16  per-tap [Cin, Cout] matrices (resident)
    b*_ref  : [1, Cp]         f32   (resident)
    mask_ref: [M, 1]          f32   1.0 on valid columns, 0.0 on width halo
    out_ref : [M, Cp]         bf16
    h1p_ref : [L, Cp]         bf16  scratch: zero-haloed LeakyReLU(conv1(x))
    """
    Cp = out_ref.shape[-1]
    L = h1p_ref.shape[0]
    M = H * Wp
    top = lead + PH * Wp          # multiple of 8 by construction -> aligned
    bot = top + M

    # Zero only the halo border of the staging scratch (lead pad + top halo
    # rows, bottom halo rows + tail pad).  The masked interior store below
    # covers the left/right halo columns of interior rows.  Done every step
    # (cheap) so per-core scratch is always initialized under megacore
    # sharding.  NOTE: nothing may ever write into [0, top) or [bot, L).
    h1p_ref[0:top, :] = jnp.zeros((top, Cp), h1p_ref.dtype)
    h1p_ref[bot:L, :] = jnp.zeros((L - bot, Cp), h1p_ref.dtype)

    def conv(src_ref, w_ref):
        """'same' KHxKW conv over the flat padded slab; vreg accumulation."""
        base = lead - PW
        acc = None
        for kh in range(KH):
            for kw in range(KW):
                off = base + kh * Wp + kw                    # static offset
                lhs = src_ref[off:off + M, :]                # [M, Cp] bf16
                d = jnp.dot(lhs, w_ref[kh * KW + kw],
                            preferred_element_type=jnp.float32)
                acc = d if acc is None else acc + d
        return acc                                           # [M, Cp] f32

    # ---- conv1 + bias + LeakyReLU, staged (zero-haloed) for conv2 ----------
    h1 = conv(xp_ref, w1_ref) + b1_ref[...]
    h1 = jnp.maximum(h1, slope * h1)                         # LeakyReLU(0.2)
    h1 = h1 * mask_ref[...]                                  # zero width halo
    h1p_ref[top:bot, :] = h1.astype(h1p_ref.dtype)           # aligned store

    # ---- conv2 + bias + residual + LeakyReLU --------------------------------
    y = conv(h1p_ref, w2_ref) + b2_ref[...]
    y = y + xp_ref[top:bot, :].astype(jnp.float32)           # residual (bf16 x)
    y = jnp.maximum(y, slope * y)
    out_ref[...] = y.astype(out_ref.dtype)


def dis_res_block(x, w1, b1, w2, b2, negative_slope=NEG_SLOPE):
    """x: [N, C, H, W] f32 (NCHW); w*: [C, C, kH, kW] (PyTorch Conv2d); b*: [C]."""
    N, C, H, W = x.shape
    Cout, Cin, KH, KW = w1.shape
    assert Cout == C and Cin == C, "dis_resBlock keeps the channel count"
    assert KH % 2 == 1 and KW % 2 == 1, "odd kernel sizes only ('same' padding)"
    PH, PW = (KH - 1) // 2, (KW - 1) // 2
    Hp, Wp = H + 2 * PH, W + 2 * PW
    M = H * Wp

    # lane-dense channel padding (multiple of 128); sliced off at the end
    Cp = ((C + 127) // 128) * 128

    # lead padding so the staged interior (offset lead + PH*Wp) is 8-row
    # aligned; tail padding so all tap reads stay in-bounds and L % 8 == 0.
    lead = (-(PH * Wp)) % 8
    if lead < PW:
        lead += 8
    tail = (-(lead + Hp * Wp)) % 8
    if tail < PW:
        tail += 8
    L = lead + Hp * Wp + tail

    # NCHW -> flat zero-padded NHWC bf16 slab [N, L, Cp]
    x_nhwc = jnp.transpose(x, (0, 2, 3, 1)).astype(jnp.bfloat16)
    xp = jnp.pad(x_nhwc, ((0, 0), (PH, PH), (PW, PW), (0, Cp - C)))
    xp = xp.reshape(N, Hp * Wp, Cp)
    xp = jnp.pad(xp, ((0, 0), (lead, tail), (0, 0)))

    def prep_w(w):
        # [Cout, Cin, KH, KW] -> [KH*KW, Cin_p, Cout_p] per-tap matmul matrices
        wt = jnp.transpose(w, (2, 3, 1, 0))
        wt = jnp.pad(wt, ((0, 0), (0, 0), (0, Cp - C), (0, Cp - C)))
        return wt.reshape(KH * KW, Cp, Cp).astype(jnp.bfloat16)

    w1m, w2m = prep_w(w1), prep_w(w2)
    b1p = jnp.pad(b1, (0, Cp - C)).reshape(1, Cp).astype(jnp.float32)
    b2p = jnp.pad(b2, (0, Cp - C)).reshape(1, Cp).astype(jnp.float32)

    # validity mask over the matmul output domain (1 on real output columns)
    col = jnp.arange(Wp)
    valid = ((col >= PW) & (col < PW + W)).astype(jnp.float32)
    mask = jnp.tile(valid, (H,)).reshape(M, 1)

    kernel = functools.partial(
        _res_block_kernel, H=H, Wp=Wp, KH=KH, KW=KW, PH=PH, PW=PW,
        lead=lead, slope=float(negative_slope))

    out = pl.pallas_call(
        kernel,
        out_shape=jax.ShapeDtypeStruct((N, M, Cp), jnp.bfloat16),
        grid_spec=pltpu.PrefetchScalarGridSpec(
            num_scalar_prefetch=0,
            grid=(N,),
            in_specs=[
                pl.BlockSpec((None, L, Cp), lambda n: (n, 0, 0)),
                pl.BlockSpec((KH * KW, Cp, Cp), lambda n: (0, 0, 0)),  # resident
                pl.BlockSpec((KH * KW, Cp, Cp), lambda n: (0, 0, 0)),  # resident
                pl.BlockSpec((1, Cp), lambda n: (0, 0)),               # resident
                pl.BlockSpec((1, Cp), lambda n: (0, 0)),               # resident
                pl.BlockSpec((M, 1), lambda n: (0, 0)),                # resident
            ],
            out_specs=pl.BlockSpec((None, M, Cp), lambda n: (n, 0, 0)),
            scratch_shapes=[
                pltpu.VMEM((L, Cp), jnp.bfloat16),   # zero-haloed lrelu(conv1)
            ],
        ),
        compiler_params=pltpu.CompilerParams(
            dimension_semantics=("parallel",)),
    )(xp, w1m, w2m, b1p, b2p, mask)

    # [N, M, Cp] -> drop width halo + channel padding -> NCHW
    out = out.reshape(N, H, Wp, Cp)[:, :, PW:PW + W, :C]
    return jnp.transpose(out, (0, 3, 1, 2)).astype(x.dtype)


# ----------------------------- reference -----------------------------------
def _bf16(a):
    return np.asarray(jnp.asarray(a, jnp.float32).astype(jnp.bfloat16)
                      .astype(jnp.float32))


def _conv2d_nchw(x, w, b, pad):
    """Plain 'same' conv (stride 1) in float64, NCHW, PyTorch weight layout."""
    N, C, H, W = x.shape
    Co, Ci, KH, KW = w.shape
    xp = np.pad(x, ((0, 0), (0, 0), (pad, pad), (pad, pad)))
    y = np.zeros((N, Co, H, W), np.float64)
    for kh in range(KH):
        for kw in range(KW):
            patch = xp[:, :, kh:kh + H, kw:kw + W].astype(np.float64)
            y += np.einsum('nchw,oc->nohw', patch,
                           w[:, :, kh, kw].astype(np.float64))
    return y + b.reshape(1, Co, 1, 1).astype(np.float64)


def _reference(x, w1, b1, w2, b2, slope=NEG_SLOPE):
    """Mirrors the kernel's precision pipeline (bf16 matmul operands/IO)."""
    xb = _bf16(x)
    h = _conv2d_nchw(xb, _bf16(w1), np.asarray(b1), pad=1)
    h = np.where(h >= 0, h, slope * h)
    h = _bf16(h.astype(np.float32))          # kernel stages lrelu(conv1) as bf16
    y = _conv2d_nchw(h, _bf16(w2), np.asarray(b2), pad=1)
    y = y + xb
    y = np.where(y >= 0, y, slope * y)
    return _bf16(y.astype(np.float32))       # kernel writes bf16 output


if __name__ == "__main__":
    # module defaults: in_channels=32, kernel_size=3, stride=1, padding=1
    N, C, H, W, K = 2, 32, 16, 16, 3

    key = jax.random.PRNGKey(0)
    k1, k2, k3, k4, k5 = jax.random.split(key, 5)
    x = jax.random.normal(k1, (N, C, H, W), dtype=jnp.float32)
    w1 = jax.random.normal(k2, (C, C, K, K), dtype=jnp.float32) * 0.1
    b1 = jax.random.normal(k3, (C,), dtype=jnp.float32) * 0.1
    w2 = jax.random.normal(k4, (C, C, K, K), dtype=jnp.float32) * 0.1
    b2 = jax.random.normal(k5, (C,), dtype=jnp.float32) * 0.1

    fn = jax.jit(dis_res_block)
    out = jax.block_until_ready(fn(x, w1, b1, w2, b2))

    ref = _reference(x, w1, b1, w2, b2)
    np.testing.assert_allclose(np.asarray(out), ref, atol=1e-2, rtol=1e-2)
    print("KERNEL_OK")
</pallas_src>

<mosaic_0001>
module attributes {stable_mosaic.version = 11 : i64} {
  func.func @_res_block_kernel(%arg0: i32, %arg1: memref<1x336x128xbf16, #tpu.memory_space<vmem>>, %arg2: memref<9x128x128xbf16, #tpu.memory_space<vmem>>, %arg3: memref<9x128x128xbf16, #tpu.memory_space<vmem>>, %arg4: memref<1x128xf32, #tpu.memory_space<vmem>>, %arg5: memref<1x128xf32, #tpu.memory_space<vmem>>, %arg6: memref<288x1xf32, #tpu.memory_space<vmem>>, %arg7: memref<1x288x128xbf16, #tpu.memory_space<vmem>>, %arg8: memref<336x128xbf16, #tpu.memory_space<vmem>>) attributes {dimension_semantics = [#tpu.dimension_semantics<parallel>], iteration_bounds = array<i64: 2>, scalar_prefetch = 0 : i64, scratch_operands = 1 : i64, tpu.core_type = #tpu.core_type<tc>, window_params = [{transform_indices = @transform_0, window_bounds = array<i64: 1, 336, 128>}, {pipeline_mode = #tpu.pipeline_mode<synchronous>, transform_indices = @transform_1, window_bounds = array<i64: 9, 128, 128>}, {pipeline_mode = #tpu.pipeline_mode<synchronous>, transform_indices = @transform_2, window_bounds = array<i64: 9, 128, 128>}, {pipeline_mode = #tpu.pipeline_mode<synchronous>, transform_indices = @transform_3, window_bounds = array<i64: 1, 128>}, {pipeline_mode = #tpu.pipeline_mode<synchronous>, transform_indices = @transform_4, window_bounds = array<i64: 1, 128>}, {pipeline_mode = #tpu.pipeline_mode<synchronous>, transform_indices = @transform_5, window_bounds = array<i64: 288, 1>}, {transform_indices = @transform_6, window_bounds = array<i64: 1, 288, 128>}]} {
    %cst = arith.constant 0.000000e+00 : bf16
    %0 = vector.broadcast %cst : bf16 to vector<24x128xbf16>
    %c0 = arith.constant 0 : index
    %c0_0 = arith.constant 0 : index
    %1 = vector.load %arg8[%c0, %c0_0] : memref<336x128xbf16, #tpu.memory_space<vmem>>, vector<24x128xbf16>
    tpu.vector_store %arg8[%c0, %c0_0], %0 {strides = array<i32>} : memref<336x128xbf16, #tpu.memory_space<vmem>>, vector<24x128xbf16>,
    %cst_1 = arith.constant 0.000000e+00 : bf16
    %2 = vector.broadcast %cst_1 : bf16 to vector<24x128xbf16>
    %c312 = arith.constant 312 : index
    %c0_2 = arith.constant 0 : index
    %3 = vector.load %arg8[%c312, %c0_2] : memref<336x128xbf16, #tpu.memory_space<vmem>>, vector<24x128xbf16>
    tpu.vector_store %arg8[%c312, %c0_2], %2 {strides = array<i32>} : memref<336x128xbf16, #tpu.memory_space<vmem>>, vector<24x128xbf16>,
    %c0_3 = arith.constant 0 : index
    %c5 = arith.constant 5 : index
    %c0_4 = arith.constant 0 : index
    %4 = vector.load %arg1[%c0_3, %c5, %c0_4] : memref<1x336x128xbf16, #tpu.memory_space<vmem>>, vector<1x288x128xbf16>
    %5 = vector.shape_cast %4 : vector<1x288x128xbf16> to vector<288x128xbf16>
    %c0_5 = arith.constant 0 : index
    %c0_6 = arith.constant 0 : index
    %c0_7 = arith.constant 0 : index
    %6 = vector.load %arg2[%c0_5, %c0_6, %c0_7] : memref<9x128x128xbf16, #tpu.memory_space<vmem>>, vector<1x128x128xbf16>
    %7 = vector.shape_cast %6 : vector<1x128x128xbf16> to vector<128x128xbf16>
    %cst_8 = arith.constant dense<0.000000e+00> : vector<288x128xf32>
    %8 = tpu.matmul %5, %7, %cst_8 {dimension_numbers = #tpu.dot_dimension_numbers<[1], [0], [0], [1], [0, 0, 1, 1], [], []>} : vector<288x128xbf16>, vector<128x128xbf16>, vector<288x128xf32> -> vector<288x128xf32>
    %c0_9 = arith.constant 0 : index
    %c6 = arith.constant 6 : index
    %c0_10 = arith.constant 0 : index
    %9 = vector.load %arg1[%c0_9, %c6, %c0_10] : memref<1x336x128xbf16, #tpu.memory_space<vmem>>, vector<1x288x128xbf16>
    %10 = vector.shape_cast %9 : vector<1x288x128xbf16> to vector<288x128xbf16>
    %c1 = arith.constant 1 : index
    %c0_11 = arith.constant 0 : index
    %c0_12 = arith.constant 0 : index
    %11 = vector.load %arg2[%c1, %c0_11, %c0_12] : memref<9x128x128xbf16, #tpu.memory_space<vmem>>, vector<1x128x128xbf16>
    %12 = vector.shape_cast %11 : vector<1x128x128xbf16> to vector<128x128xbf16>
    %cst_13 = arith.constant dense<0.000000e+00> : vector<288x128xf32>
    %13 = tpu.matmul %10, %12, %cst_13 {dimension_numbers = #tpu.dot_dimension_numbers<[1], [0], [0], [1], [0, 0, 1, 1], [], []>} : vector<288x128xbf16>, vector<128x128xbf16>, vector<288x128xf32> -> vector<288x128xf32>
    %14 = arith.addf %8, %13 : vector<288x128xf32>
    %c0_14 = arith.constant 0 : index
    %c7 = arith.constant 7 : index
    %c0_15 = arith.constant 0 : index
    %15 = vector.load %arg1[%c0_14, %c7, %c0_15] : memref<1x336x128xbf16, #tpu.memory_space<vmem>>, vector<1x288x128xbf16>
    %16 = vector.shape_cast %15 : vector<1x288x128xbf16> to vector<288x128xbf16>
    %c2 = arith.constant 2 : index
    %c0_16 = arith.constant 0 : index
    %c0_17 = arith.constant 0 : index
    %17 = vector.load %arg2[%c2, %c0_16, %c0_17] : memref<9x128x128xbf16, #tpu.memory_space<vmem>>, vector<1x128x128xbf16>
    %18 = vector.shape_cast %17 : vector<1x128x128xbf16> to vector<128x128xbf16>
    %cst_18 = arith.constant dense<0.000000e+00> : vector<288x128xf32>
    %19 = tpu.matmul %16, %18, %cst_18 {dimension_numbers = #tpu.dot_dimension_numbers<[1], [0], [0], [1], [0, 0, 1, 1], [], []>} : vector<288x128xbf16>, vector<128x128xbf16>, vector<288x128xf32> -> vector<288x128xf32>
    %20 = arith.addf %14, %19 : vector<288x128xf32>
    %c0_19 = arith.constant 0 : index
    %c23 = arith.constant 23 : index
    %c0_20 = arith.constant 0 : index
    %21 = vector.load %arg1[%c0_19, %c23, %c0_20] : memref<1x336x128xbf16, #tpu.memory_space<vmem>>, vector<1x288x128xbf16>
    %22 = vector.shape_cast %21 : vector<1x288x128xbf16> to vector<288x128xbf16>
    %c3 = arith.constant 3 : index
    %c0_21 = arith.constant 0 : index
    %c0_22 = arith.constant 0 : index
    %23 = vector.load %arg2[%c3, %c0_21, %c0_22] : memref<9x128x128xbf16, #tpu.memory_space<vmem>>, vector<1x128x128xbf16>
    %24 = vector.shape_cast %23 : vector<1x128x128xbf16> to vector<128x128xbf16>
    %cst_23 = arith.constant dense<0.000000e+00> : vector<288x128xf32>
    %25 = tpu.matmul %22, %24, %cst_23 {dimension_numbers = #tpu.dot_dimension_numbers<[1], [0], [0], [1], [0, 0, 1, 1], [], []>} : vector<288x128xbf16>, vector<128x128xbf16>, vector<288x128xf32> -> vector<288x128xf32>
    %26 = arith.addf %20, %25 : vector<288x128xf32>
    %c0_24 = arith.constant 0 : index
    %c24 = arith.constant 24 : index
    %c0_25 = arith.constant 0 : index
    %27 = vector.load %arg1[%c0_24, %c24, %c0_25] : memref<1x336x128xbf16, #tpu.memory_space<vmem>>, vector<1x288x128xbf16>
    %28 = vector.shape_cast %27 : vector<1x288x128xbf16> to vector<288x128xbf16>
    %c4 = arith.constant 4 : index
    %c0_26 = arith.constant 0 : index
    %c0_27 = arith.constant 0 : index
    %29 = vector.load %arg2[%c4, %c0_26, %c0_27] : memref<9x128x128xbf16, #tpu.memory_space<vmem>>, vector<1x128x128xbf16>
    %30 = vector.shape_cast %29 : vector<1x128x128xbf16> to vector<128x128xbf16>
    %cst_28 = arith.constant dense<0.000000e+00> : vector<288x128xf32>
    %31 = tpu.matmul %28, %30, %cst_28 {dimension_numbers = #tpu.dot_dimension_numbers<[1], [0], [0], [1], [0, 0, 1, 1], [], []>} : vector<288x128xbf16>, vector<128x128xbf16>, vector<288x128xf32> -> vector<288x128xf32>
    %32 = arith.addf %26, %31 : vector<288x128xf32>
    %c0_29 = arith.constant 0 : index
    %c25 = arith.constant 25 : index
    %c0_30 = arith.constant 0 : index
    %33 = vector.load %arg1[%c0_29, %c25, %c0_30] : memref<1x336x128xbf16, #tpu.memory_space<vmem>>, vector<1x288x128xbf16>
    %34 = vector.shape_cast %33 : vector<1x288x128xbf16> to vector<288x128xbf16>
    %c5_31 = arith.constant 5 : index
    %c0_32 = arith.constant 0 : index
    %c0_33 = arith.constant 0 : index
    %35 = vector.load %arg2[%c5_31, %c0_32, %c0_33] : memref<9x128x128xbf16, #tpu.memory_space<vmem>>, vector<1x128x128xbf16>
    %36 = vector.shape_cast %35 : vector<1x128x128xbf16> to vector<128x128xbf16>
    %cst_34 = arith.constant dense<0.000000e+00> : vector<288x128xf32>
    %37 = tpu.matmul %34, %36, %cst_34 {dimension_numbers = #tpu.dot_dimension_numbers<[1], [0], [0], [1], [0, 0, 1, 1], [], []>} : vector<288x128xbf16>, vector<128x128xbf16>, vector<288x128xf32> -> vector<288x128xf32>
    %38 = arith.addf %32, %37 : vector<288x128xf32>
    %c0_35 = arith.constant 0 : index
    %c41 = arith.constant 41 : index
    %c0_36 = arith.constant 0 : index
    %39 = vector.load %arg1[%c0_35, %c41, %c0_36] : memref<1x336x128xbf16, #tpu.memory_space<vmem>>, vector<1x288x128xbf16>
    %40 = vector.shape_cast %39 : vector<1x288x128xbf16> to vector<288x128xbf16>
    %c6_37 = arith.constant 6 : index
    %c0_38 = arith.constant 0 : index
    %c0_39 = arith.constant 0 : index
    %41 = vector.load %arg2[%c6_37, %c0_38, %c0_39] : memref<9x128x128xbf16, #tpu.memory_space<vmem>>, vector<1x128x128xbf16>
    %42 = vector.shape_cast %41 : vector<1x128x128xbf16> to vector<128x128xbf16>
    %cst_40 = arith.constant dense<0.000000e+00> : vector<288x128xf32>
    %43 = tpu.matmul %40, %42, %cst_40 {dimension_numbers = #tpu.dot_dimension_numbers<[1], [0], [0], [1], [0, 0, 1, 1], [], []>} : vector<288x128xbf16>, vector<128x128xbf16>, vector<288x128xf32> -> vector<288x128xf32>
    %44 = arith.addf %38, %43 : vector<288x128xf32>
    %c0_41 = arith.constant 0 : index
    %c42 = arith.constant 42 : index
    %c0_42 = arith.constant 0 : index
    %45 = vector.load %arg1[%c0_41, %c42, %c0_42] : memref<1x336x128xbf16, #tpu.memory_space<vmem>>, vector<1x288x128xbf16>
    %46 = vector.shape_cast %45 : vector<1x288x128xbf16> to vector<288x128xbf16>
    %c7_43 = arith.constant 7 : index
    %c0_44 = arith.constant 0 : index
    %c0_45 = arith.constant 0 : index
    %47 = vector.load %arg2[%c7_43, %c0_44, %c0_45] : memref<9x128x128xbf16, #tpu.memory_space<vmem>>, vector<1x128x128xbf16>
    %48 = vector.shape_cast %47 : vector<1x128x128xbf16> to vector<128x128xbf16>
    %cst_46 = arith.constant dense<0.000000e+00> : vector<288x128xf32>
    %49 = tpu.matmul %46, %48, %cst_46 {dimension_numbers = #tpu.dot_dimension_numbers<[1], [0], [0], [1], [0, 0, 1, 1], [], []>} : vector<288x128xbf16>, vector<128x128xbf16>, vector<288x128xf32> -> vector<288x128xf32>
    %50 = arith.addf %44, %49 : vector<288x128xf32>
    %c0_47 = arith.constant 0 : index
    %c43 = arith.constant 43 : index
    %c0_48 = arith.constant 0 : index
    %51 = vector.load %arg1[%c0_47, %c43, %c0_48] : memref<1x336x128xbf16, #tpu.memory_space<vmem>>, vector<1x288x128xbf16>
    %52 = vector.shape_cast %51 : vector<1x288x128xbf16> to vector<288x128xbf16>
    %c8 = arith.constant 8 : index
    %c0_49 = arith.constant 0 : index
    %c0_50 = arith.constant 0 : index
    %53 = vector.load %arg2[%c8, %c0_49, %c0_50] : memref<9x128x128xbf16, #tpu.memory_space<vmem>>, vector<1x128x128xbf16>
    %54 = vector.shape_cast %53 : vector<1x128x128xbf16> to vector<128x128xbf16>
    %cst_51 = arith.constant dense<0.000000e+00> : vector<288x128xf32>
    %55 = tpu.matmul %52, %54, %cst_51 {dimension_numbers = #tpu.dot_dimension_numbers<[1], [0], [0], [1], [0, 0, 1, 1], [], []>} : vector<288x128xbf16>, vector<128x128xbf16>, vector<288x128xf32> -> vector<288x128xf32>
    %56 = arith.addf %50, %55 : vector<288x128xf32>
    %c0_52 = arith.constant 0 : index
    %c0_53 = arith.constant 0 : index
    %57 = vector.load %arg4[%c0_52, %c0_53] : memref<1x128xf32, #tpu.memory_space<vmem>>, vector<1x128xf32>
    %58 = vector.broadcast %57 : vector<1x128xf32> to vector<288x128xf32>
    %59 = arith.addf %56, %58 : vector<288x128xf32>
    %cst_54 = arith.constant 2.000000e-01 : f32
    %60 = vector.broadcast %cst_54 : f32 to vector<288x128xf32>
    %61 = arith.mulf %60, %59 : vector<288x128xf32>
    %62 = arith.maximumf %59, %61 : vector<288x128xf32>
    %c0_55 = arith.constant 0 : index
    %c0_56 = arith.constant 0 : index
    %63 = vector.load %arg6[%c0_55, %c0_56] : memref<288x1xf32, #tpu.memory_space<vmem>>, vector<288x1xf32>
    %64 = vector.broadcast %63 : vector<288x1xf32> to vector<288x128xf32>
    %65 = arith.mulf %62, %64 : vector<288x128xf32>
    %66 = arith.truncf %65 : vector<288x128xf32> to vector<288x128xbf16>
    %c24_57 = arith.constant 24 : index
    %c0_58 = arith.constant 0 : index
    %67 = vector.load %arg8[%c24_57, %c0_58] : memref<336x128xbf16, #tpu.memory_space<vmem>>, vector<288x128xbf16>
    tpu.vector_store %arg8[%c24_57, %c0_58], %66 {strides = array<i32>} : memref<336x128xbf16, #tpu.memory_space<vmem>>, vector<288x128xbf16>,
    %c5_59 = arith.constant 5 : index
    %c0_60 = arith.constant 0 : index
    %68 = vector.load %arg8[%c5_59, %c0_60] : memref<336x128xbf16, #tpu.memory_space<vmem>>, vector<288x128xbf16>
    %c0_61 = arith.constant 0 : index
    %c0_62 = arith.constant 0 : index
    %c0_63 = arith.constant 0 : index
    %69 = vector.load %arg3[%c0_61, %c0_62, %c0_63] : memref<9x128x128xbf16, #tpu.memory_space<vmem>>, vector<1x128x128xbf16>
    %70 = vector.shape_cast %69 : vector<1x128x128xbf16> to vector<128x128xbf16>
    %cst_64 = arith.constant dense<0.000000e+00> : vector<288x128xf32>
    %71 = tpu.matmul %68, %70, %cst_64 {dimension_numbers = #tpu.dot_dimension_numbers<[1], [0], [0], [1], [0, 0, 1, 1], [], []>} : vector<288x128xbf16>, vector<128x128xbf16>, vector<288x128xf32> -> vector<288x128xf32>
    %c6_65 = arith.constant 6 : index
    %c0_66 = arith.constant 0 : index
    %72 = vector.load %arg8[%c6_65, %c0_66] : memref<336x128xbf16, #tpu.memory_space<vmem>>, vector<288x128xbf16>
    %c1_67 = arith.constant 1 : index
    %c0_68 = arith.constant 0 : index
    %c0_69 = arith.constant 0 : index
    %73 = vector.load %arg3[%c1_67, %c0_68, %c0_69] : memref<9x128x128xbf16, #tpu.memory_space<vmem>>, vector<1x128x128xbf16>
    %74 = vector.shape_cast %73 : vector<1x128x128xbf16> to vector<128x128xbf16>
    %cst_70 = arith.constant dense<0.000000e+00> : vector<288x128xf32>
    %75 = tpu.matmul %72, %74, %cst_70 {dimension_numbers = #tpu.dot_dimension_numbers<[1], [0], [0], [1], [0, 0, 1, 1], [], []>} : vector<288x128xbf16>, vector<128x128xbf16>, vector<288x128xf32> -> vector<288x128xf32>
    %76 = arith.addf %71, %75 : vector<288x128xf32>
    %c7_71 = arith.constant 7 : index
    %c0_72 = arith.constant 0 : index
    %77 = vector.load %arg8[%c7_71, %c0_72] : memref<336x128xbf16, #tpu.memory_space<vmem>>, vector<288x128xbf16>
    %c2_73 = arith.constant 2 : index
    %c0_74 = arith.constant 0 : index
    %c0_75 = arith.constant 0 : index
    %78 = vector.load %arg3[%c2_73, %c0_74, %c0_75] : memref<9x128x128xbf16, #tpu.memory_space<vmem>>, vector<1x128x128xbf16>
    %79 = vector.shape_cast %78 : vector<1x128x128xbf16> to vector<128x128xbf16>
    %cst_76 = arith.constant dense<0.000000e+00> : vector<288x128xf32>
    %80 = tpu.matmul %77, %79, %cst_76 {dimension_numbers = #tpu.dot_dimension_numbers<[1], [0], [0], [1], [0, 0, 1, 1], [], []>} : vector<288x128xbf16>, vector<128x128xbf16>, vector<288x128xf32> -> vector<288x128xf32>
    %81 = arith.addf %76, %80 : vector<288x128xf32>
    %c23_77 = arith.constant 23 : index
    %c0_78 = arith.constant 0 : index
    %82 = vector.load %arg8[%c23_77, %c0_78] : memref<336x128xbf16, #tpu.memory_space<vmem>>, vector<288x128xbf16>
    %c3_79 = arith.constant 3 : index
    %c0_80 = arith.constant 0 : index
    %c0_81 = arith.constant 0 : index
    %83 = vector.load %arg3[%c3_79, %c0_80, %c0_81] : memref<9x128x128xbf16, #tpu.memory_space<vmem>>, vector<1x128x128xbf16>
    %84 = vector.shape_cast %83 : vector<1x128x128xbf16> to vector<128x128xbf16>
    %cst_82 = arith.constant dense<0.000000e+00> : vector<288x128xf32>
    %85 = tpu.matmul %82, %84, %cst_82 {dimension_numbers = #tpu.dot_dimension_numbers<[1], [0], [0], [1], [0, 0, 1, 1], [], []>} : vector<288x128xbf16>, vector<128x128xbf16>, vector<288x128xf32> -> vector<288x128xf32>
    %86 = arith.addf %81, %85 : vector<288x128xf32>
    %c24_83 = arith.constant 24 : index
    %c0_84 = arith.constant 0 : index
    %87 = vector.load %arg8[%c24_83, %c0_84] : memref<336x128xbf16, #tpu.memory_space<vmem>>, vector<288x128xbf16>
    %c4_85 = arith.constant 4 : index
    %c0_86 = arith.constant 0 : index
    %c0_87 = arith.constant 0 : index
    %88 = vector.load %arg3[%c4_85, %c0_86, %c0_87] : memref<9x128x128xbf16, #tpu.memory_space<vmem>>, vector<1x128x128xbf16>
    %89 = vector.shape_cast %88 : vector<1x128x128xbf16> to vector<128x128xbf16>
    %cst_88 = arith.constant dense<0.000000e+00> : vector<288x128xf32>
    %90 = tpu.matmul %87, %89, %cst_88 {dimension_numbers = #tpu.dot_dimension_numbers<[1], [0], [0], [1], [0, 0, 1, 1], [], []>} : vector<288x128xbf16>, vector<128x128xbf16>, vector<288x128xf32> -> vector<288x128xf32>
    %91 = arith.addf %86, %90 : vector<288x128xf32>
    %c25_89 = arith.constant 25 : index
    %c0_90 = arith.constant 0 : index
    %92 = vector.load %arg8[%c25_89, %c0_90] : memref<336x128xbf16, #tpu.memory_space<vmem>>, vector<288x128xbf16>
    %c5_91 = arith.constant 5 : index
    %c0_92 = arith.constant 0 : index
    %c0_93 = arith.constant 0 : index
    %93 = vector.load %arg3[%c5_91, %c0_92, %c0_93] : memref<9x128x128xbf16, #tpu.memory_space<vmem>>, vector<1x128x128xbf16>
    %94 = vector.shape_cast %93 : vector<1x128x128xbf16> to vector<128x128xbf16>
    %cst_94 = arith.constant dense<0.000000e+00> : vector<288x128xf32>
    %95 = tpu.matmul %92, %94, %cst_94 {dimension_numbers = #tpu.dot_dimension_numbers<[1], [0], [0], [1], [0, 0, 1, 1], [], []>} : vector<288x128xbf16>, vector<128x128xbf16>, vector<288x128xf32> -> vector<288x128xf32>
    %96 = arith.addf %91, %95 : vector<288x128xf32>
    %c41_95 = arith.constant 41 : index
    %c0_96 = arith.constant 0 : index
    %97 = vector.load %arg8[%c41_95, %c0_96] : memref<336x128xbf16, #tpu.memory_space<vmem>>, vector<288x128xbf16>
    %c6_97 = arith.constant 6 : index
    %c0_98 = arith.constant 0 : index
    %c0_99 = arith.constant 0 : index
    %98 = vector.load %arg3[%c6_97, %c0_98, %c0_99] : memref<9x128x128xbf16, #tpu.memory_space<vmem>>, vector<1x128x128xbf16>
    %99 = vector.shape_cast %98 : vector<1x128x128xbf16> to vector<128x128xbf16>
    %cst_100 = arith.constant dense<0.000000e+00> : vector<288x128xf32>
    %100 = tpu.matmul %97, %99, %cst_100 {dimension_numbers = #tpu.dot_dimension_numbers<[1], [0], [0], [1], [0, 0, 1, 1], [], []>} : vector<288x128xbf16>, vector<128x128xbf16>, vector<288x128xf32> -> vector<288x128xf32>
    %101 = arith.addf %96, %100 : vector<288x128xf32>
    %c42_101 = arith.constant 42 : index
    %c0_102 = arith.constant 0 : index
    %102 = vector.load %arg8[%c42_101, %c0_102] : memref<336x128xbf16, #tpu.memory_space<vmem>>, vector<288x128xbf16>
    %c7_103 = arith.constant 7 : index
    %c0_104 = arith.constant 0 : index
    %c0_105 = arith.constant 0 : index
    %103 = vector.load %arg3[%c7_103, %c0_104, %c0_105] : memref<9x128x128xbf16, #tpu.memory_space<vmem>>, vector<1x128x128xbf16>
    %104 = vector.shape_cast %103 : vector<1x128x128xbf16> to vector<128x128xbf16>
    %cst_106 = arith.constant dense<0.000000e+00> : vector<288x128xf32>
    %105 = tpu.matmul %102, %104, %cst_106 {dimension_numbers = #tpu.dot_dimension_numbers<[1], [0], [0], [1], [0, 0, 1, 1], [], []>} : vector<288x128xbf16>, vector<128x128xbf16>, vector<288x128xf32> -> vector<288x128xf32>
    %106 = arith.addf %101, %105 : vector<288x128xf32>
    %c43_107 = arith.constant 43 : index
    %c0_108 = arith.constant 0 : index
    %107 = vector.load %arg8[%c43_107, %c0_108] : memref<336x128xbf16, #tpu.memory_space<vmem>>, vector<288x128xbf16>
    %c8_109 = arith.constant 8 : index
    %c0_110 = arith.constant 0 : index
    %c0_111 = arith.constant 0 : index
    %108 = vector.load %arg3[%c8_109, %c0_110, %c0_111] : memref<9x128x128xbf16, #tpu.memory_space<vmem>>, vector<1x128x128xbf16>
    %109 = vector.shape_cast %108 : vector<1x128x128xbf16> to vector<128x128xbf16>
    %cst_112 = arith.constant dense<0.000000e+00> : vector<288x128xf32>
    %110 = tpu.matmul %107, %109, %cst_112 {dimension_numbers = #tpu.dot_dimension_numbers<[1], [0], [0], [1], [0, 0, 1, 1], [], []>} : vector<288x128xbf16>, vector<128x128xbf16>, vector<288x128xf32> -> vector<288x128xf32>
    %111 = arith.addf %106, %110 : vector<288x128xf32>
    %c0_113 = arith.constant 0 : index
    %c0_114 = arith.constant 0 : index
    %112 = vector.load %arg5[%c0_113, %c0_114] : memref<1x128xf32, #tpu.memory_space<vmem>>, vector<1x128xf32>
    %113 = vector.broadcast %112 : vector<1x128xf32> to vector<288x128xf32>
    %114 = arith.addf %111, %113 : vector<288x128xf32>
    %c0_115 = arith.constant 0 : index
    %c24_116 = arith.constant 24 : index
    %c0_117 = arith.constant 0 : index
    %115 = vector.load %arg1[%c0_115, %c24_116, %c0_117] : memref<1x336x128xbf16, #tpu.memory_space<vmem>>, vector<1x288x128xbf16>
    %116 = vector.shape_cast %115 : vector<1x288x128xbf16> to vector<288x128xbf16>
    %117 = arith.extf %116 : vector<288x128xbf16> to vector<288x128xf32>
    %118 = arith.addf %114, %117 : vector<288x128xf32>
    %cst_118 = arith.constant 2.000000e-01 : f32
    %119 = vector.broadcast %cst_118 : f32 to vector<288x128xf32>
    %120 = arith.mulf %119, %118 : vector<288x128xf32>
    %121 = arith.maximumf %118, %120 : vector<288x128xf32>
    %122 = arith.truncf %121 : vector<288x128xf32> to vector<288x128xbf16>
    %c0_119 = arith.constant 0 : index
    %c0_120 = arith.constant 0 : index
    %c0_121 = arith.constant 0 : index
    %123 = vector.load %arg7[%c0_119, %c0_120, %c0_121] : memref<1x288x128xbf16, #tpu.memory_space<vmem>>, vector<1x288x128xbf16>
    %124 = vector.shape_cast %123 : vector<1x288x128xbf16> to vector<288x128xbf16>
    %125 = vector.shape_cast %122 : vector<288x128xbf16> to vector<1x288x128xbf16>
    tpu.vector_store %arg7[%c0_119, %c0_120, %c0_121], %125 {strides = array<i32>} : memref<1x288x128xbf16, #tpu.memory_space<vmem>>, vector<1x288x128xbf16>,
    return
  }
  func.func @transform_0(%arg0: i32) -> (i32, i32, i32) {
    %c0_i32 = arith.constant 0 : i32
    %c0_i32_0 = arith.constant 0 : i32
    %c0_i32_1 = arith.constant 0 : i32
    return %arg0, %c0_i32, %c0_i32_0 : i32, i32, i32
  }
  func.func @transform_1(%arg0: i32) -> (i32, i32, i32) {
    %c0_i32 = arith.constant 0 : i32
    %c0_i32_0 = arith.constant 0 : i32
    %c0_i32_1 = arith.constant 0 : i32
    %c0_i32_2 = arith.constant 0 : i32
    return %c0_i32, %c0_i32_0, %c0_i32_1 : i32, i32, i32
  }
  func.func @transform_2(%arg0: i32) -> (i32, i32, i32) {
    %c0_i32 = arith.constant 0 : i32
    %c0_i32_0 = arith.constant 0 : i32
    %c0_i32_1 = arith.constant 0 : i32
    %c0_i32_2 = arith.constant 0 : i32
    return %c0_i32, %c0_i32_0, %c0_i32_1 : i32, i32, i32
  }
  func.func @transform_3(%arg0: i32) -> (i32, i32) {
    %c0_i32 = arith.constant 0 : i32
    %c0_i32_0 = arith.constant 0 : i32
    %c0_i32_1 = arith.constant 0 : i32
    return %c0_i32, %c0_i32_0 : i32, i32
  }
  func.func @transform_4(%arg0: i32) -> (i32, i32) {
    %c0_i32 = arith.constant 0 : i32
    %c0_i32_0 = arith.constant 0 : i32
    %c0_i32_1 = arith.constant 0 : i32
    return %c0_i32, %c0_i32_0 : i32, i32
  }
  func.func @transform_5(%arg0: i32) -> (i32, i32) {
    %c0_i32 = arith.constant 0 : i32
    %c0_i32_0 = arith.constant 0 : i32
    %c0_i32_1 = arith.constant 0 : i32
    return %c0_i32, %c0_i32_0 : i32, i32
  }
  func.func @transform_6(%arg0: i32) -> (i32, i32, i32) {
    %c0_i32 = arith.constant 0 : i32
    %c0_i32_0 = arith.constant 0 : i32
    %c0_i32_1 = arith.constant 0 : i32
    return %arg0, %c0_i32, %c0_i32_0 : i32, i32, i32
  }
}

</mosaic_0001>

<llo_original>
// kernel: tile.8
$region0: #{tile.8}
  #allocation0 [shape = 's32[1]{0}', space=sflag, size = 0x4, scoped, tag = 'scoped memory for tile.8']
  %s0 = inlined_call_operand.vmem [shape: f32[18], index: 0, kind: input, shape index: {}]
  %s1 = inlined_call_operand.vmem [shape: f32[16,18], index: 1, kind: output, shape index: {}]
  // Predicated region
  $region2: #{tile.8} parent=0 // pred_check
    _
  $region3: #{tile.8} parent=0 // pred_check_branch
    %3 = sbr.rel (0) target = $region5
  $region4: #{tile.8} parent=0 // pred_region
    _
  $region5: #{tile.8} parent=0 // pred_fallthru
    _
  %v4 = vld [vmem:[%s0] ss:$0 sm:$0xff]
  %5 = vst [vmem:[%s1] sm:$0xff] %v4
  %s6 = scalar_lea.vmem %s1, 8
  %7 = vst [vmem:[%s6] sm:$0xff] %v4

// kernel: tile.0
$region0: #{tile.0}
  %s0 = inlined_call_operand.vmem [shape: f32[16,18], index: 0, kind: input, shape index: {}]
  %s1 = inlined_call_operand.vmem [shape: f32[288,1], index: 1, kind: output, shape index: {}]
  %v2 = vld [vmem:[%s0] sm:$0xff]
  %vm3 = vcmask 7168
  %4 = vst.msk [vmem:[%s1] ss:$18 sm:$0xff] %vm3, %v2
  %s5 = scalar_lea.vmem %s0, 8
  %v6 = vld [vmem:[%s5] sm:$0xff]
  %vm7 = vcmask 7168
  %s8 = scalar_lea.vmem %s1, 144
  %9 = vst.msk [vmem:[%s8] ss:$18 sm:$0xff] %vm7, %v6
  %v10 = vld.sshfl [vmem:[%s0] sm:$0xff pattern:$0xf6d4b290]
  %11 = vrot.lane.b32.xlu0 %v10, 127
  %v12 = vpop.permute.xlu0 %11
  %vm13 = vcmask 7168
  %s14 = scalar_lea.vmem %s1, 1
  %15 = vst.msk [vmem:[%s14] ss:$162 sm:$0x3] %vm13, %v12
  %s16 = scalar_lea.vmem %s1, 4294967009
  %17 = vst.msk [vmem:[%s16] ss:$162 sm:$0xc] %vm13, %v12
  %s18 = scalar_lea.vmem %s1, 4294966721
  %19 = vst.msk [vmem:[%s18] ss:$162 sm:$0x30] %vm13, %v12
  %s20 = scalar_lea.vmem %s1, 4294966433
  %21 = vst.msk [vmem:[%s20] ss:$162 sm:$0xc0] %vm13, %v12
  %s22 = scalar_lea.vmem %s0, 1
  %v23 = vld.sshfl [vmem:[%s22] sm:$0xff pattern:$0x6d4b2907]
  %24 = vrot.lane.b32.xlu0 %v23, 127
  %v25 = vpop.permute.xlu0 %24
  %vm26 = vcmask 7168
  %s27 = scalar_lea.vmem %s1, 145
  %28 = vst.msk [vmem:[%s27] ss:$-126 sm:$0x3] %vm26, %v25
  %s29 = scalar_lea.vmem %s1, 433
  %30 = vst.msk [vmem:[%s29] ss:$-126 sm:$0xc] %vm26, %v25
  %s31 = scalar_lea.vmem %s1, 721
  %32 = vst.msk [vmem:[%s31] ss:$-126 sm:$0x30] %vm26, %v25
  %s33 = scalar_lea.vmem %s1, 1009
  %34 = vst.msk [vmem:[%s33] ss:$-126 sm:$0xc0] %vm26, %v25
  %v35 = vld.sshfl [vmem:[%s0] sm:$0xff pattern:$0x6d4b2907]
  %36 = vrot.lane.b32.xlu0 %v35, 126
  %v37 = vpop.permute.xlu0 %36
  %vm38 = vcmask 7168
  %s39 = scalar_lea.vmem %s1, 128
  %40 = vst.msk [vmem:[%s39] ss:$-126 sm:$0x3] %vm38, %v37
  %s41 = scalar_lea.vmem %s1, 416
  %42 = vst.msk [vmem:[%s41] ss:$-126 sm:$0xc] %vm38, %v37
  %s43 = scalar_lea.vmem %s1, 704
  %44 = vst.msk [vmem:[%s43] ss:$-126 sm:$0x30] %vm38, %v37
  %s45 = scalar_lea.vmem %s1, 992
  %46 = vst.msk [vmem:[%s45] ss:$-126 sm:$0xc0] %vm38, %v37
  %s47 = scalar_lea.vmem %s0, 1
  %v48 = vld.sshfl [vmem:[%s47] sm:$0xff pattern:$0xd4b2907e]
  %49 = vrot.lane.b32.xlu0 %v48, 126
  %v50 = vpop.permute.xlu0 %49
  %vm51 = vcmask 7168
  %s52 = scalar_lea.vmem %s1, 272
  %53 = vst.msk [vmem:[%s52] ss:$-126 sm:$0x7] %vm51, %v50
  %s54 = scalar_lea.vmem %s1, 560
  %55 = vst.msk [vmem:[%s54] ss:$-126 sm:$0x18] %vm51, %v50
  %s56 = scalar_lea.vmem %s1, 848
  %57 = vst.msk [vmem:[%s56] ss:$-126 sm:$0x60] %vm51, %v50
  %s58 = scalar_lea.vmem %s1, 247
  %59 = vst.msk [vmem:[%s58] sm:$0x80] %vm51, %v50
  %v60 = vld.sshfl [vmem:[%s0] sm:$0xff pattern:$0x6d4b2907]
  %61 = vrot.lane.b32.xlu0 %v60, 125
  %v62 = vpop.permute.xlu0 %61
  %vm63 = vcmask 7168
  %s64 = scalar_lea.vmem %s1, 129
  %65 = vst.msk [vmem:[%s64] ss:$-126 sm:$0x3] %vm63, %v62
  %s66 = scalar_lea.vmem %s1, 417
  %67 = vst.msk [vmem:[%s66] ss:$-126 sm:$0xc] %vm63, %v62
  %s68 = scalar_lea.vmem %s1, 705
  %69 = vst.msk [vmem:[%s68] ss:$-126 sm:$0x30] %vm63, %v62
  %s70 = scalar_lea.vmem %s1, 993
  %71 = vst.msk [vmem:[%s70] ss:$-126 sm:$0xc0] %vm63, %v62
  %s72 = scalar_lea.vmem %s0, 1
  %v73 = vld.sshfl [vmem:[%s72] sm:$0xff pattern:$0xd4b2907e]
  %74 = vrot.lane.b32.xlu0 %v73, 125
  %v75 = vpop.permute.xlu0 %74
  %vm76 = vcmask 7168
  %s77 = scalar_lea.vmem %s1, 273
  %78 = vst.msk [vmem:[%s77] ss:$-126 sm:$0x7] %vm76, %v75
  %s79 = scalar_lea.vmem %s1, 561
  %80 = vst.msk [vmem:[%s79] ss:$-126 sm:$0x18] %vm76, %v75
  %s81 = scalar_lea.vmem %s1, 849
  %82 = vst.msk [vmem:[%s81] ss:$-126 sm:$0x60] %vm76, %v75
  %s83 = scalar_lea.vmem %s1, 248
  %84 = vst.msk [vmem:[%s83] sm:$0x80] %vm76, %v75
  %v85 = vld.sshfl [vmem:[%s0] sm:$0xff pattern:$0xd4b2907e]
  %86 = vrot.lane.b32.xlu0 %v85, 124
  %v87 = vpop.permute.xlu0 %86
  %vm88 = vcmask 7168
  %s89 = scalar_lea.vmem %s1, 256
  %90 = vst.msk [vmem:[%s89] ss:$-126 sm:$0x7] %vm88, %v87
  %s91 = scalar_lea.vmem %s1, 544
  %92 = vst.msk [vmem:[%s91] ss:$-126 sm:$0x18] %vm88, %v87
  %s93 = scalar_lea.vmem %s1, 832
  %94 = vst.msk [vmem:[%s93] ss:$-126 sm:$0x60] %vm88, %v87
  %s95 = scalar_lea.vmem %s1, 231
  %96 = vst.msk [vmem:[%s95] sm:$0x80] %vm88, %v87
  %s97 = scalar_lea.vmem %s0, 1
  %v98 = vld.sshfl [vmem:[%s97] sm:$0xff pattern:$0x4b2907e5]
  %99 = vrot.lane.b32.xlu0 %v98, 124
  %v100 = vpop.permute.xlu0 %99
  %vm101 = vcmask 7168
  %s102 = scalar_lea.vmem %s1, 112
  %103 = vst.msk [vmem:[%s102] ss:$162 sm:$0x3] %vm101, %v100
  %s104 = scalar_lea.vmem %s1, 400
  %105 = vst.msk [vmem:[%s104] ss:$-126 sm:$0xc] %vm101, %v100
  %s106 = scalar_lea.vmem %s1, 688
  %107 = vst.msk [vmem:[%s106] ss:$-126 sm:$0x30] %vm101, %v100
  %s108 = scalar_lea.vmem %s1, 976
  %109 = vst.msk [vmem:[%s108] ss:$-126 sm:$0xc0] %vm101, %v100
  %v110 = vld.sshfl [vmem:[%s0] sm:$0xff pattern:$0xd4b2907e]
  %111 = vrot.lane.b32.xlu0 %v110, 123
  %v112 = vpop.permute.xlu0 %111
  %vm113 = vcmask 7168
  %s114 = scalar_lea.vmem %s1, 257
  %115 = vst.msk [vmem:[%s114] ss:$-126 sm:$0x7] %vm113, %v112
  %s116 = scalar_lea.vmem %s1, 545
  %117 = vst.msk [vmem:[%s116] ss:$-126 sm:$0x18] %vm113, %v112
  %s118 = scalar_lea.vmem %s1, 833
  %119 = vst.msk [vmem:[%s118] ss:$-126 sm:$0x60] %vm113, %v112
  %s120 = scalar_lea.vmem %s1, 232
  %121 = vst.msk [vmem:[%s120] sm:$0x80] %vm113, %v112
  %s122 = scalar_lea.vmem %s0, 1
  %v123 = vld.sshfl [vmem:[%s122] sm:$0xff pattern:$0x4b2907e5]
  %124 = vrot.lane.b32.xlu0 %v123, 123
  %v125 = vpop.permute.xlu0 %124
  %vm126 = vcmask 7168
  %s127 = scalar_lea.vmem %s1, 113
  %128 = vst.msk [vmem:[%s127] ss:$162 sm:$0x3] %vm126, %v125
  %s129 = scalar_lea.vmem %s1, 401
  %130 = vst.msk [vmem:[%s129] ss:$-126 sm:$0xc] %vm126, %v125
  %s131 = scalar_lea.vmem %s1, 689
  %132 = vst.msk [vmem:[%s131] ss:$-126 sm:$0x30] %vm126, %v125
  %s133 = scalar_lea.vmem %s1, 977
  %134 = vst.msk [vmem:[%s133] ss:$-126 sm:$0xc0] %vm126, %v125
  %v135 = vld.sshfl [vmem:[%s0] sm:$0xff pattern:$0x4b2907e5]
  %136 = vrot.lane.b32.xlu0 %v135, 122
  %v137 = vpop.permute.xlu0 %136
  %vm138 = vcmask 7168
  %s139 = scalar_lea.vmem %s1, 96
  %140 = vst.msk [vmem:[%s139] ss:$162 sm:$0x3] %vm138, %v137
  %s141 = scalar_lea.vmem %s1, 384
  %142 = vst.msk [vmem:[%s141] ss:$-126 sm:$0xc] %vm138, %v137
  %s143 = scalar_lea.vmem %s1, 672
  %144 = vst.msk [vmem:[%s143] ss:$-126 sm:$0x30] %vm138, %v137
  %s145 = scalar_lea.vmem %s1, 960
  %146 = vst.msk [vmem:[%s145] ss:$-126 sm:$0xc0] %vm138, %v137
  %s147 = scalar_lea.vmem %s0, 1
  %v148 = vld.sshfl [vmem:[%s147] sm:$0xff pattern:$0xb2907e5c]
  %149 = vrot.lane.b32.xlu0 %v148, 122
  %v150 = vpop.permute.xlu0 %149
  %vm151 = vcmask 7168
  %s152 = scalar_lea.vmem %s1, 240
  %153 = vst.msk [vmem:[%s152] ss:$-126 sm:$0x3] %vm151, %v150
  %s154 = scalar_lea.vmem %s1, 528
  %155 = vst.msk [vmem:[%s154] ss:$-126 sm:$0x1c] %vm151, %v150
  %s156 = scalar_lea.vmem %s1, 816
  %157 = vst.msk [vmem:[%s156] ss:$-126 sm:$0x60] %vm151, %v150
  %s158 = scalar_lea.vmem %s1, 215
  %159 = vst.msk [vmem:[%s158] sm:$0x80] %vm151, %v150
  %v160 = vld.sshfl [vmem:[%s0] sm:$0xff pattern:$0x4b2907e5]
  %161 = vrot.lane.b32.xlu0 %v160, 121
  %v162 = vpop.permute.xlu0 %161
  %vm163 = vcmask 7168
  %s164 = scalar_lea.vmem %s1, 97
  %165 = vst.msk [vmem:[%s164] ss:$162 sm:$0x3] %vm163, %v162
  %s166 = scalar_lea.vmem %s1, 385
  %167 = vst.msk [vmem:[%s166] ss:$-126 sm:$0xc] %vm163, %v162
  %s168 = scalar_lea.vmem %s1, 673
  %169 = vst.msk [vmem:[%s168] ss:$-126 sm:$0x30] %vm163, %v162
  %s170 = scalar_lea.vmem %s1, 961
  %171 = vst.msk [vmem:[%s170] ss:$-126 sm:$0xc0] %vm163, %v162
  %s172 = scalar_lea.vmem %s0, 1
  %v173 = vld.sshfl [vmem:[%s172] sm:$0xff pattern:$0xb2907e5c]
  %174 = vrot.lane.b32.xlu0 %v173, 121
  %v175 = vpop.permute.xlu0 %174
  %vm176 = vcmask 7168
  %s177 = scalar_lea.vmem %s1, 241
  %178 = vst.msk [vmem:[%s177] ss:$-126 sm:$0x3] %vm176, %v175
  %s179 = scalar_lea.vmem %s1, 529
  %180 = vst.msk [vmem:[%s179] ss:$-126 sm:$0x1c] %vm176, %v175
  %s181 = scalar_lea.vmem %s1, 817
  %182 = vst.msk [vmem:[%s181] ss:$-126 sm:$0x60] %vm176, %v175
  %s183 = scalar_lea.vmem %s1, 216
  %184 = vst.msk [vmem:[%s183] sm:$0x80] %vm176, %v175
  %v185 = vld.sshfl [vmem:[%s0] sm:$0xff pattern:$0xb2907e5c]
  %186 = vrot.lane.b32.xlu0 %v185, 120
  %v187 = vpop.permute.xlu0 %186
  %vm188 = vcmask 7168
  %s189 = scalar_lea.vmem %s1, 224
  %190 = vst.msk [vmem:[%s189] ss:$-126 sm:$0x3] %vm188, %v187
  %s191 = scalar_lea.vmem %s1, 512
  %192 = vst.msk [vmem:[%s191] ss:$-126 sm:$0x1c] %vm188, %v187
  %s193 = scalar_lea.vmem %s1, 800
  %194 = vst.msk [vmem:[%s193] ss:$-126 sm:$0x60] %vm188, %v187
  %s195 = scalar_lea.vmem %s1, 199
  %196 = vst.msk [vmem:[%s195] sm:$0x80] %vm188, %v187
  %s197 = scalar_lea.vmem %s0, 1
  %v198 = vld.sshfl [vmem:[%s197] sm:$0xff pattern:$0x2907e5c3]
  %199 = vrot.lane.b32.xlu0 %v198, 120
  %v200 = vpop.permute.xlu0 %199
  %vm201 = vcmask 7168
  %s202 = scalar_lea.vmem %s1, 80
  %203 = vst.msk [vmem:[%s202] ss:$162 sm:$0x3] %vm201, %v200
  %s204 = scalar_lea.vmem %s1, 4294967088
  %205 = vst.msk [vmem:[%s204] ss:$162 sm:$0xc] %vm201, %v200
  %s206 = scalar_lea.vmem %s1, 656
  %207 = vst.msk [vmem:[%s206] ss:$-126 sm:$0x30] %vm201, %v200
  %s208 = scalar_lea.vmem %s1, 944
  %209 = vst.msk [vmem:[%s208] ss:$-126 sm:$0xc0] %vm201, %v200
  %v210 = vld.sshfl [vmem:[%s0] sm:$0xff pattern:$0xb2907e5c]
  %211 = vrot.lane.b32.xlu0 %v210, 119
  %v212 = vpop.permute.xlu0 %211
  %vm213 = vcmask 7168
  %s214 = scalar_lea.vmem %s1, 225
  %215 = vst.msk [vmem:[%s214] ss:$-126 sm:$0x3] %vm213, %v212
  %s216 = scalar_lea.vmem %s1, 513
  %217 = vst.msk [vmem:[%s216] ss:$-126 sm:$0x1c] %vm213, %v212
  %s218 = scalar_lea.vmem %s1, 801
  %219 = vst.msk [vmem:[%s218] ss:$-126 sm:$0x60] %vm213, %v212
  %s220 = scalar_lea.vmem %s1, 200
  %221 = vst.msk [vmem:[%s220] sm:$0x80] %vm213, %v212
  %s222 = scalar_lea.vmem %s0, 1
  %v223 = vld.sshfl [vmem:[%s222] sm:$0xff pattern:$0x2907e5c3]
  %224 = vrot.lane.b32.xlu0 %v223, 119
  %v225 = vpop.permute.xlu0 %224
  %vm226 = vcmask 7168
  %s227 = scalar_lea.vmem %s1, 81
  %228 = vst.msk [vmem:[%s227] ss:$162 sm:$0x3] %vm226, %v225
  %s229 = scalar_lea.vmem %s1, 4294967089
  %230 = vst.msk [vmem:[%s229] ss:$162 sm:$0xc] %vm226, %v225
  %s231 = scalar_lea.vmem %s1, 657
  %232 = vst.msk [vmem:[%s231] ss:$-126 sm:$0x30] %vm226, %v225
  %s233 = scalar_lea.vmem %s1, 945
  %234 = vst.msk [vmem:[%s233] ss:$-126 sm:$0xc0] %vm226, %v225
  %v235 = vld.sshfl [vmem:[%s0] sm:$0xff pattern:$0x2907e5c3]
  %236 = vrot.lane.b32.xlu0 %v235, 118
  %v237 = vpop.permute.xlu0 %236
  %vm238 = vcmask 7168
  %s239 = scalar_lea.vmem %s1, 64
  %240 = vst.msk [vmem:[%s239] ss:$162 sm:$0x3] %vm238, %v237
  %s241 = scalar_lea.vmem %s1, 4294967072
  %242 = vst.msk [vmem:[%s241] ss:$162 sm:$0xc] %vm238, %v237
  %s243 = scalar_lea.vmem %s1, 640
  %244 = vst.msk [vmem:[%s243] ss:$-126 sm:$0x30] %vm238, %v237
  %s245 = scalar_lea.vmem %s1, 928
  %246 = vst.msk [vmem:[%s245] ss:$-126 sm:$0xc0] %vm238, %v237
  %s247 = scalar_lea.vmem %s0, 1
  %v248 = vld.sshfl [vmem:[%s247] sm:$0xff pattern:$0x907e5c3a]
  %249 = vrot.lane.b32.xlu0 %v248, 118
  %v250 = vpop.permute.xlu0 %249
  %vm251 = vcmask 7168
  %s252 = scalar_lea.vmem %s1, 208
  %253 = vst.msk [vmem:[%s252] ss:$-126 sm:$0x3] %vm251, %v250
  %s254 = scalar_lea.vmem %s1, 496
  %255 = vst.msk [vmem:[%s254] ss:$-126 sm:$0xc] %vm251, %v250
  %s256 = scalar_lea.vmem %s1, 784
  %257 = vst.msk [vmem:[%s256] ss:$-126 sm:$0x70] %vm251, %v250
  %s258 = scalar_lea.vmem %s1, 183
  %259 = vst.msk [vmem:[%s258] sm:$0x80] %vm251, %v250
  %v260 = vld.sshfl [vmem:[%s0] sm:$0xff pattern:$0x2907e5c3]
  %261 = vrot.lane.b32.xlu0 %v260, 117
  %v262 = vpop.permute.xlu0 %261
  %vm263 = vcmask 7168
  %s264 = scalar_lea.vmem %s1, 65
  %265 = vst.msk [vmem:[%s264] ss:$162 sm:$0x3] %vm263, %v262
  %s266 = scalar_lea.vmem %s1, 4294967073
  %267 = vst.msk [vmem:[%s266] ss:$162 sm:$0xc] %vm263, %v262
  %s268 = scalar_lea.vmem %s1, 641
  %269 = vst.msk [vmem:[%s268] ss:$-126 sm:$0x30] %vm263, %v262
  %s270 = scalar_lea.vmem %s1, 929
  %271 = vst.msk [vmem:[%s270] ss:$-126 sm:$0xc0] %vm263, %v262
  %s272 = scalar_lea.vmem %s0, 1
  %v273 = vld.sshfl [vmem:[%s272] sm:$0xff pattern:$0x907e5c3a]
  %274 = vrot.lane.b32.xlu0 %v273, 117
  %v275 = vpop.permute.xlu0 %274
  %vm276 = vcmask 7168
  %s277 = scalar_lea.vmem %s1, 209
  %278 = vst.msk [vmem:[%s277] ss:$-126 sm:$0x3] %vm276, %v275
  %s279 = scalar_lea.vmem %s1, 497
  %280 = vst.msk [vmem:[%s279] ss:$-126 sm:$0xc] %vm276, %v275
  %s281 = scalar_lea.vmem %s1, 785
  %282 = vst.msk [vmem:[%s281] ss:$-126 sm:$0x70] %vm276, %v275
  %s283 = scalar_lea.vmem %s1, 184
  %284 = vst.msk [vmem:[%s283] sm:$0x80] %vm276, %v275
  %v285 = vld.sshfl [vmem:[%s0] sm:$0xff pattern:$0x907e5c3a]
  %286 = vrot.lane.b32.xlu0 %v285, 116
  %v287 = vpop.permute.xlu0 %286
  %vm288 = vcmask 7168
  %s289 = scalar_lea.vmem %s1, 192
  %290 = vst.msk [vmem:[%s289] ss:$-126 sm:$0x3] %vm288, %v287
  %s291 = scalar_lea.vmem %s1, 480
  %292 = vst.msk [vmem:[%s291] ss:$-126 sm:$0xc] %vm288, %v287
  %s293 = scalar_lea.vmem %s1, 768
  %294 = vst.msk [vmem:[%s293] ss:$-126 sm:$0x70] %vm288, %v287
  %s295 = scalar_lea.vmem %s1, 167
  %296 = vst.msk [vmem:[%s295] sm:$0x80] %vm288, %v287
  %s297 = scalar_lea.vmem %s0, 1
  %v298 = vld.sshfl [vmem:[%s297] sm:$0xff pattern:$0x7e5c3a1]
  %299 = vrot.lane.b32.xlu0 %v298, 116
  %v300 = vpop.permute.xlu0 %299
  %vm301 = vcmask 7168
  %s302 = scalar_lea.vmem %s1, 48
  %303 = vst.msk [vmem:[%s302] ss:$162 sm:$0x3] %vm301, %v300
  %s304 = scalar_lea.vmem %s1, 4294967056
  %305 = vst.msk [vmem:[%s304] ss:$162 sm:$0xc] %vm301, %v300
  %s306 = scalar_lea.vmem %s1, 4294966768
  %307 = vst.msk [vmem:[%s306] ss:$162 sm:$0x30] %vm301, %v300
  %s308 = scalar_lea.vmem %s1, 912
  %309 = vst.msk [vmem:[%s308] ss:$-126 sm:$0xc0] %vm301, %v300
  %v310 = vld.sshfl [vmem:[%s0] sm:$0xff pattern:$0x907e5c3a]
  %311 = vrot.lane.b32.xlu0 %v310, 115
  %v312 = vpop.permute.xlu0 %311
  %vm313 = vcmask 7168
  %s314 = scalar_lea.vmem %s1, 193
  %315 = vst.msk [vmem:[%s314] ss:$-126 sm:$0x3] %vm313, %v312
  %s316 = scalar_lea.vmem %s1, 481
  %317 = vst.msk [vmem:[%s316] ss:$-126 sm:$0xc] %vm313, %v312
  %s318 = scalar_lea.vmem %s1, 769
  %319 = vst.msk [vmem:[%s318] ss:$-126 sm:$0x70] %vm313, %v312
  %s320 = scalar_lea.vmem %s1, 168
  %321 = vst.msk [vmem:[%s320] sm:$0x80] %vm313, %v312
  %s322 = scalar_lea.vmem %s0, 1
  %v323 = vld.sshfl [vmem:[%s322] sm:$0xff pattern:$0x7e5c3a1]
  %324 = vrot.lane.b32.xlu0 %v323, 115
  %v325 = vpop.permute.xlu0 %324
  %vm326 = vcmask 7168
  %s327 = scalar_lea.vmem %s1, 49
  %328 = vst.msk [vmem:[%s327] ss:$162 sm:$0x3] %vm326, %v325
  %s329 = scalar_lea.vmem %s1, 4294967057
  %330 = vst.msk [vmem:[%s329] ss:$162 sm:$0xc] %vm326, %v325
  %s331 = scalar_lea.vmem %s1, 4294966769
  %332 = vst.msk [vmem:[%s331] ss:$162 sm:$0x30] %vm326, %v325
  %s333 = scalar_lea.vmem %s1, 913
  %334 = vst.msk [vmem:[%s333] ss:$-126 sm:$0xc0] %vm326, %v325
  %v335 = vld.sshfl [vmem:[%s0] sm:$0xff pattern:$0x7e5c3a1]
  %336 = vrot.lane.b32.xlu0 %v335, 114
  %v337 = vpop.permute.xlu0 %336
  %vm338 = vcmask 7168
  %s339 = scalar_lea.vmem %s1, 32
  %340 = vst.msk [vmem:[%s339] ss:$162 sm:$0x3] %vm338, %v337
  %s341 = scalar_lea.vmem %s1, 4294967040
  %342 = vst.msk [vmem:[%s341] ss:$162 sm:$0xc] %vm338, %v337
  %s343 = scalar_lea.vmem %s1, 4294966752
  %344 = vst.msk [vmem:[%s343] ss:$162 sm:$0x30] %vm338, %v337
  %s345 = scalar_lea.vmem %s1, 896
  %346 = vst.msk [vmem:[%s345] ss:$-126 sm:$0xc0] %vm338, %v337
  %s347 = scalar_lea.vmem %s0, 2
  %v348 = vld.sshfl [vmem:[%s347] sm:$0xff pattern:$0x6d4b2907]
  %349 = vrot.lane.b32.xlu0 %v348, 114
  %v350 = vpop.permute.xlu0 %349
  %vm351 = vcmask 7168
  %s352 = scalar_lea.vmem %s1, 176
  %353 = vst.msk [vmem:[%s352] ss:$-126 sm:$0x3] %vm351, %v350
  %s354 = scalar_lea.vmem %s1, 464
  %355 = vst.msk [vmem:[%s354] ss:$-126 sm:$0xc] %vm351, %v350
  %s356 = scalar_lea.vmem %s1, 752
  %357 = vst.msk [vmem:[%s356] ss:$-126 sm:$0x30] %vm351, %v350
  %s358 = scalar_lea.vmem %s1, 1040
  %359 = vst.msk [vmem:[%s358] ss:$-126 sm:$0xc0] %vm351, %v350
  %v360 = vld.sshfl [vmem:[%s0] sm:$0xff pattern:$0x7e5c3a1]
  %361 = vrot.lane.b32.xlu0 %v360, 113
  %v362 = vpop.permute.xlu0 %361
  %vm363 = vcmask 7168
  %s364 = scalar_lea.vmem %s1, 33
  %365 = vst.msk [vmem:[%s364] ss:$162 sm:$0x3] %vm363, %v362
  %s366 = scalar_lea.vmem %s1, 4294967041
  %367 = vst.msk [vmem:[%s366] ss:$162 sm:$0xc] %vm363, %v362
  %s368 = scalar_lea.vmem %s1, 4294966753
  %369 = vst.msk [vmem:[%s368] ss:$162 sm:$0x30] %vm363, %v362
  %s370 = scalar_lea.vmem %s1, 897
  %371 = vst.msk [vmem:[%s370] ss:$-126 sm:$0xc0] %vm363, %v362
  %s372 = scalar_lea.vmem %s0, 2
  %v373 = vld.sshfl [vmem:[%s372] sm:$0xff pattern:$0x6d4b2907]
  %374 = vrot.lane.b32.xlu0 %v373, 113
  %v375 = vpop.permute.xlu0 %374
  %vm376 = vcmask 7168
  %s377 = scalar_lea.vmem %s1, 177
  %378 = vst.msk [vmem:[%s377] ss:$-126 sm:$0x3] %vm376, %v375
  %s379 = scalar_lea.vmem %s1, 465
  %380 = vst.msk [vmem:[%s379] ss:$-126 sm:$0xc] %vm376, %v375
  %s381 = scalar_lea.vmem %s1, 753
  %382 = vst.msk [vmem:[%s381] ss:$-126 sm:$0x30] %vm376, %v375
  %s383 = scalar_lea.vmem %s1, 1041
  %384 = vst.msk [vmem:[%s383] ss:$-126 sm:$0xc0] %vm376, %v375
  %s385 = scalar_lea.vmem %s0, 1
  %v386 = vld.sshfl [vmem:[%s385] sm:$0xff pattern:$0x6d4b2907]
  %387 = vrot.lane.b32.xlu0 %v386, 112
  %v388 = vpop.permute.xlu0 %387
  %vm389 = vcmask 7168
  %s390 = scalar_lea.vmem %s1, 160
  %391 = vst.msk [vmem:[%s390] ss:$-126 sm:$0x3] %vm389, %v388
  %s392 = scalar_lea.vmem %s1, 448
  %393 = vst.msk [vmem:[%s392] ss:$-126 sm:$0xc] %vm389, %v388
  %s394 = scalar_lea.vmem %s1, 736
  %395 = vst.msk [vmem:[%s394] ss:$-126 sm:$0x30] %vm389, %v388
  %s396 = scalar_lea.vmem %s1, 1024
  %397 = vst.msk [vmem:[%s396] ss:$-126 sm:$0xc0] %vm389, %v388
  %v398 = vld.sshfl [vmem:[%s0] sm:$0xff pattern:$0xf6d4b290]
  %399 = vrot.lane.b32.xlu0 %v398, 112
  %v400 = vpop.permute.xlu0 %399
  %vm401 = vcmask 7168
  %s402 = scalar_lea.vmem %s1, 16
  %403 = vst.msk [vmem:[%s402] ss:$162 sm:$0x3] %vm401, %v400
  %s404 = scalar_lea.vmem %s1, 4294967024
  %405 = vst.msk [vmem:[%s404] ss:$162 sm:$0xc] %vm401, %v400
  %s406 = scalar_lea.vmem %s1, 4294966736
  %407 = vst.msk [vmem:[%s406] ss:$162 sm:$0x30] %vm401, %v400
  %s408 = scalar_lea.vmem %s1, 4294966448
  %409 = vst.msk [vmem:[%s408] ss:$162 sm:$0xc0] %vm401, %v400
  %s410 = scalar_lea.vmem %s0, 1
  %v411 = vld.sshfl [vmem:[%s410] sm:$0xff pattern:$0x6d4b2907]
  %412 = vrot.lane.b32.xlu0 %v411, 111
  %v413 = vpop.permute.xlu0 %412
  %vm414 = vcmask 7168
  %s415 = scalar_lea.vmem %s1, 161
  %416 = vst.msk [vmem:[%s415] ss:$-126 sm:$0x3] %vm414, %v413
  %s417 = scalar_lea.vmem %s1, 449
  %418 = vst.msk [vmem:[%s417] ss:$-126 sm:$0xc] %vm414, %v413
  %s419 = scalar_lea.vmem %s1, 737
  %420 = vst.msk [vmem:[%s419] ss:$-126 sm:$0x30] %vm414, %v413
  %s421 = scalar_lea.vmem %s1, 1025
  %422 = vst.msk [vmem:[%s421] ss:$-126 sm:$0xc0] %vm414, %v413
  %v423 = vld.sshfl [vmem:[%s0] sm:$0xff pattern:$0xf6d4b290]
  %424 = vrot.lane.b32.xlu0 %v423, 111
  %v425 = vpop.permute.xlu0 %424
  %vm426 = vcmask 7168
  %s427 = scalar_lea.vmem %s1, 17
  %428 = vst.msk [vmem:[%s427] ss:$162 sm:$0x3] %vm426, %v425
  %s429 = scalar_lea.vmem %s1, 4294967025
  %430 = vst.msk [vmem:[%s429] ss:$162 sm:$0xc] %vm426, %v425
  %s431 = scalar_lea.vmem %s1, 4294966737
  %432 = vst.msk [vmem:[%s431] ss:$162 sm:$0x30] %vm426, %v425
  %s433 = scalar_lea.vmem %s1, 4294966449
  %434 = vst.msk [vmem:[%s433] ss:$162 sm:$0xc0] %vm426, %v425

// kernel: dis_res_block.1
$region0: #{dis_res_block.1}
  #allocation0 [shape = 'u32[]', space=smem, size = 0x4, offset = 0x4, fixed_abs, tag = 'smem constant byte address 0x4 - core index']
  #allocation1 [shape = 'u32[144,128]{1,0:T(1,128)}', space=vmem, size = 0x12000, scoped, tag = 'internal scratch']
  #allocation2 [shape = 'bf16[336,128]{1,0:T(16,128)(2,1)}', space=vmem, size = 0x15000, scoped, tag = 'scratch operand']
  %s0 = inlined_call_operand.vmem [shape: bf16[2,336,128], index: 0, kind: input, shape index: {}]
  %s1 = inlined_call_operand.vmem [shape: bf16[9,128,128], index: 1, kind: input, shape index: {}]
  %s2 = inlined_call_operand.vmem [shape: bf16[9,128,128], index: 2, kind: input, shape index: {}]
  %s3 = inlined_call_operand.vmem [shape: f32[1,128], index: 3, kind: input, shape index: {}]
  %s4 = inlined_call_operand.vmem [shape: f32[1,128], index: 4, kind: input, shape index: {}]
  %s5 = inlined_call_operand.vmem [shape: f32[288,1], index: 5, kind: input, shape index: {}]
  %s6 = inlined_call_operand.vmem [shape: bf16[2,288,128], index: 6, kind: output, shape index: {}]
  %s7 = sld [smem:[#allocation0]]
  $region57: #{dis_res_block.1} parent=0
    _
  %s9 = ssub.s32 1, %s7
  %s10 = scalar_select 0, %s9, %s7
  loop: start=0, step=1, limit=4
  $region2: #{dis_res_block.1} parent=0 // loop_pre_header
    _
  $region3: #{dis_res_block.1} parent=0 // loop_header
    %s12 = sphi 0, %s16
    %p13 = scmp.ge.s32.totalorder %s12, 4
    %s22 = sphi 0, %s24
    %s25 = sphi 0, %s22
    %s26 = sphi 0, %s25
    %s42 = sphi 0, %s26
    %s46 = sphi 0, %s46
    %s48 = sphi 0, %s46
    %s49 = sphi 0, %s48
    %s63 = sphi 0, %s49
    %s67 = sphi 0, %s67
    %s69 = sphi 0, %s67
    %s70 = sphi 0, %s69
    %s84 = sphi 0, %s70
    %s88 = sphi 0, %s88
    %s90 = sphi 0, %s88
    %s91 = sphi 0, %s90
    %s105 = sphi 0, %s91
    %s109 = sphi 0, %s109
    %s111 = sphi 0, %s109
    %s112 = sphi 0, %s111
    %s126 = sphi 0, %s112
    %s130 = sphi 0, %s130
    %s132 = sphi 0, %s130
    %s133 = sphi 0, %s132
    %s147 = sphi 0, %s133
    %s153 = sphi 0, %s155
    %s156 = sphi 0, %s153
    %s157 = sphi 0, %s156
    %s173 = sphi 0, %s157
  $region4: #{dis_res_block.1} parent=0 // loop_header_branch
    %15 = sbr.rel (%p13) target = $region8
  $region5: #{dis_res_block.1} parent=0 // loop_body
    %s17 = ssub.s32 %s12, 1
    %s18 = ssub.s32 %s12, 2
    %s19 = sadd.s32 %s12, 1
    %s20 = ssub.s32 %s12, %s19
    %p21 = scmp.eq.s32.totalorder %s20, 0
    %s23 = sadd.s32 %s22, 1
    %s24 = scalar_select %p21, %s22, %s23
    %p27 = pneg %p21
    %p28 = scmp.eq.s32.totalorder %s12, 1
    %p29 = por %p27, %p28
    %p30 = scmp.ne.s32.totalorder %s22, %s25
    %p31 = scmp.eq.s32.totalorder %s12, 0
    %p32 = por %p30, %p31
    %p33 = scmp.ne.s32.totalorder %s22, %s25
    %p34 = scmp.eq.s32.totalorder %s17, 1
    %p35 = por %p33, %p34
    %p36 = scmp.ne.s32.totalorder %s25, %s26
    %p37 = scmp.eq.s32.totalorder %s17, 0
    %p38 = por %p36, %p37
    %p39 = scmp.ne.s32.totalorder %s25, %s26
    %p40 = scmp.eq.s32.totalorder %s18, 1
    %p41 = por %p39, %p40
    %p43 = scmp.ne.s32.totalorder %s26, %s42
    %p44 = scmp.eq.s32.totalorder %s18, 0
    %p45 = por %p43, %p44
    %s47 = sadd.s32 %s46, 1
    %p50 = scmp.eq.s32.totalorder %s12, 1
    %p51 = scmp.ne.s32.totalorder %s46, %s48
    %p52 = scmp.eq.s32.totalorder %s12, 0
    %p53 = por %p51, %p52
    %p54 = scmp.ne.s32.totalorder %s46, %s48
    %p55 = scmp.eq.s32.totalorder %s17, 1
    %p56 = por %p54, %p55
    %p57 = scmp.ne.s32.totalorder %s48, %s49
    %p58 = scmp.eq.s32.totalorder %s17, 0
    %p59 = por %p57, %p58
    %p60 = scmp.ne.s32.totalorder %s48, %s49
    %p61 = scmp.eq.s32.totalorder %s18, 1
    %p62 = por %p60, %p61
    %p64 = scmp.ne.s32.totalorder %s49, %s63
    %p65 = scmp.eq.s32.totalorder %s18, 0
    %p66 = por %p64, %p65
    %s68 = sadd.s32 %s67, 1
    %p71 = scmp.eq.s32.totalorder %s12, 1
    %p72 = scmp.ne.s32.totalorder %s67, %s69
    %p73 = scmp.eq.s32.totalorder %s12, 0
    %p74 = por %p72, %p73
    %p75 = scmp.ne.s32.totalorder %s67, %s69
    %p76 = scmp.eq.s32.totalorder %s17, 1
    %p77 = por %p75, %p76
    %p78 = scmp.ne.s32.totalorder %s69, %s70
    %p79 = scmp.eq.s32.totalorder %s17, 0
    %p80 = por %p78, %p79
    %p81 = scmp.ne.s32.totalorder %s69, %s70
    %p82 = scmp.eq.s32.totalorder %s18, 1
    %p83 = por %p81, %p82
    %p85 = scmp.ne.s32.totalorder %s70, %s84
    %p86 = scmp.eq.s32.totalorder %s18, 0
    %p87 = por %p85, %p86
    %s89 = sadd.s32 %s88, 1
    %p92 = scmp.eq.s32.totalorder %s12, 1
    %p93 = scmp.ne.s32.totalorder %s88, %s90
    %p94 = scmp.eq.s32.totalorder %s12, 0
    %p95 = por %p93, %p94
    %p96 = scmp.ne.s32.totalorder %s88, %s90
    %p97 = scmp.eq.s32.totalorder %s17, 1
    %p98 = por %p96, %p97
    %p99 = scmp.ne.s32.totalorder %s90, %s91
    %p100 = scmp.eq.s32.totalorder %s17, 0
    %p101 = por %p99, %p100
    %p102 = scmp.ne.s32.totalorder %s90, %s91
    %p103 = scmp.eq.s32.totalorder %s18, 1
    %p104 = por %p102, %p103
    %p106 = scmp.ne.s32.totalorder %s91, %s105
    %p107 = scmp.eq.s32.totalorder %s18, 0
    %p108 = por %p106, %p107
    %s110 = sadd.s32 %s109, 1
    %p113 = scmp.eq.s32.totalorder %s12, 1
    %p114 = scmp.ne.s32.totalorder %s109, %s111
    %p115 = scmp.eq.s32.totalorder %s12, 0
    %p116 = por %p114, %p115
    %p117 = scmp.ne.s32.totalorder %s109, %s111
    %p118 = scmp.eq.s32.totalorder %s17, 1
    %p119 = por %p117, %p118
    %p120 = scmp.ne.s32.totalorder %s111, %s112
    %p121 = scmp.eq.s32.totalorder %s17, 0
    %p122 = por %p120, %p121
    %p123 = scmp.ne.s32.totalorder %s111, %s112
    %p124 = scmp.eq.s32.totalorder %s18, 1
    %p125 = por %p123, %p124
    %p127 = scmp.ne.s32.totalorder %s112, %s126
    %p128 = scmp.eq.s32.totalorder %s18, 0
    %p129 = por %p127, %p128
    %s131 = sadd.s32 %s130, 1
    %p134 = scmp.eq.s32.totalorder %s12, 1
    %p135 = scmp.ne.s32.totalorder %s130, %s132
    %p136 = scmp.eq.s32.totalorder %s12, 0
    %p137 = por %p135, %p136
    %p138 = scmp.ne.s32.totalorder %s130, %s132
    %p139 = scmp.eq.s32.totalorder %s17, 1
    %p140 = por %p138, %p139
    %p141 = scmp.ne.s32.totalorder %s132, %s133
    %p142 = scmp.eq.s32.totalorder %s17, 0
    %p143 = por %p141, %p142
    %p144 = scmp.ne.s32.totalorder %s132, %s133
    %p145 = scmp.eq.s32.totalorder %s18, 1
    %p146 = por %p144, %p145
    %p148 = scmp.ne.s32.totalorder %s133, %s147
    %p149 = scmp.eq.s32.totalorder %s18, 0
    %p150 = por %p148, %p149
    %s151 = ssub.s32 %s12, %s19
    %p152 = scmp.eq.s32.totalorder %s151, 0
    %s154 = sadd.s32 %s153, 1
    %s155 = scalar_select %p152, %s153, %s154
    %p158 = pneg %p152
    %p159 = scmp.eq.s32.totalorder %s12, 1
    %p160 = por %p158, %p159
    %p161 = scmp.ne.s32.totalorder %s153, %s156
    %p162 = scmp.eq.s32.totalorder %s12, 0
    %p163 = por %p161, %p162
    %p164 = scmp.ne.s32.totalorder %s153, %s156
    %p165 = scmp.eq.s32.totalorder %s17, 1
    %p166 = por %p164, %p165
    %p167 = scmp.ne.s32.totalorder %s156, %s157
    %p168 = scmp.eq.s32.totalorder %s17, 0
    %p169 = por %p167, %p168
    %p170 = scmp.ne.s32.totalorder %s156, %s157
    %p171 = scmp.eq.s32.totalorder %s18, 1
    %p172 = por %p170, %p171
    %p174 = scmp.ne.s32.totalorder %s157, %s173
    %p175 = scmp.eq.s32.totalorder %s18, 0
    %p176 = por %p174, %p175
    %p177 = scmp.le.s32.totalorder 1, %s12
    %p178 = scmp.lt.s32.totalorder %s12, 3
    %p179 = pnand %p177, %p178
    %p180 = pneg %p179
    // Predicated region
    $region9: #{dis_res_block.1} parent=5 // pred_check
      _
    $region10: #{dis_res_block.1} parent=5 // pred_check_branch
      %182 = sbr.rel (%p179) target = $region12
    $region11: #{dis_res_block.1} parent=5 // pred_region
      %s183 = ssub.s32 %s12, 1
      // Predicated region
      $region13: #{dis_res_block.1} parent=11 // pred_check
        %p184 = pneg %p59
      $region14: #{dis_res_block.1} parent=11 // pred_check_branch
        %186 = sbr.rel (%p184) target = $region16
      $region15: #{dis_res_block.1} parent=11 // pred_region
        _
      $region16: #{dis_res_block.1} parent=11 // pred_fallthru
        _
      // Predicated region
      $region17: #{dis_res_block.1} parent=11 // pred_check
        %p187 = pneg %p80
      $region18: #{dis_res_block.1} parent=11 // pred_check_branch
        %189 = sbr.rel (%p187) target = $region20
      $region19: #{dis_res_block.1} parent=11 // pred_region
        _
      $region20: #{dis_res_block.1} parent=11 // pred_fallthru
        _
      // Predicated region
      $region21: #{dis_res_block.1} parent=11 // pred_check
        %p190 = pneg %p101
      $region22: #{dis_res_block.1} parent=11 // pred_check_branch
        %192 = sbr.rel (%p190) target = $region24
      $region23: #{dis_res_block.1} parent=11 // pred_region
        _
      $region24: #{dis_res_block.1} parent=11 // pred_fallthru
        _
      // Predicated region
      $region25: #{dis_res_block.1} parent=11 // pred_check
        %p193 = pneg %p122
      $region26: #{dis_res_block.1} parent=11 // pred_check_branch
        %195 = sbr.rel (%p193) target = $region28
      $region27: #{dis_res_block.1} parent=11 // pred_region
        _
      $region28: #{dis_res_block.1} parent=11 // pred_fallthru
        _
      // Predicated region
      $region29: #{dis_res_block.1} parent=11 // pred_check
        %p196 = pneg %p143
      $region30: #{dis_res_block.1} parent=11 // pred_check_branch
        %198 = sbr.rel (%p196) target = $region32
      $region31: #{dis_res_block.1} parent=11 // pred_region
        _
      $region32: #{dis_res_block.1} parent=11 // pred_fallthru
        _
    $region12: #{dis_res_block.1} parent=5 // pred_fallthru
      _
    %p199 = scmp.lt.s32.totalorder %s12, 2
    // Predicated region
    $region33: #{dis_res_block.1} parent=5 // pred_check
      %p200 = pneg %p199
    $region34: #{dis_res_block.1} parent=5 // pred_check_branch
      %202 = sbr.rel (%p200) target = $region36
    $region35: #{dis_res_block.1} parent=5 // pred_region
      // Predicated region
      $region37: #{dis_res_block.1} parent=35 // pred_check
        %p203 = pneg %p32
      $region38: #{dis_res_block.1} parent=35 // pred_check_branch
        %205 = sbr.rel (%p203) target = $region40
      $region39: #{dis_res_block.1} parent=35 // pred_region
        %p206 = scmp.lt.s32.totalorder %s12, 1
        %s207 = scalar_select %p206, %s12, 1
        %s208 = smul.addr %s207, 42
        %s209 = smul.addr %s208, 4
        %s210 = scalar_lea.vmem %s0, %s209
      $region40: #{dis_res_block.1} parent=35 // pred_fallthru
        _
    $region36: #{dis_res_block.1} parent=5 // pred_fallthru
      _
    %p211 = scmp.le.s32.totalorder 1, %s12
    %p212 = scmp.lt.s32.totalorder %s12, 3
    %p213 = pnand %p211, %p212
    %p214 = pneg %p213
    // Predicated region
    $region41: #{dis_res_block.1} parent=5 // pred_check
      _
    $region42: #{dis_res_block.1} parent=5 // pred_check_branch
      %216 = sbr.rel (%p213) target = $region44
    $region43: #{dis_res_block.1} parent=5 // pred_region
      %s217 = ssub.s32 %s12, 1
      %p218 = scmp.lt.s32.totalorder %s17, 1
      %s219 = scalar_select %p218, %s17, 1
      %s220 = smul.addr %s219, 42
      %s221 = smul.addr %s220, 4
      %s222 = scalar_lea.vmem %s0, %s221
      %p223 = pneg %p38
      %p224 = pneg %p35
      %p225 = pneg %p59
      %p226 = pneg %p56
      %p227 = pneg %p80
      %p228 = pneg %p77
      %p229 = pneg %p101
      %p230 = pneg %p98
      %p231 = pneg %p122
      %p232 = pneg %p119
      %p233 = pneg %p143
      %p234 = pneg %p140
      %p235 = pneg %p169
      %p236 = pneg %p166
      %p237 = scmp.lt.s32.totalorder %s17, 1
      %s238 = scalar_select %p237, %s17, 1
      %s239 = smul.addr %s238, 36
      %s240 = smul.addr %s239, 4
      %s241 = scalar_lea.vmem %s6, %s240
      %p242 = scmp.lt.s32.totalorder %s17, 1
      %s243 = scalar_select %p242, %s17, 1
      %s244 = smul.addr %s243, 42
      %s245 = smul.addr %s244, 4
      %s246 = scalar_lea.vmem %s0, %s245
      %p247 = scmp.lt.s32.totalorder %s17, 1
      %s248 = scalar_select %p247, %s17, 1
      %s249 = smul.addr %s248, 36
      %s250 = smul.addr %s249, 4
      %s251 = scalar_lea.vmem %s6, %s250
      %253 = vst [vmem:[#allocation2] sm:$0xff] 0
      %254 = vst [vmem:[#allocation2 + $0x8] sm:$0xf] 0
      %255 = vst [vmem:[#allocation2 + $0x98] sm:$0xf0] 0
      %256 = vst [vmem:[#allocation2 + $0xa0] sm:$0xff] 0
      %v257 = vld [vmem:[%s246] sm:$0xc]
      %v258 = vld [vmem:[%s246 + $0x4] sm:$0xf]
      %v259 = vld [vmem:[%s246 + $0x8] sm:$0xf]
      %v260 = vld [vmem:[%s246 + $0xc] sm:$0xf]
      %v261 = vld [vmem:[%s246 + $0x10] sm:$0xf]
      %v262 = vld [vmem:[%s246 + $0x14] sm:$0xf]
      %v263 = vld [vmem:[%s246 + $0x18] sm:$0xf]
      %v264 = vld [vmem:[%s246 + $0x1c] sm:$0xf]
      %v265 = vld [vmem:[%s246 + $0x20] sm:$0xf]
      %v266 = vld [vmem:[%s246 + $0x24] sm:$0xf]
      %v267 = vld [vmem:[%s246 + $0x28] sm:$0xf]
      %v268 = vld [vmem:[%s246 + $0x2c] sm:$0xf]
      %v269 = vld [vmem:[%s246 + $0x30] sm:$0xf]
      %v270 = vld [vmem:[%s246 + $0x34] sm:$0xf]
      %v271 = vld [vmem:[%s246 + $0x38] sm:$0xf]
      %v272 = vld [vmem:[%s246 + $0x3c] sm:$0xf]
      %v273 = vld [vmem:[%s246 + $0x40] sm:$0xf]
      %v274 = vld [vmem:[%s246 + $0x44] sm:$0xf]
      %v275 = vld [vmem:[%s246 + $0x48] sm:$0xf]
      %v276 = vld [vmem:[%s246 + $0x4c] sm:$0xf]
      %v277 = vld [vmem:[%s246 + $0x50] sm:$0xf]
      %v278 = vld [vmem:[%s246 + $0x54] sm:$0xf]
      %v279 = vld [vmem:[%s246 + $0x58] sm:$0xf]
      %v280 = vld [vmem:[%s246 + $0x5c] sm:$0xf]
      %v281 = vld [vmem:[%s246 + $0x60] sm:$0xf]
      %v282 = vld [vmem:[%s246 + $0x64] sm:$0xf]
      %v283 = vld [vmem:[%s246 + $0x68] sm:$0xf]
      %v284 = vld [vmem:[%s246 + $0x6c] sm:$0xf]
      %v285 = vld [vmem:[%s246 + $0x70] sm:$0xf]
      %v286 = vld [vmem:[%s246 + $0x74] sm:$0xf]
      %v287 = vld [vmem:[%s246 + $0x78] sm:$0xf]
      %v288 = vld [vmem:[%s246 + $0x7c] sm:$0xf]
      %v289 = vld [vmem:[%s246 + $0x80] sm:$0xf]
      %v290 = vld [vmem:[%s246 + $0x84] sm:$0xf]
      %v291 = vld [vmem:[%s246 + $0x88] sm:$0xf]
      %v292 = vld [vmem:[%s246 + $0x8c] sm:$0xf]
      %v293 = vld [vmem:[%s246 + $0x90] sm:$0x7]
      %v294 = vld [vmem:[%s1] sm:$0xf]
      %v295 = vld [vmem:[%s1 + $0x4] sm:$0xf]
      %v296 = vld [vmem:[%s1 + $0x8] sm:$0xf]
      %v297 = vld [vmem:[%s1 + $0xc] sm:$0xf]
      %v298 = vld [vmem:[%s1 + $0x10] sm:$0xf]
      %v299 = vld [vmem:[%s1 + $0x14] sm:$0xf]
      %v300 = vld [vmem:[%s1 + $0x18] sm:$0xf]
      %v301 = vld [vmem:[%s1 + $0x1c] sm:$0xf]
      %v302 = vld [vmem:[%s1 + $0x20] sm:$0xf]
      %v303 = vld [vmem:[%s1 + $0x24] sm:$0xf]
      %v304 = vld [vmem:[%s1 + $0x28] sm:$0xf]
      %v305 = vld [vmem:[%s1 + $0x2c] sm:$0xf]
      %v306 = vld [vmem:[%s1 + $0x30] sm:$0xf]
      %v307 = vld [vmem:[%s1 + $0x34] sm:$0xf]
      %v308 = vld [vmem:[%s1 + $0x38] sm:$0xf]
      %v309 = vld [vmem:[%s1 + $0x3c] sm:$0xf]
      %v310 = vld [vmem:[%s246] sm:$0x8]
      %s311 = scalar_lea.vmem %s1, 64
      %v312 = vld [vmem:[%s311] sm:$0xf]
      %v313 = vld [vmem:[%s311 + $0x4] sm:$0xf]
      %v314 = vld [vmem:[%s311 + $0x8] sm:$0xf]
      %v315 = vld [vmem:[%s311 + $0xc] sm:$0xf]
      %v316 = vld [vmem:[%s311 + $0x10] sm:$0xf]
      %v317 = vld [vmem:[%s311 + $0x14] sm:$0xf]
      %v318 = vld [vmem:[%s311 + $0x18] sm:$0xf]
      %v319 = vld [vmem:[%s311 + $0x1c] sm:$0xf]
      %v320 = vld [vmem:[%s311 + $0x20] sm:$0xf]
      %v321 = vld [vmem:[%s311 + $0x24] sm:$0xf]
      %v322 = vld [vmem:[%s311 + $0x28] sm:$0xf]
      %v323 = vld [vmem:[%s311 + $0x2c] sm:$0xf]
      %v324 = vld [vmem:[%s311 + $0x30] sm:$0xf]
      %v325 = vld [vmem:[%s311 + $0x34] sm:$0xf]
      %v326 = vld [vmem:[%s311 + $0x38] sm:$0xf]
      %v327 = vld [vmem:[%s311 + $0x3c] sm:$0xf]
      %v365 = vunpack.c.l.b16 %v310
      %v366 = vunpack.c.l.b16 %v258
      %v367 = vunpack.c.l.b16 %v259
      %v368 = vunpack.c.l.b16 %v260
      %v369 = vunpack.c.l.b16 %v261
      %v370 = vunpack.c.l.b16 %v262
      %v371 = vunpack.c.l.b16 %v263
      %v372 = vunpack.c.l.b16 %v264
      %v373 = vunpack.c.l.b16 %v265
      %v374 = vunpack.c.l.b16 %v266
      %v375 = vunpack.c.l.b16 %v267
      %v376 = vunpack.c.l.b16 %v268
      %v377 = vunpack.c.l.b16 %v269
      %v378 = vunpack.c.l.b16 %v270
      %v379 = vunpack.c.l.b16 %v271
      %v380 = vunpack.c.l.b16 %v272
      %v381 = vunpack.c.l.b16 %v273
      %v382 = vunpack.c.l.b16 %v274
      %v383 = vunpack.c.l.b16 %v275
      %v384 = vunpack.c.l.b16 %v276
      %v385 = vunpack.c.l.b16 %v277
      %v386 = vunpack.c.l.b16 %v278
      %v387 = vunpack.c.l.b16 %v279
      %v388 = vunpack.c.l.b16 %v280
      %v389 = vunpack.c.l.b16 %v281
      %v390 = vunpack.c.l.b16 %v282
      %v391 = vunpack.c.l.b16 %v283
      %v392 = vunpack.c.l.b16 %v284
      %v393 = vunpack.c.l.b16 %v285
      %v394 = vunpack.c.l.b16 %v286
      %v395 = vunpack.c.l.b16 %v287
      %v396 = vunpack.c.l.b16 %v288
      %v397 = vunpack.c.l.b16 %v289
      %v398 = vunpack.c.l.b16 %v290
      %v399 = vunpack.c.l.b16 %v291
      %v400 = vunpack.c.l.b16 %v292
      %v401 = vunpack.c.l.b16 %v293
      %v402 = vpack.c.b16 %v366, %v365
      %v403 = vpack.c.b16 %v368, %v367
      %v404 = vpack.c.b16 %v370, %v369
      %v405 = vpack.c.b16 %v372, %v371
      %v406 = vpack.c.b16 %v374, %v373
      %v407 = vpack.c.b16 %v376, %v375
      %v408 = vpack.c.b16 %v378, %v377
      %v409 = vpack.c.b16 %v380, %v379
      %v410 = vpack.c.b16 %v382, %v381
      %v411 = vpack.c.b16 %v384, %v383
      %v412 = vpack.c.b16 %v386, %v385
      %v413 = vpack.c.b16 %v388, %v387
      %v414 = vpack.c.b16 %v390, %v389
      %v415 = vpack.c.b16 %v392, %v391
      %v416 = vpack.c.b16 %v394, %v393
      %v417 = vpack.c.b16 %v396, %v395
      %v418 = vpack.c.b16 %v398, %v397
      %v419 = vpack.c.b16 %v400, %v399
      %v420 = vpack.c.b16 %v401, %v401
      %vm421 = vcmask 1044480
      %v422 = vrot.slane %v402, 3
      %v423 = vrot.slane %v403, 3
      %v424 = vsel %vm421, %v422, %v423
      %v425 = vrot.slane %v404, 3
      %v426 = vsel %vm421, %v423, %v425
      %v427 = vrot.slane %v405, 3
      %v428 = vsel %vm421, %v425, %v427
      %v429 = vrot.slane %v406, 3
      %v430 = vsel %vm421, %v427, %v429
      %v431 = vrot.slane %v407, 3
      %v432 = vsel %vm421, %v429, %v431
      %v433 = vrot.slane %v408, 3
      %v434 = vsel %vm421, %v431, %v433
      %v435 = vrot.slane %v409, 3
      %v436 = vsel %vm421, %v433, %v435
      %v437 = vrot.slane %v410, 3
      %v438 = vsel %vm421, %v435, %v437
      %v439 = vrot.slane %v411, 3
      %v440 = vsel %vm421, %v437, %v439
      %v441 = vrot.slane %v412, 3
      %v442 = vsel %vm421, %v439, %v441
      %v443 = vrot.slane %v413, 3
      %v444 = vsel %vm421, %v441, %v443
      %v445 = vrot.slane %v414, 3
      %v446 = vsel %vm421, %v443, %v445
      %v447 = vrot.slane %v415, 3
      %v448 = vsel %vm421, %v445, %v447
      %v449 = vrot.slane %v416, 3
      %v450 = vsel %vm421, %v447, %v449
      %v451 = vrot.slane %v417, 3
      %v452 = vsel %vm421, %v449, %v451
      %v453 = vrot.slane %v418, 3
      %v454 = vsel %vm421, %v451, %v453
      %v455 = vrot.slane %v419, 3
      %v456 = vsel %vm421, %v453, %v455
      %v457 = vrot.slane %v420, 3
      %v458 = vsel %vm421, %v455, %v457
      %v493 = vunpack.c.l.b16 %v312
      %v494 = vunpack.c.l.b16 %v313
      %v495 = vunpack.c.l.b16 %v314
      %v496 = vunpack.c.l.b16 %v315
      %v497 = vunpack.c.l.b16 %v316
      %v498 = vunpack.c.l.b16 %v317
      %v499 = vunpack.c.l.b16 %v318
      %v500 = vunpack.c.l.b16 %v319
      %v501 = vunpack.c.l.b16 %v320
      %v502 = vunpack.c.l.b16 %v321
      %v503 = vunpack.c.l.b16 %v322
      %v504 = vunpack.c.l.b16 %v323
      %v505 = vunpack.c.l.b16 %v324
      %v506 = vunpack.c.l.b16 %v325
      %v507 = vunpack.c.l.b16 %v326
      %v508 = vunpack.c.l.b16 %v327
      %v509 = vpack.c.b16 %v494, %v493
      %v510 = vpack.c.b16 %v496, %v495
      %v511 = vpack.c.b16 %v498, %v497
      %v512 = vpack.c.b16 %v500, %v499
      %v513 = vpack.c.b16 %v502, %v501
      %v514 = vpack.c.b16 %v504, %v503
      %v515 = vpack.c.b16 %v506, %v505
      %v516 = vpack.c.b16 %v508, %v507
      %525 = vmatprep.subr.bf16.mxu0 0
      %526 = vmatpush1.bf16.msra.mxu0 %v509
      %527 = vmatprep.subr.bf16.mxu0 0
      %528 = vmatpush1.bf16.msra.mxu0 %v510
      %529 = vmatprep.subr.bf16.mxu0 0
      %530 = vmatpush1.bf16.msra.mxu0 %v511
      %531 = vmatprep.subr.bf16.mxu0 0
      %532 = vmatpush1.bf16.msra.mxu0 %v512
      %533 = vmatprep.subr.bf16.mxu0 0
      %534 = vmatpush1.bf16.msra.mxu0 %v513
      %535 = vmatprep.subr.bf16.mxu0 0
      %536 = vmatpush1.bf16.msra.mxu0 %v514
      %537 = vmatprep.subr.bf16.mxu0 0
      %538 = vmatpush1.bf16.msra.mxu0 %v515
      %539 = vmatprep.subr.bf16.mxu0 0
      %540 = vmatpush1.bf16.msra.mxu0 %v516
      %541 = vmatprep.subr.bf16.mxu0 0
      %542 = vmatpush1.bf16.msra.mxu0 0
      %543 = vmatprep.subr.bf16.mxu0 0
      %544 = vmatpush1.bf16.msra.mxu0 0
      %545 = vmatprep.subr.bf16.mxu0 0
      %546 = vmatpush1.bf16.msra.mxu0 0
      %547 = vmatprep.subr.bf16.mxu0 0
      %548 = vmatpush1.bf16.msra.mxu0 0
      %549 = vmatprep.subr.bf16.mxu0 0
      %550 = vmatpush1.bf16.msra.mxu0 0
      %551 = vmatprep.subr.bf16.mxu0 0
      %552 = vmatpush1.bf16.msra.mxu0 0
      %553 = vmatprep.subr.bf16.mxu0 0
      %554 = vmatpush1.bf16.msra.mxu0 0
      %555 = vmatprep.subr.bf16.mxu0 0
      %556 = vmatpush1.bf16.msra.mxu0 0
      %557 = vmatprep.mubr.bf16.mxu0 0
      %558 = vmatmul.mubr.bf16.gmra.mrb[0].mxu0 %v424
      %v559 = vpop.f32.mrb[0].mxu0
      %v560 = vadd.f32 0.0, %v559
      %v561 = vpop.f32.mrb[0].mxu0
      %v562 = vpop.f32.mrb[0].mxu0
      %v563 = vadd.f32 0.0, %v562
      %v564 = vpop.f32.mrb[0].mxu0
      %565 = vmatprep.mubr.bf16.mxu0 0
      %566 = vmatmul.mubr.bf16.gmra.mrb[0].mxu0 %v426
      %v567 = vpop.f32.mrb[0].mxu0
      %v568 = vadd.f32 0.0, %v567
      %v569 = vpop.f32.mrb[0].mxu0
      %v570 = vpop.f32.mrb[0].mxu0
      %v571 = vadd.f32 0.0, %v570
      %v572 = vpop.f32.mrb[0].mxu0
      %573 = vmatprep.mubr.bf16.mxu0 0
      %574 = vmatmul.mubr.bf16.gmra.mrb[0].mxu0 %v428
      %v575 = vpop.f32.mrb[0].mxu0
      %v576 = vadd.f32 0.0, %v575
      %v577 = vpop.f32.mrb[0].mxu0
      %v578 = vpop.f32.mrb[0].mxu0
      %v579 = vadd.f32 0.0, %v578
      %v580 = vpop.f32.mrb[0].mxu0
      %581 = vmatprep.mubr.bf16.mxu0 0
      %582 = vmatmul.mubr.bf16.gmra.mrb[0].mxu0 %v430
      %v583 = vpop.f32.mrb[0].mxu0
      %v584 = vadd.f32 0.0, %v583
      %v585 = vpop.f32.mrb[0].mxu0
      %v586 = vpop.f32.mrb[0].mxu0
      %v587 = vadd.f32 0.0, %v586
      %v588 = vpop.f32.mrb[0].mxu0
      %589 = vmatprep.mubr.bf16.mxu0 0
      %590 = vmatmul.mubr.bf16.gmra.mrb[0].mxu0 %v432
      %v591 = vpop.f32.mrb[0].mxu0
      %v592 = vadd.f32 0.0, %v591
      %v593 = vpop.f32.mrb[0].mxu0
      %v594 = vpop.f32.mrb[0].mxu0
      %v595 = vadd.f32 0.0, %v594
      %v596 = vpop.f32.mrb[0].mxu0
      %597 = vmatprep.mubr.bf16.mxu0 0
      %598 = vmatmul.mubr.bf16.gmra.mrb[0].mxu0 %v434
      %v599 = vpop.f32.mrb[0].mxu0
      %v600 = vadd.f32 0.0, %v599
      %v601 = vpop.f32.mrb[0].mxu0
      %v602 = vpop.f32.mrb[0].mxu0
      %v603 = vadd.f32 0.0, %v602
      %v604 = vpop.f32.mrb[0].mxu0
      %605 = vmatprep.mubr.bf16.mxu0 0
      %606 = vmatmul.mubr.bf16.gmra.mrb[0].mxu0 %v436
      %v607 = vpop.f32.mrb[0].mxu0
      %v608 = vadd.f32 0.0, %v607
      %v609 = vpop.f32.mrb[0].mxu0
      %v610 = vpop.f32.mrb[0].mxu0
      %v611 = vadd.f32 0.0, %v610
      %v612 = vpop.f32.mrb[0].mxu0
      %613 = vmatprep.mubr.bf16.mxu0 0
      %614 = vmatmul.mubr.bf16.gmra.mrb[0].mxu0 %v438
      %v615 = vpop.f32.mrb[0].mxu0
      %v616 = vadd.f32 0.0, %v615
      %v617 = vpop.f32.mrb[0].mxu0
      %v618 = vpop.f32.mrb[0].mxu0
      %v619 = vadd.f32 0.0, %v618
      %v620 = vpop.f32.mrb[0].mxu0
      %621 = vmatprep.mubr.bf16.mxu0 0
      %622 = vmatmul.mubr.bf16.gmra.mrb[0].mxu0 %v440
      %v623 = vpop.f32.mrb[0].mxu0
      %v624 = vadd.f32 0.0, %v623
      %v625 = vpop.f32.mrb[0].mxu0
      %v626 = vpop.f32.mrb[0].mxu0
      %v627 = vadd.f32 0.0, %v626
      %v628 = vpop.f32.mrb[0].mxu0
      %629 = vmatprep.mubr.bf16.mxu0 0
      %630 = vmatmul.mubr.bf16.gmra.mrb[0].mxu0 %v442
      %v631 = vpop.f32.mrb[0].mxu0
      %v632 = vadd.f32 0.0, %v631
      %v633 = vpop.f32.mrb[0].mxu0
      %v634 = vpop.f32.mrb[0].mxu0
      %v635 = vadd.f32 0.0, %v634
      %v636 = vpop.f32.mrb[0].mxu0
      %637 = vmatprep.mubr.bf16.mxu0 0
      %638 = vmatmul.mubr.bf16.gmra.mrb[0].mxu0 %v444
      %v639 = vpop.f32.mrb[0].mxu0
      %v640 = vadd.f32 0.0, %v639
      %v641 = vpop.f32.mrb[0].mxu0
      %v642 = vpop.f32.mrb[0].mxu0
      %v643 = vadd.f32 0.0, %v642
      %v644 = vpop.f32.mrb[0].mxu0
      %645 = vmatprep.mubr.bf16.mxu0 0
      %646 = vmatmul.mubr.bf16.gmra.mrb[0].mxu0 %v446
      %v647 = vpop.f32.mrb[0].mxu0
      %v648 = vadd.f32 0.0, %v647
      %v649 = vpop.f32.mrb[0].mxu0
      %v650 = vpop.f32.mrb[0].mxu0
      %v651 = vadd.f32 0.0, %v650
      %v652 = vpop.f32.mrb[0].mxu0
      %653 = vmatprep.mubr.bf16.mxu0 0
      %654 = vmatmul.mubr.bf16.gmra.mrb[0].mxu0 %v448
      %v655 = vpop.f32.mrb[0].mxu0
      %v656 = vadd.f32 0.0, %v655
      %v657 = vpop.f32.mrb[0].mxu0
      %v658 = vpop.f32.mrb[0].mxu0
      %v659 = vadd.f32 0.0, %v658
      %v660 = vpop.f32.mrb[0].mxu0
      %661 = vmatprep.mubr.bf16.mxu0 0
      %662 = vmatmul.mubr.bf16.gmra.mrb[0].mxu0 %v450
      %v663 = vpop.f32.mrb[0].mxu0
      %v664 = vadd.f32 0.0, %v663
      %v665 = vpop.f32.mrb[0].mxu0
      %v666 = vpop.f32.mrb[0].mxu0
      %v667 = vadd.f32 0.0, %v666
      %v668 = vpop.f32.mrb[0].mxu0
      %669 = vmatprep.mubr.bf16.mxu0 0
      %670 = vmatmul.mubr.bf16.gmra.mrb[0].mxu0 %v452
      %v671 = vpop.f32.mrb[0].mxu0
      %v672 = vadd.f32 0.0, %v671
      %v673 = vpop.f32.mrb[0].mxu0
      %v674 = vpop.f32.mrb[0].mxu0
      %v675 = vadd.f32 0.0, %v674
      %v676 = vpop.f32.mrb[0].mxu0
      %677 = vmatprep.mubr.bf16.mxu0 0
      %678 = vmatmul.mubr.bf16.gmra.mrb[0].mxu0 %v454
      %v679 = vpop.f32.mrb[0].mxu0
      %v680 = vadd.f32 0.0, %v679
      %v681 = vpop.f32.mrb[0].mxu0
      %v682 = vpop.f32.mrb[0].mxu0
      %v683 = vadd.f32 0.0, %v682
      %v684 = vpop.f32.mrb[0].mxu0
      %685 = vmatprep.mubr.bf16.mxu0 0
      %686 = vmatmul.mubr.bf16.gmra.mrb[0].mxu0 %v456
      %v687 = vpop.f32.mrb[0].mxu0
      %v688 = vadd.f32 0.0, %v687
      %v689 = vpop.f32.mrb[0].mxu0
      %v690 = vpop.f32.mrb[0].mxu0
      %v691 = vadd.f32 0.0, %v690
      %v692 = vpop.f32.mrb[0].mxu0
      %693 = vmatprep.mubr.bf16.mxu0 0
      %694 = vmatmul.mubr.bf16.gmra.mrb[0].mxu0 %v458
      %v695 = vpop.f32.mrb[0].mxu0
      %v696 = vadd.f32 0.0, %v695
      %v697 = vpop.f32.mrb[0].mxu0
      %v698 = vpop.f32.mrb[0].mxu0
      %v699 = vadd.f32 0.0, %v698
      %v700 = vpop.f32.mrb[0].mxu0
      %701 = vdwg.mxu0
      %v703 = vunpack.c.l.b16 %v257
      %v704 = vpack.c.b16 %v366, %v703
      %vm705 = vsmask.f32 5376
      %v707 = vshrl.u32 %v704, 16
      %v709 = vrot.slane %v707, 2
      %v710 = vshll.u32 %v704, 16
      %v712 = vrot.slane %v710, 3
      %v713 = vor.u32 %v709, %v712
      %v715 = vshrl.u32 %v403, 16
      %v717 = vrot.slane %v715, 2
      %v718 = vshll.u32 %v403, 16
      %v720 = vrot.slane %v718, 3
      %v721 = vor.u32 %v717, %v720
      %v722 = vsel %vm705, %v713, %v721
      %v724 = vshrl.u32 %v404, 16
      %v726 = vrot.slane %v724, 2
      %v727 = vshll.u32 %v404, 16
      %v729 = vrot.slane %v727, 3
      %v730 = vor.u32 %v726, %v729
      %v731 = vsel %vm705, %v721, %v730
      %v733 = vshrl.u32 %v405, 16
      %v735 = vrot.slane %v733, 2
      %v736 = vshll.u32 %v405, 16
      %v738 = vrot.slane %v736, 3
      %v739 = vor.u32 %v735, %v738
      %v740 = vsel %vm705, %v730, %v739
      %v742 = vshrl.u32 %v406, 16
      %v744 = vrot.slane %v742, 2
      %v745 = vshll.u32 %v406, 16
      %v747 = vrot.slane %v745, 3
      %v748 = vor.u32 %v744, %v747
      %v749 = vsel %vm705, %v739, %v748
      %v751 = vshrl.u32 %v407, 16
      %v753 = vrot.slane %v751, 2
      %v754 = vshll.u32 %v407, 16
      %v756 = vrot.slane %v754, 3
      %v757 = vor.u32 %v753, %v756
      %v758 = vsel %vm705, %v748, %v757
      %v760 = vshrl.u32 %v408, 16
      %v762 = vrot.slane %v760, 2
      %v763 = vshll.u32 %v408, 16
      %v765 = vrot.slane %v763, 3
      %v766 = vor.u32 %v762, %v765
      %v767 = vsel %vm705, %v757, %v766
      %v769 = vshrl.u32 %v409, 16
      %v771 = vrot.slane %v769, 2
      %v772 = vshll.u32 %v409, 16
      %v774 = vrot.slane %v772, 3
      %v775 = vor.u32 %v771, %v774
      %v776 = vsel %vm705, %v766, %v775
      %v778 = vshrl.u32 %v410, 16
      %v780 = vrot.slane %v778, 2
      %v781 = vshll.u32 %v410, 16
      %v783 = vrot.slane %v781, 3
      %v784 = vor.u32 %v780, %v783
      %v785 = vsel %vm705, %v775, %v784
      %v787 = vshrl.u32 %v411, 16
      %v789 = vrot.slane %v787, 2
      %v790 = vshll.u32 %v411, 16
      %v792 = vrot.slane %v790, 3
      %v793 = vor.u32 %v789, %v792
      %v794 = vsel %vm705, %v784, %v793
      %v796 = vshrl.u32 %v412, 16
      %v798 = vrot.slane %v796, 2
      %v799 = vshll.u32 %v412, 16
      %v801 = vrot.slane %v799, 3
      %v802 = vor.u32 %v798, %v801
      %v803 = vsel %vm705, %v793, %v802
      %v805 = vshrl.u32 %v413, 16
      %v807 = vrot.slane %v805, 2
      %v808 = vshll.u32 %v413, 16
      %v810 = vrot.slane %v808, 3
      %v811 = vor.u32 %v807, %v810
      %v812 = vsel %vm705, %v802, %v811
      %v814 = vshrl.u32 %v414, 16
      %v816 = vrot.slane %v814, 2
      %v817 = vshll.u32 %v414, 16
      %v819 = vrot.slane %v817, 3
      %v820 = vor.u32 %v816, %v819
      %v821 = vsel %vm705, %v811, %v820
      %v823 = vshrl.u32 %v415, 16
      %v825 = vrot.slane %v823, 2
      %v826 = vshll.u32 %v415, 16
      %v828 = vrot.slane %v826, 3
      %v829 = vor.u32 %v825, %v828
      %v830 = vsel %vm705, %v820, %v829
      %v832 = vshrl.u32 %v416, 16
      %v834 = vrot.slane %v832, 2
      %v835 = vshll.u32 %v416, 16
      %v837 = vrot.slane %v835, 3
      %v838 = vor.u32 %v834, %v837
      %v839 = vsel %vm705, %v829, %v838
      %v841 = vshrl.u32 %v417, 16
      %v843 = vrot.slane %v841, 2
      %v844 = vshll.u32 %v417, 16
      %v846 = vrot.slane %v844, 3
      %v847 = vor.u32 %v843, %v846
      %v848 = vsel %vm705, %v838, %v847
      %v850 = vshrl.u32 %v418, 16
      %v852 = vrot.slane %v850, 2
      %v853 = vshll.u32 %v418, 16
      %v855 = vrot.slane %v853, 3
      %v856 = vor.u32 %v852, %v855
      %v857 = vsel %vm705, %v847, %v856
      %v859 = vshrl.u32 %v419, 16
      %v861 = vrot.slane %v859, 2
      %v862 = vshll.u32 %v419, 16
      %v864 = vrot.slane %v862, 3
      %v865 = vor.u32 %v861, %v864
      %v866 = vsel %vm705, %v856, %v865
      %v868 = vshrl.u32 %v420, 16
      %v870 = vrot.slane %v868, 2
      %v871 = vshll.u32 %v420, 16
      %v873 = vrot.slane %v871, 3
      %v874 = vor.u32 %v870, %v873
      %v875 = vsel %vm705, %v865, %v874
      %v910 = vunpack.c.l.b16 %v294
      %v911 = vunpack.c.l.b16 %v295
      %v912 = vunpack.c.l.b16 %v296
      %v913 = vunpack.c.l.b16 %v297
      %v914 = vunpack.c.l.b16 %v298
      %v915 = vunpack.c.l.b16 %v299
      %v916 = vunpack.c.l.b16 %v300
      %v917 = vunpack.c.l.b16 %v301
      %v918 = vunpack.c.l.b16 %v302
      %v919 = vunpack.c.l.b16 %v303
      %v920 = vunpack.c.l.b16 %v304
      %v921 = vunpack.c.l.b16 %v305
      %v922 = vunpack.c.l.b16 %v306
      %v923 = vunpack.c.l.b16 %v307
      %v924 = vunpack.c.l.b16 %v308
      %v925 = vunpack.c.l.b16 %v309
      %v926 = vpack.c.b16 %v911, %v910
      %v927 = vpack.c.b16 %v913, %v912
      %v928 = vpack.c.b16 %v915, %v914
      %v929 = vpack.c.b16 %v917, %v916
      %v930 = vpack.c.b16 %v919, %v918
      %v931 = vpack.c.b16 %v921, %v920
      %v932 = vpack.c.b16 %v923, %v922
      %v933 = vpack.c.b16 %v925, %v924
      %942 = vmatprep.subr.bf16.mxu0 0
      %943 = vmatpush1.bf16.msra.mxu0 %v926
      %944 = vmatprep.subr.bf16.mxu0 0
      %945 = vmatpush1.bf16.msra.mxu0 %v927
      %946 = vmatprep.subr.bf16.mxu0 0
      %947 = vmatpush1.bf16.msra.mxu0 %v928
      %948 = vmatprep.subr.bf16.mxu0 0
      %949 = vmatpush1.bf16.msra.mxu0 %v929
      %950 = vmatprep.subr.bf16.mxu0 0
      %951 = vmatpush1.bf16.msra.mxu0 %v930
      %952 = vmatprep.subr.bf16.mxu0 0
      %953 = vmatpush1.bf16.msra.mxu0 %v931
      %954 = vmatprep.subr.bf16.mxu0 0
      %955 = vmatpush1.bf16.msra.mxu0 %v932
      %956 = vmatprep.subr.bf16.mxu0 0
      %957 = vmatpush1.bf16.msra.mxu0 %v933
      %958 = vmatprep.subr.bf16.mxu0 0
      %959 = vmatpush1.bf16.msra.mxu0 0
      %960 = vmatprep.subr.bf16.mxu0 0
      %961 = vmatpush1.bf16.msra.mxu0 0
      %962 = vmatprep.subr.bf16.mxu0 0
      %963 = vmatpush1.bf16.msra.mxu0 0
      %964 = vmatprep.subr.bf16.mxu0 0
      %965 = vmatpush1.bf16.msra.mxu0 0
      %966 = vmatprep.subr.bf16.mxu0 0
      %967 = vmatpush1.bf16.msra.mxu0 0
      %968 = vmatprep.subr.bf16.mxu0 0
      %969 = vmatpush1.bf16.msra.mxu0 0
      %970 = vmatprep.subr.bf16.mxu0 0
      %971 = vmatpush1.bf16.msra.mxu0 0
      %972 = vmatprep.subr.bf16.mxu0 0
      %973 = vmatpush1.bf16.msra.mxu0 0
      %974 = vmatprep.mubr.bf16.mxu0 0
      %975 = vmatmul.mubr.bf16.gmra.mrb[0].mxu0 %v722
      %v976 = vpop.f32.mrb[0].mxu0
      %v977 = vadd.f32 %v560, %v976
      %v978 = vpop.f32.mrb[0].mxu0
      %v979 = vpop.f32.mrb[0].mxu0
      %v980 = vadd.f32 %v563, %v979
      %v981 = vpop.f32.mrb[0].mxu0
      %982 = vmatprep.mubr.bf16.mxu0 0
      %983 = vmatmul.mubr.bf16.gmra.mrb[0].mxu0 %v731
      %v984 = vpop.f32.mrb[0].mxu0
      %v985 = vadd.f32 %v568, %v984
      %v986 = vpop.f32.mrb[0].mxu0
      %v987 = vpop.f32.mrb[0].mxu0
      %v988 = vadd.f32 %v571, %v987
      %v989 = vpop.f32.mrb[0].mxu0
      %990 = vmatprep.mubr.bf16.mxu0 0
      %991 = vmatmul.mubr.bf16.gmra.mrb[0].mxu0 %v740
      %v992 = vpop.f32.mrb[0].mxu0
      %v993 = vadd.f32 %v576, %v992
      %v994 = vpop.f32.mrb[0].mxu0
      %v995 = vpop.f32.mrb[0].mxu0
      %v996 = vadd.f32 %v579, %v995
      %v997 = vpop.f32.mrb[0].mxu0
      %998 = vmatprep.mubr.bf16.mxu0 0
      %999 = vmatmul.mubr.bf16.gmra.mrb[0].mxu0 %v749
      %v1000 = vpop.f32.mrb[0].mxu0
      %v1001 = vadd.f32 %v584, %v1000
      %v1002 = vpop.f32.mrb[0].mxu0
      %v1003 = vpop.f32.mrb[0].mxu0
      %v1004 = vadd.f32 %v587, %v1003
      %v1005 = vpop.f32.mrb[0].mxu0
      %1006 = vmatprep.mubr.bf16.mxu0 0
      %1007 = vmatmul.mubr.bf16.gmra.mrb[0].mxu0 %v758
      %v1008 = vpop.f32.mrb[0].mxu0
      %v1009 = vadd.f32 %v592, %v1008
      %v1010 = vpop.f32.mrb[0].mxu0
      %v1011 = vpop.f32.mrb[0].mxu0
      %v1012 = vadd.f32 %v595, %v1011
      %v1013 = vpop.f32.mrb[0].mxu0
      %1014 = vmatprep.mubr.bf16.mxu0 0
      %1015 = vmatmul.mubr.bf16.gmra.mrb[0].mxu0 %v767
      %v1016 = vpop.f32.mrb[0].mxu0
      %v1017 = vadd.f32 %v600, %v1016
      %v1018 = vpop.f32.mrb[0].mxu0
      %v1019 = vpop.f32.mrb[0].mxu0
      %v1020 = vadd.f32 %v603, %v1019
      %v1021 = vpop.f32.mrb[0].mxu0
      %1022 = vmatprep.mubr.bf16.mxu0 0
      %1023 = vmatmul.mubr.bf16.gmra.mrb[0].mxu0 %v776
      %v1024 = vpop.f32.mrb[0].mxu0
      %v1025 = vadd.f32 %v608, %v1024
      %v1026 = vpop.f32.mrb[0].mxu0
      %v1027 = vpop.f32.mrb[0].mxu0
      %v1028 = vadd.f32 %v611, %v1027
      %v1029 = vpop.f32.mrb[0].mxu0
      %1030 = vmatprep.mubr.bf16.mxu0 0
      %1031 = vmatmul.mubr.bf16.gmra.mrb[0].mxu0 %v785
      %v1032 = vpop.f32.mrb[0].mxu0
      %v1033 = vadd.f32 %v616, %v1032
      %v1034 = vpop.f32.mrb[0].mxu0
      %v1035 = vpop.f32.mrb[0].mxu0
      %v1036 = vadd.f32 %v619, %v1035
      %v1037 = vpop.f32.mrb[0].mxu0
      %1038 = vmatprep.mubr.bf16.mxu0 0
      %1039 = vmatmul.mubr.bf16.gmra.mrb[0].mxu0 %v794
      %v1040 = vpop.f32.mrb[0].mxu0
      %v1041 = vadd.f32 %v624, %v1040
      %v1042 = vpop.f32.mrb[0].mxu0
      %v1043 = vpop.f32.mrb[0].mxu0
      %v1044 = vadd.f32 %v627, %v1043
      %v1045 = vpop.f32.mrb[0].mxu0
      %1046 = vmatprep.mubr.bf16.mxu0 0
      %1047 = vmatmul.mubr.bf16.gmra.mrb[0].mxu0 %v803
      %v1048 = vpop.f32.mrb[0].mxu0
      %v1049 = vadd.f32 %v632, %v1048
      %v1050 = vpop.f32.mrb[0].mxu0
      %v1051 = vpop.f32.mrb[0].mxu0
      %v1052 = vadd.f32 %v635, %v1051
      %v1053 = vpop.f32.mrb[0].mxu0
      %1054 = vmatprep.mubr.bf16.mxu0 0
      %1055 = vmatmul.mubr.bf16.gmra.mrb[0].mxu0 %v812
      %v1056 = vpop.f32.mrb[0].mxu0
      %v1057 = vadd.f32 %v640, %v1056
      %v1058 = vpop.f32.mrb[0].mxu0
      %v1059 = vpop.f32.mrb[0].mxu0
      %v1060 = vadd.f32 %v643, %v1059
      %v1061 = vpop.f32.mrb[0].mxu0
      %1062 = vmatprep.mubr.bf16.mxu0 0
      %1063 = vmatmul.mubr.bf16.gmra.mrb[0].mxu0 %v821
      %v1064 = vpop.f32.mrb[0].mxu0
      %v1065 = vadd.f32 %v648, %v1064
      %v1066 = vpop.f32.mrb[0].mxu0
      %v1067 = vpop.f32.mrb[0].mxu0
      %v1068 = vadd.f32 %v651, %v1067
      %v1069 = vpop.f32.mrb[0].mxu0
      %1070 = vmatprep.mubr.bf16.mxu0 0
      %1071 = vmatmul.mubr.bf16.gmra.mrb[0].mxu0 %v830
      %v1072 = vpop.f32.mrb[0].mxu0
      %v1073 = vadd.f32 %v656, %v1072
      %v1074 = vpop.f32.mrb[0].mxu0
      %v1075 = vpop.f32.mrb[0].mxu0
      %v1076 = vadd.f32 %v659, %v1075
      %v1077 = vpop.f32.mrb[0].mxu0
      %1078 = vmatprep.mubr.bf16.mxu0 0
      %1079 = vmatmul.mubr.bf16.gmra.mrb[0].mxu0 %v839
      %v1080 = vpop.f32.mrb[0].mxu0
      %v1081 = vadd.f32 %v664, %v1080
      %v1082 = vpop.f32.mrb[0].mxu0
      %v1083 = vpop.f32.mrb[0].mxu0
      %v1084 = vadd.f32 %v667, %v1083
      %v1085 = vpop.f32.mrb[0].mxu0
      %1086 = vmatprep.mubr.bf16.mxu0 0
      %1087 = vmatmul.mubr.bf16.gmra.mrb[0].mxu0 %v848
      %v1088 = vpop.f32.mrb[0].mxu0
      %v1089 = vadd.f32 %v672, %v1088
      %v1090 = vpop.f32.mrb[0].mxu0
      %v1091 = vpop.f32.mrb[0].mxu0
      %v1092 = vadd.f32 %v675, %v1091
      %v1093 = vpop.f32.mrb[0].mxu0
      %1094 = vmatprep.mubr.bf16.mxu0 0
      %1095 = vmatmul.mubr.bf16.gmra.mrb[0].mxu0 %v857
      %v1096 = vpop.f32.mrb[0].mxu0
      %v1097 = vadd.f32 %v680, %v1096
      %v1098 = vpop.f32.mrb[0].mxu0
      %v1099 = vpop.f32.mrb[0].mxu0
      %v1100 = vadd.f32 %v683, %v1099
      %v1101 = vpop.f32.mrb[0].mxu0
      %1102 = vmatprep.mubr.bf16.mxu0 0
      %1103 = vmatmul.mubr.bf16.gmra.mrb[0].mxu0 %v866
      %v1104 = vpop.f32.mrb[0].mxu0
      %v1105 = vadd.f32 %v688, %v1104
      %v1106 = vpop.f32.mrb[0].mxu0
      %v1107 = vpop.f32.mrb[0].mxu0
      %v1108 = vadd.f32 %v691, %v1107
      %v1109 = vpop.f32.mrb[0].mxu0
      %1110 = vmatprep.mubr.bf16.mxu0 0
      %1111 = vmatmul.mubr.bf16.gmra.mrb[0].mxu0 %v875
      %v1112 = vpop.f32.mrb[0].mxu0
      %v1113 = vadd.f32 %v696, %v1112
      %v1114 = vpop.f32.mrb[0].mxu0
      %v1115 = vpop.f32.mrb[0].mxu0
      %v1116 = vadd.f32 %v699, %v1115
      %v1117 = vpop.f32.mrb[0].mxu0
      %1118 = vdwg.mxu0
      %v1119 = vld [vmem:[%s246 + $0x90] sm:$0xf]
      %s1120 = scalar_lea.vmem %s1, 128
      %v1121 = vld [vmem:[%s1120] sm:$0xf]
      %v1122 = vld [vmem:[%s1120 + $0x4] sm:$0xf]
      %v1123 = vld [vmem:[%s1120 + $0x8] sm:$0xf]
      %v1124 = vld [vmem:[%s1120 + $0xc] sm:$0xf]
      %v1125 = vld [vmem:[%s1120 + $0x10] sm:$0xf]
      %v1126 = vld [vmem:[%s1120 + $0x14] sm:$0xf]
      %v1127 = vld [vmem:[%s1120 + $0x18] sm:$0xf]
      %v1128 = vld [vmem:[%s1120 + $0x1c] sm:$0xf]
      %v1129 = vld [vmem:[%s1120 + $0x20] sm:$0xf]
      %v1130 = vld [vmem:[%s1120 + $0x24] sm:$0xf]
      %v1131 = vld [vmem:[%s1120 + $0x28] sm:$0xf]
      %v1132 = vld [vmem:[%s1120 + $0x2c] sm:$0xf]
      %v1133 = vld [vmem:[%s1120 + $0x30] sm:$0xf]
      %v1134 = vld [vmem:[%s1120 + $0x34] sm:$0xf]
      %v1135 = vld [vmem:[%s1120 + $0x38] sm:$0xf]
      %v1136 = vld [vmem:[%s1120 + $0x3c] sm:$0xf]
      %v1138 = vunpack.c.l.b16 %v1119
      %v1139 = vpack.c.b16 %v1138, %v1138
      %vm1140 = vsmask.f32 4352
      %v1142 = vshrl.u32 %v402, 16
      %v1144 = vrot.slane %v1142, 3
      %v1145 = vshll.u32 %v402, 16
      %v1147 = vrot.slane %v1145, 4
      %v1148 = vor.u32 %v1144, %v1147
      %v1149 = vrot.slane %v715, 3
      %v1150 = vrot.slane %v718, 4
      %v1151 = vor.u32 %v1149, %v1150
      %v1152 = vsel %vm1140, %v1148, %v1151
      %v1153 = vrot.slane %v724, 3
      %v1154 = vrot.slane %v727, 4
      %v1155 = vor.u32 %v1153, %v1154
      %v1156 = vsel %vm1140, %v1151, %v1155
      %v1157 = vrot.slane %v733, 3
      %v1158 = vrot.slane %v736, 4
      %v1159 = vor.u32 %v1157, %v1158
      %v1160 = vsel %vm1140, %v1155, %v1159
      %v1161 = vrot.slane %v742, 3
      %v1162 = vrot.slane %v745, 4
      %v1163 = vor.u32 %v1161, %v1162
      %v1164 = vsel %vm1140, %v1159, %v1163
      %v1165 = vrot.slane %v751, 3
      %v1166 = vrot.slane %v754, 4
      %v1167 = vor.u32 %v1165, %v1166
      %v1168 = vsel %vm1140, %v1163, %v1167
      %v1169 = vrot.slane %v760, 3
      %v1170 = vrot.slane %v763, 4
      %v1171 = vor.u32 %v1169, %v1170
      %v1172 = vsel %vm1140, %v1167, %v1171
      %v1173 = vrot.slane %v769, 3
      %v1174 = vrot.slane %v772, 4
      %v1175 = vor.u32 %v1173, %v1174
      %v1176 = vsel %vm1140, %v1171, %v1175
      %v1177 = vrot.slane %v778, 3
      %v1178 = vrot.slane %v781, 4
      %v1179 = vor.u32 %v1177, %v1178
      %v1180 = vsel %vm1140, %v1175, %v1179
      %v1181 = vrot.slane %v787, 3
      %v1182 = vrot.slane %v790, 4
      %v1183 = vor.u32 %v1181, %v1182
      %v1184 = vsel %vm1140, %v1179, %v1183
      %v1185 = vrot.slane %v796, 3
      %v1186 = vrot.slane %v799, 4
      %v1187 = vor.u32 %v1185, %v1186
      %v1188 = vsel %vm1140, %v1183, %v1187
      %v1189 = vrot.slane %v805, 3
      %v1190 = vrot.slane %v808, 4
      %v1191 = vor.u32 %v1189, %v1190
      %v1192 = vsel %vm1140, %v1187, %v1191
      %v1193 = vrot.slane %v814, 3
      %v1194 = vrot.slane %v817, 4
      %v1195 = vor.u32 %v1193, %v1194
      %v1196 = vsel %vm1140, %v1191, %v1195
      %v1197 = vrot.slane %v823, 3
      %v1198 = vrot.slane %v826, 4
      %v1199 = vor.u32 %v1197, %v1198
      %v1200 = vsel %vm1140, %v1195, %v1199
      %v1201 = vrot.slane %v832, 3
      %v1202 = vrot.slane %v835, 4
      %v1203 = vor.u32 %v1201, %v1202
      %v1204 = vsel %vm1140, %v1199, %v1203
      %v1205 = vrot.slane %v841, 3
      %v1206 = vrot.slane %v844, 4
      %v1207 = vor.u32 %v1205, %v1206
      %v1208 = vsel %vm1140, %v1203, %v1207
      %v1209 = vrot.slane %v850, 3
      %v1210 = vrot.slane %v853, 4
      %v1211 = vor.u32 %v1209, %v1210
      %v1212 = vsel %vm1140, %v1207, %v1211
      %v1213 = vrot.slane %v859, 3
      %v1214 = vrot.slane %v862, 4
      %v1215 = vor.u32 %v1213, %v1214
      %v1216 = vsel %vm1140, %v1211, %v1215
      %v1218 = vshrl.u32 %v1139, 16
      %v1220 = vrot.slane %v1218, 3
      %v1221 = vshll.u32 %v1139, 16
      %v1223 = vrot.slane %v1221, 4
      %v1224 = vor.u32 %v1220, %v1223
      %v1225 = vsel %vm1140, %v1215, %v1224
      %v1260 = vunpack.c.l.b16 %v1121
      %v1261 = vunpack.c.l.b16 %v1122
      %v1262 = vunpack.c.l.b16 %v1123
      %v1263 = vunpack.c.l.b16 %v1124
      %v1264 = vunpack.c.l.b16 %v1125
      %v1265 = vunpack.c.l.b16 %v1126
      %v1266 = vunpack.c.l.b16 %v1127
      %v1267 = vunpack.c.l.b16 %v1128
      %v1268 = vunpack.c.l.b16 %v1129
      %v1269 = vunpack.c.l.b16 %v1130
      %v1270 = vunpack.c.l.b16 %v1131
      %v1271 = vunpack.c.l.b16 %v1132
      %v1272 = vunpack.c.l.b16 %v1133
      %v1273 = vunpack.c.l.b16 %v1134
      %v1274 = vunpack.c.l.b16 %v1135
      %v1275 = vunpack.c.l.b16 %v1136
      %v1276 = vpack.c.b16 %v1261, %v1260
      %v1277 = vpack.c.b16 %v1263, %v1262
      %v1278 = vpack.c.b16 %v1265, %v1264
      %v1279 = vpack.c.b16 %v1267, %v1266
      %v1280 = vpack.c.b16 %v1269, %v1268
      %v1281 = vpack.c.b16 %v1271, %v1270
      %v1282 = vpack.c.b16 %v1273, %v1272
      %v1283 = vpack.c.b16 %v1275, %v1274
      %1292 = vmatprep.subr.bf16.mxu0 0
      %1293 = vmatpush1.bf16.msra.mxu0 %v1276
      %1294 = vmatprep.subr.bf16.mxu0 0
      %1295 = vmatpush1.bf16.msra.mxu0 %v1277
      %1296 = vmatprep.subr.bf16.mxu0 0
      %1297 = vmatpush1.bf16.msra.mxu0 %v1278
      %1298 = vmatprep.subr.bf16.mxu0 0
      %1299 = vmatpush1.bf16.msra.mxu0 %v1279
      %1300 = vmatprep.subr.bf16.mxu0 0
      %1301 = vmatpush1.bf16.msra.mxu0 %v1280
      %1302 = vmatprep.subr.bf16.mxu0 0
      %1303 = vmatpush1.bf16.msra.mxu0 %v1281
      %1304 = vmatprep.subr.bf16.mxu0 0
      %1305 = vmatpush1.bf16.msra.mxu0 %v1282
      %1306 = vmatprep.subr.bf16.mxu0 0
      %1307 = vmatpush1.bf16.msra.mxu0 %v1283
      %1308 = vmatprep.subr.bf16.mxu0 0
      %1309 = vmatpush1.bf16.msra.mxu0 0
      %1310 = vmatprep.subr.bf16.mxu0 0
      %1311 = vmatpush1.bf16.msra.mxu0 0
      %1312 = vmatprep.subr.bf16.mxu0 0
      %1313 = vmatpush1.bf16.msra.mxu0 0
      %1314 = vmatprep.subr.bf16.mxu0 0
      %1315 = vmatpush1.bf16.msra.mxu0 0
      %1316 = vmatprep.subr.bf16.mxu0 0
      %1317 = vmatpush1.bf16.msra.mxu0 0
      %1318 = vmatprep.subr.bf16.mxu0 0
      %1319 = vmatpush1.bf16.msra.mxu0 0
      %1320 = vmatprep.subr.bf16.mxu0 0
      %1321 = vmatpush1.bf16.msra.mxu0 0
      %1322 = vmatprep.subr.bf16.mxu0 0
      %1323 = vmatpush1.bf16.msra.mxu0 0
      %1324 = vmatprep.mubr.bf16.mxu0 0
      %1325 = vmatmul.mubr.bf16.gmra.mrb[0].mxu0 %v1152
      %v1326 = vpop.f32.mrb[0].mxu0
      %v1327 = vadd.f32 0.0, %v1326
      %v1328 = vpop.f32.mrb[0].mxu0
      %v1329 = vpop.f32.mrb[0].mxu0
      %v1330 = vadd.f32 0.0, %v1329
      %v1331 = vpop.f32.mrb[0].mxu0
      %1332 = vmatprep.mubr.bf16.mxu0 0
      %1333 = vmatmul.mubr.bf16.gmra.mrb[0].mxu0 %v1156
      %v1334 = vpop.f32.mrb[0].mxu0
      %v1335 = vadd.f32 0.0, %v1334
      %v1336 = vpop.f32.mrb[0].mxu0
      %v1337 = vpop.f32.mrb[0].mxu0
      %v1338 = vadd.f32 0.0, %v1337
      %v1339 = vpop.f32.mrb[0].mxu0
      %1340 = vmatprep.mubr.bf16.mxu0 0
      %1341 = vmatmul.mubr.bf16.gmra.mrb[0].mxu0 %v1160
      %v1342 = vpop.f32.mrb[0].mxu0
      %v1343 = vadd.f32 0.0, %v1342
      %v1344 = vpop.f32.mrb[0].mxu0
      %v1345 = vpop.f32.mrb[0].mxu0
      %v1346 = vadd.f32 0.0, %v1345
      %v1347 = vpop.f32.mrb[0].mxu0
      %1348 = vmatprep.mubr.bf16.mxu0 0
      %1349 = vmatmul.mubr.bf16.gmra.mrb[0].mxu0 %v1164
      %v1350 = vpop.f32.mrb[0].mxu0
      %v1351 = vadd.f32 0.0, %v1350
      %v1352 = vpop.f32.mrb[0].mxu0
      %v1353 = vpop.f32.mrb[0].mxu0
      %v1354 = vadd.f32 0.0, %v1353
      %v1355 = vpop.f32.mrb[0].mxu0
      %1356 = vmatprep.mubr.bf16.mxu0 0
      %1357 = vmatmul.mubr.bf16.gmra.mrb[0].mxu0 %v1168
      %v1358 = vpop.f32.mrb[0].mxu0
      %v1359 = vadd.f32 0.0, %v1358
      %v1360 = vpop.f32.mrb[0].mxu0
      %v1361 = vpop.f32.mrb[0].mxu0
      %v1362 = vadd.f32 0.0, %v1361
      %v1363 = vpop.f32.mrb[0].mxu0
      %1364 = vmatprep.mubr.bf16.mxu0 0
      %1365 = vmatmul.mubr.bf16.gmra.mrb[0].mxu0 %v1172
      %v1366 = vpop.f32.mrb[0].mxu0
      %v1367 = vadd.f32 0.0, %v1366
      %v1368 = vpop.f32.mrb[0].mxu0
      %v1369 = vpop.f32.mrb[0].mxu0
      %v1370 = vadd.f32 0.0, %v1369
      %v1371 = vpop.f32.mrb[0].mxu0
      %1372 = vmatprep.mubr.bf16.mxu0 0
      %1373 = vmatmul.mubr.bf16.gmra.mrb[0].mxu0 %v1176
      %v1374 = vpop.f32.mrb[0].mxu0
      %v1375 = vadd.f32 0.0, %v1374
      %v1376 = vpop.f32.mrb[0].mxu0
      %v1377 = vpop.f32.mrb[0].mxu0
      %v1378 = vadd.f32 0.0, %v1377
      %v1379 = vpop.f32.mrb[0].mxu0
      %1380 = vmatprep.mubr.bf16.mxu0 0
      %1381 = vmatmul.mubr.bf16.gmra.mrb[0].mxu0 %v1180
      %v1382 = vpop.f32.mrb[0].mxu0
      %v1383 = vadd.f32 0.0, %v1382
      %v1384 = vpop.f32.mrb[0].mxu0
      %v1385 = vpop.f32.mrb[0].mxu0
      %v1386 = vadd.f32 0.0, %v1385
      %v1387 = vpop.f32.mrb[0].mxu0
      %1388 = vmatprep.mubr.bf16.mxu0 0
      %1389 = vmatmul.mubr.bf16.gmra.mrb[0].mxu0 %v1184
      %v1390 = vpop.f32.mrb[0].mxu0
      %v1391 = vadd.f32 0.0, %v1390
      %v1392 = vpop.f32.mrb[0].mxu0
      %v1393 = vpop.f32.mrb[0].mxu0
      %v1394 = vadd.f32 0.0, %v1393
      %v1395 = vpop.f32.mrb[0].mxu0
      %1396 = vmatprep.mubr.bf16.mxu0 0
      %1397 = vmatmul.mubr.bf16.gmra.mrb[0].mxu0 %v1188
      %v1398 = vpop.f32.mrb[0].mxu0
      %v1399 = vadd.f32 0.0, %v1398
      %v1400 = vpop.f32.mrb[0].mxu0
      %v1401 = vpop.f32.mrb[0].mxu0
      %v1402 = vadd.f32 0.0, %v1401
      %v1403 = vpop.f32.mrb[0].mxu0
      %1404 = vmatprep.mubr.bf16.mxu0 0
      %1405 = vmatmul.mubr.bf16.gmra.mrb[0].mxu0 %v1192
      %v1406 = vpop.f32.mrb[0].mxu0
      %v1407 = vadd.f32 0.0, %v1406
      %v1408 = vpop.f32.mrb[0].mxu0
      %v1409 = vpop.f32.mrb[0].mxu0
      %v1410 = vadd.f32 0.0, %v1409
      %v1411 = vpop.f32.mrb[0].mxu0
      %1412 = vmatprep.mubr.bf16.mxu0 0
      %1413 = vmatmul.mubr.bf16.gmra.mrb[0].mxu0 %v1196
      %v1414 = vpop.f32.mrb[0].mxu0
      %v1415 = vadd.f32 0.0, %v1414
      %v1416 = vpop.f32.mrb[0].mxu0
      %v1417 = vpop.f32.mrb[0].mxu0
      %v1418 = vadd.f32 0.0, %v1417
      %v1419 = vpop.f32.mrb[0].mxu0
      %1420 = vmatprep.mubr.bf16.mxu0 0
      %1421 = vmatmul.mubr.bf16.gmra.mrb[0].mxu0 %v1200
      %v1422 = vpop.f32.mrb[0].mxu0
      %v1423 = vadd.f32 0.0, %v1422
      %v1424 = vpop.f32.mrb[0].mxu0
      %v1425 = vpop.f32.mrb[0].mxu0
      %v1426 = vadd.f32 0.0, %v1425
      %v1427 = vpop.f32.mrb[0].mxu0
      %1428 = vmatprep.mubr.bf16.mxu0 0
      %1429 = vmatmul.mubr.bf16.gmra.mrb[0].mxu0 %v1204
      %v1430 = vpop.f32.mrb[0].mxu0
      %v1431 = vadd.f32 0.0, %v1430
      %v1432 = vpop.f32.mrb[0].mxu0
      %v1433 = vpop.f32.mrb[0].mxu0
      %v1434 = vadd.f32 0.0, %v1433
      %v1435 = vpop.f32.mrb[0].mxu0
      %1436 = vmatprep.mubr.bf16.mxu0 0
      %1437 = vmatmul.mubr.bf16.gmra.mrb[0].mxu0 %v1208
      %v1438 = vpop.f32.mrb[0].mxu0
      %v1439 = vadd.f32 0.0, %v1438
      %v1440 = vpop.f32.mrb[0].mxu0
      %v1441 = vpop.f32.mrb[0].mxu0
      %v1442 = vadd.f32 0.0, %v1441
      %v1443 = vpop.f32.mrb[0].mxu0
      %1444 = vmatprep.mubr.bf16.mxu0 0
      %1445 = vmatmul.mubr.bf16.gmra.mrb[0].mxu0 %v1212
      %v1446 = vpop.f32.mrb[0].mxu0
      %v1447 = vadd.f32 0.0, %v1446
      %v1448 = vpop.f32.mrb[0].mxu0
      %v1449 = vpop.f32.mrb[0].mxu0
      %v1450 = vadd.f32 0.0, %v1449
      %v1451 = vpop.f32.mrb[0].mxu0
      %1452 = vmatprep.mubr.bf16.mxu0 0
      %1453 = vmatmul.mubr.bf16.gmra.mrb[0].mxu0 %v1216
      %v1454 = vpop.f32.mrb[0].mxu0
      %v1455 = vadd.f32 0.0, %v1454
      %v1456 = vpop.f32.mrb[0].mxu0
      %v1457 = vpop.f32.mrb[0].mxu0
      %v1458 = vadd.f32 0.0, %v1457
      %v1459 = vpop.f32.mrb[0].mxu0
      %1460 = vmatprep.mubr.bf16.mxu0 0
      %1461 = vmatmul.mubr.bf16.gmra.mrb[0].mxu0 %v1225
      %v1462 = vpop.f32.mrb[0].mxu0
      %v1463 = vadd.f32 0.0, %v1462
      %v1464 = vpop.f32.mrb[0].mxu0
      %v1465 = vpop.f32.mrb[0].mxu0
      %v1466 = vadd.f32 0.0, %v1465
      %v1467 = vpop.f32.mrb[0].mxu0
      %1468 = vdwg.mxu0
      %v1469 = vadd.f32 %v977, %v1327
      %v1470 = vadd.f32 %v980, %v1330
      %v1471 = vadd.f32 %v985, %v1335
      %v1472 = vadd.f32 %v988, %v1338
      %v1473 = vadd.f32 %v993, %v1343
      %v1474 = vadd.f32 %v996, %v1346
      %v1475 = vadd.f32 %v1001, %v1351
      %v1476 = vadd.f32 %v1004, %v1354
      %v1477 = vadd.f32 %v1009, %v1359
      %v1478 = vadd.f32 %v1012, %v1362
      %v1479 = vadd.f32 %v1017, %v1367
      %v1480 = vadd.f32 %v1020, %v1370
      %v1481 = vadd.f32 %v1025, %v1375
      %v1482 = vadd.f32 %v1028, %v1378
      %v1483 = vadd.f32 %v1033, %v1383
      %v1484 = vadd.f32 %v1036, %v1386
      %v1485 = vadd.f32 %v1041, %v1391
      %v1486 = vadd.f32 %v1044, %v1394
      %v1487 = vadd.f32 %v1049, %v1399
      %v1488 = vadd.f32 %v1052, %v1402
      %v1489 = vadd.f32 %v1057, %v1407
      %v1490 = vadd.f32 %v1060, %v1410
      %v1491 = vadd.f32 %v1065, %v1415
      %v1492 = vadd.f32 %v1068, %v1418
      %v1493 = vadd.f32 %v1073, %v1423
      %v1494 = vadd.f32 %v1076, %v1426
      %v1495 = vadd.f32 %v1081, %v1431
      %v1496 = vadd.f32 %v1084, %v1434
      %v1497 = vadd.f32 %v1089, %v1439
      %v1498 = vadd.f32 %v1092, %v1442
      %v1499 = vadd.f32 %v1097, %v1447
      %v1500 = vadd.f32 %v1100, %v1450
      %v1501 = vadd.f32 %v1105, %v1455
      %v1502 = vadd.f32 %v1108, %v1458
      %v1503 = vadd.f32 %v1113, %v1463
      %v1504 = vadd.f32 %v1116, %v1466
      %v1505 = vld [vmem:[%s246 + $0x8] sm:$0x8]
      %v1506 = vld [vmem:[%s246 + $0xc] sm:$0xf]
      %v1507 = vld [vmem:[%s246 + $0x10] sm:$0xf]
      %v1508 = vld [vmem:[%s246 + $0x14] sm:$0xf]
      %v1509 = vld [vmem:[%s246 + $0x18] sm:$0xf]
      %v1510 = vld [vmem:[%s246 + $0x1c] sm:$0xf]
      %v1511 = vld [vmem:[%s246 + $0x20] sm:$0xf]
      %v1512 = vld [vmem:[%s246 + $0x24] sm:$0xf]
      %v1513 = vld [vmem:[%s246 + $0x28] sm:$0xf]
      %v1514 = vld [vmem:[%s246 + $0x2c] sm:$0xf]
      %v1515 = vld [vmem:[%s246 + $0x30] sm:$0xf]
      %v1516 = vld [vmem:[%s246 + $0x34] sm:$0xf]
      %v1517 = vld [vmem:[%s246 + $0x38] sm:$0xf]
      %v1518 = vld [vmem:[%s246 + $0x3c] sm:$0xf]
      %v1519 = vld [vmem:[%s246 + $0x40] sm:$0xf]
      %v1520 = vld [vmem:[%s246 + $0x44] sm:$0xf]
      %v1521 = vld [vmem:[%s246 + $0x48] sm:$0xf]
      %v1522 = vld [vmem:[%s246 + $0x4c] sm:$0xf]
      %v1523 = vld [vmem:[%s246 + $0x50] sm:$0xf]
      %v1524 = vld [vmem:[%s246 + $0x54] sm:$0xf]
      %v1525 = vld [vmem:[%s246 + $0x58] sm:$0xf]
      %v1526 = vld [vmem:[%s246 + $0x5c] sm:$0xf]
      %v1527 = vld [vmem:[%s246 + $0x60] sm:$0xf]
      %v1528 = vld [vmem:[%s246 + $0x64] sm:$0xf]
      %v1529 = vld [vmem:[%s246 + $0x68] sm:$0xf]
      %v1530 = vld [vmem:[%s246 + $0x6c] sm:$0xf]
      %v1531 = vld [vmem:[%s246 + $0x70] sm:$0xf]
      %v1532 = vld [vmem:[%s246 + $0x74] sm:$0xf]
      %v1533 = vld [vmem:[%s246 + $0x78] sm:$0xf]
      %v1534 = vld [vmem:[%s246 + $0x7c] sm:$0xf]
      %v1535 = vld [vmem:[%s246 + $0x80] sm:$0xf]
      %v1536 = vld [vmem:[%s246 + $0x84] sm:$0xf]
      %v1537 = vld [vmem:[%s246 + $0x88] sm:$0xf]
      %v1538 = vld [vmem:[%s246 + $0x8c] sm:$0xf]
      %v1539 = vld [vmem:[%s246 + $0x90] sm:$0xf]
      %v1540 = vld [vmem:[%s246 + $0x94] sm:$0xf]
      %v1541 = vld [vmem:[%s246 + $0x98] sm:$0xf]
      %s1542 = scalar_lea.vmem %s1, 192
      %v1543 = vld [vmem:[%s1542] sm:$0xf]
      %v1544 = vld [vmem:[%s1542 + $0x4] sm:$0xf]
      %v1545 = vld [vmem:[%s1542 + $0x8] sm:$0xf]
      %v1546 = vld [vmem:[%s1542 + $0xc] sm:$0xf]
      %v1547 = vld [vmem:[%s1542 + $0x10] sm:$0xf]
      %v1548 = vld [vmem:[%s1542 + $0x14] sm:$0xf]
      %v1549 = vld [vmem:[%s1542 + $0x18] sm:$0xf]
      %v1550 = vld [vmem:[%s1542 + $0x1c] sm:$0xf]
      %v1551 = vld [vmem:[%s1542 + $0x20] sm:$0xf]
      %v1552 = vld [vmem:[%s1542 + $0x24] sm:$0xf]
      %v1553 = vld [vmem:[%s1542 + $0x28] sm:$0xf]
      %v1554 = vld [vmem:[%s1542 + $0x2c] sm:$0xf]
      %v1555 = vld [vmem:[%s1542 + $0x30] sm:$0xf]
      %v1556 = vld [vmem:[%s1542 + $0x34] sm:$0xf]
      %v1557 = vld [vmem:[%s1542 + $0x38] sm:$0xf]
      %v1558 = vld [vmem:[%s1542 + $0x3c] sm:$0xf]
      %v1596 = vunpack.c.l.b16 %v1505
      %v1597 = vunpack.c.l.b16 %v1506
      %v1598 = vunpack.c.l.b16 %v1507
      %v1599 = vunpack.c.l.b16 %v1508
      %v1600 = vunpack.c.l.b16 %v1509
      %v1601 = vunpack.c.l.b16 %v1510
      %v1602 = vunpack.c.l.b16 %v1511
      %v1603 = vunpack.c.l.b16 %v1512
      %v1604 = vunpack.c.l.b16 %v1513
      %v1605 = vunpack.c.l.b16 %v1514
      %v1606 = vunpack.c.l.b16 %v1515
      %v1607 = vunpack.c.l.b16 %v1516
      %v1608 = vunpack.c.l.b16 %v1517
      %v1609 = vunpack.c.l.b16 %v1518
      %v1610 = vunpack.c.l.b16 %v1519
      %v1611 = vunpack.c.l.b16 %v1520
      %v1612 = vunpack.c.l.b16 %v1521
      %v1613 = vunpack.c.l.b16 %v1522
      %v1614 = vunpack.c.l.b16 %v1523
      %v1615 = vunpack.c.l.b16 %v1524
      %v1616 = vunpack.c.l.b16 %v1525
      %v1617 = vunpack.c.l.b16 %v1526
      %v1618 = vunpack.c.l.b16 %v1527
      %v1619 = vunpack.c.l.b16 %v1528
      %v1620 = vunpack.c.l.b16 %v1529
      %v1621 = vunpack.c.l.b16 %v1530
      %v1622 = vunpack.c.l.b16 %v1531
      %v1623 = vunpack.c.l.b16 %v1532
      %v1624 = vunpack.c.l.b16 %v1533
      %v1625 = vunpack.c.l.b16 %v1534
      %v1626 = vunpack.c.l.b16 %v1535
      %v1627 = vunpack.c.l.b16 %v1536
      %v1628 = vunpack.c.l.b16 %v1537
      %v1629 = vunpack.c.l.b16 %v1538
      %v1630 = vunpack.c.l.b16 %v1539
      %v1631 = vunpack.c.l.b16 %v1540
      %v1632 = vunpack.c.l.b16 %v1541
      %v1633 = vpack.c.b16 %v1597, %v1596
      %v1634 = vpack.c.b16 %v1599, %v1598
      %v1635 = vpack.c.b16 %v1601, %v1600
      %v1636 = vpack.c.b16 %v1603, %v1602
      %v1637 = vpack.c.b16 %v1605, %v1604
      %v1638 = vpack.c.b16 %v1607, %v1606
      %v1639 = vpack.c.b16 %v1609, %v1608
      %v1640 = vpack.c.b16 %v1611, %v1610
      %v1641 = vpack.c.b16 %v1613, %v1612
      %v1642 = vpack.c.b16 %v1615, %v1614
      %v1643 = vpack.c.b16 %v1617, %v1616
      %v1644 = vpack.c.b16 %v1619, %v1618
      %v1645 = vpack.c.b16 %v1621, %v1620
      %v1646 = vpack.c.b16 %v1623, %v1622
      %v1647 = vpack.c.b16 %v1625, %v1624
      %v1648 = vpack.c.b16 %v1627, %v1626
      %v1649 = vpack.c.b16 %v1629, %v1628
      %v1650 = vpack.c.b16 %v1631, %v1630
      %v1651 = vpack.c.b16 %v1632, %v1632
      %v1653 = vshrl.u32 %v1633, 16
      %v1655 = vrot.slane %v1653, 3
      %v1656 = vshll.u32 %v1633, 16
      %v1658 = vrot.slane %v1656, 4
      %v1659 = vor.u32 %v1655, %v1658
      %v1661 = vshrl.u32 %v1634, 16
      %v1663 = vrot.slane %v1661, 3
      %v1664 = vshll.u32 %v1634, 16
      %v1666 = vrot.slane %v1664, 4
      %v1667 = vor.u32 %v1663, %v1666
      %v1668 = vsel %vm1140, %v1659, %v1667
      %v1670 = vshrl.u32 %v1635, 16
      %v1672 = vrot.slane %v1670, 3
      %v1673 = vshll.u32 %v1635, 16
      %v1675 = vrot.slane %v1673, 4
      %v1676 = vor.u32 %v1672, %v1675
      %v1677 = vsel %vm1140, %v1667, %v1676
      %v1679 = vshrl.u32 %v1636, 16
      %v1681 = vrot.slane %v1679, 3
      %v1682 = vshll.u32 %v1636, 16
      %v1684 = vrot.slane %v1682, 4
      %v1685 = vor.u32 %v1681, %v1684
      %v1686 = vsel %vm1140, %v1676, %v1685
      %v1688 = vshrl.u32 %v1637, 16
      %v1690 = vrot.slane %v1688, 3
      %v1691 = vshll.u32 %v1637, 16
      %v1693 = vrot.slane %v1691, 4
      %v1694 = vor.u32 %v1690, %v1693
      %v1695 = vsel %vm1140, %v1685, %v1694
      %v1697 = vshrl.u32 %v1638, 16
      %v1699 = vrot.slane %v1697, 3
      %v1700 = vshll.u32 %v1638, 16
      %v1702 = vrot.slane %v1700, 4
      %v1703 = vor.u32 %v1699, %v1702
      %v1704 = vsel %vm1140, %v1694, %v1703
      %v1706 = vshrl.u32 %v1639, 16
      %v1708 = vrot.slane %v1706, 3
      %v1709 = vshll.u32 %v1639, 16
      %v1711 = vrot.slane %v1709, 4
      %v1712 = vor.u32 %v1708, %v1711
      %v1713 = vsel %vm1140, %v1703, %v1712
      %v1715 = vshrl.u32 %v1640, 16
      %v1717 = vrot.slane %v1715, 3
      %v1718 = vshll.u32 %v1640, 16
      %v1720 = vrot.slane %v1718, 4
      %v1721 = vor.u32 %v1717, %v1720
      %v1722 = vsel %vm1140, %v1712, %v1721
      %v1724 = vshrl.u32 %v1641, 16
      %v1726 = vrot.slane %v1724, 3
      %v1727 = vshll.u32 %v1641, 16
      %v1729 = vrot.slane %v1727, 4
      %v1730 = vor.u32 %v1726, %v1729
      %v1731 = vsel %vm1140, %v1721, %v1730
      %v1733 = vshrl.u32 %v1642, 16
      %v1735 = vrot.slane %v1733, 3
      %v1736 = vshll.u32 %v1642, 16
      %v1738 = vrot.slane %v1736, 4
      %v1739 = vor.u32 %v1735, %v1738
      %v1740 = vsel %vm1140, %v1730, %v1739
      %v1742 = vshrl.u32 %v1643, 16
      %v1744 = vrot.slane %v1742, 3
      %v1745 = vshll.u32 %v1643, 16
      %v1747 = vrot.slane %v1745, 4
      %v1748 = vor.u32 %v1744, %v1747
      %v1749 = vsel %vm1140, %v1739, %v1748
      %v1751 = vshrl.u32 %v1644, 16
      %v1753 = vrot.slane %v1751, 3
      %v1754 = vshll.u32 %v1644, 16
      %v1756 = vrot.slane %v1754, 4
      %v1757 = vor.u32 %v1753, %v1756
      %v1758 = vsel %vm1140, %v1748, %v1757
      %v1760 = vshrl.u32 %v1645, 16
      %v1762 = vrot.slane %v1760, 3
      %v1763 = vshll.u32 %v1645, 16
      %v1765 = vrot.slane %v1763, 4
      %v1766 = vor.u32 %v1762, %v1765
      %v1767 = vsel %vm1140, %v1757, %v1766
      %v1769 = vshrl.u32 %v1646, 16
      %v1771 = vrot.slane %v1769, 3
      %v1772 = vshll.u32 %v1646, 16
      %v1774 = vrot.slane %v1772, 4
      %v1775 = vor.u32 %v1771, %v1774
      %v1776 = vsel %vm1140, %v1766, %v1775
      %v1778 = vshrl.u32 %v1647, 16
      %v1780 = vrot.slane %v1778, 3
      %v1781 = vshll.u32 %v1647, 16
      %v1783 = vrot.slane %v1781, 4
      %v1784 = vor.u32 %v1780, %v1783
      %v1785 = vsel %vm1140, %v1775, %v1784
      %v1787 = vshrl.u32 %v1648, 16
      %v1789 = vrot.slane %v1787, 3
      %v1790 = vshll.u32 %v1648, 16
      %v1792 = vrot.slane %v1790, 4
      %v1793 = vor.u32 %v1789, %v1792
      %v1794 = vsel %vm1140, %v1784, %v1793
      %v1796 = vshrl.u32 %v1649, 16
      %v1798 = vrot.slane %v1796, 3
      %v1799 = vshll.u32 %v1649, 16
      %v1801 = vrot.slane %v1799, 4
      %v1802 = vor.u32 %v1798, %v1801
      %v1803 = vsel %vm1140, %v1793, %v1802
      %v1805 = vshrl.u32 %v1650, 16
      %v1807 = vrot.slane %v1805, 3
      %v1808 = vshll.u32 %v1650, 16
      %v1810 = vrot.slane %v1808, 4
      %v1811 = vor.u32 %v1807, %v1810
      %v1812 = vsel %vm1140, %v1802, %v1811
      %v1814 = vshrl.u32 %v1651, 16
      %v1816 = vrot.slane %v1814, 3
      %v1817 = vshll.u32 %v1651, 16
      %v1819 = vrot.slane %v1817, 4
      %v1820 = vor.u32 %v1816, %v1819
      %v1821 = vsel %vm1140, %v1811, %v1820
      %v1856 = vunpack.c.l.b16 %v1543
      %v1857 = vunpack.c.l.b16 %v1544
      %v1858 = vunpack.c.l.b16 %v1545
      %v1859 = vunpack.c.l.b16 %v1546
      %v1860 = vunpack.c.l.b16 %v1547
      %v1861 = vunpack.c.l.b16 %v1548
      %v1862 = vunpack.c.l.b16 %v1549
      %v1863 = vunpack.c.l.b16 %v1550
      %v1864 = vunpack.c.l.b16 %v1551
      %v1865 = vunpack.c.l.b16 %v1552
      %v1866 = vunpack.c.l.b16 %v1553
      %v1867 = vunpack.c.l.b16 %v1554
      %v1868 = vunpack.c.l.b16 %v1555
      %v1869 = vunpack.c.l.b16 %v1556
      %v1870 = vunpack.c.l.b16 %v1557
      %v1871 = vunpack.c.l.b16 %v1558
      %v1872 = vpack.c.b16 %v1857, %v1856
      %v1873 = vpack.c.b16 %v1859, %v1858
      %v1874 = vpack.c.b16 %v1861, %v1860
      %v1875 = vpack.c.b16 %v1863, %v1862
      %v1876 = vpack.c.b16 %v1865, %v1864
      %v1877 = vpack.c.b16 %v1867, %v1866
      %v1878 = vpack.c.b16 %v1869, %v1868
      %v1879 = vpack.c.b16 %v1871, %v1870
      %1888 = vmatprep.subr.bf16.mxu0 0
      %1889 = vmatpush1.bf16.msra.mxu0 %v1872
      %1890 = vmatprep.subr.bf16.mxu0 0
      %1891 = vmatpush1.bf16.msra.mxu0 %v1873
      %1892 = vmatprep.subr.bf16.mxu0 0
      %1893 = vmatpush1.bf16.msra.mxu0 %v1874
      %1894 = vmatprep.subr.bf16.mxu0 0
      %1895 = vmatpush1.bf16.msra.mxu0 %v1875
      %1896 = vmatprep.subr.bf16.mxu0 0
      %1897 = vmatpush1.bf16.msra.mxu0 %v1876
      %1898 = vmatprep.subr.bf16.mxu0 0
      %1899 = vmatpush1.bf16.msra.mxu0 %v1877
      %1900 = vmatprep.subr.bf16.mxu0 0
      %1901 = vmatpush1.bf16.msra.mxu0 %v1878
      %1902 = vmatprep.subr.bf16.mxu0 0
      %1903 = vmatpush1.bf16.msra.mxu0 %v1879
      %1904 = vmatprep.subr.bf16.mxu0 0
      %1905 = vmatpush1.bf16.msra.mxu0 0
      %1906 = vmatprep.subr.bf16.mxu0 0
      %1907 = vmatpush1.bf16.msra.mxu0 0
      %1908 = vmatprep.subr.bf16.mxu0 0
      %1909 = vmatpush1.bf16.msra.mxu0 0
      %1910 = vmatprep.subr.bf16.mxu0 0
      %1911 = vmatpush1.bf16.msra.mxu0 0
      %1912 = vmatprep.subr.bf16.mxu0 0
      %1913 = vmatpush1.bf16.msra.mxu0 0
      %1914 = vmatprep.subr.bf16.mxu0 0
      %1915 = vmatpush1.bf16.msra.mxu0 0
      %1916 = vmatprep.subr.bf16.mxu0 0
      %1917 = vmatpush1.bf16.msra.mxu0 0
      %1918 = vmatprep.subr.bf16.mxu0 0
      %1919 = vmatpush1.bf16.msra.mxu0 0
      %1920 = vmatprep.mubr.bf16.mxu0 0
      %1921 = vmatmul.mubr.bf16.gmra.mrb[0].mxu0 %v1668
      %v1922 = vpop.f32.mrb[0].mxu0
      %v1923 = vadd.f32 0.0, %v1922
      %v1924 = vpop.f32.mrb[0].mxu0
      %v1925 = vpop.f32.mrb[0].mxu0
      %v1926 = vadd.f32 0.0, %v1925
      %v1927 = vpop.f32.mrb[0].mxu0
      %1928 = vmatprep.mubr.bf16.mxu0 0
      %1929 = vmatmul.mubr.bf16.gmra.mrb[0].mxu0 %v1677
      %v1930 = vpop.f32.mrb[0].mxu0
      %v1931 = vadd.f32 0.0, %v1930
      %v1932 = vpop.f32.mrb[0].mxu0
      %v1933 = vpop.f32.mrb[0].mxu0
      %v1934 = vadd.f32 0.0, %v1933
      %v1935 = vpop.f32.mrb[0].mxu0
      %1936 = vmatprep.mubr.bf16.mxu0 0
      %1937 = vmatmul.mubr.bf16.gmra.mrb[0].mxu0 %v1686
      %v1938 = vpop.f32.mrb[0].mxu0
      %v1939 = vadd.f32 0.0, %v1938
      %v1940 = vpop.f32.mrb[0].mxu0
      %v1941 = vpop.f32.mrb[0].mxu0
      %v1942 = vadd.f32 0.0, %v1941
      %v1943 = vpop.f32.mrb[0].mxu0
      %1944 = vmatprep.mubr.bf16.mxu0 0
      %1945 = vmatmul.mubr.bf16.gmra.mrb[0].mxu0 %v1695
      %v1946 = vpop.f32.mrb[0].mxu0
      %v1947 = vadd.f32 0.0, %v1946
      %v1948 = vpop.f32.mrb[0].mxu0
      %v1949 = vpop.f32.mrb[0].mxu0
      %v1950 = vadd.f32 0.0, %v1949
      %v1951 = vpop.f32.mrb[0].mxu0
      %1952 = vmatprep.mubr.bf16.mxu0 0
      %1953 = vmatmul.mubr.bf16.gmra.mrb[0].mxu0 %v1704
      %v1954 = vpop.f32.mrb[0].mxu0
      %v1955 = vadd.f32 0.0, %v1954
      %v1956 = vpop.f32.mrb[0].mxu0
      %v1957 = vpop.f32.mrb[0].mxu0
      %v1958 = vadd.f32 0.0, %v1957
      %v1959 = vpop.f32.mrb[0].mxu0
      %1960 = vmatprep.mubr.bf16.mxu0 0
      %1961 = vmatmul.mubr.bf16.gmra.mrb[0].mxu0 %v1713
      %v1962 = vpop.f32.mrb[0].mxu0
      %v1963 = vadd.f32 0.0, %v1962
      %v1964 = vpop.f32.mrb[0].mxu0
      %v1965 = vpop.f32.mrb[0].mxu0
      %v1966 = vadd.f32 0.0, %v1965
      %v1967 = vpop.f32.mrb[0].mxu0
      %1968 = vmatprep.mubr.bf16.mxu0 0
      %1969 = vmatmul.mubr.bf16.gmra.mrb[0].mxu0 %v1722
      %v1970 = vpop.f32.mrb[0].mxu0
      %v1971 = vadd.f32 0.0, %v1970
      %v1972 = vpop.f32.mrb[0].mxu0
      %v1973 = vpop.f32.mrb[0].mxu0
      %v1974 = vadd.f32 0.0, %v1973
      %v1975 = vpop.f32.mrb[0].mxu0
      %1976 = vmatprep.mubr.bf16.mxu0 0
      %1977 = vmatmul.mubr.bf16.gmra.mrb[0].mxu0 %v1731
      %v1978 = vpop.f32.mrb[0].mxu0
      %v1979 = vadd.f32 0.0, %v1978
      %v1980 = vpop.f32.mrb[0].mxu0
      %v1981 = vpop.f32.mrb[0].mxu0
      %v1982 = vadd.f32 0.0, %v1981
      %v1983 = vpop.f32.mrb[0].mxu0
      %1984 = vmatprep.mubr.bf16.mxu0 0
      %1985 = vmatmul.mubr.bf16.gmra.mrb[0].mxu0 %v1740
      %v1986 = vpop.f32.mrb[0].mxu0
      %v1987 = vadd.f32 0.0, %v1986
      %v1988 = vpop.f32.mrb[0].mxu0
      %v1989 = vpop.f32.mrb[0].mxu0
      %v1990 = vadd.f32 0.0, %v1989
      %v1991 = vpop.f32.mrb[0].mxu0
      %1992 = vmatprep.mubr.bf16.mxu0 0
      %1993 = vmatmul.mubr.bf16.gmra.mrb[0].mxu0 %v1749
      %v1994 = vpop.f32.mrb[0].mxu0
      %v1995 = vadd.f32 0.0, %v1994
      %v1996 = vpop.f32.mrb[0].mxu0
      %v1997 = vpop.f32.mrb[0].mxu0
      %v1998 = vadd.f32 0.0, %v1997
      %v1999 = vpop.f32.mrb[0].mxu0
      %2000 = vmatprep.mubr.bf16.mxu0 0
      %2001 = vmatmul.mubr.bf16.gmra.mrb[0].mxu0 %v1758
      %v2002 = vpop.f32.mrb[0].mxu0
      %v2003 = vadd.f32 0.0, %v2002
      %v2004 = vpop.f32.mrb[0].mxu0
      %v2005 = vpop.f32.mrb[0].mxu0
      %v2006 = vadd.f32 0.0, %v2005
      %v2007 = vpop.f32.mrb[0].mxu0
      %2008 = vmatprep.mubr.bf16.mxu0 0
      %2009 = vmatmul.mubr.bf16.gmra.mrb[0].mxu0 %v1767
      %v2010 = vpop.f32.mrb[0].mxu0
      %v2011 = vadd.f32 0.0, %v2010
      %v2012 = vpop.f32.mrb[0].mxu0
      %v2013 = vpop.f32.mrb[0].mxu0
      %v2014 = vadd.f32 0.0, %v2013
      %v2015 = vpop.f32.mrb[0].mxu0
      %2016 = vmatprep.mubr.bf16.mxu0 0
      %2017 = vmatmul.mubr.bf16.gmra.mrb[0].mxu0 %v1776
      %v2018 = vpop.f32.mrb[0].mxu0
      %v2019 = vadd.f32 0.0, %v2018
      %v2020 = vpop.f32.mrb[0].mxu0
      %v2021 = vpop.f32.mrb[0].mxu0
      %v2022 = vadd.f32 0.0, %v2021
      %v2023 = vpop.f32.mrb[0].mxu0
      %2024 = vmatprep.mubr.bf16.mxu0 0
      %2025 = vmatmul.mubr.bf16.gmra.mrb[0].mxu0 %v1785
      %v2026 = vpop.f32.mrb[0].mxu0
      %v2027 = vadd.f32 0.0, %v2026
      %v2028 = vpop.f32.mrb[0].mxu0
      %v2029 = vpop.f32.mrb[0].mxu0
      %v2030 = vadd.f32 0.0, %v2029
      %v2031 = vpop.f32.mrb[0].mxu0
      %2032 = vmatprep.mubr.bf16.mxu0 0
      %2033 = vmatmul.mubr.bf16.gmra.mrb[0].mxu0 %v1794
      %v2034 = vpop.f32.mrb[0].mxu0
      %v2035 = vadd.f32 0.0, %v2034
      %v2036 = vpop.f32.mrb[0].mxu0
      %v2037 = vpop.f32.mrb[0].mxu0
      %v2038 = vadd.f32 0.0, %v2037
      %v2039 = vpop.f32.mrb[0].mxu0
      %2040 = vmatprep.mubr.bf16.mxu0 0
      %2041 = vmatmul.mubr.bf16.gmra.mrb[0].mxu0 %v1803
      %v2042 = vpop.f32.mrb[0].mxu0
      %v2043 = vadd.f32 0.0, %v2042
      %v2044 = vpop.f32.mrb[0].mxu0
      %v2045 = vpop.f32.mrb[0].mxu0
      %v2046 = vadd.f32 0.0, %v2045
      %v2047 = vpop.f32.mrb[0].mxu0
      %2048 = vmatprep.mubr.bf16.mxu0 0
      %2049 = vmatmul.mubr.bf16.gmra.mrb[0].mxu0 %v1812
      %v2050 = vpop.f32.mrb[0].mxu0
      %v2051 = vadd.f32 0.0, %v2050
      %v2052 = vpop.f32.mrb[0].mxu0
      %v2053 = vpop.f32.mrb[0].mxu0
      %v2054 = vadd.f32 0.0, %v2053
      %v2055 = vpop.f32.mrb[0].mxu0
      %2056 = vmatprep.mubr.bf16.mxu0 0
      %2057 = vmatmul.mubr.bf16.gmra.mrb[0].mxu0 %v1821
      %v2058 = vpop.f32.mrb[0].mxu0
      %v2059 = vadd.f32 0.0, %v2058
      %v2060 = vpop.f32.mrb[0].mxu0
      %v2061 = vpop.f32.mrb[0].mxu0
      %v2062 = vadd.f32 0.0, %v2061
      %v2063 = vpop.f32.mrb[0].mxu0
      %2064 = vdwg.mxu0
      %v2065 = vadd.f32 %v1469, %v1923
      %v2066 = vadd.f32 %v1470, %v1926
      %v2067 = vadd.f32 %v1471, %v1931
      %v2068 = vadd.f32 %v1472, %v1934
      %v2069 = vadd.f32 %v1473, %v1939
      %v2070 = vadd.f32 %v1474, %v1942
      %v2071 = vadd.f32 %v1475, %v1947
      %v2072 = vadd.f32 %v1476, %v1950
      %v2073 = vadd.f32 %v1477, %v1955
      %v2074 = vadd.f32 %v1478, %v1958
      %v2075 = vadd.f32 %v1479, %v1963
      %v2076 = vadd.f32 %v1480, %v1966
      %v2077 = vadd.f32 %v1481, %v1971
      %v2078 = vadd.f32 %v1482, %v1974
      %v2079 = vadd.f32 %v1483, %v1979
      %v2080 = vadd.f32 %v1484, %v1982
      %v2081 = vadd.f32 %v1485, %v1987
      %v2082 = vadd.f32 %v1486, %v1990
      %v2083 = vadd.f32 %v1487, %v1995
      %v2084 = vadd.f32 %v1488, %v1998
      %v2085 = vadd.f32 %v1489, %v2003
      %v2086 = vadd.f32 %v1490, %v2006
      %v2087 = vadd.f32 %v1491, %v2011
      %v2088 = vadd.f32 %v1492, %v2014
      %v2089 = vadd.f32 %v1493, %v2019
      %v2090 = vadd.f32 %v1494, %v2022
      %v2091 = vadd.f32 %v1495, %v2027
      %v2092 = vadd.f32 %v1496, %v2030
      %v2093 = vadd.f32 %v1497, %v2035
      %v2094 = vadd.f32 %v1498, %v2038
      %v2095 = vadd.f32 %v1499, %v2043
      %v2096 = vadd.f32 %v1500, %v2046
      %v2097 = vadd.f32 %v1501, %v2051
      %v2098 = vadd.f32 %v1502, %v2054
      %v2099 = vadd.f32 %v1503, %v2059
      %v2100 = vadd.f32 %v1504, %v2062
      %s2101 = scalar_lea.vmem %s1, 256
      %v2102 = vld [vmem:[%s2101] sm:$0xf]
      %v2103 = vld [vmem:[%s2101 + $0x4] sm:$0xf]
      %v2104 = vld [vmem:[%s2101 + $0x8] sm:$0xf]
      %v2105 = vld [vmem:[%s2101 + $0xc] sm:$0xf]
      %v2106 = vld [vmem:[%s2101 + $0x10] sm:$0xf]
      %v2107 = vld [vmem:[%s2101 + $0x14] sm:$0xf]
      %v2108 = vld [vmem:[%s2101 + $0x18] sm:$0xf]
      %v2109 = vld [vmem:[%s2101 + $0x1c] sm:$0xf]
      %v2110 = vld [vmem:[%s2101 + $0x20] sm:$0xf]
      %v2111 = vld [vmem:[%s2101 + $0x24] sm:$0xf]
      %v2112 = vld [vmem:[%s2101 + $0x28] sm:$0xf]
      %v2113 = vld [vmem:[%s2101 + $0x2c] sm:$0xf]
      %v2114 = vld [vmem:[%s2101 + $0x30] sm:$0xf]
      %v2115 = vld [vmem:[%s2101 + $0x34] sm:$0xf]
      %v2116 = vld [vmem:[%s2101 + $0x38] sm:$0xf]
      %v2117 = vld [vmem:[%s2101 + $0x3c] sm:$0xf]
      %v2118 = vpack.c.b16 %v1598, %v1597
      %v2119 = vpack.c.b16 %v1600, %v1599
      %v2120 = vpack.c.b16 %v1602, %v1601
      %v2121 = vpack.c.b16 %v1604, %v1603
      %v2122 = vpack.c.b16 %v1606, %v1605
      %v2123 = vpack.c.b16 %v1608, %v1607
      %v2124 = vpack.c.b16 %v1610, %v1609
      %v2125 = vpack.c.b16 %v1612, %v1611
      %v2126 = vpack.c.b16 %v1614, %v1613
      %v2127 = vpack.c.b16 %v1616, %v1615
      %v2128 = vpack.c.b16 %v1618, %v1617
      %v2129 = vpack.c.b16 %v1620, %v1619
      %v2130 = vpack.c.b16 %v1622, %v1621
      %v2131 = vpack.c.b16 %v1624, %v1623
      %v2132 = vpack.c.b16 %v1626, %v1625
      %v2133 = vpack.c.b16 %v1628, %v1627
      %v2134 = vpack.c.b16 %v1630, %v1629
      %v2135 = vpack.c.b16 %v1632, %v1631
      %v2170 = vunpack.c.l.b16 %v2102
      %v2171 = vunpack.c.l.b16 %v2103
      %v2172 = vunpack.c.l.b16 %v2104
      %v2173 = vunpack.c.l.b16 %v2105
      %v2174 = vunpack.c.l.b16 %v2106
      %v2175 = vunpack.c.l.b16 %v2107
      %v2176 = vunpack.c.l.b16 %v2108
      %v2177 = vunpack.c.l.b16 %v2109
      %v2178 = vunpack.c.l.b16 %v2110
      %v2179 = vunpack.c.l.b16 %v2111
      %v2180 = vunpack.c.l.b16 %v2112
      %v2181 = vunpack.c.l.b16 %v2113
      %v2182 = vunpack.c.l.b16 %v2114
      %v2183 = vunpack.c.l.b16 %v2115
      %v2184 = vunpack.c.l.b16 %v2116
      %v2185 = vunpack.c.l.b16 %v2117
      %v2186 = vpack.c.b16 %v2171, %v2170
      %v2187 = vpack.c.b16 %v2173, %v2172
      %v2188 = vpack.c.b16 %v2175, %v2174
      %v2189 = vpack.c.b16 %v2177, %v2176
      %v2190 = vpack.c.b16 %v2179, %v2178
      %v2191 = vpack.c.b16 %v2181, %v2180
      %v2192 = vpack.c.b16 %v2183, %v2182
      %v2193 = vpack.c.b16 %v2185, %v2184
      %2202 = vmatprep.subr.bf16.mxu0 0
      %2203 = vmatpush1.bf16.msra.mxu0 %v2186
      %2204 = vmatprep.subr.bf16.mxu0 0
      %2205 = vmatpush1.bf16.msra.mxu0 %v2187
      %2206 = vmatprep.subr.bf16.mxu0 0
      %2207 = vmatpush1.bf16.msra.mxu0 %v2188
      %2208 = vmatprep.subr.bf16.mxu0 0
      %2209 = vmatpush1.bf16.msra.mxu0 %v2189
      %2210 = vmatprep.subr.bf16.mxu0 0
      %2211 = vmatpush1.bf16.msra.mxu0 %v2190
      %2212 = vmatprep.subr.bf16.mxu0 0
      %2213 = vmatpush1.bf16.msra.mxu0 %v2191
      %2214 = vmatprep.subr.bf16.mxu0 0
      %2215 = vmatpush1.bf16.msra.mxu0 %v2192
      %2216 = vmatprep.subr.bf16.mxu0 0
      %2217 = vmatpush1.bf16.msra.mxu0 %v2193
      %2218 = vmatprep.subr.bf16.mxu0 0
      %2219 = vmatpush1.bf16.msra.mxu0 0
      %2220 = vmatprep.subr.bf16.mxu0 0
      %2221 = vmatpush1.bf16.msra.mxu0 0
      %2222 = vmatprep.subr.bf16.mxu0 0
      %2223 = vmatpush1.bf16.msra.mxu0 0
      %2224 = vmatprep.subr.bf16.mxu0 0
      %2225 = vmatpush1.bf16.msra.mxu0 0
      %2226 = vmatprep.subr.bf16.mxu0 0
      %2227 = vmatpush1.bf16.msra.mxu0 0
      %2228 = vmatprep.subr.bf16.mxu0 0
      %2229 = vmatpush1.bf16.msra.mxu0 0
      %2230 = vmatprep.subr.bf16.mxu0 0
      %2231 = vmatpush1.bf16.msra.mxu0 0
      %2232 = vmatprep.subr.bf16.mxu0 0
      %2233 = vmatpush1.bf16.msra.mxu0 0
      %2234 = vmatprep.mubr.bf16.mxu0 0
      %2235 = vmatmul.mubr.bf16.gmra.mrb[0].mxu0 %v2118
      %v2236 = vpop.f32.mrb[0].mxu0
      %v2237 = vadd.f32 0.0, %v2236
      %v2238 = vpop.f32.mrb[0].mxu0
      %v2239 = vpop.f32.mrb[0].mxu0
      %v2240 = vadd.f32 0.0, %v2239
      %v2241 = vpop.f32.mrb[0].mxu0
      %2242 = vmatprep.mubr.bf16.mxu0 0
      %2243 = vmatmul.mubr.bf16.gmra.mrb[0].mxu0 %v2119
      %v2244 = vpop.f32.mrb[0].mxu0
      %v2245 = vadd.f32 0.0, %v2244
      %v2246 = vpop.f32.mrb[0].mxu0
      %v2247 = vpop.f32.mrb[0].mxu0
      %v2248 = vadd.f32 0.0, %v2247
      %v2249 = vpop.f32.mrb[0].mxu0
      %2250 = vmatprep.mubr.bf16.mxu0 0
      %2251 = vmatmul.mubr.bf16.gmra.mrb[0].mxu0 %v2120
      %v2252 = vpop.f32.mrb[0].mxu0
      %v2253 = vadd.f32 0.0, %v2252
      %v2254 = vpop.f32.mrb[0].mxu0
      %v2255 = vpop.f32.mrb[0].mxu0
      %v2256 = vadd.f32 0.0, %v2255
      %v2257 = vpop.f32.mrb[0].mxu0
      %2258 = vmatprep.mubr.bf16.mxu0 0
      %2259 = vmatmul.mubr.bf16.gmra.mrb[0].mxu0 %v2121
      %v2260 = vpop.f32.mrb[0].mxu0
      %v2261 = vadd.f32 0.0, %v2260
      %v2262 = vpop.f32.mrb[0].mxu0
      %v2263 = vpop.f32.mrb[0].mxu0
      %v2264 = vadd.f32 0.0, %v2263
      %v2265 = vpop.f32.mrb[0].mxu0
      %2266 = vmatprep.mubr.bf16.mxu0 0
      %2267 = vmatmul.mubr.bf16.gmra.mrb[0].mxu0 %v2122
      %v2268 = vpop.f32.mrb[0].mxu0
      %v2269 = vadd.f32 0.0, %v2268
      %v2270 = vpop.f32.mrb[0].mxu0
      %v2271 = vpop.f32.mrb[0].mxu0
      %v2272 = vadd.f32 0.0, %v2271
      %v2273 = vpop.f32.mrb[0].mxu0
      %2274 = vmatprep.mubr.bf16.mxu0 0
      %2275 = vmatmul.mubr.bf16.gmra.mrb[0].mxu0 %v2123
      %v2276 = vpop.f32.mrb[0].mxu0
      %v2277 = vadd.f32 0.0, %v2276
      %v2278 = vpop.f32.mrb[0].mxu0
      %v2279 = vpop.f32.mrb[0].mxu0
      %v2280 = vadd.f32 0.0, %v2279
      %v2281 = vpop.f32.mrb[0].mxu0
      %2282 = vmatprep.mubr.bf16.mxu0 0
      %2283 = vmatmul.mubr.bf16.gmra.mrb[0].mxu0 %v2124
      %v2284 = vpop.f32.mrb[0].mxu0
      %v2285 = vadd.f32 0.0, %v2284
      %v2286 = vpop.f32.mrb[0].mxu0
      %v2287 = vpop.f32.mrb[0].mxu0
      %v2288 = vadd.f32 0.0, %v2287
      %v2289 = vpop.f32.mrb[0].mxu0
      %2290 = vmatprep.mubr.bf16.mxu0 0
      %2291 = vmatmul.mubr.bf16.gmra.mrb[0].mxu0 %v2125
      %v2292 = vpop.f32.mrb[0].mxu0
      %v2293 = vadd.f32 0.0, %v2292
      %v2294 = vpop.f32.mrb[0].mxu0
      %v2295 = vpop.f32.mrb[0].mxu0
      %v2296 = vadd.f32 0.0, %v2295
      %v2297 = vpop.f32.mrb[0].mxu0
      %2298 = vmatprep.mubr.bf16.mxu0 0
      %2299 = vmatmul.mubr.bf16.gmra.mrb[0].mxu0 %v2126
      %v2300 = vpop.f32.mrb[0].mxu0
      %v2301 = vadd.f32 0.0, %v2300
      %v2302 = vpop.f32.mrb[0].mxu0
      %v2303 = vpop.f32.mrb[0].mxu0
      %v2304 = vadd.f32 0.0, %v2303
      %v2305 = vpop.f32.mrb[0].mxu0
      %2306 = vmatprep.mubr.bf16.mxu0 0
      %2307 = vmatmul.mubr.bf16.gmra.mrb[0].mxu0 %v2127
      %v2308 = vpop.f32.mrb[0].mxu0
      %v2309 = vadd.f32 0.0, %v2308
      %v2310 = vpop.f32.mrb[0].mxu0
      %v2311 = vpop.f32.mrb[0].mxu0
      %v2312 = vadd.f32 0.0, %v2311
      %v2313 = vpop.f32.mrb[0].mxu0
      %2314 = vmatprep.mubr.bf16.mxu0 0
      %2315 = vmatmul.mubr.bf16.gmra.mrb[0].mxu0 %v2128
      %v2316 = vpop.f32.mrb[0].mxu0
      %v2317 = vadd.f32 0.0, %v2316
      %v2318 = vpop.f32.mrb[0].mxu0
      %v2319 = vpop.f32.mrb[0].mxu0
      %v2320 = vadd.f32 0.0, %v2319
      %v2321 = vpop.f32.mrb[0].mxu0
      %2322 = vmatprep.mubr.bf16.mxu0 0
      %2323 = vmatmul.mubr.bf16.gmra.mrb[0].mxu0 %v2129
      %v2324 = vpop.f32.mrb[0].mxu0
      %v2325 = vadd.f32 0.0, %v2324
      %v2326 = vpop.f32.mrb[0].mxu0
      %v2327 = vpop.f32.mrb[0].mxu0
      %v2328 = vadd.f32 0.0, %v2327
      %v2329 = vpop.f32.mrb[0].mxu0
      %2330 = vmatprep.mubr.bf16.mxu0 0
      %2331 = vmatmul.mubr.bf16.gmra.mrb[0].mxu0 %v2130
      %v2332 = vpop.f32.mrb[0].mxu0
      %v2333 = vadd.f32 0.0, %v2332
      %v2334 = vpop.f32.mrb[0].mxu0
      %v2335 = vpop.f32.mrb[0].mxu0
      %v2336 = vadd.f32 0.0, %v2335
      %v2337 = vpop.f32.mrb[0].mxu0
      %2338 = vmatprep.mubr.bf16.mxu0 0
      %2339 = vmatmul.mubr.bf16.gmra.mrb[0].mxu0 %v2131
      %v2340 = vpop.f32.mrb[0].mxu0
      %v2341 = vadd.f32 0.0, %v2340
      %v2342 = vpop.f32.mrb[0].mxu0
      %v2343 = vpop.f32.mrb[0].mxu0
      %v2344 = vadd.f32 0.0, %v2343
      %v2345 = vpop.f32.mrb[0].mxu0
      %2346 = vmatprep.mubr.bf16.mxu0 0
      %2347 = vmatmul.mubr.bf16.gmra.mrb[0].mxu0 %v2132
      %v2348 = vpop.f32.mrb[0].mxu0
      %v2349 = vadd.f32 0.0, %v2348
      %v2350 = vpop.f32.mrb[0].mxu0
      %v2351 = vpop.f32.mrb[0].mxu0
      %v2352 = vadd.f32 0.0, %v2351
      %v2353 = vpop.f32.mrb[0].mxu0
      %2354 = vmatprep.mubr.bf16.mxu0 0
      %2355 = vmatmul.mubr.bf16.gmra.mrb[0].mxu0 %v2133
      %v2356 = vpop.f32.mrb[0].mxu0
      %v2357 = vadd.f32 0.0, %v2356
      %v2358 = vpop.f32.mrb[0].mxu0
      %v2359 = vpop.f32.mrb[0].mxu0
      %v2360 = vadd.f32 0.0, %v2359
      %v2361 = vpop.f32.mrb[0].mxu0
      %2362 = vmatprep.mubr.bf16.mxu0 0
      %2363 = vmatmul.mubr.bf16.gmra.mrb[0].mxu0 %v2134
      %v2364 = vpop.f32.mrb[0].mxu0
      %v2365 = vadd.f32 0.0, %v2364
      %v2366 = vpop.f32.mrb[0].mxu0
      %v2367 = vpop.f32.mrb[0].mxu0
      %v2368 = vadd.f32 0.0, %v2367
      %v2369 = vpop.f32.mrb[0].mxu0
      %2370 = vmatprep.mubr.bf16.mxu0 0
      %2371 = vmatmul.mubr.bf16.gmra.mrb[0].mxu0 %v2135
      %v2372 = vpop.f32.mrb[0].mxu0
      %v2373 = vadd.f32 0.0, %v2372
      %v2374 = vpop.f32.mrb[0].mxu0
      %v2375 = vpop.f32.mrb[0].mxu0
      %v2376 = vadd.f32 0.0, %v2375
      %v2377 = vpop.f32.mrb[0].mxu0
      %2378 = vdwg.mxu0
      %v2379 = vadd.f32 %v2065, %v2237
      %v2380 = vadd.f32 %v2066, %v2240
      %v2381 = vadd.f32 %v2067, %v2245
      %v2382 = vadd.f32 %v2068, %v2248
      %v2383 = vadd.f32 %v2069, %v2253
      %v2384 = vadd.f32 %v2070, %v2256
      %v2385 = vadd.f32 %v2071, %v2261
      %v2386 = vadd.f32 %v2072, %v2264
      %v2387 = vadd.f32 %v2073, %v2269
      %v2388 = vadd.f32 %v2074, %v2272
      %v2389 = vadd.f32 %v2075, %v2277
      %v2390 = vadd.f32 %v2076, %v2280
      %v2391 = vadd.f32 %v2077, %v2285
      %v2392 = vadd.f32 %v2078, %v2288
      %v2393 = vadd.f32 %v2079, %v2293
      %v2394 = vadd.f32 %v2080, %v2296
      %v2395 = vadd.f32 %v2081, %v2301
      %v2396 = vadd.f32 %v2082, %v2304
      %v2397 = vadd.f32 %v2083, %v2309
      %v2398 = vadd.f32 %v2084, %v2312
      %v2399 = vadd.f32 %v2085, %v2317
      %v2400 = vadd.f32 %v2086, %v2320
      %v2401 = vadd.f32 %v2087, %v2325
      %v2402 = vadd.f32 %v2088, %v2328
      %v2403 = vadd.f32 %v2089, %v2333
      %v2404 = vadd.f32 %v2090, %v2336
      %v2405 = vadd.f32 %v2091, %v2341
      %v2406 = vadd.f32 %v2092, %v2344
      %v2407 = vadd.f32 %v2093, %v2349
      %v2408 = vadd.f32 %v2094, %v2352
      %v2409 = vadd.f32 %v2095, %v2357
      %v2410 = vadd.f32 %v2096, %v2360
      %v2411 = vadd.f32 %v2097, %v2365
      %v2412 = vadd.f32 %v2098, %v2368
      %v2413 = vadd.f32 %v2099, %v2373
      %v2414 = vadd.f32 %v2100, %v2376
      %v2415 = vld [vmem:[%s246 + $0xc] sm:$0xf]
      %v2416 = vld [vmem:[%s246 + $0x10] sm:$0xf]
      %v2417 = vld [vmem:[%s246 + $0x14] sm:$0xf]
      %v2418 = vld [vmem:[%s246 + $0x18] sm:$0xf]
      %v2419 = vld [vmem:[%s246 + $0x1c] sm:$0xf]
      %v2420 = vld [vmem:[%s246 + $0x20] sm:$0xf]
      %v2421 = vld [vmem:[%s246 + $0x24] sm:$0xf]
      %v2422 = vld [vmem:[%s246 + $0x28] sm:$0xf]
      %v2423 = vld [vmem:[%s246 + $0x2c] sm:$0xf]
      %v2424 = vld [vmem:[%s246 + $0x30] sm:$0xf]
      %v2425 = vld [vmem:[%s246 + $0x34] sm:$0xf]
      %v2426 = vld [vmem:[%s246 + $0x38] sm:$0xf]
      %v2427 = vld [vmem:[%s246 + $0x3c] sm:$0xf]
      %v2428 = vld [vmem:[%s246 + $0x40] sm:$0xf]
      %v2429 = vld [vmem:[%s246 + $0x44] sm:$0xf]
      %v2430 = vld [vmem:[%s246 + $0x48] sm:$0xf]
      %v2431 = vld [vmem:[%s246 + $0x4c] sm:$0xf]
      %v2432 = vld [vmem:[%s246 + $0x50] sm:$0xf]
      %v2433 = vld [vmem:[%s246 + $0x54] sm:$0xf]
      %v2434 = vld [vmem:[%s246 + $0x58] sm:$0xf]
      %v2435 = vld [vmem:[%s246 + $0x5c] sm:$0xf]
      %v2436 = vld [vmem:[%s246 + $0x60] sm:$0xf]
      %v2437 = vld [vmem:[%s246 + $0x64] sm:$0xf]
      %v2438 = vld [vmem:[%s246 + $0x68] sm:$0xf]
      %v2439 = vld [vmem:[%s246 + $0x6c] sm:$0xf]
      %v2440 = vld [vmem:[%s246 + $0x70] sm:$0xf]
      %v2441 = vld [vmem:[%s246 + $0x74] sm:$0xf]
      %v2442 = vld [vmem:[%s246 + $0x78] sm:$0xf]
      %v2443 = vld [vmem:[%s246 + $0x7c] sm:$0xf]
      %v2444 = vld [vmem:[%s246 + $0x80] sm:$0xf]
      %v2445 = vld [vmem:[%s246 + $0x84] sm:$0xf]
      %v2446 = vld [vmem:[%s246 + $0x88] sm:$0xf]
      %v2447 = vld [vmem:[%s246 + $0x8c] sm:$0xf]
      %v2448 = vld [vmem:[%s246 + $0x90] sm:$0xf]
      %v2449 = vld [vmem:[%s246 + $0x94] sm:$0xf]
      %v2450 = vld [vmem:[%s246 + $0x98] sm:$0xf]
      %v2451 = vld [vmem:[%s246 + $0x9c] sm:$0x1]
      %s2452 = scalar_lea.vmem %s1, 320
      %v2453 = vld [vmem:[%s2452] sm:$0xf]
      %v2454 = vld [vmem:[%s2452 + $0x4] sm:$0xf]
      %v2455 = vld [vmem:[%s2452 + $0x8] sm:$0xf]
      %v2456 = vld [vmem:[%s2452 + $0xc] sm:$0xf]
      %v2457 = vld [vmem:[%s2452 + $0x10] sm:$0xf]
      %v2458 = vld [vmem:[%s2452 + $0x14] sm:$0xf]
      %v2459 = vld [vmem:[%s2452 + $0x18] sm:$0xf]
      %v2460 = vld [vmem:[%s2452 + $0x1c] sm:$0xf]
      %v2461 = vld [vmem:[%s2452 + $0x20] sm:$0xf]
      %v2462 = vld [vmem:[%s2452 + $0x24] sm:$0xf]
      %v2463 = vld [vmem:[%s2452 + $0x28] sm:$0xf]
      %v2464 = vld [vmem:[%s2452 + $0x2c] sm:$0xf]
      %v2465 = vld [vmem:[%s2452 + $0x30] sm:$0xf]
      %v2466 = vld [vmem:[%s2452 + $0x34] sm:$0xf]
      %v2467 = vld [vmem:[%s2452 + $0x38] sm:$0xf]
      %v2468 = vld [vmem:[%s2452 + $0x3c] sm:$0xf]
      %v2506 = vunpack.c.l.b16 %v2415
      %v2507 = vunpack.c.l.b16 %v2416
      %v2508 = vunpack.c.l.b16 %v2417
      %v2509 = vunpack.c.l.b16 %v2418
      %v2510 = vunpack.c.l.b16 %v2419
      %v2511 = vunpack.c.l.b16 %v2420
      %v2512 = vunpack.c.l.b16 %v2421
      %v2513 = vunpack.c.l.b16 %v2422
      %v2514 = vunpack.c.l.b16 %v2423
      %v2515 = vunpack.c.l.b16 %v2424
      %v2516 = vunpack.c.l.b16 %v2425
      %v2517 = vunpack.c.l.b16 %v2426
      %v2518 = vunpack.c.l.b16 %v2427
      %v2519 = vunpack.c.l.b16 %v2428
      %v2520 = vunpack.c.l.b16 %v2429
      %v2521 = vunpack.c.l.b16 %v2430
      %v2522 = vunpack.c.l.b16 %v2431
      %v2523 = vunpack.c.l.b16 %v2432
      %v2524 = vunpack.c.l.b16 %v2433
      %v2525 = vunpack.c.l.b16 %v2434
      %v2526 = vunpack.c.l.b16 %v2435
      %v2527 = vunpack.c.l.b16 %v2436
      %v2528 = vunpack.c.l.b16 %v2437
      %v2529 = vunpack.c.l.b16 %v2438
      %v2530 = vunpack.c.l.b16 %v2439
      %v2531 = vunpack.c.l.b16 %v2440
      %v2532 = vunpack.c.l.b16 %v2441
      %v2533 = vunpack.c.l.b16 %v2442
      %v2534 = vunpack.c.l.b16 %v2443
      %v2535 = vunpack.c.l.b16 %v2444
      %v2536 = vunpack.c.l.b16 %v2445
      %v2537 = vunpack.c.l.b16 %v2446
      %v2538 = vunpack.c.l.b16 %v2447
      %v2539 = vunpack.c.l.b16 %v2448
      %v2540 = vunpack.c.l.b16 %v2449
      %v2541 = vunpack.c.l.b16 %v2450
      %v2542 = vunpack.c.l.b16 %v2451
      %v2543 = vpack.c.b16 %v2507, %v2506
      %v2544 = vpack.c.b16 %v2509, %v2508
      %v2545 = vpack.c.b16 %v2511, %v2510
      %v2546 = vpack.c.b16 %v2513, %v2512
      %v2547 = vpack.c.b16 %v2515, %v2514
      %v2548 = vpack.c.b16 %v2517, %v2516
      %v2549 = vpack.c.b16 %v2519, %v2518
      %v2550 = vpack.c.b16 %v2521, %v2520
      %v2551 = vpack.c.b16 %v2523, %v2522
      %v2552 = vpack.c.b16 %v2525, %v2524
      %v2553 = vpack.c.b16 %v2527, %v2526
      %v2554 = vpack.c.b16 %v2529, %v2528
      %v2555 = vpack.c.b16 %v2531, %v2530
      %v2556 = vpack.c.b16 %v2533, %v2532
      %v2557 = vpack.c.b16 %v2535, %v2534
      %v2558 = vpack.c.b16 %v2537, %v2536
      %v2559 = vpack.c.b16 %v2539, %v2538
      %v2560 = vpack.c.b16 %v2541, %v2540
      %v2561 = vpack.c.b16 %v2542, %v2542
      %vm2562 = vsmask.f32 7424
      %v2564 = vshrl.u32 %v2543, 16
      %v2566 = vshll.u32 %v2543, 16
      %v2568 = vrot.slane %v2566, 1
      %v2569 = vor.u32 %v2564, %v2568
      %v2571 = vshll.u32 %v2544, 16
      %v2573 = vrot.slane %v2571, 1
      %v2574 = vsel %vm2562, %v2569, %v2573
      %v2575 = vshrl.u32 %v2544, 16
      %v2577 = vor.u32 %v2575, %v2573
      %v2579 = vshll.u32 %v2545, 16
      %v2581 = vrot.slane %v2579, 1
      %v2582 = vsel %vm2562, %v2577, %v2581
      %v2583 = vshrl.u32 %v2545, 16
      %v2585 = vor.u32 %v2583, %v2581
      %v2587 = vshll.u32 %v2546, 16
      %v2589 = vrot.slane %v2587, 1
      %v2590 = vsel %vm2562, %v2585, %v2589
      %v2591 = vshrl.u32 %v2546, 16
      %v2593 = vor.u32 %v2591, %v2589
      %v2595 = vshll.u32 %v2547, 16
      %v2597 = vrot.slane %v2595, 1
      %v2598 = vsel %vm2562, %v2593, %v2597
      %v2599 = vshrl.u32 %v2547, 16
      %v2601 = vor.u32 %v2599, %v2597
      %v2603 = vshll.u32 %v2548, 16
      %v2605 = vrot.slane %v2603, 1
      %v2606 = vsel %vm2562, %v2601, %v2605
      %v2607 = vshrl.u32 %v2548, 16
      %v2609 = vor.u32 %v2607, %v2605
      %v2611 = vshll.u32 %v2549, 16
      %v2613 = vrot.slane %v2611, 1
      %v2614 = vsel %vm2562, %v2609, %v2613
      %v2615 = vshrl.u32 %v2549, 16
      %v2617 = vor.u32 %v2615, %v2613
      %v2619 = vshll.u32 %v2550, 16
      %v2621 = vrot.slane %v2619, 1
      %v2622 = vsel %vm2562, %v2617, %v2621
      %v2623 = vshrl.u32 %v2550, 16
      %v2625 = vor.u32 %v2623, %v2621
      %v2627 = vshll.u32 %v2551, 16
      %v2629 = vrot.slane %v2627, 1
      %v2630 = vsel %vm2562, %v2625, %v2629
      %v2631 = vshrl.u32 %v2551, 16
      %v2633 = vor.u32 %v2631, %v2629
      %v2635 = vshll.u32 %v2552, 16
      %v2637 = vrot.slane %v2635, 1
      %v2638 = vsel %vm2562, %v2633, %v2637
      %v2639 = vshrl.u32 %v2552, 16
      %v2641 = vor.u32 %v2639, %v2637
      %v2643 = vshll.u32 %v2553, 16
      %v2645 = vrot.slane %v2643, 1
      %v2646 = vsel %vm2562, %v2641, %v2645
      %v2647 = vshrl.u32 %v2553, 16
      %v2649 = vor.u32 %v2647, %v2645
      %v2651 = vshll.u32 %v2554, 16
      %v2653 = vrot.slane %v2651, 1
      %v2654 = vsel %vm2562, %v2649, %v2653
      %v2655 = vshrl.u32 %v2554, 16
      %v2657 = vor.u32 %v2655, %v2653
      %v2659 = vshll.u32 %v2555, 16
      %v2661 = vrot.slane %v2659, 1
      %v2662 = vsel %vm2562, %v2657, %v2661
      %v2663 = vshrl.u32 %v2555, 16
      %v2665 = vor.u32 %v2663, %v2661
      %v2667 = vshll.u32 %v2556, 16
      %v2669 = vrot.slane %v2667, 1
      %v2670 = vsel %vm2562, %v2665, %v2669
      %v2671 = vshrl.u32 %v2556, 16
      %v2673 = vor.u32 %v2671, %v2669
      %v2675 = vshll.u32 %v2557, 16
      %v2677 = vrot.slane %v2675, 1
      %v2678 = vsel %vm2562, %v2673, %v2677
      %v2679 = vshrl.u32 %v2557, 16
      %v2681 = vor.u32 %v2679, %v2677
      %v2683 = vshll.u32 %v2558, 16
      %v2685 = vrot.slane %v2683, 1
      %v2686 = vsel %vm2562, %v2681, %v2685
      %v2687 = vshrl.u32 %v2558, 16
      %v2689 = vor.u32 %v2687, %v2685
      %v2691 = vshll.u32 %v2559, 16
      %v2693 = vrot.slane %v2691, 1
      %v2694 = vsel %vm2562, %v2689, %v2693
      %v2695 = vshrl.u32 %v2559, 16
      %v2697 = vor.u32 %v2695, %v2693
      %v2699 = vshll.u32 %v2560, 16
      %v2701 = vrot.slane %v2699, 1
      %v2702 = vsel %vm2562, %v2697, %v2701
      %v2703 = vshrl.u32 %v2560, 16
      %v2705 = vor.u32 %v2703, %v2701
      %v2707 = vshll.u32 %v2561, 16
      %v2709 = vrot.slane %v2707, 1
      %v2710 = vsel %vm2562, %v2705, %v2709
      %v2745 = vunpack.c.l.b16 %v2453
      %v2746 = vunpack.c.l.b16 %v2454
      %v2747 = vunpack.c.l.b16 %v2455
      %v2748 = vunpack.c.l.b16 %v2456
      %v2749 = vunpack.c.l.b16 %v2457
      %v2750 = vunpack.c.l.b16 %v2458
      %v2751 = vunpack.c.l.b16 %v2459
      %v2752 = vunpack.c.l.b16 %v2460
      %v2753 = vunpack.c.l.b16 %v2461
      %v2754 = vunpack.c.l.b16 %v2462
      %v2755 = vunpack.c.l.b16 %v2463
      %v2756 = vunpack.c.l.b16 %v2464
      %v2757 = vunpack.c.l.b16 %v2465
      %v2758 = vunpack.c.l.b16 %v2466
      %v2759 = vunpack.c.l.b16 %v2467
      %v2760 = vunpack.c.l.b16 %v2468
      %v2761 = vpack.c.b16 %v2746, %v2745
      %v2762 = vpack.c.b16 %v2748, %v2747
      %v2763 = vpack.c.b16 %v2750, %v2749
      %v2764 = vpack.c.b16 %v2752, %v2751
      %v2765 = vpack.c.b16 %v2754, %v2753
      %v2766 = vpack.c.b16 %v2756, %v2755
      %v2767 = vpack.c.b16 %v2758, %v2757
      %v2768 = vpack.c.b16 %v2760, %v2759
      %2777 = vmatprep.subr.bf16.mxu0 0
      %2778 = vmatpush1.bf16.msra.mxu0 %v2761
      %2779 = vmatprep.subr.bf16.mxu0 0
      %2780 = vmatpush1.bf16.msra.mxu0 %v2762
      %2781 = vmatprep.subr.bf16.mxu0 0
      %2782 = vmatpush1.bf16.msra.mxu0 %v2763
      %2783 = vmatprep.subr.bf16.mxu0 0
      %2784 = vmatpush1.bf16.msra.mxu0 %v2764
      %2785 = vmatprep.subr.bf16.mxu0 0
      %2786 = vmatpush1.bf16.msra.mxu0 %v2765
      %2787 = vmatprep.subr.bf16.mxu0 0
      %2788 = vmatpush1.bf16.msra.mxu0 %v2766
      %2789 = vmatprep.subr.bf16.mxu0 0
      %2790 = vmatpush1.bf16.msra.mxu0 %v2767
      %2791 = vmatprep.subr.bf16.mxu0 0
      %2792 = vmatpush1.bf16.msra.mxu0 %v2768
      %2793 = vmatprep.subr.bf16.mxu0 0
      %2794 = vmatpush1.bf16.msra.mxu0 0
      %2795 = vmatprep.subr.bf16.mxu0 0
      %2796 = vmatpush1.bf16.msra.mxu0 0
      %2797 = vmatprep.subr.bf16.mxu0 0
      %2798 = vmatpush1.bf16.msra.mxu0 0
      %2799 = vmatprep.subr.bf16.mxu0 0
      %2800 = vmatpush1.bf16.msra.mxu0 0
      %2801 = vmatprep.subr.bf16.mxu0 0
      %2802 = vmatpush1.bf16.msra.mxu0 0
      %2803 = vmatprep.subr.bf16.mxu0 0
      %2804 = vmatpush1.bf16.msra.mxu0 0
      %2805 = vmatprep.subr.bf16.mxu0 0
      %2806 = vmatpush1.bf16.msra.mxu0 0
      %2807 = vmatprep.subr.bf16.mxu0 0
      %2808 = vmatpush1.bf16.msra.mxu0 0
      %2809 = vmatprep.mubr.bf16.mxu0 0
      %2810 = vmatmul.mubr.bf16.gmra.mrb[0].mxu0 %v2574
      %v2811 = vpop.f32.mrb[0].mxu0
      %v2812 = vadd.f32 0.0, %v2811
      %v2813 = vpop.f32.mrb[0].mxu0
      %v2814 = vpop.f32.mrb[0].mxu0
      %v2815 = vadd.f32 0.0, %v2814
      %v2816 = vpop.f32.mrb[0].mxu0
      %2817 = vmatprep.mubr.bf16.mxu0 0
      %2818 = vmatmul.mubr.bf16.gmra.mrb[0].mxu0 %v2582
      %v2819 = vpop.f32.mrb[0].mxu0
      %v2820 = vadd.f32 0.0, %v2819
      %v2821 = vpop.f32.mrb[0].mxu0
      %v2822 = vpop.f32.mrb[0].mxu0
      %v2823 = vadd.f32 0.0, %v2822
      %v2824 = vpop.f32.mrb[0].mxu0
      %2825 = vmatprep.mubr.bf16.mxu0 0
      %2826 = vmatmul.mubr.bf16.gmra.mrb[0].mxu0 %v2590
      %v2827 = vpop.f32.mrb[0].mxu0
      %v2828 = vadd.f32 0.0, %v2827
      %v2829 = vpop.f32.mrb[0].mxu0
      %v2830 = vpop.f32.mrb[0].mxu0
      %v2831 = vadd.f32 0.0, %v2830
      %v2832 = vpop.f32.mrb[0].mxu0
      %2833 = vmatprep.mubr.bf16.mxu0 0
      %2834 = vmatmul.mubr.bf16.gmra.mrb[0].mxu0 %v2598
      %v2835 = vpop.f32.mrb[0].mxu0
      %v2836 = vadd.f32 0.0, %v2835
      %v2837 = vpop.f32.mrb[0].mxu0
      %v2838 = vpop.f32.mrb[0].mxu0
      %v2839 = vadd.f32 0.0, %v2838
      %v2840 = vpop.f32.mrb[0].mxu0
      %2841 = vmatprep.mubr.bf16.mxu0 0
      %2842 = vmatmul.mubr.bf16.gmra.mrb[0].mxu0 %v2606
      %v2843 = vpop.f32.mrb[0].mxu0
      %v2844 = vadd.f32 0.0, %v2843
      %v2845 = vpop.f32.mrb[0].mxu0
      %v2846 = vpop.f32.mrb[0].mxu0
      %v2847 = vadd.f32 0.0, %v2846
      %v2848 = vpop.f32.mrb[0].mxu0
      %2849 = vmatprep.mubr.bf16.mxu0 0
      %2850 = vmatmul.mubr.bf16.gmra.mrb[0].mxu0 %v2614
      %v2851 = vpop.f32.mrb[0].mxu0
      %v2852 = vadd.f32 0.0, %v2851
      %v2853 = vpop.f32.mrb[0].mxu0
      %v2854 = vpop.f32.mrb[0].mxu0
      %v2855 = vadd.f32 0.0, %v2854
      %v2856 = vpop.f32.mrb[0].mxu0
      %2857 = vmatprep.mubr.bf16.mxu0 0
      %2858 = vmatmul.mubr.bf16.gmra.mrb[0].mxu0 %v2622
      %v2859 = vpop.f32.mrb[0].mxu0
      %v2860 = vadd.f32 0.0, %v2859
      %v2861 = vpop.f32.mrb[0].mxu0
      %v2862 = vpop.f32.mrb[0].mxu0
      %v2863 = vadd.f32 0.0, %v2862
      %v2864 = vpop.f32.mrb[0].mxu0
      %2865 = vmatprep.mubr.bf16.mxu0 0
      %2866 = vmatmul.mubr.bf16.gmra.mrb[0].mxu0 %v2630
      %v2867 = vpop.f32.mrb[0].mxu0
      %v2868 = vadd.f32 0.0, %v2867
      %v2869 = vpop.f32.mrb[0].mxu0
      %v2870 = vpop.f32.mrb[0].mxu0
      %v2871 = vadd.f32 0.0, %v2870
      %v2872 = vpop.f32.mrb[0].mxu0
      %2873 = vmatprep.mubr.bf16.mxu0 0
      %2874 = vmatmul.mubr.bf16.gmra.mrb[0].mxu0 %v2638
      %v2875 = vpop.f32.mrb[0].mxu0
      %v2876 = vadd.f32 0.0, %v2875
      %v2877 = vpop.f32.mrb[0].mxu0
      %v2878 = vpop.f32.mrb[0].mxu0
      %v2879 = vadd.f32 0.0, %v2878
      %v2880 = vpop.f32.mrb[0].mxu0
      %2881 = vmatprep.mubr.bf16.mxu0 0
      %2882 = vmatmul.mubr.bf16.gmra.mrb[0].mxu0 %v2646
      %v2883 = vpop.f32.mrb[0].mxu0
      %v2884 = vadd.f32 0.0, %v2883
      %v2885 = vpop.f32.mrb[0].mxu0
      %v2886 = vpop.f32.mrb[0].mxu0
      %v2887 = vadd.f32 0.0, %v2886
      %v2888 = vpop.f32.mrb[0].mxu0
      %2889 = vmatprep.mubr.bf16.mxu0 0
      %2890 = vmatmul.mubr.bf16.gmra.mrb[0].mxu0 %v2654
      %v2891 = vpop.f32.mrb[0].mxu0
      %v2892 = vadd.f32 0.0, %v2891
      %v2893 = vpop.f32.mrb[0].mxu0
      %v2894 = vpop.f32.mrb[0].mxu0
      %v2895 = vadd.f32 0.0, %v2894
      %v2896 = vpop.f32.mrb[0].mxu0
      %2897 = vmatprep.mubr.bf16.mxu0 0
      %2898 = vmatmul.mubr.bf16.gmra.mrb[0].mxu0 %v2662
      %v2899 = vpop.f32.mrb[0].mxu0
      %v2900 = vadd.f32 0.0, %v2899
      %v2901 = vpop.f32.mrb[0].mxu0
      %v2902 = vpop.f32.mrb[0].mxu0
      %v2903 = vadd.f32 0.0, %v2902
      %v2904 = vpop.f32.mrb[0].mxu0
      %2905 = vmatprep.mubr.bf16.mxu0 0
      %2906 = vmatmul.mubr.bf16.gmra.mrb[0].mxu0 %v2670
      %v2907 = vpop.f32.mrb[0].mxu0
      %v2908 = vadd.f32 0.0, %v2907
      %v2909 = vpop.f32.mrb[0].mxu0
      %v2910 = vpop.f32.mrb[0].mxu0
      %v2911 = vadd.f32 0.0, %v2910
      %v2912 = vpop.f32.mrb[0].mxu0
      %2913 = vmatprep.mubr.bf16.mxu0 0
      %2914 = vmatmul.mubr.bf16.gmra.mrb[0].mxu0 %v2678
      %v2915 = vpop.f32.mrb[0].mxu0
      %v2916 = vadd.f32 0.0, %v2915
      %v2917 = vpop.f32.mrb[0].mxu0
      %v2918 = vpop.f32.mrb[0].mxu0
      %v2919 = vadd.f32 0.0, %v2918
      %v2920 = vpop.f32.mrb[0].mxu0
      %2921 = vmatprep.mubr.bf16.mxu0 0
      %2922 = vmatmul.mubr.bf16.gmra.mrb[0].mxu0 %v2686
      %v2923 = vpop.f32.mrb[0].mxu0
      %v2924 = vadd.f32 0.0, %v2923
      %v2925 = vpop.f32.mrb[0].mxu0
      %v2926 = vpop.f32.mrb[0].mxu0
      %v2927 = vadd.f32 0.0, %v2926
      %v2928 = vpop.f32.mrb[0].mxu0
      %2929 = vmatprep.mubr.bf16.mxu0 0
      %2930 = vmatmul.mubr.bf16.gmra.mrb[0].mxu0 %v2694
      %v2931 = vpop.f32.mrb[0].mxu0
      %v2932 = vadd.f32 0.0, %v2931
      %v2933 = vpop.f32.mrb[0].mxu0
      %v2934 = vpop.f32.mrb[0].mxu0
      %v2935 = vadd.f32 0.0, %v2934
      %v2936 = vpop.f32.mrb[0].mxu0
      %2937 = vmatprep.mubr.bf16.mxu0 0
      %2938 = vmatmul.mubr.bf16.gmra.mrb[0].mxu0 %v2702
      %v2939 = vpop.f32.mrb[0].mxu0
      %v2940 = vadd.f32 0.0, %v2939
      %v2941 = vpop.f32.mrb[0].mxu0
      %v2942 = vpop.f32.mrb[0].mxu0
      %v2943 = vadd.f32 0.0, %v2942
      %v2944 = vpop.f32.mrb[0].mxu0
      %2945 = vmatprep.mubr.bf16.mxu0 0
      %2946 = vmatmul.mubr.bf16.gmra.mrb[0].mxu0 %v2710
      %v2947 = vpop.f32.mrb[0].mxu0
      %v2948 = vadd.f32 0.0, %v2947
      %v2949 = vpop.f32.mrb[0].mxu0
      %v2950 = vpop.f32.mrb[0].mxu0
      %v2951 = vadd.f32 0.0, %v2950
      %v2952 = vpop.f32.mrb[0].mxu0
      %2953 = vdwg.mxu0
      %v2954 = vadd.f32 %v2379, %v2812
      %v2955 = vadd.f32 %v2380, %v2815
      %v2956 = vadd.f32 %v2381, %v2820
      %v2957 = vadd.f32 %v2382, %v2823
      %v2958 = vadd.f32 %v2383, %v2828
      %v2959 = vadd.f32 %v2384, %v2831
      %v2960 = vadd.f32 %v2385, %v2836
      %v2961 = vadd.f32 %v2386, %v2839
      %v2962 = vadd.f32 %v2387, %v2844
      %v2963 = vadd.f32 %v2388, %v2847
      %v2964 = vadd.f32 %v2389, %v2852
      %v2965 = vadd.f32 %v2390, %v2855
      %v2966 = vadd.f32 %v2391, %v2860
      %v2967 = vadd.f32 %v2392, %v2863
      %v2968 = vadd.f32 %v2393, %v2868
      %v2969 = vadd.f32 %v2394, %v2871
      %v2970 = vadd.f32 %v2395, %v2876
      %v2971 = vadd.f32 %v2396, %v2879
      %v2972 = vadd.f32 %v2397, %v2884
      %v2973 = vadd.f32 %v2398, %v2887
      %v2974 = vadd.f32 %v2399, %v2892
      %v2975 = vadd.f32 %v2400, %v2895
      %v2976 = vadd.f32 %v2401, %v2900
      %v2977 = vadd.f32 %v2402, %v2903
      %v2978 = vadd.f32 %v2403, %v2908
      %v2979 = vadd.f32 %v2404, %v2911
      %v2980 = vadd.f32 %v2405, %v2916
      %v2981 = vadd.f32 %v2406, %v2919
      %v2982 = vadd.f32 %v2407, %v2924
      %v2983 = vadd.f32 %v2408, %v2927
      %v2984 = vadd.f32 %v2409, %v2932
      %v2985 = vadd.f32 %v2410, %v2935
      %v2986 = vadd.f32 %v2411, %v2940
      %v2987 = vadd.f32 %v2412, %v2943
      %v2988 = vadd.f32 %v2413, %v2948
      %v2989 = vadd.f32 %v2414, %v2951
      %v2990 = vld [vmem:[%s246 + $0x14] sm:$0xf]
      %v2991 = vld [vmem:[%s246 + $0x18] sm:$0xf]
      %v2992 = vld [vmem:[%s246 + $0x1c] sm:$0xf]
      %v2993 = vld [vmem:[%s246 + $0x20] sm:$0xf]
      %v2994 = vld [vmem:[%s246 + $0x24] sm:$0xf]
      %v2995 = vld [vmem:[%s246 + $0x28] sm:$0xf]
      %v2996 = vld [vmem:[%s246 + $0x2c] sm:$0xf]
      %v2997 = vld [vmem:[%s246 + $0x30] sm:$0xf]
      %v2998 = vld [vmem:[%s246 + $0x34] sm:$0xf]
      %v2999 = vld [vmem:[%s246 + $0x38] sm:$0xf]
      %v3000 = vld [vmem:[%s246 + $0x3c] sm:$0xf]
      %v3001 = vld [vmem:[%s246 + $0x40] sm:$0xf]
      %v3002 = vld [vmem:[%s246 + $0x44] sm:$0xf]
      %v3003 = vld [vmem:[%s246 + $0x48] sm:$0xf]
      %v3004 = vld [vmem:[%s246 + $0x4c] sm:$0xf]
      %v3005 = vld [vmem:[%s246 + $0x50] sm:$0xf]
      %v3006 = vld [vmem:[%s246 + $0x54] sm:$0xf]
      %v3007 = vld [vmem:[%s246 + $0x58] sm:$0xf]
      %v3008 = vld [vmem:[%s246 + $0x5c] sm:$0xf]
      %v3009 = vld [vmem:[%s246 + $0x60] sm:$0xf]
      %v3010 = vld [vmem:[%s246 + $0x64] sm:$0xf]
      %v3011 = vld [vmem:[%s246 + $0x68] sm:$0xf]
      %v3012 = vld [vmem:[%s246 + $0x6c] sm:$0xf]
      %v3013 = vld [vmem:[%s246 + $0x70] sm:$0xf]
      %v3014 = vld [vmem:[%s246 + $0x74] sm:$0xf]
      %v3015 = vld [vmem:[%s246 + $0x78] sm:$0xf]
      %v3016 = vld [vmem:[%s246 + $0x7c] sm:$0xf]
      %v3017 = vld [vmem:[%s246 + $0x80] sm:$0xf]
      %v3018 = vld [vmem:[%s246 + $0x84] sm:$0xf]
      %v3019 = vld [vmem:[%s246 + $0x88] sm:$0xf]
      %v3020 = vld [vmem:[%s246 + $0x8c] sm:$0xf]
      %v3021 = vld [vmem:[%s246 + $0x90] sm:$0xf]
      %v3022 = vld [vmem:[%s246 + $0x94] sm:$0xf]
      %v3023 = vld [vmem:[%s246 + $0x98] sm:$0xf]
      %v3024 = vld [vmem:[%s246 + $0x9c] sm:$0xf]
      %v3025 = vld [vmem:[%s246 + $0xa0] sm:$0xf]
      %v3026 = vld [vmem:[%s246 + $0xa4] sm:$0x1]
      %s3027 = scalar_lea.vmem %s1, 384
      %v3028 = vld [vmem:[%s3027] sm:$0xf]
      %v3029 = vld [vmem:[%s3027 + $0x4] sm:$0xf]
      %v3030 = vld [vmem:[%s3027 + $0x8] sm:$0xf]
      %v3031 = vld [vmem:[%s3027 + $0xc] sm:$0xf]
      %v3032 = vld [vmem:[%s3027 + $0x10] sm:$0xf]
      %v3033 = vld [vmem:[%s3027 + $0x14] sm:$0xf]
      %v3034 = vld [vmem:[%s3027 + $0x18] sm:$0xf]
      %v3035 = vld [vmem:[%s3027 + $0x1c] sm:$0xf]
      %v3036 = vld [vmem:[%s3027 + $0x20] sm:$0xf]
      %v3037 = vld [vmem:[%s3027 + $0x24] sm:$0xf]
      %v3038 = vld [vmem:[%s3027 + $0x28] sm:$0xf]
      %v3039 = vld [vmem:[%s3027 + $0x2c] sm:$0xf]
      %v3040 = vld [vmem:[%s3027 + $0x30] sm:$0xf]
      %v3041 = vld [vmem:[%s3027 + $0x34] sm:$0xf]
      %v3042 = vld [vmem:[%s3027 + $0x38] sm:$0xf]
      %v3043 = vld [vmem:[%s3027 + $0x3c] sm:$0xf]
      %v3081 = vunpack.c.l.b16 %v2990
      %v3082 = vunpack.c.l.b16 %v2991
      %v3083 = vunpack.c.l.b16 %v2992
      %v3084 = vunpack.c.l.b16 %v2993
      %v3085 = vunpack.c.l.b16 %v2994
      %v3086 = vunpack.c.l.b16 %v2995
      %v3087 = vunpack.c.l.b16 %v2996
      %v3088 = vunpack.c.l.b16 %v2997
      %v3089 = vunpack.c.l.b16 %v2998
      %v3090 = vunpack.c.l.b16 %v2999
      %v3091 = vunpack.c.l.b16 %v3000
      %v3092 = vunpack.c.l.b16 %v3001
      %v3093 = vunpack.c.l.b16 %v3002
      %v3094 = vunpack.c.l.b16 %v3003
      %v3095 = vunpack.c.l.b16 %v3004
      %v3096 = vunpack.c.l.b16 %v3005
      %v3097 = vunpack.c.l.b16 %v3006
      %v3098 = vunpack.c.l.b16 %v3007
      %v3099 = vunpack.c.l.b16 %v3008
      %v3100 = vunpack.c.l.b16 %v3009
      %v3101 = vunpack.c.l.b16 %v3010
      %v3102 = vunpack.c.l.b16 %v3011
      %v3103 = vunpack.c.l.b16 %v3012
      %v3104 = vunpack.c.l.b16 %v3013
      %v3105 = vunpack.c.l.b16 %v3014
      %v3106 = vunpack.c.l.b16 %v3015
      %v3107 = vunpack.c.l.b16 %v3016
      %v3108 = vunpack.c.l.b16 %v3017
      %v3109 = vunpack.c.l.b16 %v3018
      %v3110 = vunpack.c.l.b16 %v3019
      %v3111 = vunpack.c.l.b16 %v3020
      %v3112 = vunpack.c.l.b16 %v3021
      %v3113 = vunpack.c.l.b16 %v3022
      %v3114 = vunpack.c.l.b16 %v3023
      %v3115 = vunpack.c.l.b16 %v3024
      %v3116 = vunpack.c.l.b16 %v3025
      %v3117 = vunpack.c.l.b16 %v3026
      %v3118 = vpack.c.b16 %v3082, %v3081
      %v3119 = vpack.c.b16 %v3084, %v3083
      %v3120 = vpack.c.b16 %v3086, %v3085
      %v3121 = vpack.c.b16 %v3088, %v3087
      %v3122 = vpack.c.b16 %v3090, %v3089
      %v3123 = vpack.c.b16 %v3092, %v3091
      %v3124 = vpack.c.b16 %v3094, %v3093
      %v3125 = vpack.c.b16 %v3096, %v3095
      %v3126 = vpack.c.b16 %v3098, %v3097
      %v3127 = vpack.c.b16 %v3100, %v3099
      %v3128 = vpack.c.b16 %v3102, %v3101
      %v3129 = vpack.c.b16 %v3104, %v3103
      %v3130 = vpack.c.b16 %v3106, %v3105
      %v3131 = vpack.c.b16 %v3108, %v3107
      %v3132 = vpack.c.b16 %v3110, %v3109
      %v3133 = vpack.c.b16 %v3112, %v3111
      %v3134 = vpack.c.b16 %v3114, %v3113
      %v3135 = vpack.c.b16 %v3116, %v3115
      %v3136 = vpack.c.b16 %v3117, %v3117
      %v3138 = vshrl.u32 %v3118, 16
      %v3140 = vshll.u32 %v3118, 16
      %v3142 = vrot.slane %v3140, 1
      %v3143 = vor.u32 %v3138, %v3142
      %v3145 = vshll.u32 %v3119, 16
      %v3147 = vrot.slane %v3145, 1
      %v3148 = vsel %vm2562, %v3143, %v3147
      %v3149 = vshrl.u32 %v3119, 16
      %v3151 = vor.u32 %v3149, %v3147
      %v3153 = vshll.u32 %v3120, 16
      %v3155 = vrot.slane %v3153, 1
      %v3156 = vsel %vm2562, %v3151, %v3155
      %v3157 = vshrl.u32 %v3120, 16
      %v3159 = vor.u32 %v3157, %v3155
      %v3161 = vshll.u32 %v3121, 16
      %v3163 = vrot.slane %v3161, 1
      %v3164 = vsel %vm2562, %v3159, %v3163
      %v3165 = vshrl.u32 %v3121, 16
      %v3167 = vor.u32 %v3165, %v3163
      %v3169 = vshll.u32 %v3122, 16
      %v3171 = vrot.slane %v3169, 1
      %v3172 = vsel %vm2562, %v3167, %v3171
      %v3173 = vshrl.u32 %v3122, 16
      %v3175 = vor.u32 %v3173, %v3171
      %v3177 = vshll.u32 %v3123, 16
      %v3179 = vrot.slane %v3177, 1
      %v3180 = vsel %vm2562, %v3175, %v3179
      %v3181 = vshrl.u32 %v3123, 16
      %v3183 = vor.u32 %v3181, %v3179
      %v3185 = vshll.u32 %v3124, 16
      %v3187 = vrot.slane %v3185, 1
      %v3188 = vsel %vm2562, %v3183, %v3187
      %v3189 = vshrl.u32 %v3124, 16
      %v3191 = vor.u32 %v3189, %v3187
      %v3193 = vshll.u32 %v3125, 16
      %v3195 = vrot.slane %v3193, 1
      %v3196 = vsel %vm2562, %v3191, %v3195
      %v3197 = vshrl.u32 %v3125, 16
      %v3199 = vor.u32 %v3197, %v3195
      %v3201 = vshll.u32 %v3126, 16
      %v3203 = vrot.slane %v3201, 1
      %v3204 = vsel %vm2562, %v3199, %v3203
      %v3205 = vshrl.u32 %v3126, 16
      %v3207 = vor.u32 %v3205, %v3203
      %v3209 = vshll.u32 %v3127, 16
      %v3211 = vrot.slane %v3209, 1
      %v3212 = vsel %vm2562, %v3207, %v3211
      %v3213 = vshrl.u32 %v3127, 16
      %v3215 = vor.u32 %v3213, %v3211
      %v3217 = vshll.u32 %v3128, 16
      %v3219 = vrot.slane %v3217, 1
      %v3220 = vsel %vm2562, %v3215, %v3219
      %v3221 = vshrl.u32 %v3128, 16
      %v3223 = vor.u32 %v3221, %v3219
      %v3225 = vshll.u32 %v3129, 16
      %v3227 = vrot.slane %v3225, 1
      %v3228 = vsel %vm2562, %v3223, %v3227
      %v3229 = vshrl.u32 %v3129, 16
      %v3231 = vor.u32 %v3229, %v3227
      %v3233 = vshll.u32 %v3130, 16
      %v3235 = vrot.slane %v3233, 1
      %v3236 = vsel %vm2562, %v3231, %v3235
      %v3237 = vshrl.u32 %v3130, 16
      %v3239 = vor.u32 %v3237, %v3235
      %v3241 = vshll.u32 %v3131, 16
      %v3243 = vrot.slane %v3241, 1
      %v3244 = vsel %vm2562, %v3239, %v3243
      %v3245 = vshrl.u32 %v3131, 16
      %v3247 = vor.u32 %v3245, %v3243
      %v3249 = vshll.u32 %v3132, 16
      %v3251 = vrot.slane %v3249, 1
      %v3252 = vsel %vm2562, %v3247, %v3251
      %v3253 = vshrl.u32 %v3132, 16
      %v3255 = vor.u32 %v3253, %v3251
      %v3257 = vshll.u32 %v3133, 16
      %v3259 = vrot.slane %v3257, 1
      %v3260 = vsel %vm2562, %v3255, %v3259
      %v3261 = vshrl.u32 %v3133, 16
      %v3263 = vor.u32 %v3261, %v3259
      %v3265 = vshll.u32 %v3134, 16
      %v3267 = vrot.slane %v3265, 1
      %v3268 = vsel %vm2562, %v3263, %v3267
      %v3269 = vshrl.u32 %v3134, 16
      %v3271 = vor.u32 %v3269, %v3267
      %v3273 = vshll.u32 %v3135, 16
      %v3275 = vrot.slane %v3273, 1
      %v3276 = vsel %vm2562, %v3271, %v3275
      %v3277 = vshrl.u32 %v3135, 16
      %v3279 = vor.u32 %v3277, %v3275
      %v3281 = vshll.u32 %v3136, 16
      %v3283 = vrot.slane %v3281, 1
      %v3284 = vsel %vm2562, %v3279, %v3283
      %v3319 = vunpack.c.l.b16 %v3028
      %v3320 = vunpack.c.l.b16 %v3029
      %v3321 = vunpack.c.l.b16 %v3030
      %v3322 = vunpack.c.l.b16 %v3031
      %v3323 = vunpack.c.l.b16 %v3032
      %v3324 = vunpack.c.l.b16 %v3033
      %v3325 = vunpack.c.l.b16 %v3034
      %v3326 = vunpack.c.l.b16 %v3035
      %v3327 = vunpack.c.l.b16 %v3036
      %v3328 = vunpack.c.l.b16 %v3037
      %v3329 = vunpack.c.l.b16 %v3038
      %v3330 = vunpack.c.l.b16 %v3039
      %v3331 = vunpack.c.l.b16 %v3040
      %v3332 = vunpack.c.l.b16 %v3041
      %v3333 = vunpack.c.l.b16 %v3042
      %v3334 = vunpack.c.l.b16 %v3043
      %v3335 = vpack.c.b16 %v3320, %v3319
      %v3336 = vpack.c.b16 %v3322, %v3321
      %v3337 = vpack.c.b16 %v3324, %v3323
      %v3338 = vpack.c.b16 %v3326, %v3325
      %v3339 = vpack.c.b16 %v3328, %v3327
      %v3340 = vpack.c.b16 %v3330, %v3329
      %v3341 = vpack.c.b16 %v3332, %v3331
      %v3342 = vpack.c.b16 %v3334, %v3333
      %3351 = vmatprep.subr.bf16.mxu0 0
      %3352 = vmatpush1.bf16.msra.mxu0 %v3335
      %3353 = vmatprep.subr.bf16.mxu0 0
      %3354 = vmatpush1.bf16.msra.mxu0 %v3336
      %3355 = vmatprep.subr.bf16.mxu0 0
      %3356 = vmatpush1.bf16.msra.mxu0 %v3337
      %3357 = vmatprep.subr.bf16.mxu0 0
      %3358 = vmatpush1.bf16.msra.mxu0 %v3338
      %3359 = vmatprep.subr.bf16.mxu0 0
      %3360 = vmatpush1.bf16.msra.mxu0 %v3339
      %3361 = vmatprep.subr.bf16.mxu0 0
      %3362 = vmatpush1.bf16.msra.mxu0 %v3340
      %3363 = vmatprep.subr.bf16.mxu0 0
      %3364 = vmatpush1.bf16.msra.mxu0 %v3341
      %3365 = vmatprep.subr.bf16.mxu0 0
      %3366 = vmatpush1.bf16.msra.mxu0 %v3342
      %3367 = vmatprep.subr.bf16.mxu0 0
      %3368 = vmatpush1.bf16.msra.mxu0 0
      %3369 = vmatprep.subr.bf16.mxu0 0
      %3370 = vmatpush1.bf16.msra.mxu0 0
      %3371 = vmatprep.subr.bf16.mxu0 0
      %3372 = vmatpush1.bf16.msra.mxu0 0
      %3373 = vmatprep.subr.bf16.mxu0 0
      %3374 = vmatpush1.bf16.msra.mxu0 0
      %3375 = vmatprep.subr.bf16.mxu0 0
      %3376 = vmatpush1.bf16.msra.mxu0 0
      %3377 = vmatprep.subr.bf16.mxu0 0
      %3378 = vmatpush1.bf16.msra.mxu0 0
      %3379 = vmatprep.subr.bf16.mxu0 0
      %3380 = vmatpush1.bf16.msra.mxu0 0
      %3381 = vmatprep.subr.bf16.mxu0 0
      %3382 = vmatpush1.bf16.msra.mxu0 0
      %3383 = vmatprep.mubr.bf16.mxu0 0
      %3384 = vmatmul.mubr.bf16.gmra.mrb[0].mxu0 %v3148
      %v3385 = vpop.f32.mrb[0].mxu0
      %v3386 = vadd.f32 0.0, %v3385
      %v3387 = vpop.f32.mrb[0].mxu0
      %v3388 = vpop.f32.mrb[0].mxu0
      %v3389 = vadd.f32 0.0, %v3388
      %v3390 = vpop.f32.mrb[0].mxu0
      %3391 = vmatprep.mubr.bf16.mxu0 0
      %3392 = vmatmul.mubr.bf16.gmra.mrb[0].mxu0 %v3156
      %v3393 = vpop.f32.mrb[0].mxu0
      %v3394 = vadd.f32 0.0, %v3393
      %v3395 = vpop.f32.mrb[0].mxu0
      %v3396 = vpop.f32.mrb[0].mxu0
      %v3397 = vadd.f32 0.0, %v3396
      %v3398 = vpop.f32.mrb[0].mxu0
      %3399 = vmatprep.mubr.bf16.mxu0 0
      %3400 = vmatmul.mubr.bf16.gmra.mrb[0].mxu0 %v3164
      %v3401 = vpop.f32.mrb[0].mxu0
      %v3402 = vadd.f32 0.0, %v3401
      %v3403 = vpop.f32.mrb[0].mxu0
      %v3404 = vpop.f32.mrb[0].mxu0
      %v3405 = vadd.f32 0.0, %v3404
      %v3406 = vpop.f32.mrb[0].mxu0
      %3407 = vmatprep.mubr.bf16.mxu0 0
      %3408 = vmatmul.mubr.bf16.gmra.mrb[0].mxu0 %v3172
      %v3409 = vpop.f32.mrb[0].mxu0
      %v3410 = vadd.f32 0.0, %v3409
      %v3411 = vpop.f32.mrb[0].mxu0
      %v3412 = vpop.f32.mrb[0].mxu0
      %v3413 = vadd.f32 0.0, %v3412
      %v3414 = vpop.f32.mrb[0].mxu0
      %3415 = vmatprep.mubr.bf16.mxu0 0
      %3416 = vmatmul.mubr.bf16.gmra.mrb[0].mxu0 %v3180
      %v3417 = vpop.f32.mrb[0].mxu0
      %v3418 = vadd.f32 0.0, %v3417
      %v3419 = vpop.f32.mrb[0].mxu0
      %v3420 = vpop.f32.mrb[0].mxu0
      %v3421 = vadd.f32 0.0, %v3420
      %v3422 = vpop.f32.mrb[0].mxu0
      %3423 = vmatprep.mubr.bf16.mxu0 0
      %3424 = vmatmul.mubr.bf16.gmra.mrb[0].mxu0 %v3188
      %v3425 = vpop.f32.mrb[0].mxu0
      %v3426 = vadd.f32 0.0, %v3425
      %v3427 = vpop.f32.mrb[0].mxu0
      %v3428 = vpop.f32.mrb[0].mxu0
      %v3429 = vadd.f32 0.0, %v3428
      %v3430 = vpop.f32.mrb[0].mxu0
      %3431 = vmatprep.mubr.bf16.mxu0 0
      %3432 = vmatmul.mubr.bf16.gmra.mrb[0].mxu0 %v3196
      %v3433 = vpop.f32.mrb[0].mxu0
      %v3434 = vadd.f32 0.0, %v3433
      %v3435 = vpop.f32.mrb[0].mxu0
      %v3436 = vpop.f32.mrb[0].mxu0
      %v3437 = vadd.f32 0.0, %v3436
      %v3438 = vpop.f32.mrb[0].mxu0
      %3439 = vmatprep.mubr.bf16.mxu0 0
      %3440 = vmatmul.mubr.bf16.gmra.mrb[0].mxu0 %v3204
      %v3441 = vpop.f32.mrb[0].mxu0
      %v3442 = vadd.f32 0.0, %v3441
      %v3443 = vpop.f32.mrb[0].mxu0
      %v3444 = vpop.f32.mrb[0].mxu0
      %v3445 = vadd.f32 0.0, %v3444
      %v3446 = vpop.f32.mrb[0].mxu0
      %3447 = vmatprep.mubr.bf16.mxu0 0
      %3448 = vmatmul.mubr.bf16.gmra.mrb[0].mxu0 %v3212
      %v3449 = vpop.f32.mrb[0].mxu0
      %v3450 = vadd.f32 0.0, %v3449
      %v3451 = vpop.f32.mrb[0].mxu0
      %v3452 = vpop.f32.mrb[0].mxu0
      %v3453 = vadd.f32 0.0, %v3452
      %v3454 = vpop.f32.mrb[0].mxu0
      %3455 = vmatprep.mubr.bf16.mxu0 0
      %3456 = vmatmul.mubr.bf16.gmra.mrb[0].mxu0 %v3220
      %v3457 = vpop.f32.mrb[0].mxu0
      %v3458 = vadd.f32 0.0, %v3457
      %v3459 = vpop.f32.mrb[0].mxu0
      %v3460 = vpop.f32.mrb[0].mxu0
      %v3461 = vadd.f32 0.0, %v3460
      %v3462 = vpop.f32.mrb[0].mxu0
      %3463 = vmatprep.mubr.bf16.mxu0 0
      %3464 = vmatmul.mubr.bf16.gmra.mrb[0].mxu0 %v3228
      %v3465 = vpop.f32.mrb[0].mxu0
      %v3466 = vadd.f32 0.0, %v3465
      %v3467 = vpop.f32.mrb[0].mxu0
      %v3468 = vpop.f32.mrb[0].mxu0
      %v3469 = vadd.f32 0.0, %v3468
      %v3470 = vpop.f32.mrb[0].mxu0
      %3471 = vmatprep.mubr.bf16.mxu0 0
      %3472 = vmatmul.mubr.bf16.gmra.mrb[0].mxu0 %v3236
      %v3473 = vpop.f32.mrb[0].mxu0
      %v3474 = vadd.f32 0.0, %v3473
      %v3475 = vpop.f32.mrb[0].mxu0
      %v3476 = vpop.f32.mrb[0].mxu0
      %v3477 = vadd.f32 0.0, %v3476
      %v3478 = vpop.f32.mrb[0].mxu0
      %3479 = vmatprep.mubr.bf16.mxu0 0
      %3480 = vmatmul.mubr.bf16.gmra.mrb[0].mxu0 %v3244
      %v3481 = vpop.f32.mrb[0].mxu0
      %v3482 = vadd.f32 0.0, %v3481
      %v3483 = vpop.f32.mrb[0].mxu0
      %v3484 = vpop.f32.mrb[0].mxu0
      %v3485 = vadd.f32 0.0, %v3484
      %v3486 = vpop.f32.mrb[0].mxu0
      %3487 = vmatprep.mubr.bf16.mxu0 0
      %3488 = vmatmul.mubr.bf16.gmra.mrb[0].mxu0 %v3252
      %v3489 = vpop.f32.mrb[0].mxu0
      %v3490 = vadd.f32 0.0, %v3489
      %v3491 = vpop.f32.mrb[0].mxu0
      %v3492 = vpop.f32.mrb[0].mxu0
      %v3493 = vadd.f32 0.0, %v3492
      %v3494 = vpop.f32.mrb[0].mxu0
      %3495 = vmatprep.mubr.bf16.mxu0 0
      %3496 = vmatmul.mubr.bf16.gmra.mrb[0].mxu0 %v3260
      %v3497 = vpop.f32.mrb[0].mxu0
      %v3498 = vadd.f32 0.0, %v3497
      %v3499 = vpop.f32.mrb[0].mxu0
      %v3500 = vpop.f32.mrb[0].mxu0
      %v3501 = vadd.f32 0.0, %v3500
      %v3502 = vpop.f32.mrb[0].mxu0
      %3503 = vmatprep.mubr.bf16.mxu0 0
      %3504 = vmatmul.mubr.bf16.gmra.mrb[0].mxu0 %v3268
      %v3505 = vpop.f32.mrb[0].mxu0
      %v3506 = vadd.f32 0.0, %v3505
      %v3507 = vpop.f32.mrb[0].mxu0
      %v3508 = vpop.f32.mrb[0].mxu0
      %v3509 = vadd.f32 0.0, %v3508
      %v3510 = vpop.f32.mrb[0].mxu0
      %3511 = vmatprep.mubr.bf16.mxu0 0
      %3512 = vmatmul.mubr.bf16.gmra.mrb[0].mxu0 %v3276
      %v3513 = vpop.f32.mrb[0].mxu0
      %v3514 = vadd.f32 0.0, %v3513
      %v3515 = vpop.f32.mrb[0].mxu0
      %v3516 = vpop.f32.mrb[0].mxu0
      %v3517 = vadd.f32 0.0, %v3516
      %v3518 = vpop.f32.mrb[0].mxu0
      %3519 = vmatprep.mubr.bf16.mxu0 0
      %3520 = vmatmul.mubr.bf16.gmra.mrb[0].mxu0 %v3284
      %v3521 = vpop.f32.mrb[0].mxu0
      %v3522 = vadd.f32 0.0, %v3521
      %v3523 = vpop.f32.mrb[0].mxu0
      %v3524 = vpop.f32.mrb[0].mxu0
      %v3525 = vadd.f32 0.0, %v3524
      %v3526 = vpop.f32.mrb[0].mxu0
      %3527 = vdwg.mxu0
      %v3528 = vadd.f32 %v2954, %v3386
      %v3529 = vadd.f32 %v2955, %v3389
      %v3530 = vadd.f32 %v2956, %v3394
      %v3531 = vadd.f32 %v2957, %v3397
      %v3532 = vadd.f32 %v2958, %v3402
      %v3533 = vadd.f32 %v2959, %v3405
      %v3534 = vadd.f32 %v2960, %v3410
      %v3535 = vadd.f32 %v2961, %v3413
      %v3536 = vadd.f32 %v2962, %v3418
      %v3537 = vadd.f32 %v2963, %v3421
      %v3538 = vadd.f32 %v2964, %v3426
      %v3539 = vadd.f32 %v2965, %v3429
      %v3540 = vadd.f32 %v2966, %v3434
      %v3541 = vadd.f32 %v2967, %v3437
      %v3542 = vadd.f32 %v2968, %v3442
      %v3543 = vadd.f32 %v2969, %v3445
      %v3544 = vadd.f32 %v2970, %v3450
      %v3545 = vadd.f32 %v2971, %v3453
      %v3546 = vadd.f32 %v2972, %v3458
      %v3547 = vadd.f32 %v2973, %v3461
      %v3548 = vadd.f32 %v2974, %v3466
      %v3549 = vadd.f32 %v2975, %v3469
      %v3550 = vadd.f32 %v2976, %v3474
      %v3551 = vadd.f32 %v2977, %v3477
      %v3552 = vadd.f32 %v2978, %v3482
      %v3553 = vadd.f32 %v2979, %v3485
      %v3554 = vadd.f32 %v2980, %v3490
      %v3555 = vadd.f32 %v2981, %v3493
      %v3556 = vadd.f32 %v2982, %v3498
      %v3557 = vadd.f32 %v2983, %v3501
      %v3558 = vadd.f32 %v2984, %v3506
      %v3559 = vadd.f32 %v2985, %v3509
      %v3560 = vadd.f32 %v2986, %v3514
      %v3561 = vadd.f32 %v2987, %v3517
      %v3562 = vadd.f32 %v2988, %v3522
      %v3563 = vadd.f32 %v2989, %v3525
      %v3564 = vld [vmem:[%s246 + $0x14] sm:$0xe]
      %s3565 = scalar_lea.vmem %s1, 448
      %v3566 = vld [vmem:[%s3565] sm:$0xf]
      %v3567 = vld [vmem:[%s3565 + $0x4] sm:$0xf]
      %v3568 = vld [vmem:[%s3565 + $0x8] sm:$0xf]
      %v3569 = vld [vmem:[%s3565 + $0xc] sm:$0xf]
      %v3570 = vld [vmem:[%s3565 + $0x10] sm:$0xf]
      %v3571 = vld [vmem:[%s3565 + $0x14] sm:$0xf]
      %v3572 = vld [vmem:[%s3565 + $0x18] sm:$0xf]
      %v3573 = vld [vmem:[%s3565 + $0x1c] sm:$0xf]
      %v3574 = vld [vmem:[%s3565 + $0x20] sm:$0xf]
      %v3575 = vld [vmem:[%s3565 + $0x24] sm:$0xf]
      %v3576 = vld [vmem:[%s3565 + $0x28] sm:$0xf]
      %v3577 = vld [vmem:[%s3565 + $0x2c] sm:$0xf]
      %v3578 = vld [vmem:[%s3565 + $0x30] sm:$0xf]
      %v3579 = vld [vmem:[%s3565 + $0x34] sm:$0xf]
      %v3580 = vld [vmem:[%s3565 + $0x38] sm:$0xf]
      %v3581 = vld [vmem:[%s3565 + $0x3c] sm:$0xf]
      %v3583 = vunpack.c.l.b16 %v3564
      %v3584 = vpack.c.b16 %v3082, %v3583
      %vm3585 = vcmask 1046528
      %v3586 = vrot.slane %v3584, 1
      %v3587 = vrot.slane %v3119, 1
      %v3588 = vsel %vm3585, %v3586, %v3587
      %v3589 = vrot.slane %v3120, 1
      %v3590 = vsel %vm3585, %v3587, %v3589
      %v3591 = vrot.slane %v3121, 1
      %v3592 = vsel %vm3585, %v3589, %v3591
      %v3593 = vrot.slane %v3122, 1
      %v3594 = vsel %vm3585, %v3591, %v3593
      %v3595 = vrot.slane %v3123, 1
      %v3596 = vsel %vm3585, %v3593, %v3595
      %v3597 = vrot.slane %v3124, 1
      %v3598 = vsel %vm3585, %v3595, %v3597
      %v3599 = vrot.slane %v3125, 1
      %v3600 = vsel %vm3585, %v3597, %v3599
      %v3601 = vrot.slane %v3126, 1
      %v3602 = vsel %vm3585, %v3599, %v3601
      %v3603 = vrot.slane %v3127, 1
      %v3604 = vsel %vm3585, %v3601, %v3603
      %v3605 = vrot.slane %v3128, 1
      %v3606 = vsel %vm3585, %v3603, %v3605
      %v3607 = vrot.slane %v3129, 1
      %v3608 = vsel %vm3585, %v3605, %v3607
      %v3609 = vrot.slane %v3130, 1
      %v3610 = vsel %vm3585, %v3607, %v3609
      %v3611 = vrot.slane %v3131, 1
      %v3612 = vsel %vm3585, %v3609, %v3611
      %v3613 = vrot.slane %v3132, 1
      %v3614 = vsel %vm3585, %v3611, %v3613
      %v3615 = vrot.slane %v3133, 1
      %v3616 = vsel %vm3585, %v3613, %v3615
      %v3617 = vrot.slane %v3134, 1
      %v3618 = vsel %vm3585, %v3615, %v3617
      %v3619 = vrot.slane %v3135, 1
      %v3620 = vsel %vm3585, %v3617, %v3619
      %v3621 = vrot.slane %v3136, 1
      %v3622 = vsel %vm3585, %v3619, %v3621
      %v3657 = vunpack.c.l.b16 %v3566
      %v3658 = vunpack.c.l.b16 %v3567
      %v3659 = vunpack.c.l.b16 %v3568
      %v3660 = vunpack.c.l.b16 %v3569
      %v3661 = vunpack.c.l.b16 %v3570
      %v3662 = vunpack.c.l.b16 %v3571
      %v3663 = vunpack.c.l.b16 %v3572
      %v3664 = vunpack.c.l.b16 %v3573
      %v3665 = vunpack.c.l.b16 %v3574
      %v3666 = vunpack.c.l.b16 %v3575
      %v3667 = vunpack.c.l.b16 %v3576
      %v3668 = vunpack.c.l.b16 %v3577
      %v3669 = vunpack.c.l.b16 %v3578
      %v3670 = vunpack.c.l.b16 %v3579
      %v3671 = vunpack.c.l.b16 %v3580
      %v3672 = vunpack.c.l.b16 %v3581
      %v3673 = vpack.c.b16 %v3658, %v3657
      %v3674 = vpack.c.b16 %v3660, %v3659
      %v3675 = vpack.c.b16 %v3662, %v3661
      %v3676 = vpack.c.b16 %v3664, %v3663
      %v3677 = vpack.c.b16 %v3666, %v3665
      %v3678 = vpack.c.b16 %v3668, %v3667
      %v3679 = vpack.c.b16 %v3670, %v3669
      %v3680 = vpack.c.b16 %v3672, %v3671
      %3689 = vmatprep.subr.bf16.mxu0 0
      %3690 = vmatpush1.bf16.msra.mxu0 %v3673
      %3691 = vmatprep.subr.bf16.mxu0 0
      %3692 = vmatpush1.bf16.msra.mxu0 %v3674
      %3693 = vmatprep.subr.bf16.mxu0 0
      %3694 = vmatpush1.bf16.msra.mxu0 %v3675
      %3695 = vmatprep.subr.bf16.mxu0 0
      %3696 = vmatpush1.bf16.msra.mxu0 %v3676
      %3697 = vmatprep.subr.bf16.mxu0 0
      %3698 = vmatpush1.bf16.msra.mxu0 %v3677
      %3699 = vmatprep.subr.bf16.mxu0 0
      %3700 = vmatpush1.bf16.msra.mxu0 %v3678
      %3701 = vmatprep.subr.bf16.mxu0 0
      %3702 = vmatpush1.bf16.msra.mxu0 %v3679
      %3703 = vmatprep.subr.bf16.mxu0 0
      %3704 = vmatpush1.bf16.msra.mxu0 %v3680
      %3705 = vmatprep.subr.bf16.mxu0 0
      %3706 = vmatpush1.bf16.msra.mxu0 0
      %3707 = vmatprep.subr.bf16.mxu0 0
      %3708 = vmatpush1.bf16.msra.mxu0 0
      %3709 = vmatprep.subr.bf16.mxu0 0
      %3710 = vmatpush1.bf16.msra.mxu0 0
      %3711 = vmatprep.subr.bf16.mxu0 0
      %3712 = vmatpush1.bf16.msra.mxu0 0
      %3713 = vmatprep.subr.bf16.mxu0 0
      %3714 = vmatpush1.bf16.msra.mxu0 0
      %3715 = vmatprep.subr.bf16.mxu0 0
      %3716 = vmatpush1.bf16.msra.mxu0 0
      %3717 = vmatprep.subr.bf16.mxu0 0
      %3718 = vmatpush1.bf16.msra.mxu0 0
      %3719 = vmatprep.subr.bf16.mxu0 0
      %3720 = vmatpush1.bf16.msra.mxu0 0
      %3721 = vmatprep.mubr.bf16.mxu0 0
      %3722 = vmatmul.mubr.bf16.gmra.mrb[0].mxu0 %v3588
      %v3723 = vpop.f32.mrb[0].mxu0
      %v3724 = vadd.f32 0.0, %v3723
      %v3725 = vpop.f32.mrb[0].mxu0
      %v3726 = vpop.f32.mrb[0].mxu0
      %v3727 = vadd.f32 0.0, %v3726
      %v3728 = vpop.f32.mrb[0].mxu0
      %3729 = vmatprep.mubr.bf16.mxu0 0
      %3730 = vmatmul.mubr.bf16.gmra.mrb[0].mxu0 %v3590
      %v3731 = vpop.f32.mrb[0].mxu0
      %v3732 = vadd.f32 0.0, %v3731
      %v3733 = vpop.f32.mrb[0].mxu0
      %v3734 = vpop.f32.mrb[0].mxu0
      %v3735 = vadd.f32 0.0, %v3734
      %v3736 = vpop.f32.mrb[0].mxu0
      %3737 = vmatprep.mubr.bf16.mxu0 0
      %3738 = vmatmul.mubr.bf16.gmra.mrb[0].mxu0 %v3592
      %v3739 = vpop.f32.mrb[0].mxu0
      %v3740 = vadd.f32 0.0, %v3739
      %v3741 = vpop.f32.mrb[0].mxu0
      %v3742 = vpop.f32.mrb[0].mxu0
      %v3743 = vadd.f32 0.0, %v3742
      %v3744 = vpop.f32.mrb[0].mxu0
      %3745 = vmatprep.mubr.bf16.mxu0 0
      %3746 = vmatmul.mubr.bf16.gmra.mrb[0].mxu0 %v3594
      %v3747 = vpop.f32.mrb[0].mxu0
      %v3748 = vadd.f32 0.0, %v3747
      %v3749 = vpop.f32.mrb[0].mxu0
      %v3750 = vpop.f32.mrb[0].mxu0
      %v3751 = vadd.f32 0.0, %v3750
      %v3752 = vpop.f32.mrb[0].mxu0
      %3753 = vmatprep.mubr.bf16.mxu0 0
      %3754 = vmatmul.mubr.bf16.gmra.mrb[0].mxu0 %v3596
      %v3755 = vpop.f32.mrb[0].mxu0
      %v3756 = vadd.f32 0.0, %v3755
      %v3757 = vpop.f32.mrb[0].mxu0
      %v3758 = vpop.f32.mrb[0].mxu0
      %v3759 = vadd.f32 0.0, %v3758
      %v3760 = vpop.f32.mrb[0].mxu0
      %3761 = vmatprep.mubr.bf16.mxu0 0
      %3762 = vmatmul.mubr.bf16.gmra.mrb[0].mxu0 %v3598
      %v3763 = vpop.f32.mrb[0].mxu0
      %v3764 = vadd.f32 0.0, %v3763
      %v3765 = vpop.f32.mrb[0].mxu0
      %v3766 = vpop.f32.mrb[0].mxu0
      %v3767 = vadd.f32 0.0, %v3766
      %v3768 = vpop.f32.mrb[0].mxu0
      %3769 = vmatprep.mubr.bf16.mxu0 0
      %3770 = vmatmul.mubr.bf16.gmra.mrb[0].mxu0 %v3600
      %v3771 = vpop.f32.mrb[0].mxu0
      %v3772 = vadd.f32 0.0, %v3771
      %v3773 = vpop.f32.mrb[0].mxu0
      %v3774 = vpop.f32.mrb[0].mxu0
      %v3775 = vadd.f32 0.0, %v3774
      %v3776 = vpop.f32.mrb[0].mxu0
      %3777 = vmatprep.mubr.bf16.mxu0 0
      %3778 = vmatmul.mubr.bf16.gmra.mrb[0].mxu0 %v3602
      %v3779 = vpop.f32.mrb[0].mxu0
      %v3780 = vadd.f32 0.0, %v3779
      %v3781 = vpop.f32.mrb[0].mxu0
      %v3782 = vpop.f32.mrb[0].mxu0
      %v3783 = vadd.f32 0.0, %v3782
      %v3784 = vpop.f32.mrb[0].mxu0
      %3785 = vmatprep.mubr.bf16.mxu0 0
      %3786 = vmatmul.mubr.bf16.gmra.mrb[0].mxu0 %v3604
      %v3787 = vpop.f32.mrb[0].mxu0
      %v3788 = vadd.f32 0.0, %v3787
      %v3789 = vpop.f32.mrb[0].mxu0
      %v3790 = vpop.f32.mrb[0].mxu0
      %v3791 = vadd.f32 0.0, %v3790
      %v3792 = vpop.f32.mrb[0].mxu0
      %3793 = vmatprep.mubr.bf16.mxu0 0
      %3794 = vmatmul.mubr.bf16.gmra.mrb[0].mxu0 %v3606
      %v3795 = vpop.f32.mrb[0].mxu0
      %v3796 = vadd.f32 0.0, %v3795
      %v3797 = vpop.f32.mrb[0].mxu0
      %v3798 = vpop.f32.mrb[0].mxu0
      %v3799 = vadd.f32 0.0, %v3798
      %v3800 = vpop.f32.mrb[0].mxu0
      %3801 = vmatprep.mubr.bf16.mxu0 0
      %3802 = vmatmul.mubr.bf16.gmra.mrb[0].mxu0 %v3608
      %v3803 = vpop.f32.mrb[0].mxu0
      %v3804 = vadd.f32 0.0, %v3803
      %v3805 = vpop.f32.mrb[0].mxu0
      %v3806 = vpop.f32.mrb[0].mxu0
      %v3807 = vadd.f32 0.0, %v3806
      %v3808 = vpop.f32.mrb[0].mxu0
      %3809 = vmatprep.mubr.bf16.mxu0 0
      %3810 = vmatmul.mubr.bf16.gmra.mrb[0].mxu0 %v3610
      %v3811 = vpop.f32.mrb[0].mxu0
      %v3812 = vadd.f32 0.0, %v3811
      %v3813 = vpop.f32.mrb[0].mxu0
      %v3814 = vpop.f32.mrb[0].mxu0
      %v3815 = vadd.f32 0.0, %v3814
      %v3816 = vpop.f32.mrb[0].mxu0
      %3817 = vmatprep.mubr.bf16.mxu0 0
      %3818 = vmatmul.mubr.bf16.gmra.mrb[0].mxu0 %v3612
      %v3819 = vpop.f32.mrb[0].mxu0
      %v3820 = vadd.f32 0.0, %v3819
      %v3821 = vpop.f32.mrb[0].mxu0
      %v3822 = vpop.f32.mrb[0].mxu0
      %v3823 = vadd.f32 0.0, %v3822
      %v3824 = vpop.f32.mrb[0].mxu0
      %3825 = vmatprep.mubr.bf16.mxu0 0
      %3826 = vmatmul.mubr.bf16.gmra.mrb[0].mxu0 %v3614
      %v3827 = vpop.f32.mrb[0].mxu0
      %v3828 = vadd.f32 0.0, %v3827
      %v3829 = vpop.f32.mrb[0].mxu0
      %v3830 = vpop.f32.mrb[0].mxu0
      %v3831 = vadd.f32 0.0, %v3830
      %v3832 = vpop.f32.mrb[0].mxu0
      %3833 = vmatprep.mubr.bf16.mxu0 0
      %3834 = vmatmul.mubr.bf16.gmra.mrb[0].mxu0 %v3616
      %v3835 = vpop.f32.mrb[0].mxu0
      %v3836 = vadd.f32 0.0, %v3835
      %v3837 = vpop.f32.mrb[0].mxu0
      %v3838 = vpop.f32.mrb[0].mxu0
      %v3839 = vadd.f32 0.0, %v3838
      %v3840 = vpop.f32.mrb[0].mxu0
      %3841 = vmatprep.mubr.bf16.mxu0 0
      %3842 = vmatmul.mubr.bf16.gmra.mrb[0].mxu0 %v3618
      %v3843 = vpop.f32.mrb[0].mxu0
      %v3844 = vadd.f32 0.0, %v3843
      %v3845 = vpop.f32.mrb[0].mxu0
      %v3846 = vpop.f32.mrb[0].mxu0
      %v3847 = vadd.f32 0.0, %v3846
      %v3848 = vpop.f32.mrb[0].mxu0
      %3849 = vmatprep.mubr.bf16.mxu0 0
      %3850 = vmatmul.mubr.bf16.gmra.mrb[0].mxu0 %v3620
      %v3851 = vpop.f32.mrb[0].mxu0
      %v3852 = vadd.f32 0.0, %v3851
      %v3853 = vpop.f32.mrb[0].mxu0
      %v3854 = vpop.f32.mrb[0].mxu0
      %v3855 = vadd.f32 0.0, %v3854
      %v3856 = vpop.f32.mrb[0].mxu0
      %3857 = vmatprep.mubr.bf16.mxu0 0
      %3858 = vmatmul.mubr.bf16.gmra.mrb[0].mxu0 %v3622
      %v3859 = vpop.f32.mrb[0].mxu0
      %v3860 = vadd.f32 0.0, %v3859
      %v3861 = vpop.f32.mrb[0].mxu0
      %v3862 = vpop.f32.mrb[0].mxu0
      %v3863 = vadd.f32 0.0, %v3862
      %v3864 = vpop.f32.mrb[0].mxu0
      %3865 = vdwg.mxu0
      %v3866 = vadd.f32 %v3528, %v3724
      %v3867 = vadd.f32 %v3529, %v3727
      %v3868 = vadd.f32 %v3530, %v3732
      %v3869 = vadd.f32 %v3531, %v3735
      %v3870 = vadd.f32 %v3532, %v3740
      %v3871 = vadd.f32 %v3533, %v3743
      %v3872 = vadd.f32 %v3534, %v3748
      %v3873 = vadd.f32 %v3535, %v3751
      %v3874 = vadd.f32 %v3536, %v3756
      %v3875 = vadd.f32 %v3537, %v3759
      %v3876 = vadd.f32 %v3538, %v3764
      %v3877 = vadd.f32 %v3539, %v3767
      %v3878 = vadd.f32 %v3540, %v3772
      %v3879 = vadd.f32 %v3541, %v3775
      %v3880 = vadd.f32 %v3542, %v3780
      %v3881 = vadd.f32 %v3543, %v3783
      %v3882 = vadd.f32 %v3544, %v3788
      %v3883 = vadd.f32 %v3545, %v3791
      %v3884 = vadd.f32 %v3546, %v3796
      %v3885 = vadd.f32 %v3547, %v3799
      %v3886 = vadd.f32 %v3548, %v3804
      %v3887 = vadd.f32 %v3549, %v3807
      %v3888 = vadd.f32 %v3550, %v3812
      %v3889 = vadd.f32 %v3551, %v3815
      %v3890 = vadd.f32 %v3552, %v3820
      %v3891 = vadd.f32 %v3553, %v3823
      %v3892 = vadd.f32 %v3554, %v3828
      %v3893 = vadd.f32 %v3555, %v3831
      %v3894 = vadd.f32 %v3556, %v3836
      %v3895 = vadd.f32 %v3557, %v3839
      %v3896 = vadd.f32 %v3558, %v3844
      %v3897 = vadd.f32 %v3559, %v3847
      %v3898 = vadd.f32 %v3560, %v3852
      %v3899 = vadd.f32 %v3561, %v3855
      %v3900 = vadd.f32 %v3562, %v3860
      %v3901 = vadd.f32 %v3563, %v3863
      %v3902 = vld [vmem:[%s246 + $0xa4] sm:$0x3]
      %s3903 = scalar_lea.vmem %s1, 512
      %v3904 = vld [vmem:[%s3903] sm:$0xf]
      %v3905 = vld [vmem:[%s3903 + $0x4] sm:$0xf]
      %v3906 = vld [vmem:[%s3903 + $0x8] sm:$0xf]
      %v3907 = vld [vmem:[%s3903 + $0xc] sm:$0xf]
      %v3908 = vld [vmem:[%s3903 + $0x10] sm:$0xf]
      %v3909 = vld [vmem:[%s3903 + $0x14] sm:$0xf]
      %v3910 = vld [vmem:[%s3903 + $0x18] sm:$0xf]
      %v3911 = vld [vmem:[%s3903 + $0x1c] sm:$0xf]
      %v3912 = vld [vmem:[%s3903 + $0x20] sm:$0xf]
      %v3913 = vld [vmem:[%s3903 + $0x24] sm:$0xf]
      %v3914 = vld [vmem:[%s3903 + $0x28] sm:$0xf]
      %v3915 = vld [vmem:[%s3903 + $0x2c] sm:$0xf]
      %v3916 = vld [vmem:[%s3903 + $0x30] sm:$0xf]
      %v3917 = vld [vmem:[%s3903 + $0x34] sm:$0xf]
      %v3918 = vld [vmem:[%s3903 + $0x38] sm:$0xf]
      %v3919 = vld [vmem:[%s3903 + $0x3c] sm:$0xf]
      %v3921 = vunpack.c.l.b16 %v3902
      %v3922 = vpack.c.b16 %v3921, %v3921
      %vm3923 = vsmask.f32 6400
      %v3925 = vshrl.u32 %v3584, 16
      %v3927 = vrot.slane %v3925, 1
      %v3928 = vshll.u32 %v3584, 16
      %v3930 = vrot.slane %v3928, 2
      %v3931 = vor.u32 %v3927, %v3930
      %v3932 = vrot.slane %v3149, 1
      %v3933 = vrot.slane %v3145, 2
      %v3934 = vor.u32 %v3932, %v3933
      %v3935 = vsel %vm3923, %v3931, %v3934
      %v3936 = vrot.slane %v3157, 1
      %v3937 = vrot.slane %v3153, 2
      %v3938 = vor.u32 %v3936, %v3937
      %v3939 = vsel %vm3923, %v3934, %v3938
      %v3940 = vrot.slane %v3165, 1
      %v3941 = vrot.slane %v3161, 2
      %v3942 = vor.u32 %v3940, %v3941
      %v3943 = vsel %vm3923, %v3938, %v3942
      %v3944 = vrot.slane %v3173, 1
      %v3945 = vrot.slane %v3169, 2
      %v3946 = vor.u32 %v3944, %v3945
      %v3947 = vsel %vm3923, %v3942, %v3946
      %v3948 = vrot.slane %v3181, 1
      %v3949 = vrot.slane %v3177, 2
      %v3950 = vor.u32 %v3948, %v3949
      %v3951 = vsel %vm3923, %v3946, %v3950
      %v3952 = vrot.slane %v3189, 1
      %v3953 = vrot.slane %v3185, 2
      %v3954 = vor.u32 %v3952, %v3953
      %v3955 = vsel %vm3923, %v3950, %v3954
      %v3956 = vrot.slane %v3197, 1
      %v3957 = vrot.slane %v3193, 2
      %v3958 = vor.u32 %v3956, %v3957
      %v3959 = vsel %vm3923, %v3954, %v3958
      %v3960 = vrot.slane %v3205, 1
      %v3961 = vrot.slane %v3201, 2
      %v3962 = vor.u32 %v3960, %v3961
      %v3963 = vsel %vm3923, %v3958, %v3962
      %v3964 = vrot.slane %v3213, 1
      %v3965 = vrot.slane %v3209, 2
      %v3966 = vor.u32 %v3964, %v3965
      %v3967 = vsel %vm3923, %v3962, %v3966
      %v3968 = vrot.slane %v3221, 1
      %v3969 = vrot.slane %v3217, 2
      %v3970 = vor.u32 %v3968, %v3969
      %v3971 = vsel %vm3923, %v3966, %v3970
      %v3972 = vrot.slane %v3229, 1
      %v3973 = vrot.slane %v3225, 2
      %v3974 = vor.u32 %v3972, %v3973
      %v3975 = vsel %vm3923, %v3970, %v3974
      %v3976 = vrot.slane %v3237, 1
      %v3977 = vrot.slane %v3233, 2
      %v3978 = vor.u32 %v3976, %v3977
      %v3979 = vsel %vm3923, %v3974, %v3978
      %v3980 = vrot.slane %v3245, 1
      %v3981 = vrot.slane %v3241, 2
      %v3982 = vor.u32 %v3980, %v3981
      %v3983 = vsel %vm3923, %v3978, %v3982
      %v3984 = vrot.slane %v3253, 1
      %v3985 = vrot.slane %v3249, 2
      %v3986 = vor.u32 %v3984, %v3985
      %v3987 = vsel %vm3923, %v3982, %v3986
      %v3988 = vrot.slane %v3261, 1
      %v3989 = vrot.slane %v3257, 2
      %v3990 = vor.u32 %v3988, %v3989
      %v3991 = vsel %vm3923, %v3986, %v3990
      %v3992 = vrot.slane %v3269, 1
      %v3993 = vrot.slane %v3265, 2
      %v3994 = vor.u32 %v3992, %v3993
      %v3995 = vsel %vm3923, %v3990, %v3994
      %v3996 = vrot.slane %v3277, 1
      %v3997 = vrot.slane %v3273, 2
      %v3998 = vor.u32 %v3996, %v3997
      %v3999 = vsel %vm3923, %v3994, %v3998
      %v4001 = vshrl.u32 %v3922, 16
      %v4003 = vrot.slane %v4001, 1
      %v4004 = vshll.u32 %v3922, 16
      %v4006 = vrot.slane %v4004, 2
      %v4007 = vor.u32 %v4003, %v4006
      %v4008 = vsel %vm3923, %v3998, %v4007
      %v4043 = vunpack.c.l.b16 %v3904
      %v4044 = vunpack.c.l.b16 %v3905
      %v4045 = vunpack.c.l.b16 %v3906
      %v4046 = vunpack.c.l.b16 %v3907
      %v4047 = vunpack.c.l.b16 %v3908
      %v4048 = vunpack.c.l.b16 %v3909
      %v4049 = vunpack.c.l.b16 %v3910
      %v4050 = vunpack.c.l.b16 %v3911
      %v4051 = vunpack.c.l.b16 %v3912
      %v4052 = vunpack.c.l.b16 %v3913
      %v4053 = vunpack.c.l.b16 %v3914
      %v4054 = vunpack.c.l.b16 %v3915
      %v4055 = vunpack.c.l.b16 %v3916
      %v4056 = vunpack.c.l.b16 %v3917
      %v4057 = vunpack.c.l.b16 %v3918
      %v4058 = vunpack.c.l.b16 %v3919
      %v4059 = vpack.c.b16 %v4044, %v4043
      %v4060 = vpack.c.b16 %v4046, %v4045
      %v4061 = vpack.c.b16 %v4048, %v4047
      %v4062 = vpack.c.b16 %v4050, %v4049
      %v4063 = vpack.c.b16 %v4052, %v4051
      %v4064 = vpack.c.b16 %v4054, %v4053
      %v4065 = vpack.c.b16 %v4056, %v4055
      %v4066 = vpack.c.b16 %v4058, %v4057
      %4075 = vmatprep.subr.bf16.mxu0 0
      %4076 = vmatpush1.bf16.msra.mxu0 %v4059
      %4077 = vmatprep.subr.bf16.mxu0 0
      %4078 = vmatpush1.bf16.msra.mxu0 %v4060
      %4079 = vmatprep.subr.bf16.mxu0 0
      %4080 = vmatpush1.bf16.msra.mxu0 %v4061
      %4081 = vmatprep.subr.bf16.mxu0 0
      %4082 = vmatpush1.bf16.msra.mxu0 %v4062
      %4083 = vmatprep.subr.bf16.mxu0 0
      %4084 = vmatpush1.bf16.msra.mxu0 %v4063
      %4085 = vmatprep.subr.bf16.mxu0 0
      %4086 = vmatpush1.bf16.msra.mxu0 %v4064
      %4087 = vmatprep.subr.bf16.mxu0 0
      %4088 = vmatpush1.bf16.msra.mxu0 %v4065
      %4089 = vmatprep.subr.bf16.mxu0 0
      %4090 = vmatpush1.bf16.msra.mxu0 %v4066
      %4091 = vmatprep.subr.bf16.mxu0 0
      %4092 = vmatpush1.bf16.msra.mxu0 0
      %4093 = vmatprep.subr.bf16.mxu0 0
      %4094 = vmatpush1.bf16.msra.mxu0 0
      %4095 = vmatprep.subr.bf16.mxu0 0
      %4096 = vmatpush1.bf16.msra.mxu0 0
      %4097 = vmatprep.subr.bf16.mxu0 0
      %4098 = vmatpush1.bf16.msra.mxu0 0
      %4099 = vmatprep.subr.bf16.mxu0 0
      %4100 = vmatpush1.bf16.msra.mxu0 0
      %4101 = vmatprep.subr.bf16.mxu0 0
      %4102 = vmatpush1.bf16.msra.mxu0 0
      %4103 = vmatprep.subr.bf16.mxu0 0
      %4104 = vmatpush1.bf16.msra.mxu0 0
      %4105 = vmatprep.subr.bf16.mxu0 0
      %4106 = vmatpush1.bf16.msra.mxu0 0
      %4107 = vmatprep.mubr.bf16.mxu0 0
      %4108 = vmatmul.mubr.bf16.gmra.mrb[0].mxu0 %v3935
      %v4109 = vpop.f32.mrb[0].mxu0
      %v4110 = vadd.f32 0.0, %v4109
      %v4111 = vpop.f32.mrb[0].mxu0
      %v4112 = vpop.f32.mrb[0].mxu0
      %v4113 = vadd.f32 0.0, %v4112
      %v4114 = vpop.f32.mrb[0].mxu0
      %4115 = vmatprep.mubr.bf16.mxu0 0
      %4116 = vmatmul.mubr.bf16.gmra.mrb[0].mxu0 %v3939
      %v4117 = vpop.f32.mrb[0].mxu0
      %v4118 = vadd.f32 0.0, %v4117
      %v4119 = vpop.f32.mrb[0].mxu0
      %v4120 = vpop.f32.mrb[0].mxu0
      %v4121 = vadd.f32 0.0, %v4120
      %v4122 = vpop.f32.mrb[0].mxu0
      %4123 = vmatprep.mubr.bf16.mxu0 0
      %4124 = vmatmul.mubr.bf16.gmra.mrb[0].mxu0 %v3943
      %v4125 = vpop.f32.mrb[0].mxu0
      %v4126 = vadd.f32 0.0, %v4125
      %v4127 = vpop.f32.mrb[0].mxu0
      %v4128 = vpop.f32.mrb[0].mxu0
      %v4129 = vadd.f32 0.0, %v4128
      %v4130 = vpop.f32.mrb[0].mxu0
      %4131 = vmatprep.mubr.bf16.mxu0 0
      %4132 = vmatmul.mubr.bf16.gmra.mrb[0].mxu0 %v3947
      %v4133 = vpop.f32.mrb[0].mxu0
      %v4134 = vadd.f32 0.0, %v4133
      %v4135 = vpop.f32.mrb[0].mxu0
      %v4136 = vpop.f32.mrb[0].mxu0
      %v4137 = vadd.f32 0.0, %v4136
      %v4138 = vpop.f32.mrb[0].mxu0
      %4139 = vmatprep.mubr.bf16.mxu0 0
      %4140 = vmatmul.mubr.bf16.gmra.mrb[0].mxu0 %v3951
      %v4141 = vpop.f32.mrb[0].mxu0
      %v4142 = vadd.f32 0.0, %v4141
      %v4143 = vpop.f32.mrb[0].mxu0
      %v4144 = vpop.f32.mrb[0].mxu0
      %v4145 = vadd.f32 0.0, %v4144
      %v4146 = vpop.f32.mrb[0].mxu0
      %4147 = vmatprep.mubr.bf16.mxu0 0
      %4148 = vmatmul.mubr.bf16.gmra.mrb[0].mxu0 %v3955
      %v4149 = vpop.f32.mrb[0].mxu0
      %v4150 = vadd.f32 0.0, %v4149
      %v4151 = vpop.f32.mrb[0].mxu0
      %v4152 = vpop.f32.mrb[0].mxu0
      %v4153 = vadd.f32 0.0, %v4152
      %v4154 = vpop.f32.mrb[0].mxu0
      %4155 = vmatprep.mubr.bf16.mxu0 0
      %4156 = vmatmul.mubr.bf16.gmra.mrb[0].mxu0 %v3959
      %v4157 = vpop.f32.mrb[0].mxu0
      %v4158 = vadd.f32 0.0, %v4157
      %v4159 = vpop.f32.mrb[0].mxu0
      %v4160 = vpop.f32.mrb[0].mxu0
      %v4161 = vadd.f32 0.0, %v4160
      %v4162 = vpop.f32.mrb[0].mxu0
      %4163 = vmatprep.mubr.bf16.mxu0 0
      %4164 = vmatmul.mubr.bf16.gmra.mrb[0].mxu0 %v3963
      %v4165 = vpop.f32.mrb[0].mxu0
      %v4166 = vadd.f32 0.0, %v4165
      %v4167 = vpop.f32.mrb[0].mxu0
      %v4168 = vpop.f32.mrb[0].mxu0
      %v4169 = vadd.f32 0.0, %v4168
      %v4170 = vpop.f32.mrb[0].mxu0
      %4171 = vmatprep.mubr.bf16.mxu0 0
      %4172 = vmatmul.mubr.bf16.gmra.mrb[0].mxu0 %v3967
      %v4173 = vpop.f32.mrb[0].mxu0
      %v4174 = vadd.f32 0.0, %v4173
      %v4175 = vpop.f32.mrb[0].mxu0
      %v4176 = vpop.f32.mrb[0].mxu0
      %v4177 = vadd.f32 0.0, %v4176
      %v4178 = vpop.f32.mrb[0].mxu0
      %4179 = vmatprep.mubr.bf16.mxu0 0
      %4180 = vmatmul.mubr.bf16.gmra.mrb[0].mxu0 %v3971
      %v4181 = vpop.f32.mrb[0].mxu0
      %v4182 = vadd.f32 0.0, %v4181
      %v4183 = vpop.f32.mrb[0].mxu0
      %v4184 = vpop.f32.mrb[0].mxu0
      %v4185 = vadd.f32 0.0, %v4184
      %v4186 = vpop.f32.mrb[0].mxu0
      %4187 = vmatprep.mubr.bf16.mxu0 0
      %4188 = vmatmul.mubr.bf16.gmra.mrb[0].mxu0 %v3975
      %v4189 = vpop.f32.mrb[0].mxu0
      %v4190 = vadd.f32 0.0, %v4189
      %v4191 = vpop.f32.mrb[0].mxu0
      %v4192 = vpop.f32.mrb[0].mxu0
      %v4193 = vadd.f32 0.0, %v4192
      %v4194 = vpop.f32.mrb[0].mxu0
      %4195 = vmatprep.mubr.bf16.mxu0 0
      %4196 = vmatmul.mubr.bf16.gmra.mrb[0].mxu0 %v3979
      %v4197 = vpop.f32.mrb[0].mxu0
      %v4198 = vadd.f32 0.0, %v4197
      %v4199 = vpop.f32.mrb[0].mxu0
      %v4200 = vpop.f32.mrb[0].mxu0
      %v4201 = vadd.f32 0.0, %v4200
      %v4202 = vpop.f32.mrb[0].mxu0
      %4203 = vmatprep.mubr.bf16.mxu0 0
      %4204 = vmatmul.mubr.bf16.gmra.mrb[0].mxu0 %v3983
      %v4205 = vpop.f32.mrb[0].mxu0
      %v4206 = vadd.f32 0.0, %v4205
      %v4207 = vpop.f32.mrb[0].mxu0
      %v4208 = vpop.f32.mrb[0].mxu0
      %v4209 = vadd.f32 0.0, %v4208
      %v4210 = vpop.f32.mrb[0].mxu0
      %4211 = vmatprep.mubr.bf16.mxu0 0
      %4212 = vmatmul.mubr.bf16.gmra.mrb[0].mxu0 %v3987
      %v4213 = vpop.f32.mrb[0].mxu0
      %v4214 = vadd.f32 0.0, %v4213
      %v4215 = vpop.f32.mrb[0].mxu0
      %v4216 = vpop.f32.mrb[0].mxu0
      %v4217 = vadd.f32 0.0, %v4216
      %v4218 = vpop.f32.mrb[0].mxu0
      %4219 = vmatprep.mubr.bf16.mxu0 0
      %4220 = vmatmul.mubr.bf16.gmra.mrb[0].mxu0 %v3991
      %v4221 = vpop.f32.mrb[0].mxu0
      %v4222 = vadd.f32 0.0, %v4221
      %v4223 = vpop.f32.mrb[0].mxu0
      %v4224 = vpop.f32.mrb[0].mxu0
      %v4225 = vadd.f32 0.0, %v4224
      %v4226 = vpop.f32.mrb[0].mxu0
      %4227 = vmatprep.mubr.bf16.mxu0 0
      %4228 = vmatmul.mubr.bf16.gmra.mrb[0].mxu0 %v3995
      %v4229 = vpop.f32.mrb[0].mxu0
      %v4230 = vadd.f32 0.0, %v4229
      %v4231 = vpop.f32.mrb[0].mxu0
      %v4232 = vpop.f32.mrb[0].mxu0
      %v4233 = vadd.f32 0.0, %v4232
      %v4234 = vpop.f32.mrb[0].mxu0
      %4235 = vmatprep.mubr.bf16.mxu0 0
      %4236 = vmatmul.mubr.bf16.gmra.mrb[0].mxu0 %v3999
      %v4237 = vpop.f32.mrb[0].mxu0
      %v4238 = vadd.f32 0.0, %v4237
      %v4239 = vpop.f32.mrb[0].mxu0
      %v4240 = vpop.f32.mrb[0].mxu0
      %v4241 = vadd.f32 0.0, %v4240
      %v4242 = vpop.f32.mrb[0].mxu0
      %4243 = vmatprep.mubr.bf16.mxu0 0
      %4244 = vmatmul.mubr.bf16.gmra.mrb[0].mxu0 %v4008
      %v4245 = vpop.f32.mrb[0].mxu0
      %v4246 = vadd.f32 0.0, %v4245
      %v4247 = vpop.f32.mrb[0].mxu0
      %v4248 = vpop.f32.mrb[0].mxu0
      %v4249 = vadd.f32 0.0, %v4248
      %v4250 = vpop.f32.mrb[0].mxu0
      %4251 = vdwg.mxu0
      %v4252 = vadd.f32 %v3866, %v4110
      %v4253 = vadd.f32 %v3867, %v4113
      %v4254 = vadd.f32 %v3868, %v4118
      %v4255 = vadd.f32 %v3869, %v4121
      %v4256 = vadd.f32 %v3870, %v4126
      %v4257 = vadd.f32 %v3871, %v4129
      %v4258 = vadd.f32 %v3872, %v4134
      %v4259 = vadd.f32 %v3873, %v4137
      %v4260 = vadd.f32 %v3874, %v4142
      %v4261 = vadd.f32 %v3875, %v4145
      %v4262 = vadd.f32 %v3876, %v4150
      %v4263 = vadd.f32 %v3877, %v4153
      %v4264 = vadd.f32 %v3878, %v4158
      %v4265 = vadd.f32 %v3879, %v4161
      %v4266 = vadd.f32 %v3880, %v4166
      %v4267 = vadd.f32 %v3881, %v4169
      %v4268 = vadd.f32 %v3882, %v4174
      %v4269 = vadd.f32 %v3883, %v4177
      %v4270 = vadd.f32 %v3884, %v4182
      %v4271 = vadd.f32 %v3885, %v4185
      %v4272 = vadd.f32 %v3886, %v4190
      %v4273 = vadd.f32 %v3887, %v4193
      %v4274 = vadd.f32 %v3888, %v4198
      %v4275 = vadd.f32 %v3889, %v4201
      %v4276 = vadd.f32 %v3890, %v4206
      %v4277 = vadd.f32 %v3891, %v4209
      %v4278 = vadd.f32 %v3892, %v4214
      %v4279 = vadd.f32 %v3893, %v4217
      %v4280 = vadd.f32 %v3894, %v4222
      %v4281 = vadd.f32 %v3895, %v4225
      %v4282 = vadd.f32 %v3896, %v4230
      %v4283 = vadd.f32 %v3897, %v4233
      %v4284 = vadd.f32 %v3898, %v4238
      %v4285 = vadd.f32 %v3899, %v4241
      %v4286 = vadd.f32 %v3900, %v4246
      %v4287 = vadd.f32 %v3901, %v4249
      %v4288 = vld [vmem:[%s3] sm:$0x1]
      %v4290 = vlaneseq
      %v4291 = vshrl.u32 %v4290, 7
      %v4292 = vsub.s32 0, %v4291
      %v4293 = vrot.slane %v4288, %v4292
      %v4295 = vadd.f32 %v4252, %v4293
      %v4296 = vadd.f32 %v4253, %v4293
      %v4297 = vadd.f32 %v4254, %v4293
      %v4298 = vadd.f32 %v4255, %v4293
      %v4299 = vadd.f32 %v4256, %v4293
      %v4300 = vadd.f32 %v4257, %v4293
      %v4301 = vadd.f32 %v4258, %v4293
      %v4302 = vadd.f32 %v4259, %v4293
      %v4303 = vadd.f32 %v4260, %v4293
      %v4304 = vadd.f32 %v4261, %v4293
      %v4305 = vadd.f32 %v4262, %v4293
      %v4306 = vadd.f32 %v4263, %v4293
      %v4307 = vadd.f32 %v4264, %v4293
      %v4308 = vadd.f32 %v4265, %v4293
      %v4309 = vadd.f32 %v4266, %v4293
      %v4310 = vadd.f32 %v4267, %v4293
      %v4311 = vadd.f32 %v4268, %v4293
      %v4312 = vadd.f32 %v4269, %v4293
      %v4313 = vadd.f32 %v4270, %v4293
      %v4314 = vadd.f32 %v4271, %v4293
      %v4315 = vadd.f32 %v4272, %v4293
      %v4316 = vadd.f32 %v4273, %v4293
      %v4317 = vadd.f32 %v4274, %v4293
      %v4318 = vadd.f32 %v4275, %v4293
      %v4319 = vadd.f32 %v4276, %v4293
      %v4320 = vadd.f32 %v4277, %v4293
      %v4321 = vadd.f32 %v4278, %v4293
      %v4322 = vadd.f32 %v4279, %v4293
      %v4323 = vadd.f32 %v4280, %v4293
      %v4324 = vadd.f32 %v4281, %v4293
      %v4325 = vadd.f32 %v4282, %v4293
      %v4326 = vadd.f32 %v4283, %v4293
      %v4327 = vadd.f32 %v4284, %v4293
      %v4328 = vadd.f32 %v4285, %v4293
      %v4329 = vadd.f32 %v4286, %v4293
      %v4330 = vadd.f32 %v4287, %v4293
      %v4331 = vmul.f32 %v4295, 0.2
      %v4332 = vmul.f32 %v4296, 0.2
      %v4333 = vmul.f32 %v4297, 0.2
      %v4334 = vmul.f32 %v4298, 0.2
      %v4335 = vmul.f32 %v4299, 0.2
      %v4336 = vmul.f32 %v4300, 0.2
      %v4337 = vmul.f32 %v4301, 0.2
      %v4338 = vmul.f32 %v4302, 0.2
      %v4339 = vmul.f32 %v4303, 0.2
      %v4340 = vmul.f32 %v4304, 0.2
      %v4341 = vmul.f32 %v4305, 0.2
      %v4342 = vmul.f32 %v4306, 0.2
      %v4343 = vmul.f32 %v4307, 0.2
      %v4344 = vmul.f32 %v4308, 0.2
      %v4345 = vmul.f32 %v4309, 0.2
      %v4346 = vmul.f32 %v4310, 0.2
      %v4347 = vmul.f32 %v4311, 0.2
      %v4348 = vmul.f32 %v4312, 0.2
      %v4349 = vmul.f32 %v4313, 0.2
      %v4350 = vmul.f32 %v4314, 0.2
      %v4351 = vmul.f32 %v4315, 0.2
      %v4352 = vmul.f32 %v4316, 0.2
      %v4353 = vmul.f32 %v4317, 0.2
      %v4354 = vmul.f32 %v4318, 0.2
      %v4355 = vmul.f32 %v4319, 0.2
      %v4356 = vmul.f32 %v4320, 0.2
      %v4357 = vmul.f32 %v4321, 0.2
      %v4358 = vmul.f32 %v4322, 0.2
      %v4359 = vmul.f32 %v4323, 0.2
      %v4360 = vmul.f32 %v4324, 0.2
      %v4361 = vmul.f32 %v4325, 0.2
      %v4362 = vmul.f32 %v4326, 0.2
      %v4363 = vmul.f32 %v4327, 0.2
      %v4364 = vmul.f32 %v4328, 0.2
      %v4365 = vmul.f32 %v4329, 0.2
      %v4366 = vmul.f32 %v4330, 0.2
      %v4367 = vmax.f32 %v4295, %v4331
      %v4368 = vmax.f32 %v4296, %v4332
      %v4369 = vmax.f32 %v4297, %v4333
      %v4370 = vmax.f32 %v4298, %v4334
      %v4371 = vmax.f32 %v4299, %v4335
      %v4372 = vmax.f32 %v4300, %v4336
      %v4373 = vmax.f32 %v4301, %v4337
      %v4374 = vmax.f32 %v4302, %v4338
      %v4375 = vmax.f32 %v4303, %v4339
      %v4376 = vmax.f32 %v4304, %v4340
      %v4377 = vmax.f32 %v4305, %v4341
      %v4378 = vmax.f32 %v4306, %v4342
      %v4379 = vmax.f32 %v4307, %v4343
      %v4380 = vmax.f32 %v4308, %v4344
      %v4381 = vmax.f32 %v4309, %v4345
      %v4382 = vmax.f32 %v4310, %v4346
      %v4383 = vmax.f32 %v4311, %v4347
      %v4384 = vmax.f32 %v4312, %v4348
      %v4385 = vmax.f32 %v4313, %v4349
      %v4386 = vmax.f32 %v4314, %v4350
      %v4387 = vmax.f32 %v4315, %v4351
      %v4388 = vmax.f32 %v4316, %v4352
      %v4389 = vmax.f32 %v4317, %v4353
      %v4390 = vmax.f32 %v4318, %v4354
      %v4391 = vmax.f32 %v4319, %v4355
      %v4392 = vmax.f32 %v4320, %v4356
      %v4393 = vmax.f32 %v4321, %v4357
      %v4394 = vmax.f32 %v4322, %v4358
      %v4395 = vmax.f32 %v4323, %v4359
      %v4396 = vmax.f32 %v4324, %v4360
      %v4397 = vmax.f32 %v4325, %v4361
      %v4398 = vmax.f32 %v4326, %v4362
      %v4399 = vmax.f32 %v4327, %v4363
      %v4400 = vmax.f32 %v4328, %v4364
      %v4401 = vmax.f32 %v4329, %v4365
      %v4402 = vmax.f32 %v4330, %v4366
      %v4403 = vld [vmem:[%s5] sm:$0xff]
      %v4404 = vld [vmem:[%s5 + $0x8] sm:$0xff]
      %v4405 = vld [vmem:[%s5 + $0x10] sm:$0xff]
      %v4406 = vld [vmem:[%s5 + $0x18] sm:$0xff]
      %v4407 = vld [vmem:[%s5 + $0x20] sm:$0xff]
      %v4408 = vld [vmem:[%s5 + $0x28] sm:$0xff]
      %v4409 = vld [vmem:[%s5 + $0x30] sm:$0xff]
      %v4410 = vld [vmem:[%s5 + $0x38] sm:$0xff]
      %v4411 = vld [vmem:[%s5 + $0x40] sm:$0xff]
      %v4412 = vld [vmem:[%s5 + $0x48] sm:$0xff]
      %v4413 = vld [vmem:[%s5 + $0x50] sm:$0xff]
      %v4414 = vld [vmem:[%s5 + $0x58] sm:$0xff]
      %v4415 = vld [vmem:[%s5 + $0x60] sm:$0xff]
      %v4416 = vld [vmem:[%s5 + $0x68] sm:$0xff]
      %v4417 = vld [vmem:[%s5 + $0x70] sm:$0xff]
      %v4418 = vld [vmem:[%s5 + $0x78] sm:$0xff]
      %v4419 = vld [vmem:[%s5 + $0x80] sm:$0xff]
      %v4420 = vld [vmem:[%s5 + $0x88] sm:$0xff]
      %v4421 = vld [vmem:[%s5 + $0x90] sm:$0xff]
      %v4422 = vld [vmem:[%s5 + $0x98] sm:$0xff]
      %v4423 = vld [vmem:[%s5 + $0xa0] sm:$0xff]
      %v4424 = vld [vmem:[%s5 + $0xa8] sm:$0xff]
      %v4425 = vld [vmem:[%s5 + $0xb0] sm:$0xff]
      %v4426 = vld [vmem:[%s5 + $0xb8] sm:$0xff]
      %v4427 = vld [vmem:[%s5 + $0xc0] sm:$0xff]
      %v4428 = vld [vmem:[%s5 + $0xc8] sm:$0xff]
      %v4429 = vld [vmem:[%s5 + $0xd0] sm:$0xff]
      %v4430 = vld [vmem:[%s5 + $0xd8] sm:$0xff]
      %v4431 = vld [vmem:[%s5 + $0xe0] sm:$0xff]
      %v4432 = vld [vmem:[%s5 + $0xe8] sm:$0xff]
      %v4433 = vld [vmem:[%s5 + $0xf0] sm:$0xff]
      %v4434 = vld [vmem:[%s5 + $0xf8] sm:$0xff]
      %v4435 = vld [vmem:[%s5 + $0x100] sm:$0xff]
      %v4436 = vld [vmem:[%s5 + $0x108] sm:$0xff]
      %v4437 = vld [vmem:[%s5 + $0x110] sm:$0xff]
      %v4438 = vld [vmem:[%s5 + $0x118] sm:$0xff]
      %4440 = vset.pattern.permute.xlu0 0
      %4441 = vperm.xlu0 %4440, %v4403
      %v4442 = vpop.permute.xlu0 %4441
      %4445 = vset.pattern.permute.xlu0 0
      %4446 = vperm.xlu0 %4445, %v4404
      %v4447 = vpop.permute.xlu0 %4446
      %4450 = vset.pattern.permute.xlu0 0
      %4451 = vperm.xlu0 %4450, %v4405
      %v4452 = vpop.permute.xlu0 %4451
      %4455 = vset.pattern.permute.xlu0 0
      %4456 = vperm.xlu0 %4455, %v4406
      %v4457 = vpop.permute.xlu0 %4456
      %4460 = vset.pattern.permute.xlu0 0
      %4461 = vperm.xlu0 %4460, %v4407
      %v4462 = vpop.permute.xlu0 %4461
      %4465 = vset.pattern.permute.xlu0 0
      %4466 = vperm.xlu0 %4465, %v4408
      %v4467 = vpop.permute.xlu0 %4466
      %4470 = vset.pattern.permute.xlu0 0
      %4471 = vperm.xlu0 %4470, %v4409
      %v4472 = vpop.permute.xlu0 %4471
      %4475 = vset.pattern.permute.xlu0 0
      %4476 = vperm.xlu0 %4475, %v4410
      %v4477 = vpop.permute.xlu0 %4476
      %4480 = vset.pattern.permute.xlu0 0
      %4481 = vperm.xlu0 %4480, %v4411
      %v4482 = vpop.permute.xlu0 %4481
      %4485 = vset.pattern.permute.xlu0 0
      %4486 = vperm.xlu0 %4485, %v4412
      %v4487 = vpop.permute.xlu0 %4486
      %4490 = vset.pattern.permute.xlu0 0
      %4491 = vperm.xlu0 %4490, %v4413
      %v4492 = vpop.permute.xlu0 %4491
      %4495 = vset.pattern.permute.xlu0 0
      %4496 = vperm.xlu0 %4495, %v4414
      %v4497 = vpop.permute.xlu0 %4496
      %4500 = vset.pattern.permute.xlu0 0
      %4501 = vperm.xlu0 %4500, %v4415
      %v4502 = vpop.permute.xlu0 %4501
      %4505 = vset.pattern.permute.xlu0 0
      %4506 = vperm.xlu0 %4505, %v4416
      %v4507 = vpop.permute.xlu0 %4506
      %4510 = vset.pattern.permute.xlu0 0
      %4511 = vperm.xlu0 %4510, %v4417
      %v4512 = vpop.permute.xlu0 %4511
      %4515 = vset.pattern.permute.xlu0 0
      %4516 = vperm.xlu0 %4515, %v4418
      %v4517 = vpop.permute.xlu0 %4516
      %4520 = vset.pattern.permute.xlu0 0
      %4521 = vperm.xlu0 %4520, %v4419
      %v4522 = vpop.permute.xlu0 %4521
      %4525 = vset.pattern.permute.xlu0 0
      %4526 = vperm.xlu0 %4525, %v4420
      %v4527 = vpop.permute.xlu0 %4526
      %4530 = vset.pattern.permute.xlu0 0
      %4531 = vperm.xlu0 %4530, %v4421
      %v4532 = vpop.permute.xlu0 %4531
      %4535 = vset.pattern.permute.xlu0 0
      %4536 = vperm.xlu0 %4535, %v4422
      %v4537 = vpop.permute.xlu0 %4536
      %4540 = vset.pattern.permute.xlu0 0
      %4541 = vperm.xlu0 %4540, %v4423
      %v4542 = vpop.permute.xlu0 %4541
      %4545 = vset.pattern.permute.xlu0 0
      %4546 = vperm.xlu0 %4545, %v4424
      %v4547 = vpop.permute.xlu0 %4546
      %4550 = vset.pattern.permute.xlu0 0
      %4551 = vperm.xlu0 %4550, %v4425
      %v4552 = vpop.permute.xlu0 %4551
      %4555 = vset.pattern.permute.xlu0 0
      %4556 = vperm.xlu0 %4555, %v4426
      %v4557 = vpop.permute.xlu0 %4556
      %4560 = vset.pattern.permute.xlu0 0
      %4561 = vperm.xlu0 %4560, %v4427
      %v4562 = vpop.permute.xlu0 %4561
      %4565 = vset.pattern.permute.xlu0 0
      %4566 = vperm.xlu0 %4565, %v4428
      %v4567 = vpop.permute.xlu0 %4566
      %4570 = vset.pattern.permute.xlu0 0
      %4571 = vperm.xlu0 %4570, %v4429
      %v4572 = vpop.permute.xlu0 %4571
      %4575 = vset.pattern.permute.xlu0 0
      %4576 = vperm.xlu0 %4575, %v4430
      %v4577 = vpop.permute.xlu0 %4576
      %4580 = vset.pattern.permute.xlu0 0
      %4581 = vperm.xlu0 %4580, %v4431
      %v4582 = vpop.permute.xlu0 %4581
      %4585 = vset.pattern.permute.xlu0 0
      %4586 = vperm.xlu0 %4585, %v4432
      %v4587 = vpop.permute.xlu0 %4586
      %4590 = vset.pattern.permute.xlu0 0
      %4591 = vperm.xlu0 %4590, %v4433
      %v4592 = vpop.permute.xlu0 %4591
      %4595 = vset.pattern.permute.xlu0 0
      %4596 = vperm.xlu0 %4595, %v4434
      %v4597 = vpop.permute.xlu0 %4596
      %4600 = vset.pattern.permute.xlu0 0
      %4601 = vperm.xlu0 %4600, %v4435
      %v4602 = vpop.permute.xlu0 %4601
      %4605 = vset.pattern.permute.xlu0 0
      %4606 = vperm.xlu0 %4605, %v4436
      %v4607 = vpop.permute.xlu0 %4606
      %4610 = vset.pattern.permute.xlu0 0
      %4611 = vperm.xlu0 %4610, %v4437
      %v4612 = vpop.permute.xlu0 %4611
      %4615 = vset.pattern.permute.xlu0 0
      %4616 = vperm.xlu0 %4615, %v4438
      %v4617 = vpop.permute.xlu0 %4616
      %v4619 = vmul.f32 %v4367, %v4442
      %v4620 = vmul.f32 %v4368, %v4447
      %v4621 = vmul.f32 %v4369, %v4452
      %v4622 = vmul.f32 %v4370, %v4457
      %v4623 = vmul.f32 %v4371, %v4462
      %v4624 = vmul.f32 %v4372, %v4467
      %v4625 = vmul.f32 %v4373, %v4472
      %v4626 = vmul.f32 %v4374, %v4477
      %v4627 = vmul.f32 %v4375, %v4482
      %v4628 = vmul.f32 %v4376, %v4487
      %v4629 = vmul.f32 %v4377, %v4492
      %v4630 = vmul.f32 %v4378, %v4497
      %v4631 = vmul.f32 %v4379, %v4502
      %v4632 = vmul.f32 %v4380, %v4507
      %v4633 = vmul.f32 %v4381, %v4512
      %v4634 = vmul.f32 %v4382, %v4517
      %v4635 = vmul.f32 %v4383, %v4522
      %v4636 = vmul.f32 %v4384, %v4527
      %v4637 = vmul.f32 %v4385, %v4532
      %v4638 = vmul.f32 %v4386, %v4537
      %v4639 = vmul.f32 %v4387, %v4542
      %v4640 = vmul.f32 %v4388, %v4547
      %v4641 = vmul.f32 %v4389, %v4552
      %v4642 = vmul.f32 %v4390, %v4557
      %v4643 = vmul.f32 %v4391, %v4562
      %v4644 = vmul.f32 %v4392, %v4567
      %v4645 = vmul.f32 %v4393, %v4572
      %v4646 = vmul.f32 %v4394, %v4577
      %v4647 = vmul.f32 %v4395, %v4582
      %v4648 = vmul.f32 %v4396, %v4587
      %v4649 = vmul.f32 %v4397, %v4592
      %v4650 = vmul.f32 %v4398, %v4597
      %v4651 = vmul.f32 %v4399, %v4602
      %v4652 = vmul.f32 %v4400, %v4607
      %v4653 = vmul.f32 %v4401, %v4612
      %v4654 = vmul.f32 %v4402, %v4617
      %v4655 = vpack.c.bf16 %v4620, %v4619
      %v4656 = vpack.c.bf16 %v4622, %v4621
      %v4657 = vpack.c.bf16 %v4624, %v4623
      %v4658 = vpack.c.bf16 %v4626, %v4625
      %v4659 = vpack.c.bf16 %v4628, %v4627
      %v4660 = vpack.c.bf16 %v4630, %v4629
      %v4661 = vpack.c.bf16 %v4632, %v4631
      %v4662 = vpack.c.bf16 %v4634, %v4633
      %v4663 = vpack.c.bf16 %v4636, %v4635
      %v4664 = vpack.c.bf16 %v4638, %v4637
      %v4665 = vpack.c.bf16 %v4640, %v4639
      %v4666 = vpack.c.bf16 %v4642, %v4641
      %v4667 = vpack.c.bf16 %v4644, %v4643
      %v4668 = vpack.c.bf16 %v4646, %v4645
      %v4669 = vpack.c.bf16 %v4648, %v4647
      %v4670 = vpack.c.bf16 %v4650, %v4649
      %v4671 = vpack.c.bf16 %v4652, %v4651
      %v4672 = vpack.c.bf16 %v4654, %v4653
      %vm4691 = vcmask 1043456
      %v4692 = vrot.slane %v4655, 4
      %v4693 = vrot.slane %v4656, 4
      %v4694 = vsel %vm4691, %v4692, %v4693
      %v4695 = vrot.slane %v4657, 4
      %v4696 = vsel %vm4691, %v4693, %v4695
      %v4697 = vrot.slane %v4658, 4
      %v4698 = vsel %vm4691, %v4695, %v4697
      %v4699 = vrot.slane %v4659, 4
      %v4700 = vsel %vm4691, %v4697, %v4699
      %v4701 = vrot.slane %v4660, 4
      %v4702 = vsel %vm4691, %v4699, %v4701
      %v4703 = vrot.slane %v4661, 4
      %v4704 = vsel %vm4691, %v4701, %v4703
      %v4705 = vrot.slane %v4662, 4
      %v4706 = vsel %vm4691, %v4703, %v4705
      %v4707 = vrot.slane %v4663, 4
      %v4708 = vsel %vm4691, %v4705, %v4707
      %v4709 = vrot.slane %v4664, 4
      %v4710 = vsel %vm4691, %v4707, %v4709
      %v4711 = vrot.slane %v4665, 4
      %v4712 = vsel %vm4691, %v4709, %v4711
      %v4713 = vrot.slane %v4666, 4
      %v4714 = vsel %vm4691, %v4711, %v4713
      %v4715 = vrot.slane %v4667, 4
      %v4716 = vsel %vm4691, %v4713, %v4715
      %v4717 = vrot.slane %v4668, 4
      %v4718 = vsel %vm4691, %v4715, %v4717
      %v4719 = vrot.slane %v4669, 4
      %v4720 = vsel %vm4691, %v4717, %v4719
      %v4721 = vrot.slane %v4670, 4
      %v4722 = vsel %vm4691, %v4719, %v4721
      %v4723 = vrot.slane %v4671, 4
      %v4724 = vsel %vm4691, %v4721, %v4723
      %v4725 = vrot.slane %v4672, 4
      %v4726 = vsel %vm4691, %v4723, %v4725
      %4746 = vst [vmem:[#allocation2 + $0x8] sm:$0xf0] %v4692
      %4747 = vst [vmem:[#allocation2 + $0x10] sm:$0xff] %v4694
      %4748 = vst [vmem:[#allocation2 + $0x18] sm:$0xff] %v4696
      %4749 = vst [vmem:[#allocation2 + $0x20] sm:$0xff] %v4698
      %4750 = vst [vmem:[#allocation2 + $0x28] sm:$0xff] %v4700
      %4751 = vst [vmem:[#allocation2 + $0x30] sm:$0xff] %v4702
      %4752 = vst [vmem:[#allocation2 + $0x38] sm:$0xff] %v4704
      %4753 = vst [vmem:[#allocation2 + $0x40] sm:$0xff] %v4706
      %4754 = vst [vmem:[#allocation2 + $0x48] sm:$0xff] %v4708
      %4755 = vst [vmem:[#allocation2 + $0x50] sm:$0xff] %v4710
      %4756 = vst [vmem:[#allocation2 + $0x58] sm:$0xff] %v4712
      %4757 = vst [vmem:[#allocation2 + $0x60] sm:$0xff] %v4714
      %4758 = vst [vmem:[#allocation2 + $0x68] sm:$0xff] %v4716
      %4759 = vst [vmem:[#allocation2 + $0x70] sm:$0xff] %v4718
      %4760 = vst [vmem:[#allocation2 + $0x78] sm:$0xff] %v4720
      %4761 = vst [vmem:[#allocation2 + $0x80] sm:$0xff] %v4722
      %4762 = vst [vmem:[#allocation2 + $0x88] sm:$0xff] %v4724
      %4763 = vst [vmem:[#allocation2 + $0x90] sm:$0xff] %v4726
      %4764 = vst [vmem:[#allocation2 + $0x98] sm:$0xf] %v4725
      %v4765 = vld [vmem:[#allocation2] sm:$0xfc]
      %v4766 = vld [vmem:[#allocation2 + $0x8] sm:$0xff]
      %v4767 = vld [vmem:[#allocation2 + $0x10] sm:$0xff]
      %v4768 = vld [vmem:[#allocation2 + $0x18] sm:$0xff]
      %v4769 = vld [vmem:[#allocation2 + $0x20] sm:$0xff]
      %v4770 = vld [vmem:[#allocation2 + $0x28] sm:$0xff]
      %v4771 = vld [vmem:[#allocation2 + $0x30] sm:$0xff]
      %v4772 = vld [vmem:[#allocation2 + $0x38] sm:$0xff]
      %v4773 = vld [vmem:[#allocation2 + $0x40] sm:$0xff]
      %v4774 = vld [vmem:[#allocation2 + $0x48] sm:$0xff]
      %v4775 = vld [vmem:[#allocation2 + $0x50] sm:$0xff]
      %v4776 = vld [vmem:[#allocation2 + $0x58] sm:$0xff]
      %v4777 = vld [vmem:[#allocation2 + $0x60] sm:$0xff]
      %v4778 = vld [vmem:[#allocation2 + $0x68] sm:$0xff]
      %v4779 = vld [vmem:[#allocation2 + $0x70] sm:$0xff]
      %v4780 = vld [vmem:[#allocation2 + $0x78] sm:$0xff]
      %v4781 = vld [vmem:[#allocation2 + $0x80] sm:$0xff]
      %v4782 = vld [vmem:[#allocation2 + $0x88] sm:$0xff]
      %v4783 = vld [vmem:[#allocation2 + $0x90] sm:$0x7]
      %v4784 = vld [vmem:[%s2] sm:$0xf]
      %v4785 = vld [vmem:[%s2 + $0x4] sm:$0xf]
      %v4786 = vld [vmem:[%s2 + $0x8] sm:$0xf]
      %v4787 = vld [vmem:[%s2 + $0xc] sm:$0xf]
      %v4788 = vld [vmem:[%s2 + $0x10] sm:$0xf]
      %v4789 = vld [vmem:[%s2 + $0x14] sm:$0xf]
      %v4790 = vld [vmem:[%s2 + $0x18] sm:$0xf]
      %v4791 = vld [vmem:[%s2 + $0x1c] sm:$0xf]
      %v4792 = vld [vmem:[%s2 + $0x20] sm:$0xf]
      %v4793 = vld [vmem:[%s2 + $0x24] sm:$0xf]
      %v4794 = vld [vmem:[%s2 + $0x28] sm:$0xf]
      %v4795 = vld [vmem:[%s2 + $0x2c] sm:$0xf]
      %v4796 = vld [vmem:[%s2 + $0x30] sm:$0xf]
      %v4797 = vld [vmem:[%s2 + $0x34] sm:$0xf]
      %v4798 = vld [vmem:[%s2 + $0x38] sm:$0xf]
      %v4799 = vld [vmem:[%s2 + $0x3c] sm:$0xf]
      %v4800 = vld [vmem:[#allocation2] sm:$0xf8]
      %s4801 = scalar_lea.vmem %s2, 64
      %v4802 = vld [vmem:[%s4801] sm:$0xf]
      %v4803 = vld [vmem:[%s4801 + $0x4] sm:$0xf]
      %v4804 = vld [vmem:[%s4801 + $0x8] sm:$0xf]
      %v4805 = vld [vmem:[%s4801 + $0xc] sm:$0xf]
      %v4806 = vld [vmem:[%s4801 + $0x10] sm:$0xf]
      %v4807 = vld [vmem:[%s4801 + $0x14] sm:$0xf]
      %v4808 = vld [vmem:[%s4801 + $0x18] sm:$0xf]
      %v4809 = vld [vmem:[%s4801 + $0x1c] sm:$0xf]
      %v4810 = vld [vmem:[%s4801 + $0x20] sm:$0xf]
      %v4811 = vld [vmem:[%s4801 + $0x24] sm:$0xf]
      %v4812 = vld [vmem:[%s4801 + $0x28] sm:$0xf]
      %v4813 = vld [vmem:[%s4801 + $0x2c] sm:$0xf]
      %v4814 = vld [vmem:[%s4801 + $0x30] sm:$0xf]
      %v4815 = vld [vmem:[%s4801 + $0x34] sm:$0xf]
      %v4816 = vld [vmem:[%s4801 + $0x38] sm:$0xf]
      %v4817 = vld [vmem:[%s4801 + $0x3c] sm:$0xf]
      %v4837 = vrot.slane %v4800, 3
      %v4838 = vrot.slane %v4766, 3
      %v4839 = vsel %vm421, %v4837, %v4838
      %v4840 = vrot.slane %v4767, 3
      %v4841 = vsel %vm421, %v4838, %v4840
      %v4842 = vrot.slane %v4768, 3
      %v4843 = vsel %vm421, %v4840, %v4842
      %v4844 = vrot.slane %v4769, 3
      %v4845 = vsel %vm421, %v4842, %v4844
      %v4846 = vrot.slane %v4770, 3
      %v4847 = vsel %vm421, %v4844, %v4846
      %v4848 = vrot.slane %v4771, 3
      %v4849 = vsel %vm421, %v4846, %v4848
      %v4850 = vrot.slane %v4772, 3
      %v4851 = vsel %vm421, %v4848, %v4850
      %v4852 = vrot.slane %v4773, 3
      %v4853 = vsel %vm421, %v4850, %v4852
      %v4854 = vrot.slane %v4774, 3
      %v4855 = vsel %vm421, %v4852, %v4854
      %v4856 = vrot.slane %v4775, 3
      %v4857 = vsel %vm421, %v4854, %v4856
      %v4858 = vrot.slane %v4776, 3
      %v4859 = vsel %vm421, %v4856, %v4858
      %v4860 = vrot.slane %v4777, 3
      %v4861 = vsel %vm421, %v4858, %v4860
      %v4862 = vrot.slane %v4778, 3
      %v4863 = vsel %vm421, %v4860, %v4862
      %v4864 = vrot.slane %v4779, 3
      %v4865 = vsel %vm421, %v4862, %v4864
      %v4866 = vrot.slane %v4780, 3
      %v4867 = vsel %vm421, %v4864, %v4866
      %v4868 = vrot.slane %v4781, 3
      %v4869 = vsel %vm421, %v4866, %v4868
      %v4870 = vrot.slane %v4782, 3
      %v4871 = vsel %vm421, %v4868, %v4870
      %v4872 = vrot.slane %v4783, 3
      %v4873 = vsel %vm421, %v4870, %v4872
      %v4908 = vunpack.c.l.b16 %v4802
      %v4909 = vunpack.c.l.b16 %v4803
      %v4910 = vunpack.c.l.b16 %v4804
      %v4911 = vunpack.c.l.b16 %v4805
      %v4912 = vunpack.c.l.b16 %v4806
      %v4913 = vunpack.c.l.b16 %v4807
      %v4914 = vunpack.c.l.b16 %v4808
      %v4915 = vunpack.c.l.b16 %v4809
      %v4916 = vunpack.c.l.b16 %v4810
      %v4917 = vunpack.c.l.b16 %v4811
      %v4918 = vunpack.c.l.b16 %v4812
      %v4919 = vunpack.c.l.b16 %v4813
      %v4920 = vunpack.c.l.b16 %v4814
      %v4921 = vunpack.c.l.b16 %v4815
      %v4922 = vunpack.c.l.b16 %v4816
      %v4923 = vunpack.c.l.b16 %v4817
      %v4924 = vpack.c.b16 %v4909, %v4908
      %v4925 = vpack.c.b16 %v4911, %v4910
      %v4926 = vpack.c.b16 %v4913, %v4912
      %v4927 = vpack.c.b16 %v4915, %v4914
      %v4928 = vpack.c.b16 %v4917, %v4916
      %v4929 = vpack.c.b16 %v4919, %v4918
      %v4930 = vpack.c.b16 %v4921, %v4920
      %v4931 = vpack.c.b16 %v4923, %v4922
      %4940 = vmatprep.subr.bf16.mxu0 0
      %4941 = vmatpush1.bf16.msra.mxu0 %v4924
      %4942 = vmatprep.subr.bf16.mxu0 0
      %4943 = vmatpush1.bf16.msra.mxu0 %v4925
      %4944 = vmatprep.subr.bf16.mxu0 0
      %4945 = vmatpush1.bf16.msra.mxu0 %v4926
      %4946 = vmatprep.subr.bf16.mxu0 0
      %4947 = vmatpush1.bf16.msra.mxu0 %v4927
      %4948 = vmatprep.subr.bf16.mxu0 0
      %4949 = vmatpush1.bf16.msra.mxu0 %v4928
      %4950 = vmatprep.subr.bf16.mxu0 0
      %4951 = vmatpush1.bf16.msra.mxu0 %v4929
      %4952 = vmatprep.subr.bf16.mxu0 0
      %4953 = vmatpush1.bf16.msra.mxu0 %v4930
      %4954 = vmatprep.subr.bf16.mxu0 0
      %4955 = vmatpush1.bf16.msra.mxu0 %v4931
      %4956 = vmatprep.subr.bf16.mxu0 0
      %4957 = vmatpush1.bf16.msra.mxu0 0
      %4958 = vmatprep.subr.bf16.mxu0 0
      %4959 = vmatpush1.bf16.msra.mxu0 0
      %4960 = vmatprep.subr.bf16.mxu0 0
      %4961 = vmatpush1.bf16.msra.mxu0 0
      %4962 = vmatprep.subr.bf16.mxu0 0
      %4963 = vmatpush1.bf16.msra.mxu0 0
      %4964 = vmatprep.subr.bf16.mxu0 0
      %4965 = vmatpush1.bf16.msra.mxu0 0
      %4966 = vmatprep.subr.bf16.mxu0 0
      %4967 = vmatpush1.bf16.msra.mxu0 0
      %4968 = vmatprep.subr.bf16.mxu0 0
      %4969 = vmatpush1.bf16.msra.mxu0 0
      %4970 = vmatprep.subr.bf16.mxu0 0
      %4971 = vmatpush1.bf16.msra.mxu0 0
      %4972 = vmatprep.mubr.bf16.mxu0 0
      %4973 = vmatmul.mubr.bf16.gmra.mrb[0].mxu0 %v4839
      %v4974 = vpop.f32.mrb[0].mxu0
      %v4975 = vadd.f32 0.0, %v4974
      %v4976 = vpop.f32.mrb[0].mxu0
      %v4977 = vpop.f32.mrb[0].mxu0
      %v4978 = vadd.f32 0.0, %v4977
      %v4979 = vpop.f32.mrb[0].mxu0
      %4980 = vmatprep.mubr.bf16.mxu0 0
      %4981 = vmatmul.mubr.bf16.gmra.mrb[0].mxu0 %v4841
      %v4982 = vpop.f32.mrb[0].mxu0
      %v4983 = vadd.f32 0.0, %v4982
      %v4984 = vpop.f32.mrb[0].mxu0
      %v4985 = vpop.f32.mrb[0].mxu0
      %v4986 = vadd.f32 0.0, %v4985
      %v4987 = vpop.f32.mrb[0].mxu0
      %4988 = vmatprep.mubr.bf16.mxu0 0
      %4989 = vmatmul.mubr.bf16.gmra.mrb[0].mxu0 %v4843
      %v4990 = vpop.f32.mrb[0].mxu0
      %v4991 = vadd.f32 0.0, %v4990
      %v4992 = vpop.f32.mrb[0].mxu0
      %v4993 = vpop.f32.mrb[0].mxu0
      %v4994 = vadd.f32 0.0, %v4993
      %v4995 = vpop.f32.mrb[0].mxu0
      %4996 = vmatprep.mubr.bf16.mxu0 0
      %4997 = vmatmul.mubr.bf16.gmra.mrb[0].mxu0 %v4845
      %v4998 = vpop.f32.mrb[0].mxu0
      %v4999 = vadd.f32 0.0, %v4998
      %v5000 = vpop.f32.mrb[0].mxu0
      %v5001 = vpop.f32.mrb[0].mxu0
      %v5002 = vadd.f32 0.0, %v5001
      %v5003 = vpop.f32.mrb[0].mxu0
      %5004 = vmatprep.mubr.bf16.mxu0 0
      %5005 = vmatmul.mubr.bf16.gmra.mrb[0].mxu0 %v4847
      %v5006 = vpop.f32.mrb[0].mxu0
      %v5007 = vadd.f32 0.0, %v5006
      %v5008 = vpop.f32.mrb[0].mxu0
      %v5009 = vpop.f32.mrb[0].mxu0
      %v5010 = vadd.f32 0.0, %v5009
      %v5011 = vpop.f32.mrb[0].mxu0
      %5012 = vmatprep.mubr.bf16.mxu0 0
      %5013 = vmatmul.mubr.bf16.gmra.mrb[0].mxu0 %v4849
      %v5014 = vpop.f32.mrb[0].mxu0
      %v5015 = vadd.f32 0.0, %v5014
      %v5016 = vpop.f32.mrb[0].mxu0
      %v5017 = vpop.f32.mrb[0].mxu0
      %v5018 = vadd.f32 0.0, %v5017
      %v5019 = vpop.f32.mrb[0].mxu0
      %5020 = vmatprep.mubr.bf16.mxu0 0
      %5021 = vmatmul.mubr.bf16.gmra.mrb[0].mxu0 %v4851
      %v5022 = vpop.f32.mrb[0].mxu0
      %v5023 = vadd.f32 0.0, %v5022
      %v5024 = vpop.f32.mrb[0].mxu0
      %v5025 = vpop.f32.mrb[0].mxu0
      %v5026 = vadd.f32 0.0, %v5025
      %v5027 = vpop.f32.mrb[0].mxu0
      %5028 = vmatprep.mubr.bf16.mxu0 0
      %5029 = vmatmul.mubr.bf16.gmra.mrb[0].mxu0 %v4853
      %v5030 = vpop.f32.mrb[0].mxu0
      %v5031 = vadd.f32 0.0, %v5030
      %v5032 = vpop.f32.mrb[0].mxu0
      %v5033 = vpop.f32.mrb[0].mxu0
      %v5034 = vadd.f32 0.0, %v5033
      %v5035 = vpop.f32.mrb[0].mxu0
      %5036 = vmatprep.mubr.bf16.mxu0 0
      %5037 = vmatmul.mubr.bf16.gmra.mrb[0].mxu0 %v4855
      %v5038 = vpop.f32.mrb[0].mxu0
      %v5039 = vadd.f32 0.0, %v5038
      %v5040 = vpop.f32.mrb[0].mxu0
      %v5041 = vpop.f32.mrb[0].mxu0
      %v5042 = vadd.f32 0.0, %v5041
      %v5043 = vpop.f32.mrb[0].mxu0
      %5044 = vmatprep.mubr.bf16.mxu0 0
      %5045 = vmatmul.mubr.bf16.gmra.mrb[0].mxu0 %v4857
      %v5046 = vpop.f32.mrb[0].mxu0
      %v5047 = vadd.f32 0.0, %v5046
      %v5048 = vpop.f32.mrb[0].mxu0
      %v5049 = vpop.f32.mrb[0].mxu0
      %v5050 = vadd.f32 0.0, %v5049
      %v5051 = vpop.f32.mrb[0].mxu0
      %5052 = vmatprep.mubr.bf16.mxu0 0
      %5053 = vmatmul.mubr.bf16.gmra.mrb[0].mxu0 %v4859
      %v5054 = vpop.f32.mrb[0].mxu0
      %v5055 = vadd.f32 0.0, %v5054
      %v5056 = vpop.f32.mrb[0].mxu0
      %v5057 = vpop.f32.mrb[0].mxu0
      %v5058 = vadd.f32 0.0, %v5057
      %v5059 = vpop.f32.mrb[0].mxu0
      %5060 = vmatprep.mubr.bf16.mxu0 0
      %5061 = vmatmul.mubr.bf16.gmra.mrb[0].mxu0 %v4861
      %v5062 = vpop.f32.mrb[0].mxu0
      %v5063 = vadd.f32 0.0, %v5062
      %v5064 = vpop.f32.mrb[0].mxu0
      %v5065 = vpop.f32.mrb[0].mxu0
      %v5066 = vadd.f32 0.0, %v5065
      %v5067 = vpop.f32.mrb[0].mxu0
      %5068 = vmatprep.mubr.bf16.mxu0 0
      %5069 = vmatmul.mubr.bf16.gmra.mrb[0].mxu0 %v4863
      %v5070 = vpop.f32.mrb[0].mxu0
      %v5071 = vadd.f32 0.0, %v5070
      %v5072 = vpop.f32.mrb[0].mxu0
      %v5073 = vpop.f32.mrb[0].mxu0
      %v5074 = vadd.f32 0.0, %v5073
      %v5075 = vpop.f32.mrb[0].mxu0
      %5076 = vmatprep.mubr.bf16.mxu0 0
      %5077 = vmatmul.mubr.bf16.gmra.mrb[0].mxu0 %v4865
      %v5078 = vpop.f32.mrb[0].mxu0
      %v5079 = vadd.f32 0.0, %v5078
      %v5080 = vpop.f32.mrb[0].mxu0
      %v5081 = vpop.f32.mrb[0].mxu0
      %v5082 = vadd.f32 0.0, %v5081
      %v5083 = vpop.f32.mrb[0].mxu0
      %5084 = vmatprep.mubr.bf16.mxu0 0
      %5085 = vmatmul.mubr.bf16.gmra.mrb[0].mxu0 %v4867
      %v5086 = vpop.f32.mrb[0].mxu0
      %v5087 = vadd.f32 0.0, %v5086
      %v5088 = vpop.f32.mrb[0].mxu0
      %v5089 = vpop.f32.mrb[0].mxu0
      %v5090 = vadd.f32 0.0, %v5089
      %v5091 = vpop.f32.mrb[0].mxu0
      %5092 = vmatprep.mubr.bf16.mxu0 0
      %5093 = vmatmul.mubr.bf16.gmra.mrb[0].mxu0 %v4869
      %v5094 = vpop.f32.mrb[0].mxu0
      %v5095 = vadd.f32 0.0, %v5094
      %v5096 = vpop.f32.mrb[0].mxu0
      %v5097 = vpop.f32.mrb[0].mxu0
      %v5098 = vadd.f32 0.0, %v5097
      %v5099 = vpop.f32.mrb[0].mxu0
      %5100 = vmatprep.mubr.bf16.mxu0 0
      %5101 = vmatmul.mubr.bf16.gmra.mrb[0].mxu0 %v4871
      %v5102 = vpop.f32.mrb[0].mxu0
      %v5103 = vadd.f32 0.0, %v5102
      %v5104 = vpop.f32.mrb[0].mxu0
      %v5105 = vpop.f32.mrb[0].mxu0
      %v5106 = vadd.f32 0.0, %v5105
      %v5107 = vpop.f32.mrb[0].mxu0
      %5108 = vmatprep.mubr.bf16.mxu0 0
      %5109 = vmatmul.mubr.bf16.gmra.mrb[0].mxu0 %v4873
      %v5110 = vpop.f32.mrb[0].mxu0
      %v5111 = vadd.f32 0.0, %v5110
      %v5112 = vpop.f32.mrb[0].mxu0
      %v5113 = vpop.f32.mrb[0].mxu0
      %v5114 = vadd.f32 0.0, %v5113
      %v5115 = vpop.f32.mrb[0].mxu0
      %5116 = vdwg.mxu0
      %v5118 = vshrl.u32 %v4765, 16
      %v5120 = vrot.slane %v5118, 2
      %v5121 = vshll.u32 %v4765, 16
      %v5123 = vrot.slane %v5121, 3
      %v5124 = vor.u32 %v5120, %v5123
      %v5126 = vshrl.u32 %v4766, 16
      %v5128 = vrot.slane %v5126, 2
      %v5129 = vshll.u32 %v4766, 16
      %v5131 = vrot.slane %v5129, 3
      %v5132 = vor.u32 %v5128, %v5131
      %v5133 = vsel %vm705, %v5124, %v5132
      %v5135 = vshrl.u32 %v4767, 16
      %v5137 = vrot.slane %v5135, 2
      %v5138 = vshll.u32 %v4767, 16
      %v5140 = vrot.slane %v5138, 3
      %v5141 = vor.u32 %v5137, %v5140
      %v5142 = vsel %vm705, %v5132, %v5141
      %v5144 = vshrl.u32 %v4768, 16
      %v5146 = vrot.slane %v5144, 2
      %v5147 = vshll.u32 %v4768, 16
      %v5149 = vrot.slane %v5147, 3
      %v5150 = vor.u32 %v5146, %v5149
      %v5151 = vsel %vm705, %v5141, %v5150
      %v5153 = vshrl.u32 %v4769, 16
      %v5155 = vrot.slane %v5153, 2
      %v5156 = vshll.u32 %v4769, 16
      %v5158 = vrot.slane %v5156, 3
      %v5159 = vor.u32 %v5155, %v5158
      %v5160 = vsel %vm705, %v5150, %v5159
      %v5162 = vshrl.u32 %v4770, 16
      %v5164 = vrot.slane %v5162, 2
      %v5165 = vshll.u32 %v4770, 16
      %v5167 = vrot.slane %v5165, 3
      %v5168 = vor.u32 %v5164, %v5167
      %v5169 = vsel %vm705, %v5159, %v5168
      %v5171 = vshrl.u32 %v4771, 16
      %v5173 = vrot.slane %v5171, 2
      %v5174 = vshll.u32 %v4771, 16
      %v5176 = vrot.slane %v5174, 3
      %v5177 = vor.u32 %v5173, %v5176
      %v5178 = vsel %vm705, %v5168, %v5177
      %v5180 = vshrl.u32 %v4772, 16
      %v5182 = vrot.slane %v5180, 2
      %v5183 = vshll.u32 %v4772, 16
      %v5185 = vrot.slane %v5183, 3
      %v5186 = vor.u32 %v5182, %v5185
      %v5187 = vsel %vm705, %v5177, %v5186
      %v5189 = vshrl.u32 %v4773, 16
      %v5191 = vrot.slane %v5189, 2
      %v5192 = vshll.u32 %v4773, 16
      %v5194 = vrot.slane %v5192, 3
      %v5195 = vor.u32 %v5191, %v5194
      %v5196 = vsel %vm705, %v5186, %v5195
      %v5198 = vshrl.u32 %v4774, 16
      %v5200 = vrot.slane %v5198, 2
      %v5201 = vshll.u32 %v4774, 16
      %v5203 = vrot.slane %v5201, 3
      %v5204 = vor.u32 %v5200, %v5203
      %v5205 = vsel %vm705, %v5195, %v5204
      %v5207 = vshrl.u32 %v4775, 16
      %v5209 = vrot.slane %v5207, 2
      %v5210 = vshll.u32 %v4775, 16
      %v5212 = vrot.slane %v5210, 3
      %v5213 = vor.u32 %v5209, %v5212
      %v5214 = vsel %vm705, %v5204, %v5213
      %v5216 = vshrl.u32 %v4776, 16
      %v5218 = vrot.slane %v5216, 2
      %v5219 = vshll.u32 %v4776, 16
      %v5221 = vrot.slane %v5219, 3
      %v5222 = vor.u32 %v5218, %v5221
      %v5223 = vsel %vm705, %v5213, %v5222
      %v5225 = vshrl.u32 %v4777, 16
      %v5227 = vrot.slane %v5225, 2
      %v5228 = vshll.u32 %v4777, 16
      %v5230 = vrot.slane %v5228, 3
      %v5231 = vor.u32 %v5227, %v5230
      %v5232 = vsel %vm705, %v5222, %v5231
      %v5234 = vshrl.u32 %v4778, 16
      %v5236 = vrot.slane %v5234, 2
      %v5237 = vshll.u32 %v4778, 16
      %v5239 = vrot.slane %v5237, 3
      %v5240 = vor.u32 %v5236, %v5239
      %v5241 = vsel %vm705, %v5231, %v5240
      %v5243 = vshrl.u32 %v4779, 16
      %v5245 = vrot.slane %v5243, 2
      %v5246 = vshll.u32 %v4779, 16
      %v5248 = vrot.slane %v5246, 3
      %v5249 = vor.u32 %v5245, %v5248
      %v5250 = vsel %vm705, %v5240, %v5249
      %v5252 = vshrl.u32 %v4780, 16
      %v5254 = vrot.slane %v5252, 2
      %v5255 = vshll.u32 %v4780, 16
      %v5257 = vrot.slane %v5255, 3
      %v5258 = vor.u32 %v5254, %v5257
      %v5259 = vsel %vm705, %v5249, %v5258
      %v5261 = vshrl.u32 %v4781, 16
      %v5263 = vrot.slane %v5261, 2
      %v5264 = vshll.u32 %v4781, 16
      %v5266 = vrot.slane %v5264, 3
      %v5267 = vor.u32 %v5263, %v5266
      %v5268 = vsel %vm705, %v5258, %v5267
      %v5270 = vshrl.u32 %v4782, 16
      %v5272 = vrot.slane %v5270, 2
      %v5273 = vshll.u32 %v4782, 16
      %v5275 = vrot.slane %v5273, 3
      %v5276 = vor.u32 %v5272, %v5275
      %v5277 = vsel %vm705, %v5267, %v5276
      %v5279 = vshrl.u32 %v4783, 16
      %v5281 = vrot.slane %v5279, 2
      %v5282 = vshll.u32 %v4783, 16
      %v5284 = vrot.slane %v5282, 3
      %v5285 = vor.u32 %v5281, %v5284
      %v5286 = vsel %vm705, %v5276, %v5285
      %v5321 = vunpack.c.l.b16 %v4784
      %v5322 = vunpack.c.l.b16 %v4785
      %v5323 = vunpack.c.l.b16 %v4786
      %v5324 = vunpack.c.l.b16 %v4787
      %v5325 = vunpack.c.l.b16 %v4788
      %v5326 = vunpack.c.l.b16 %v4789
      %v5327 = vunpack.c.l.b16 %v4790
      %v5328 = vunpack.c.l.b16 %v4791
      %v5329 = vunpack.c.l.b16 %v4792
      %v5330 = vunpack.c.l.b16 %v4793
      %v5331 = vunpack.c.l.b16 %v4794
      %v5332 = vunpack.c.l.b16 %v4795
      %v5333 = vunpack.c.l.b16 %v4796
      %v5334 = vunpack.c.l.b16 %v4797
      %v5335 = vunpack.c.l.b16 %v4798
      %v5336 = vunpack.c.l.b16 %v4799
      %v5337 = vpack.c.b16 %v5322, %v5321
      %v5338 = vpack.c.b16 %v5324, %v5323
      %v5339 = vpack.c.b16 %v5326, %v5325
      %v5340 = vpack.c.b16 %v5328, %v5327
      %v5341 = vpack.c.b16 %v5330, %v5329
      %v5342 = vpack.c.b16 %v5332, %v5331
      %v5343 = vpack.c.b16 %v5334, %v5333
      %v5344 = vpack.c.b16 %v5336, %v5335
      %5353 = vmatprep.subr.bf16.mxu0 0
      %5354 = vmatpush1.bf16.msra.mxu0 %v5337
      %5355 = vmatprep.subr.bf16.mxu0 0
      %5356 = vmatpush1.bf16.msra.mxu0 %v5338
      %5357 = vmatprep.subr.bf16.mxu0 0
      %5358 = vmatpush1.bf16.msra.mxu0 %v5339
      %5359 = vmatprep.subr.bf16.mxu0 0
      %5360 = vmatpush1.bf16.msra.mxu0 %v5340
      %5361 = vmatprep.subr.bf16.mxu0 0
      %5362 = vmatpush1.bf16.msra.mxu0 %v5341
      %5363 = vmatprep.subr.bf16.mxu0 0
      %5364 = vmatpush1.bf16.msra.mxu0 %v5342
      %5365 = vmatprep.subr.bf16.mxu0 0
      %5366 = vmatpush1.bf16.msra.mxu0 %v5343
      %5367 = vmatprep.subr.bf16.mxu0 0
      %5368 = vmatpush1.bf16.msra.mxu0 %v5344
      %5369 = vmatprep.subr.bf16.mxu0 0
      %5370 = vmatpush1.bf16.msra.mxu0 0
      %5371 = vmatprep.subr.bf16.mxu0 0
      %5372 = vmatpush1.bf16.msra.mxu0 0
      %5373 = vmatprep.subr.bf16.mxu0 0
      %5374 = vmatpush1.bf16.msra.mxu0 0
      %5375 = vmatprep.subr.bf16.mxu0 0
      %5376 = vmatpush1.bf16.msra.mxu0 0
      %5377 = vmatprep.subr.bf16.mxu0 0
      %5378 = vmatpush1.bf16.msra.mxu0 0
      %5379 = vmatprep.subr.bf16.mxu0 0
      %5380 = vmatpush1.bf16.msra.mxu0 0
      %5381 = vmatprep.subr.bf16.mxu0 0
      %5382 = vmatpush1.bf16.msra.mxu0 0
      %5383 = vmatprep.subr.bf16.mxu0 0
      %5384 = vmatpush1.bf16.msra.mxu0 0
      %5385 = vmatprep.mubr.bf16.mxu0 0
      %5386 = vmatmul.mubr.bf16.gmra.mrb[0].mxu0 %v5133
      %v5387 = vpop.f32.mrb[0].mxu0
      %v5388 = vadd.f32 %v4975, %v5387
      %v5389 = vpop.f32.mrb[0].mxu0
      %v5390 = vpop.f32.mrb[0].mxu0
      %v5391 = vadd.f32 %v4978, %v5390
      %v5392 = vpop.f32.mrb[0].mxu0
      %5393 = vmatprep.mubr.bf16.mxu0 0
      %5394 = vmatmul.mubr.bf16.gmra.mrb[0].mxu0 %v5142
      %v5395 = vpop.f32.mrb[0].mxu0
      %v5396 = vadd.f32 %v4983, %v5395
      %v5397 = vpop.f32.mrb[0].mxu0
      %v5398 = vpop.f32.mrb[0].mxu0
      %v5399 = vadd.f32 %v4986, %v5398
      %v5400 = vpop.f32.mrb[0].mxu0
      %5401 = vmatprep.mubr.bf16.mxu0 0
      %5402 = vmatmul.mubr.bf16.gmra.mrb[0].mxu0 %v5151
      %v5403 = vpop.f32.mrb[0].mxu0
      %v5404 = vadd.f32 %v4991, %v5403
      %v5405 = vpop.f32.mrb[0].mxu0
      %v5406 = vpop.f32.mrb[0].mxu0
      %v5407 = vadd.f32 %v4994, %v5406
      %v5408 = vpop.f32.mrb[0].mxu0
      %5409 = vmatprep.mubr.bf16.mxu0 0
      %5410 = vmatmul.mubr.bf16.gmra.mrb[0].mxu0 %v5160
      %v5411 = vpop.f32.mrb[0].mxu0
      %v5412 = vadd.f32 %v4999, %v5411
      %v5413 = vpop.f32.mrb[0].mxu0
      %v5414 = vpop.f32.mrb[0].mxu0
      %v5415 = vadd.f32 %v5002, %v5414
      %v5416 = vpop.f32.mrb[0].mxu0
      %5417 = vmatprep.mubr.bf16.mxu0 0
      %5418 = vmatmul.mubr.bf16.gmra.mrb[0].mxu0 %v5169
      %v5419 = vpop.f32.mrb[0].mxu0
      %v5420 = vadd.f32 %v5007, %v5419
      %v5421 = vpop.f32.mrb[0].mxu0
      %v5422 = vpop.f32.mrb[0].mxu0
      %v5423 = vadd.f32 %v5010, %v5422
      %v5424 = vpop.f32.mrb[0].mxu0
      %5425 = vmatprep.mubr.bf16.mxu0 0
      %5426 = vmatmul.mubr.bf16.gmra.mrb[0].mxu0 %v5178
      %v5427 = vpop.f32.mrb[0].mxu0
      %v5428 = vadd.f32 %v5015, %v5427
      %v5429 = vpop.f32.mrb[0].mxu0
      %v5430 = vpop.f32.mrb[0].mxu0
      %v5431 = vadd.f32 %v5018, %v5430
      %v5432 = vpop.f32.mrb[0].mxu0
      %5433 = vmatprep.mubr.bf16.mxu0 0
      %5434 = vmatmul.mubr.bf16.gmra.mrb[0].mxu0 %v5187
      %v5435 = vpop.f32.mrb[0].mxu0
      %v5436 = vadd.f32 %v5023, %v5435
      %v5437 = vpop.f32.mrb[0].mxu0
      %v5438 = vpop.f32.mrb[0].mxu0
      %v5439 = vadd.f32 %v5026, %v5438
      %v5440 = vpop.f32.mrb[0].mxu0
      %5441 = vmatprep.mubr.bf16.mxu0 0
      %5442 = vmatmul.mubr.bf16.gmra.mrb[0].mxu0 %v5196
      %v5443 = vpop.f32.mrb[0].mxu0
      %v5444 = vadd.f32 %v5031, %v5443
      %v5445 = vpop.f32.mrb[0].mxu0
      %v5446 = vpop.f32.mrb[0].mxu0
      %v5447 = vadd.f32 %v5034, %v5446
      %v5448 = vpop.f32.mrb[0].mxu0
      %5449 = vmatprep.mubr.bf16.mxu0 0
      %5450 = vmatmul.mubr.bf16.gmra.mrb[0].mxu0 %v5205
      %v5451 = vpop.f32.mrb[0].mxu0
      %v5452 = vadd.f32 %v5039, %v5451
      %v5453 = vpop.f32.mrb[0].mxu0
      %v5454 = vpop.f32.mrb[0].mxu0
      %v5455 = vadd.f32 %v5042, %v5454
      %v5456 = vpop.f32.mrb[0].mxu0
      %5457 = vmatprep.mubr.bf16.mxu0 0
      %5458 = vmatmul.mubr.bf16.gmra.mrb[0].mxu0 %v5214
      %v5459 = vpop.f32.mrb[0].mxu0
      %v5460 = vadd.f32 %v5047, %v5459
      %v5461 = vpop.f32.mrb[0].mxu0
      %v5462 = vpop.f32.mrb[0].mxu0
      %v5463 = vadd.f32 %v5050, %v5462
      %v5464 = vpop.f32.mrb[0].mxu0
      %5465 = vmatprep.mubr.bf16.mxu0 0
      %5466 = vmatmul.mubr.bf16.gmra.mrb[0].mxu0 %v5223
      %v5467 = vpop.f32.mrb[0].mxu0
      %v5468 = vadd.f32 %v5055, %v5467
      %v5469 = vpop.f32.mrb[0].mxu0
      %v5470 = vpop.f32.mrb[0].mxu0
      %v5471 = vadd.f32 %v5058, %v5470
      %v5472 = vpop.f32.mrb[0].mxu0
      %5473 = vmatprep.mubr.bf16.mxu0 0
      %5474 = vmatmul.mubr.bf16.gmra.mrb[0].mxu0 %v5232
      %v5475 = vpop.f32.mrb[0].mxu0
      %v5476 = vadd.f32 %v5063, %v5475
      %v5477 = vpop.f32.mrb[0].mxu0
      %v5478 = vpop.f32.mrb[0].mxu0
      %v5479 = vadd.f32 %v5066, %v5478
      %v5480 = vpop.f32.mrb[0].mxu0
      %5481 = vmatprep.mubr.bf16.mxu0 0
      %5482 = vmatmul.mubr.bf16.gmra.mrb[0].mxu0 %v5241
      %v5483 = vpop.f32.mrb[0].mxu0
      %v5484 = vadd.f32 %v5071, %v5483
      %v5485 = vpop.f32.mrb[0].mxu0
      %v5486 = vpop.f32.mrb[0].mxu0
      %v5487 = vadd.f32 %v5074, %v5486
      %v5488 = vpop.f32.mrb[0].mxu0
      %5489 = vmatprep.mubr.bf16.mxu0 0
      %5490 = vmatmul.mubr.bf16.gmra.mrb[0].mxu0 %v5250
      %v5491 = vpop.f32.mrb[0].mxu0
      %v5492 = vadd.f32 %v5079, %v5491
      %v5493 = vpop.f32.mrb[0].mxu0
      %v5494 = vpop.f32.mrb[0].mxu0
      %v5495 = vadd.f32 %v5082, %v5494
      %v5496 = vpop.f32.mrb[0].mxu0
      %5497 = vmatprep.mubr.bf16.mxu0 0
      %5498 = vmatmul.mubr.bf16.gmra.mrb[0].mxu0 %v5259
      %v5499 = vpop.f32.mrb[0].mxu0
      %v5500 = vadd.f32 %v5087, %v5499
      %v5501 = vpop.f32.mrb[0].mxu0
      %v5502 = vpop.f32.mrb[0].mxu0
      %v5503 = vadd.f32 %v5090, %v5502
      %v5504 = vpop.f32.mrb[0].mxu0
      %5505 = vmatprep.mubr.bf16.mxu0 0
      %5506 = vmatmul.mubr.bf16.gmra.mrb[0].mxu0 %v5268
      %v5507 = vpop.f32.mrb[0].mxu0
      %v5508 = vadd.f32 %v5095, %v5507
      %v5509 = vpop.f32.mrb[0].mxu0
      %v5510 = vpop.f32.mrb[0].mxu0
      %v5511 = vadd.f32 %v5098, %v5510
      %v5512 = vpop.f32.mrb[0].mxu0
      %5513 = vmatprep.mubr.bf16.mxu0 0
      %5514 = vmatmul.mubr.bf16.gmra.mrb[0].mxu0 %v5277
      %v5515 = vpop.f32.mrb[0].mxu0
      %v5516 = vadd.f32 %v5103, %v5515
      %v5517 = vpop.f32.mrb[0].mxu0
      %v5518 = vpop.f32.mrb[0].mxu0
      %v5519 = vadd.f32 %v5106, %v5518
      %v5520 = vpop.f32.mrb[0].mxu0
      %5521 = vmatprep.mubr.bf16.mxu0 0
      %5522 = vmatmul.mubr.bf16.gmra.mrb[0].mxu0 %v5286
      %v5523 = vpop.f32.mrb[0].mxu0
      %v5524 = vadd.f32 %v5111, %v5523
      %v5525 = vpop.f32.mrb[0].mxu0
      %v5526 = vpop.f32.mrb[0].mxu0
      %v5527 = vadd.f32 %v5114, %v5526
      %v5528 = vpop.f32.mrb[0].mxu0
      %5529 = vdwg.mxu0
      %v5530 = vld [vmem:[#allocation2 + $0x90] sm:$0xf]
      %s5531 = scalar_lea.vmem %s2, 128
      %v5532 = vld [vmem:[%s5531] sm:$0xf]
      %v5533 = vld [vmem:[%s5531 + $0x4] sm:$0xf]
      %v5534 = vld [vmem:[%s5531 + $0x8] sm:$0xf]
      %v5535 = vld [vmem:[%s5531 + $0xc] sm:$0xf]
      %v5536 = vld [vmem:[%s5531 + $0x10] sm:$0xf]
      %v5537 = vld [vmem:[%s5531 + $0x14] sm:$0xf]
      %v5538 = vld [vmem:[%s5531 + $0x18] sm:$0xf]
      %v5539 = vld [vmem:[%s5531 + $0x1c] sm:$0xf]
      %v5540 = vld [vmem:[%s5531 + $0x20] sm:$0xf]
      %v5541 = vld [vmem:[%s5531 + $0x24] sm:$0xf]
      %v5542 = vld [vmem:[%s5531 + $0x28] sm:$0xf]
      %v5543 = vld [vmem:[%s5531 + $0x2c] sm:$0xf]
      %v5544 = vld [vmem:[%s5531 + $0x30] sm:$0xf]
      %v5545 = vld [vmem:[%s5531 + $0x34] sm:$0xf]
      %v5546 = vld [vmem:[%s5531 + $0x38] sm:$0xf]
      %v5547 = vld [vmem:[%s5531 + $0x3c] sm:$0xf]
      %v5549 = vshrl.u32 %v4800, 16
      %v5551 = vrot.slane %v5549, 3
      %v5552 = vshll.u32 %v4800, 16
      %v5554 = vrot.slane %v5552, 4
      %v5555 = vor.u32 %v5551, %v5554
      %v5556 = vrot.slane %v5126, 3
      %v5557 = vrot.slane %v5129, 4
      %v5558 = vor.u32 %v5556, %v5557
      %v5559 = vsel %vm1140, %v5555, %v5558
      %v5560 = vrot.slane %v5135, 3
      %v5561 = vrot.slane %v5138, 4
      %v5562 = vor.u32 %v5560, %v5561
      %v5563 = vsel %vm1140, %v5558, %v5562
      %v5564 = vrot.slane %v5144, 3
      %v5565 = vrot.slane %v5147, 4
      %v5566 = vor.u32 %v5564, %v5565
      %v5567 = vsel %vm1140, %v5562, %v5566
      %v5568 = vrot.slane %v5153, 3
      %v5569 = vrot.slane %v5156, 4
      %v5570 = vor.u32 %v5568, %v5569
      %v5571 = vsel %vm1140, %v5566, %v5570
      %v5572 = vrot.slane %v5162, 3
      %v5573 = vrot.slane %v5165, 4
      %v5574 = vor.u32 %v5572, %v5573
      %v5575 = vsel %vm1140, %v5570, %v5574
      %v5576 = vrot.slane %v5171, 3
      %v5577 = vrot.slane %v5174, 4
      %v5578 = vor.u32 %v5576, %v5577
      %v5579 = vsel %vm1140, %v5574, %v5578
      %v5580 = vrot.slane %v5180, 3
      %v5581 = vrot.slane %v5183, 4
      %v5582 = vor.u32 %v5580, %v5581
      %v5583 = vsel %vm1140, %v5578, %v5582
      %v5584 = vrot.slane %v5189, 3
      %v5585 = vrot.slane %v5192, 4
      %v5586 = vor.u32 %v5584, %v5585
      %v5587 = vsel %vm1140, %v5582, %v5586
      %v5588 = vrot.slane %v5198, 3
      %v5589 = vrot.slane %v5201, 4
      %v5590 = vor.u32 %v5588, %v5589
      %v5591 = vsel %vm1140, %v5586, %v5590
      %v5592 = vrot.slane %v5207, 3
      %v5593 = vrot.slane %v5210, 4
      %v5594 = vor.u32 %v5592, %v5593
      %v5595 = vsel %vm1140, %v5590, %v5594
      %v5596 = vrot.slane %v5216, 3
      %v5597 = vrot.slane %v5219, 4
      %v5598 = vor.u32 %v5596, %v5597
      %v5599 = vsel %vm1140, %v5594, %v5598
      %v5600 = vrot.slane %v5225, 3
      %v5601 = vrot.slane %v5228, 4
      %v5602 = vor.u32 %v5600, %v5601
      %v5603 = vsel %vm1140, %v5598, %v5602
      %v5604 = vrot.slane %v5234, 3
      %v5605 = vrot.slane %v5237, 4
      %v5606 = vor.u32 %v5604, %v5605
      %v5607 = vsel %vm1140, %v5602, %v5606
      %v5608 = vrot.slane %v5243, 3
      %v5609 = vrot.slane %v5246, 4
      %v5610 = vor.u32 %v5608, %v5609
      %v5611 = vsel %vm1140, %v5606, %v5610
      %v5612 = vrot.slane %v5252, 3
      %v5613 = vrot.slane %v5255, 4
      %v5614 = vor.u32 %v5612, %v5613
      %v5615 = vsel %vm1140, %v5610, %v5614
      %v5616 = vrot.slane %v5261, 3
      %v5617 = vrot.slane %v5264, 4
      %v5618 = vor.u32 %v5616, %v5617
      %v5619 = vsel %vm1140, %v5614, %v5618
      %v5620 = vrot.slane %v5270, 3
      %v5621 = vrot.slane %v5273, 4
      %v5622 = vor.u32 %v5620, %v5621
      %v5623 = vsel %vm1140, %v5618, %v5622
      %v5625 = vshrl.u32 %v5530, 16
      %v5627 = vrot.slane %v5625, 3
      %v5628 = vshll.u32 %v5530, 16
      %v5630 = vrot.slane %v5628, 4
      %v5631 = vor.u32 %v5627, %v5630
      %v5632 = vsel %vm1140, %v5622, %v5631
      %v5667 = vunpack.c.l.b16 %v5532
      %v5668 = vunpack.c.l.b16 %v5533
      %v5669 = vunpack.c.l.b16 %v5534
      %v5670 = vunpack.c.l.b16 %v5535
      %v5671 = vunpack.c.l.b16 %v5536
      %v5672 = vunpack.c.l.b16 %v5537
      %v5673 = vunpack.c.l.b16 %v5538
      %v5674 = vunpack.c.l.b16 %v5539
      %v5675 = vunpack.c.l.b16 %v5540
      %v5676 = vunpack.c.l.b16 %v5541
      %v5677 = vunpack.c.l.b16 %v5542
      %v5678 = vunpack.c.l.b16 %v5543
      %v5679 = vunpack.c.l.b16 %v5544
      %v5680 = vunpack.c.l.b16 %v5545
      %v5681 = vunpack.c.l.b16 %v5546
      %v5682 = vunpack.c.l.b16 %v5547
      %v5683 = vpack.c.b16 %v5668, %v5667
      %v5684 = vpack.c.b16 %v5670, %v5669
      %v5685 = vpack.c.b16 %v5672, %v5671
      %v5686 = vpack.c.b16 %v5674, %v5673
      %v5687 = vpack.c.b16 %v5676, %v5675
      %v5688 = vpack.c.b16 %v5678, %v5677
      %v5689 = vpack.c.b16 %v5680, %v5679
      %v5690 = vpack.c.b16 %v5682, %v5681
      %5699 = vmatprep.subr.bf16.mxu0 0
      %5700 = vmatpush1.bf16.msra.mxu0 %v5683
      %5701 = vmatprep.subr.bf16.mxu0 0
      %5702 = vmatpush1.bf16.msra.mxu0 %v5684
      %5703 = vmatprep.subr.bf16.mxu0 0
      %5704 = vmatpush1.bf16.msra.mxu0 %v5685
      %5705 = vmatprep.subr.bf16.mxu0 0
      %5706 = vmatpush1.bf16.msra.mxu0 %v5686
      %5707 = vmatprep.subr.bf16.mxu0 0
      %5708 = vmatpush1.bf16.msra.mxu0 %v5687
      %5709 = vmatprep.subr.bf16.mxu0 0
      %5710 = vmatpush1.bf16.msra.mxu0 %v5688
      %5711 = vmatprep.subr.bf16.mxu0 0
      %5712 = vmatpush1.bf16.msra.mxu0 %v5689
      %5713 = vmatprep.subr.bf16.mxu0 0
      %5714 = vmatpush1.bf16.msra.mxu0 %v5690
      %5715 = vmatprep.subr.bf16.mxu0 0
      %5716 = vmatpush1.bf16.msra.mxu0 0
      %5717 = vmatprep.subr.bf16.mxu0 0
      %5718 = vmatpush1.bf16.msra.mxu0 0
      %5719 = vmatprep.subr.bf16.mxu0 0
      %5720 = vmatpush1.bf16.msra.mxu0 0
      %5721 = vmatprep.subr.bf16.mxu0 0
      %5722 = vmatpush1.bf16.msra.mxu0 0
      %5723 = vmatprep.subr.bf16.mxu0 0
      %5724 = vmatpush1.bf16.msra.mxu0 0
      %5725 = vmatprep.subr.bf16.mxu0 0
      %5726 = vmatpush1.bf16.msra.mxu0 0
      %5727 = vmatprep.subr.bf16.mxu0 0
      %5728 = vmatpush1.bf16.msra.mxu0 0
      %5729 = vmatprep.subr.bf16.mxu0 0
      %5730 = vmatpush1.bf16.msra.mxu0 0
      %5731 = vmatprep.mubr.bf16.mxu0 0
      %5732 = vmatmul.mubr.bf16.gmra.mrb[0].mxu0 %v5559
      %v5733 = vpop.f32.mrb[0].mxu0
      %v5734 = vadd.f32 0.0, %v5733
      %v5735 = vpop.f32.mrb[0].mxu0
      %v5736 = vpop.f32.mrb[0].mxu0
      %v5737 = vadd.f32 0.0, %v5736
      %v5738 = vpop.f32.mrb[0].mxu0
      %5739 = vmatprep.mubr.bf16.mxu0 0
      %5740 = vmatmul.mubr.bf16.gmra.mrb[0].mxu0 %v5563
      %v5741 = vpop.f32.mrb[0].mxu0
      %v5742 = vadd.f32 0.0, %v5741
      %v5743 = vpop.f32.mrb[0].mxu0
      %v5744 = vpop.f32.mrb[0].mxu0
      %v5745 = vadd.f32 0.0, %v5744
      %v5746 = vpop.f32.mrb[0].mxu0
      %5747 = vmatprep.mubr.bf16.mxu0 0
      %5748 = vmatmul.mubr.bf16.gmra.mrb[0].mxu0 %v5567
      %v5749 = vpop.f32.mrb[0].mxu0
      %v5750 = vadd.f32 0.0, %v5749
      %v5751 = vpop.f32.mrb[0].mxu0
      %v5752 = vpop.f32.mrb[0].mxu0
      %v5753 = vadd.f32 0.0, %v5752
      %v5754 = vpop.f32.mrb[0].mxu0
      %5755 = vmatprep.mubr.bf16.mxu0 0
      %5756 = vmatmul.mubr.bf16.gmra.mrb[0].mxu0 %v5571
      %v5757 = vpop.f32.mrb[0].mxu0
      %v5758 = vadd.f32 0.0, %v5757
      %v5759 = vpop.f32.mrb[0].mxu0
      %v5760 = vpop.f32.mrb[0].mxu0
      %v5761 = vadd.f32 0.0, %v5760
      %v5762 = vpop.f32.mrb[0].mxu0
      %5763 = vmatprep.mubr.bf16.mxu0 0
      %5764 = vmatmul.mubr.bf16.gmra.mrb[0].mxu0 %v5575
      %v5765 = vpop.f32.mrb[0].mxu0
      %v5766 = vadd.f32 0.0, %v5765
      %v5767 = vpop.f32.mrb[0].mxu0
      %v5768 = vpop.f32.mrb[0].mxu0
      %v5769 = vadd.f32 0.0, %v5768
      %v5770 = vpop.f32.mrb[0].mxu0
      %5771 = vmatprep.mubr.bf16.mxu0 0
      %5772 = vmatmul.mubr.bf16.gmra.mrb[0].mxu0 %v5579
      %v5773 = vpop.f32.mrb[0].mxu0
      %v5774 = vadd.f32 0.0, %v5773
      %v5775 = vpop.f32.mrb[0].mxu0
      %v5776 = vpop.f32.mrb[0].mxu0
      %v5777 = vadd.f32 0.0, %v5776
      %v5778 = vpop.f32.mrb[0].mxu0
      %5779 = vmatprep.mubr.bf16.mxu0 0
      %5780 = vmatmul.mubr.bf16.gmra.mrb[0].mxu0 %v5583
      %v5781 = vpop.f32.mrb[0].mxu0
      %v5782 = vadd.f32 0.0, %v5781
      %v5783 = vpop.f32.mrb[0].mxu0
      %v5784 = vpop.f32.mrb[0].mxu0
      %v5785 = vadd.f32 0.0, %v5784
      %v5786 = vpop.f32.mrb[0].mxu0
      %5787 = vmatprep.mubr.bf16.mxu0 0
      %5788 = vmatmul.mubr.bf16.gmra.mrb[0].mxu0 %v5587
      %v5789 = vpop.f32.mrb[0].mxu0
      %v5790 = vadd.f32 0.0, %v5789
      %v5791 = vpop.f32.mrb[0].mxu0
      %v5792 = vpop.f32.mrb[0].mxu0
      %v5793 = vadd.f32 0.0, %v5792
      %v5794 = vpop.f32.mrb[0].mxu0
      %5795 = vmatprep.mubr.bf16.mxu0 0
      %5796 = vmatmul.mubr.bf16.gmra.mrb[0].mxu0 %v5591
      %v5797 = vpop.f32.mrb[0].mxu0
      %v5798 = vadd.f32 0.0, %v5797
      %v5799 = vpop.f32.mrb[0].mxu0
      %v5800 = vpop.f32.mrb[0].mxu0
      %v5801 = vadd.f32 0.0, %v5800
      %v5802 = vpop.f32.mrb[0].mxu0
      %5803 = vmatprep.mubr.bf16.mxu0 0
      %5804 = vmatmul.mubr.bf16.gmra.mrb[0].mxu0 %v5595
      %v5805 = vpop.f32.mrb[0].mxu0
      %v5806 = vadd.f32 0.0, %v5805
      %v5807 = vpop.f32.mrb[0].mxu0
      %v5808 = vpop.f32.mrb[0].mxu0
      %v5809 = vadd.f32 0.0, %v5808
      %v5810 = vpop.f32.mrb[0].mxu0
      %5811 = vmatprep.mubr.bf16.mxu0 0
      %5812 = vmatmul.mubr.bf16.gmra.mrb[0].mxu0 %v5599
      %v5813 = vpop.f32.mrb[0].mxu0
      %v5814 = vadd.f32 0.0, %v5813
      %v5815 = vpop.f32.mrb[0].mxu0
      %v5816 = vpop.f32.mrb[0].mxu0
      %v5817 = vadd.f32 0.0, %v5816
      %v5818 = vpop.f32.mrb[0].mxu0
      %5819 = vmatprep.mubr.bf16.mxu0 0
      %5820 = vmatmul.mubr.bf16.gmra.mrb[0].mxu0 %v5603
      %v5821 = vpop.f32.mrb[0].mxu0
      %v5822 = vadd.f32 0.0, %v5821
      %v5823 = vpop.f32.mrb[0].mxu0
      %v5824 = vpop.f32.mrb[0].mxu0
      %v5825 = vadd.f32 0.0, %v5824
      %v5826 = vpop.f32.mrb[0].mxu0
      %5827 = vmatprep.mubr.bf16.mxu0 0
      %5828 = vmatmul.mubr.bf16.gmra.mrb[0].mxu0 %v5607
      %v5829 = vpop.f32.mrb[0].mxu0
      %v5830 = vadd.f32 0.0, %v5829
      %v5831 = vpop.f32.mrb[0].mxu0
      %v5832 = vpop.f32.mrb[0].mxu0
      %v5833 = vadd.f32 0.0, %v5832
      %v5834 = vpop.f32.mrb[0].mxu0
      %5835 = vmatprep.mubr.bf16.mxu0 0
      %5836 = vmatmul.mubr.bf16.gmra.mrb[0].mxu0 %v5611
      %v5837 = vpop.f32.mrb[0].mxu0
      %v5838 = vadd.f32 0.0, %v5837
      %v5839 = vpop.f32.mrb[0].mxu0
      %v5840 = vpop.f32.mrb[0].mxu0
      %v5841 = vadd.f32 0.0, %v5840
      %v5842 = vpop.f32.mrb[0].mxu0
      %5843 = vmatprep.mubr.bf16.mxu0 0
      %5844 = vmatmul.mubr.bf16.gmra.mrb[0].mxu0 %v5615
      %v5845 = vpop.f32.mrb[0].mxu0
      %v5846 = vadd.f32 0.0, %v5845
      %v5847 = vpop.f32.mrb[0].mxu0
      %v5848 = vpop.f32.mrb[0].mxu0
      %v5849 = vadd.f32 0.0, %v5848
      %v5850 = vpop.f32.mrb[0].mxu0
      %5851 = vmatprep.mubr.bf16.mxu0 0
      %5852 = vmatmul.mubr.bf16.gmra.mrb[0].mxu0 %v5619
      %v5853 = vpop.f32.mrb[0].mxu0
      %v5854 = vadd.f32 0.0, %v5853
      %v5855 = vpop.f32.mrb[0].mxu0
      %v5856 = vpop.f32.mrb[0].mxu0
      %v5857 = vadd.f32 0.0, %v5856
      %v5858 = vpop.f32.mrb[0].mxu0
      %5859 = vmatprep.mubr.bf16.mxu0 0
      %5860 = vmatmul.mubr.bf16.gmra.mrb[0].mxu0 %v5623
      %v5861 = vpop.f32.mrb[0].mxu0
      %v5862 = vadd.f32 0.0, %v5861
      %v5863 = vpop.f32.mrb[0].mxu0
      %v5864 = vpop.f32.mrb[0].mxu0
      %v5865 = vadd.f32 0.0, %v5864
      %v5866 = vpop.f32.mrb[0].mxu0
      %5867 = vmatprep.mubr.bf16.mxu0 0
      %5868 = vmatmul.mubr.bf16.gmra.mrb[0].mxu0 %v5632
      %v5869 = vpop.f32.mrb[0].mxu0
      %v5870 = vadd.f32 0.0, %v5869
      %v5871 = vpop.f32.mrb[0].mxu0
      %v5872 = vpop.f32.mrb[0].mxu0
      %v5873 = vadd.f32 0.0, %v5872
      %v5874 = vpop.f32.mrb[0].mxu0
      %5875 = vdwg.mxu0
      %v5876 = vadd.f32 %v5388, %v5734
      %v5877 = vadd.f32 %v5391, %v5737
      %v5878 = vadd.f32 %v5396, %v5742
      %v5879 = vadd.f32 %v5399, %v5745
      %v5880 = vadd.f32 %v5404, %v5750
      %v5881 = vadd.f32 %v5407, %v5753
      %v5882 = vadd.f32 %v5412, %v5758
      %v5883 = vadd.f32 %v5415, %v5761
      %v5884 = vadd.f32 %v5420, %v5766
      %v5885 = vadd.f32 %v5423, %v5769
      %v5886 = vadd.f32 %v5428, %v5774
      %v5887 = vadd.f32 %v5431, %v5777
      %v5888 = vadd.f32 %v5436, %v5782
      %v5889 = vadd.f32 %v5439, %v5785
      %v5890 = vadd.f32 %v5444, %v5790
      %v5891 = vadd.f32 %v5447, %v5793
      %v5892 = vadd.f32 %v5452, %v5798
      %v5893 = vadd.f32 %v5455, %v5801
      %v5894 = vadd.f32 %v5460, %v5806
      %v5895 = vadd.f32 %v5463, %v5809
      %v5896 = vadd.f32 %v5468, %v5814
      %v5897 = vadd.f32 %v5471, %v5817
      %v5898 = vadd.f32 %v5476, %v5822
      %v5899 = vadd.f32 %v5479, %v5825
      %v5900 = vadd.f32 %v5484, %v5830
      %v5901 = vadd.f32 %v5487, %v5833
      %v5902 = vadd.f32 %v5492, %v5838
      %v5903 = vadd.f32 %v5495, %v5841
      %v5904 = vadd.f32 %v5500, %v5846
      %v5905 = vadd.f32 %v5503, %v5849
      %v5906 = vadd.f32 %v5508, %v5854
      %v5907 = vadd.f32 %v5511, %v5857
      %v5908 = vadd.f32 %v5516, %v5862
      %v5909 = vadd.f32 %v5519, %v5865
      %v5910 = vadd.f32 %v5524, %v5870
      %v5911 = vadd.f32 %v5527, %v5873
      %v5912 = vld [vmem:[#allocation2 + $0x8] sm:$0xf8]
      %v5913 = vld [vmem:[#allocation2 + $0x10] sm:$0xff]
      %v5914 = vld [vmem:[#allocation2 + $0x18] sm:$0xff]
      %v5915 = vld [vmem:[#allocation2 + $0x20] sm:$0xff]
      %v5916 = vld [vmem:[#allocation2 + $0x28] sm:$0xff]
      %v5917 = vld [vmem:[#allocation2 + $0x30] sm:$0xff]
      %v5918 = vld [vmem:[#allocation2 + $0x38] sm:$0xff]
      %v5919 = vld [vmem:[#allocation2 + $0x40] sm:$0xff]
      %v5920 = vld [vmem:[#allocation2 + $0x48] sm:$0xff]
      %v5921 = vld [vmem:[#allocation2 + $0x50] sm:$0xff]
      %v5922 = vld [vmem:[#allocation2 + $0x58] sm:$0xff]
      %v5923 = vld [vmem:[#allocation2 + $0x60] sm:$0xff]
      %v5924 = vld [vmem:[#allocation2 + $0x68] sm:$0xff]
      %v5925 = vld [vmem:[#allocation2 + $0x70] sm:$0xff]
      %v5926 = vld [vmem:[#allocation2 + $0x78] sm:$0xff]
      %v5927 = vld [vmem:[#allocation2 + $0x80] sm:$0xff]
      %v5928 = vld [vmem:[#allocation2 + $0x88] sm:$0xff]
      %v5929 = vld [vmem:[#allocation2 + $0x90] sm:$0xff]
      %v5930 = vld [vmem:[#allocation2 + $0x98] sm:$0xf]
      %s5931 = scalar_lea.vmem %s2, 192
      %v5932 = vld [vmem:[%s5931] sm:$0xf]
      %v5933 = vld [vmem:[%s5931 + $0x4] sm:$0xf]
      %v5934 = vld [vmem:[%s5931 + $0x8] sm:$0xf]
      %v5935 = vld [vmem:[%s5931 + $0xc] sm:$0xf]
      %v5936 = vld [vmem:[%s5931 + $0x10] sm:$0xf]
      %v5937 = vld [vmem:[%s5931 + $0x14] sm:$0xf]
      %v5938 = vld [vmem:[%s5931 + $0x18] sm:$0xf]
      %v5939 = vld [vmem:[%s5931 + $0x1c] sm:$0xf]
      %v5940 = vld [vmem:[%s5931 + $0x20] sm:$0xf]
      %v5941 = vld [vmem:[%s5931 + $0x24] sm:$0xf]
      %v5942 = vld [vmem:[%s5931 + $0x28] sm:$0xf]
      %v5943 = vld [vmem:[%s5931 + $0x2c] sm:$0xf]
      %v5944 = vld [vmem:[%s5931 + $0x30] sm:$0xf]
      %v5945 = vld [vmem:[%s5931 + $0x34] sm:$0xf]
      %v5946 = vld [vmem:[%s5931 + $0x38] sm:$0xf]
      %v5947 = vld [vmem:[%s5931 + $0x3c] sm:$0xf]
      %v5949 = vshrl.u32 %v5912, 16
      %v5951 = vrot.slane %v5949, 3
      %v5952 = vshll.u32 %v5912, 16
      %v5954 = vrot.slane %v5952, 4
      %v5955 = vor.u32 %v5951, %v5954
      %v5957 = vshrl.u32 %v5913, 16
      %v5959 = vrot.slane %v5957, 3
      %v5960 = vshll.u32 %v5913, 16
      %v5962 = vrot.slane %v5960, 4
      %v5963 = vor.u32 %v5959, %v5962
      %v5964 = vsel %vm1140, %v5955, %v5963
      %v5966 = vshrl.u32 %v5914, 16
      %v5968 = vrot.slane %v5966, 3
      %v5969 = vshll.u32 %v5914, 16
      %v5971 = vrot.slane %v5969, 4
      %v5972 = vor.u32 %v5968, %v5971
      %v5973 = vsel %vm1140, %v5963, %v5972
      %v5975 = vshrl.u32 %v5915, 16
      %v5977 = vrot.slane %v5975, 3
      %v5978 = vshll.u32 %v5915, 16
      %v5980 = vrot.slane %v5978, 4
      %v5981 = vor.u32 %v5977, %v5980
      %v5982 = vsel %vm1140, %v5972, %v5981
      %v5984 = vshrl.u32 %v5916, 16
      %v5986 = vrot.slane %v5984, 3
      %v5987 = vshll.u32 %v5916, 16
      %v5989 = vrot.slane %v5987, 4
      %v5990 = vor.u32 %v5986, %v5989
      %v5991 = vsel %vm1140, %v5981, %v5990
      %v5993 = vshrl.u32 %v5917, 16
      %v5995 = vrot.slane %v5993, 3
      %v5996 = vshll.u32 %v5917, 16
      %v5998 = vrot.slane %v5996, 4
      %v5999 = vor.u32 %v5995, %v5998
      %v6000 = vsel %vm1140, %v5990, %v5999
      %v6002 = vshrl.u32 %v5918, 16
      %v6004 = vrot.slane %v6002, 3
      %v6005 = vshll.u32 %v5918, 16
      %v6007 = vrot.slane %v6005, 4
      %v6008 = vor.u32 %v6004, %v6007
      %v6009 = vsel %vm1140, %v5999, %v6008
      %v6011 = vshrl.u32 %v5919, 16
      %v6013 = vrot.slane %v6011, 3
      %v6014 = vshll.u32 %v5919, 16
      %v6016 = vrot.slane %v6014, 4
      %v6017 = vor.u32 %v6013, %v6016
      %v6018 = vsel %vm1140, %v6008, %v6017
      %v6020 = vshrl.u32 %v5920, 16
      %v6022 = vrot.slane %v6020, 3
      %v6023 = vshll.u32 %v5920, 16
      %v6025 = vrot.slane %v6023, 4
      %v6026 = vor.u32 %v6022, %v6025
      %v6027 = vsel %vm1140, %v6017, %v6026
      %v6029 = vshrl.u32 %v5921, 16
      %v6031 = vrot.slane %v6029, 3
      %v6032 = vshll.u32 %v5921, 16
      %v6034 = vrot.slane %v6032, 4
      %v6035 = vor.u32 %v6031, %v6034
      %v6036 = vsel %vm1140, %v6026, %v6035
      %v6038 = vshrl.u32 %v5922, 16
      %v6040 = vrot.slane %v6038, 3
      %v6041 = vshll.u32 %v5922, 16
      %v6043 = vrot.slane %v6041, 4
      %v6044 = vor.u32 %v6040, %v6043
      %v6045 = vsel %vm1140, %v6035, %v6044
      %v6047 = vshrl.u32 %v5923, 16
      %v6049 = vrot.slane %v6047, 3
      %v6050 = vshll.u32 %v5923, 16
      %v6052 = vrot.slane %v6050, 4
      %v6053 = vor.u32 %v6049, %v6052
      %v6054 = vsel %vm1140, %v6044, %v6053
      %v6056 = vshrl.u32 %v5924, 16
      %v6058 = vrot.slane %v6056, 3
      %v6059 = vshll.u32 %v5924, 16
      %v6061 = vrot.slane %v6059, 4
      %v6062 = vor.u32 %v6058, %v6061
      %v6063 = vsel %vm1140, %v6053, %v6062
      %v6065 = vshrl.u32 %v5925, 16
      %v6067 = vrot.slane %v6065, 3
      %v6068 = vshll.u32 %v5925, 16
      %v6070 = vrot.slane %v6068, 4
      %v6071 = vor.u32 %v6067, %v6070
      %v6072 = vsel %vm1140, %v6062, %v6071
      %v6074 = vshrl.u32 %v5926, 16
      %v6076 = vrot.slane %v6074, 3
      %v6077 = vshll.u32 %v5926, 16
      %v6079 = vrot.slane %v6077, 4
      %v6080 = vor.u32 %v6076, %v6079
      %v6081 = vsel %vm1140, %v6071, %v6080
      %v6083 = vshrl.u32 %v5927, 16
      %v6085 = vrot.slane %v6083, 3
      %v6086 = vshll.u32 %v5927, 16
      %v6088 = vrot.slane %v6086, 4
      %v6089 = vor.u32 %v6085, %v6088
      %v6090 = vsel %vm1140, %v6080, %v6089
      %v6092 = vshrl.u32 %v5928, 16
      %v6094 = vrot.slane %v6092, 3
      %v6095 = vshll.u32 %v5928, 16
      %v6097 = vrot.slane %v6095, 4
      %v6098 = vor.u32 %v6094, %v6097
      %v6099 = vsel %vm1140, %v6089, %v6098
      %v6101 = vshrl.u32 %v5929, 16
      %v6103 = vrot.slane %v6101, 3
      %v6104 = vshll.u32 %v5929, 16
      %v6106 = vrot.slane %v6104, 4
      %v6107 = vor.u32 %v6103, %v6106
      %v6108 = vsel %vm1140, %v6098, %v6107
      %v6110 = vshrl.u32 %v5930, 16
      %v6112 = vrot.slane %v6110, 3
      %v6113 = vshll.u32 %v5930, 16
      %v6115 = vrot.slane %v6113, 4
      %v6116 = vor.u32 %v6112, %v6115
      %v6117 = vsel %vm1140, %v6107, %v6116
      %v6152 = vunpack.c.l.b16 %v5932
      %v6153 = vunpack.c.l.b16 %v5933
      %v6154 = vunpack.c.l.b16 %v5934
      %v6155 = vunpack.c.l.b16 %v5935
      %v6156 = vunpack.c.l.b16 %v5936
      %v6157 = vunpack.c.l.b16 %v5937
      %v6158 = vunpack.c.l.b16 %v5938
      %v6159 = vunpack.c.l.b16 %v5939
      %v6160 = vunpack.c.l.b16 %v5940
      %v6161 = vunpack.c.l.b16 %v5941
      %v6162 = vunpack.c.l.b16 %v5942
      %v6163 = vunpack.c.l.b16 %v5943
      %v6164 = vunpack.c.l.b16 %v5944
      %v6165 = vunpack.c.l.b16 %v5945
      %v6166 = vunpack.c.l.b16 %v5946
      %v6167 = vunpack.c.l.b16 %v5947
      %v6168 = vpack.c.b16 %v6153, %v6152
      %v6169 = vpack.c.b16 %v6155, %v6154
      %v6170 = vpack.c.b16 %v6157, %v6156
      %v6171 = vpack.c.b16 %v6159, %v6158
      %v6172 = vpack.c.b16 %v6161, %v6160
      %v6173 = vpack.c.b16 %v6163, %v6162
      %v6174 = vpack.c.b16 %v6165, %v6164
      %v6175 = vpack.c.b16 %v6167, %v6166
      %6184 = vmatprep.subr.bf16.mxu0 0
      %6185 = vmatpush1.bf16.msra.mxu0 %v6168
      %6186 = vmatprep.subr.bf16.mxu0 0
      %6187 = vmatpush1.bf16.msra.mxu0 %v6169
      %6188 = vmatprep.subr.bf16.mxu0 0
      %6189 = vmatpush1.bf16.msra.mxu0 %v6170
      %6190 = vmatprep.subr.bf16.mxu0 0
      %6191 = vmatpush1.bf16.msra.mxu0 %v6171
      %6192 = vmatprep.subr.bf16.mxu0 0
      %6193 = vmatpush1.bf16.msra.mxu0 %v6172
      %6194 = vmatprep.subr.bf16.mxu0 0
      %6195 = vmatpush1.bf16.msra.mxu0 %v6173
      %6196 = vmatprep.subr.bf16.mxu0 0
      %6197 = vmatpush1.bf16.msra.mxu0 %v6174
      %6198 = vmatprep.subr.bf16.mxu0 0
      %6199 = vmatpush1.bf16.msra.mxu0 %v6175
      %6200 = vmatprep.subr.bf16.mxu0 0
      %6201 = vmatpush1.bf16.msra.mxu0 0
      %6202 = vmatprep.subr.bf16.mxu0 0
      %6203 = vmatpush1.bf16.msra.mxu0 0
      %6204 = vmatprep.subr.bf16.mxu0 0
      %6205 = vmatpush1.bf16.msra.mxu0 0
      %6206 = vmatprep.subr.bf16.mxu0 0
      %6207 = vmatpush1.bf16.msra.mxu0 0
      %6208 = vmatprep.subr.bf16.mxu0 0
      %6209 = vmatpush1.bf16.msra.mxu0 0
      %6210 = vmatprep.subr.bf16.mxu0 0
      %6211 = vmatpush1.bf16.msra.mxu0 0
      %6212 = vmatprep.subr.bf16.mxu0 0
      %6213 = vmatpush1.bf16.msra.mxu0 0
      %6214 = vmatprep.subr.bf16.mxu0 0
      %6215 = vmatpush1.bf16.msra.mxu0 0
      %6216 = vmatprep.mubr.bf16.mxu0 0
      %6217 = vmatmul.mubr.bf16.gmra.mrb[0].mxu0 %v5964
      %v6218 = vpop.f32.mrb[0].mxu0
      %v6219 = vadd.f32 0.0, %v6218
      %v6220 = vpop.f32.mrb[0].mxu0
      %v6221 = vpop.f32.mrb[0].mxu0
      %v6222 = vadd.f32 0.0, %v6221
      %v6223 = vpop.f32.mrb[0].mxu0
      %6224 = vmatprep.mubr.bf16.mxu0 0
      %6225 = vmatmul.mubr.bf16.gmra.mrb[0].mxu0 %v5973
      %v6226 = vpop.f32.mrb[0].mxu0
      %v6227 = vadd.f32 0.0, %v6226
      %v6228 = vpop.f32.mrb[0].mxu0
      %v6229 = vpop.f32.mrb[0].mxu0
      %v6230 = vadd.f32 0.0, %v6229
      %v6231 = vpop.f32.mrb[0].mxu0
      %6232 = vmatprep.mubr.bf16.mxu0 0
      %6233 = vmatmul.mubr.bf16.gmra.mrb[0].mxu0 %v5982
      %v6234 = vpop.f32.mrb[0].mxu0
      %v6235 = vadd.f32 0.0, %v6234
      %v6236 = vpop.f32.mrb[0].mxu0
      %v6237 = vpop.f32.mrb[0].mxu0
      %v6238 = vadd.f32 0.0, %v6237
      %v6239 = vpop.f32.mrb[0].mxu0
      %6240 = vmatprep.mubr.bf16.mxu0 0
      %6241 = vmatmul.mubr.bf16.gmra.mrb[0].mxu0 %v5991
      %v6242 = vpop.f32.mrb[0].mxu0
      %v6243 = vadd.f32 0.0, %v6242
      %v6244 = vpop.f32.mrb[0].mxu0
      %v6245 = vpop.f32.mrb[0].mxu0
      %v6246 = vadd.f32 0.0, %v6245
      %v6247 = vpop.f32.mrb[0].mxu0
      %6248 = vmatprep.mubr.bf16.mxu0 0
      %6249 = vmatmul.mubr.bf16.gmra.mrb[0].mxu0 %v6000
      %v6250 = vpop.f32.mrb[0].mxu0
      %v6251 = vadd.f32 0.0, %v6250
      %v6252 = vpop.f32.mrb[0].mxu0
      %v6253 = vpop.f32.mrb[0].mxu0
      %v6254 = vadd.f32 0.0, %v6253
      %v6255 = vpop.f32.mrb[0].mxu0
      %6256 = vmatprep.mubr.bf16.mxu0 0
      %6257 = vmatmul.mubr.bf16.gmra.mrb[0].mxu0 %v6009
      %v6258 = vpop.f32.mrb[0].mxu0
      %v6259 = vadd.f32 0.0, %v6258
      %v6260 = vpop.f32.mrb[0].mxu0
      %v6261 = vpop.f32.mrb[0].mxu0
      %v6262 = vadd.f32 0.0, %v6261
      %v6263 = vpop.f32.mrb[0].mxu0
      %6264 = vmatprep.mubr.bf16.mxu0 0
      %6265 = vmatmul.mubr.bf16.gmra.mrb[0].mxu0 %v6018
      %v6266 = vpop.f32.mrb[0].mxu0
      %v6267 = vadd.f32 0.0, %v6266
      %v6268 = vpop.f32.mrb[0].mxu0
      %v6269 = vpop.f32.mrb[0].mxu0
      %v6270 = vadd.f32 0.0, %v6269
      %v6271 = vpop.f32.mrb[0].mxu0
      %6272 = vmatprep.mubr.bf16.mxu0 0
      %6273 = vmatmul.mubr.bf16.gmra.mrb[0].mxu0 %v6027
      %v6274 = vpop.f32.mrb[0].mxu0
      %v6275 = vadd.f32 0.0, %v6274
      %v6276 = vpop.f32.mrb[0].mxu0
      %v6277 = vpop.f32.mrb[0].mxu0
      %v6278 = vadd.f32 0.0, %v6277
      %v6279 = vpop.f32.mrb[0].mxu0
      %6280 = vmatprep.mubr.bf16.mxu0 0
      %6281 = vmatmul.mubr.bf16.gmra.mrb[0].mxu0 %v6036
      %v6282 = vpop.f32.mrb[0].mxu0
      %v6283 = vadd.f32 0.0, %v6282
      %v6284 = vpop.f32.mrb[0].mxu0
      %v6285 = vpop.f32.mrb[0].mxu0
      %v6286 = vadd.f32 0.0, %v6285
      %v6287 = vpop.f32.mrb[0].mxu0
      %6288 = vmatprep.mubr.bf16.mxu0 0
      %6289 = vmatmul.mubr.bf16.gmra.mrb[0].mxu0 %v6045
      %v6290 = vpop.f32.mrb[0].mxu0
      %v6291 = vadd.f32 0.0, %v6290
      %v6292 = vpop.f32.mrb[0].mxu0
      %v6293 = vpop.f32.mrb[0].mxu0
      %v6294 = vadd.f32 0.0, %v6293
      %v6295 = vpop.f32.mrb[0].mxu0
      %6296 = vmatprep.mubr.bf16.mxu0 0
      %6297 = vmatmul.mubr.bf16.gmra.mrb[0].mxu0 %v6054
      %v6298 = vpop.f32.mrb[0].mxu0
      %v6299 = vadd.f32 0.0, %v6298
      %v6300 = vpop.f32.mrb[0].mxu0
      %v6301 = vpop.f32.mrb[0].mxu0
      %v6302 = vadd.f32 0.0, %v6301
      %v6303 = vpop.f32.mrb[0].mxu0
      %6304 = vmatprep.mubr.bf16.mxu0 0
      %6305 = vmatmul.mubr.bf16.gmra.mrb[0].mxu0 %v6063
      %v6306 = vpop.f32.mrb[0].mxu0
      %v6307 = vadd.f32 0.0, %v6306
      %v6308 = vpop.f32.mrb[0].mxu0
      %v6309 = vpop.f32.mrb[0].mxu0
      %v6310 = vadd.f32 0.0, %v6309
      %v6311 = vpop.f32.mrb[0].mxu0
      %6312 = vmatprep.mubr.bf16.mxu0 0
      %6313 = vmatmul.mubr.bf16.gmra.mrb[0].mxu0 %v6072
      %v6314 = vpop.f32.mrb[0].mxu0
      %v6315 = vadd.f32 0.0, %v6314
      %v6316 = vpop.f32.mrb[0].mxu0
      %v6317 = vpop.f32.mrb[0].mxu0
      %v6318 = vadd.f32 0.0, %v6317
      %v6319 = vpop.f32.mrb[0].mxu0
      %6320 = vmatprep.mubr.bf16.mxu0 0
      %6321 = vmatmul.mubr.bf16.gmra.mrb[0].mxu0 %v6081
      %v6322 = vpop.f32.mrb[0].mxu0
      %v6323 = vadd.f32 0.0, %v6322
      %v6324 = vpop.f32.mrb[0].mxu0
      %v6325 = vpop.f32.mrb[0].mxu0
      %v6326 = vadd.f32 0.0, %v6325
      %v6327 = vpop.f32.mrb[0].mxu0
      %6328 = vmatprep.mubr.bf16.mxu0 0
      %6329 = vmatmul.mubr.bf16.gmra.mrb[0].mxu0 %v6090
      %v6330 = vpop.f32.mrb[0].mxu0
      %v6331 = vadd.f32 0.0, %v6330
      %v6332 = vpop.f32.mrb[0].mxu0
      %v6333 = vpop.f32.mrb[0].mxu0
      %v6334 = vadd.f32 0.0, %v6333
      %v6335 = vpop.f32.mrb[0].mxu0
      %6336 = vmatprep.mubr.bf16.mxu0 0
      %6337 = vmatmul.mubr.bf16.gmra.mrb[0].mxu0 %v6099
      %v6338 = vpop.f32.mrb[0].mxu0
      %v6339 = vadd.f32 0.0, %v6338
      %v6340 = vpop.f32.mrb[0].mxu0
      %v6341 = vpop.f32.mrb[0].mxu0
      %v6342 = vadd.f32 0.0, %v6341
      %v6343 = vpop.f32.mrb[0].mxu0
      %6344 = vmatprep.mubr.bf16.mxu0 0
      %6345 = vmatmul.mubr.bf16.gmra.mrb[0].mxu0 %v6108
      %v6346 = vpop.f32.mrb[0].mxu0
      %v6347 = vadd.f32 0.0, %v6346
      %v6348 = vpop.f32.mrb[0].mxu0
      %v6349 = vpop.f32.mrb[0].mxu0
      %v6350 = vadd.f32 0.0, %v6349
      %v6351 = vpop.f32.mrb[0].mxu0
      %6352 = vmatprep.mubr.bf16.mxu0 0
      %6353 = vmatmul.mubr.bf16.gmra.mrb[0].mxu0 %v6117
      %v6354 = vpop.f32.mrb[0].mxu0
      %v6355 = vadd.f32 0.0, %v6354
      %v6356 = vpop.f32.mrb[0].mxu0
      %v6357 = vpop.f32.mrb[0].mxu0
      %v6358 = vadd.f32 0.0, %v6357
      %v6359 = vpop.f32.mrb[0].mxu0
      %6360 = vdwg.mxu0
      %v6361 = vadd.f32 %v5876, %v6219
      %v6362 = vadd.f32 %v5877, %v6222
      %v6363 = vadd.f32 %v5878, %v6227
      %v6364 = vadd.f32 %v5879, %v6230
      %v6365 = vadd.f32 %v5880, %v6235
      %v6366 = vadd.f32 %v5881, %v6238
      %v6367 = vadd.f32 %v5882, %v6243
      %v6368 = vadd.f32 %v5883, %v6246
      %v6369 = vadd.f32 %v5884, %v6251
      %v6370 = vadd.f32 %v5885, %v6254
      %v6371 = vadd.f32 %v5886, %v6259
      %v6372 = vadd.f32 %v5887, %v6262
      %v6373 = vadd.f32 %v5888, %v6267
      %v6374 = vadd.f32 %v5889, %v6270
      %v6375 = vadd.f32 %v5890, %v6275
      %v6376 = vadd.f32 %v5891, %v6278
      %v6377 = vadd.f32 %v5892, %v6283
      %v6378 = vadd.f32 %v5893, %v6286
      %v6379 = vadd.f32 %v5894, %v6291
      %v6380 = vadd.f32 %v5895, %v6294
      %v6381 = vadd.f32 %v5896, %v6299
      %v6382 = vadd.f32 %v5897, %v6302
      %v6383 = vadd.f32 %v5898, %v6307
      %v6384 = vadd.f32 %v5899, %v6310
      %v6385 = vadd.f32 %v5900, %v6315
      %v6386 = vadd.f32 %v5901, %v6318
      %v6387 = vadd.f32 %v5902, %v6323
      %v6388 = vadd.f32 %v5903, %v6326
      %v6389 = vadd.f32 %v5904, %v6331
      %v6390 = vadd.f32 %v5905, %v6334
      %v6391 = vadd.f32 %v5906, %v6339
      %v6392 = vadd.f32 %v5907, %v6342
      %v6393 = vadd.f32 %v5908, %v6347
      %v6394 = vadd.f32 %v5909, %v6350
      %v6395 = vadd.f32 %v5910, %v6355
      %v6396 = vadd.f32 %v5911, %v6358
      %v6397 = vld [vmem:[#allocation2 + $0x8] sm:$0xf0]
      %s6398 = scalar_lea.vmem %s2, 256
      %v6399 = vld [vmem:[%s6398] sm:$0xf]
      %v6400 = vld [vmem:[%s6398 + $0x4] sm:$0xf]
      %v6401 = vld [vmem:[%s6398 + $0x8] sm:$0xf]
      %v6402 = vld [vmem:[%s6398 + $0xc] sm:$0xf]
      %v6403 = vld [vmem:[%s6398 + $0x10] sm:$0xf]
      %v6404 = vld [vmem:[%s6398 + $0x14] sm:$0xf]
      %v6405 = vld [vmem:[%s6398 + $0x18] sm:$0xf]
      %v6406 = vld [vmem:[%s6398 + $0x1c] sm:$0xf]
      %v6407 = vld [vmem:[%s6398 + $0x20] sm:$0xf]
      %v6408 = vld [vmem:[%s6398 + $0x24] sm:$0xf]
      %v6409 = vld [vmem:[%s6398 + $0x28] sm:$0xf]
      %v6410 = vld [vmem:[%s6398 + $0x2c] sm:$0xf]
      %v6411 = vld [vmem:[%s6398 + $0x30] sm:$0xf]
      %v6412 = vld [vmem:[%s6398 + $0x34] sm:$0xf]
      %v6413 = vld [vmem:[%s6398 + $0x38] sm:$0xf]
      %v6414 = vld [vmem:[%s6398 + $0x3c] sm:$0xf]
      %v6434 = vrot.slane %v6397, 4
      %v6435 = vrot.slane %v5913, 4
      %v6436 = vsel %vm4691, %v6434, %v6435
      %v6437 = vrot.slane %v5914, 4
      %v6438 = vsel %vm4691, %v6435, %v6437
      %v6439 = vrot.slane %v5915, 4
      %v6440 = vsel %vm4691, %v6437, %v6439
      %v6441 = vrot.slane %v5916, 4
      %v6442 = vsel %vm4691, %v6439, %v6441
      %v6443 = vrot.slane %v5917, 4
      %v6444 = vsel %vm4691, %v6441, %v6443
      %v6445 = vrot.slane %v5918, 4
      %v6446 = vsel %vm4691, %v6443, %v6445
      %v6447 = vrot.slane %v5919, 4
      %v6448 = vsel %vm4691, %v6445, %v6447
      %v6449 = vrot.slane %v5920, 4
      %v6450 = vsel %vm4691, %v6447, %v6449
      %v6451 = vrot.slane %v5921, 4
      %v6452 = vsel %vm4691, %v6449, %v6451
      %v6453 = vrot.slane %v5922, 4
      %v6454 = vsel %vm4691, %v6451, %v6453
      %v6455 = vrot.slane %v5923, 4
      %v6456 = vsel %vm4691, %v6453, %v6455
      %v6457 = vrot.slane %v5924, 4
      %v6458 = vsel %vm4691, %v6455, %v6457
      %v6459 = vrot.slane %v5925, 4
      %v6460 = vsel %vm4691, %v6457, %v6459
      %v6461 = vrot.slane %v5926, 4
      %v6462 = vsel %vm4691, %v6459, %v6461
      %v6463 = vrot.slane %v5927, 4
      %v6464 = vsel %vm4691, %v6461, %v6463
      %v6465 = vrot.slane %v5928, 4
      %v6466 = vsel %vm4691, %v6463, %v6465
      %v6467 = vrot.slane %v5929, 4
      %v6468 = vsel %vm4691, %v6465, %v6467
      %v6469 = vrot.slane %v5930, 4
      %v6470 = vsel %vm4691, %v6467, %v6469
      %v6505 = vunpack.c.l.b16 %v6399
      %v6506 = vunpack.c.l.b16 %v6400
      %v6507 = vunpack.c.l.b16 %v6401
      %v6508 = vunpack.c.l.b16 %v6402
      %v6509 = vunpack.c.l.b16 %v6403
      %v6510 = vunpack.c.l.b16 %v6404
      %v6511 = vunpack.c.l.b16 %v6405
      %v6512 = vunpack.c.l.b16 %v6406
      %v6513 = vunpack.c.l.b16 %v6407
      %v6514 = vunpack.c.l.b16 %v6408
      %v6515 = vunpack.c.l.b16 %v6409
      %v6516 = vunpack.c.l.b16 %v6410
      %v6517 = vunpack.c.l.b16 %v6411
      %v6518 = vunpack.c.l.b16 %v6412
      %v6519 = vunpack.c.l.b16 %v6413
      %v6520 = vunpack.c.l.b16 %v6414
      %v6521 = vpack.c.b16 %v6506, %v6505
      %v6522 = vpack.c.b16 %v6508, %v6507
      %v6523 = vpack.c.b16 %v6510, %v6509
      %v6524 = vpack.c.b16 %v6512, %v6511
      %v6525 = vpack.c.b16 %v6514, %v6513
      %v6526 = vpack.c.b16 %v6516, %v6515
      %v6527 = vpack.c.b16 %v6518, %v6517
      %v6528 = vpack.c.b16 %v6520, %v6519
      %6537 = vmatprep.subr.bf16.mxu0 0
      %6538 = vmatpush1.bf16.msra.mxu0 %v6521
      %6539 = vmatprep.subr.bf16.mxu0 0
      %6540 = vmatpush1.bf16.msra.mxu0 %v6522
      %6541 = vmatprep.subr.bf16.mxu0 0
      %6542 = vmatpush1.bf16.msra.mxu0 %v6523
      %6543 = vmatprep.subr.bf16.mxu0 0
      %6544 = vmatpush1.bf16.msra.mxu0 %v6524
      %6545 = vmatprep.subr.bf16.mxu0 0
      %6546 = vmatpush1.bf16.msra.mxu0 %v6525
      %6547 = vmatprep.subr.bf16.mxu0 0
      %6548 = vmatpush1.bf16.msra.mxu0 %v6526
      %6549 = vmatprep.subr.bf16.mxu0 0
      %6550 = vmatpush1.bf16.msra.mxu0 %v6527
      %6551 = vmatprep.subr.bf16.mxu0 0
      %6552 = vmatpush1.bf16.msra.mxu0 %v6528
      %6553 = vmatprep.subr.bf16.mxu0 0
      %6554 = vmatpush1.bf16.msra.mxu0 0
      %6555 = vmatprep.subr.bf16.mxu0 0
      %6556 = vmatpush1.bf16.msra.mxu0 0
      %6557 = vmatprep.subr.bf16.mxu0 0
      %6558 = vmatpush1.bf16.msra.mxu0 0
      %6559 = vmatprep.subr.bf16.mxu0 0
      %6560 = vmatpush1.bf16.msra.mxu0 0
      %6561 = vmatprep.subr.bf16.mxu0 0
      %6562 = vmatpush1.bf16.msra.mxu0 0
      %6563 = vmatprep.subr.bf16.mxu0 0
      %6564 = vmatpush1.bf16.msra.mxu0 0
      %6565 = vmatprep.subr.bf16.mxu0 0
      %6566 = vmatpush1.bf16.msra.mxu0 0
      %6567 = vmatprep.subr.bf16.mxu0 0
      %6568 = vmatpush1.bf16.msra.mxu0 0
      %6569 = vmatprep.mubr.bf16.mxu0 0
      %6570 = vmatmul.mubr.bf16.gmra.mrb[0].mxu0 %v6436
      %v6571 = vpop.f32.mrb[0].mxu0
      %v6572 = vadd.f32 0.0, %v6571
      %v6573 = vpop.f32.mrb[0].mxu0
      %v6574 = vpop.f32.mrb[0].mxu0
      %v6575 = vadd.f32 0.0, %v6574
      %v6576 = vpop.f32.mrb[0].mxu0
      %6577 = vmatprep.mubr.bf16.mxu0 0
      %6578 = vmatmul.mubr.bf16.gmra.mrb[0].mxu0 %v6438
      %v6579 = vpop.f32.mrb[0].mxu0
      %v6580 = vadd.f32 0.0, %v6579
      %v6581 = vpop.f32.mrb[0].mxu0
      %v6582 = vpop.f32.mrb[0].mxu0
      %v6583 = vadd.f32 0.0, %v6582
      %v6584 = vpop.f32.mrb[0].mxu0
      %6585 = vmatprep.mubr.bf16.mxu0 0
      %6586 = vmatmul.mubr.bf16.gmra.mrb[0].mxu0 %v6440
      %v6587 = vpop.f32.mrb[0].mxu0
      %v6588 = vadd.f32 0.0, %v6587
      %v6589 = vpop.f32.mrb[0].mxu0
      %v6590 = vpop.f32.mrb[0].mxu0
      %v6591 = vadd.f32 0.0, %v6590
      %v6592 = vpop.f32.mrb[0].mxu0
      %6593 = vmatprep.mubr.bf16.mxu0 0
      %6594 = vmatmul.mubr.bf16.gmra.mrb[0].mxu0 %v6442
      %v6595 = vpop.f32.mrb[0].mxu0
      %v6596 = vadd.f32 0.0, %v6595
      %v6597 = vpop.f32.mrb[0].mxu0
      %v6598 = vpop.f32.mrb[0].mxu0
      %v6599 = vadd.f32 0.0, %v6598
      %v6600 = vpop.f32.mrb[0].mxu0
      %6601 = vmatprep.mubr.bf16.mxu0 0
      %6602 = vmatmul.mubr.bf16.gmra.mrb[0].mxu0 %v6444
      %v6603 = vpop.f32.mrb[0].mxu0
      %v6604 = vadd.f32 0.0, %v6603
      %v6605 = vpop.f32.mrb[0].mxu0
      %v6606 = vpop.f32.mrb[0].mxu0
      %v6607 = vadd.f32 0.0, %v6606
      %v6608 = vpop.f32.mrb[0].mxu0
      %6609 = vmatprep.mubr.bf16.mxu0 0
      %6610 = vmatmul.mubr.bf16.gmra.mrb[0].mxu0 %v6446
      %v6611 = vpop.f32.mrb[0].mxu0
      %v6612 = vadd.f32 0.0, %v6611
      %v6613 = vpop.f32.mrb[0].mxu0
      %v6614 = vpop.f32.mrb[0].mxu0
      %v6615 = vadd.f32 0.0, %v6614
      %v6616 = vpop.f32.mrb[0].mxu0
      %6617 = vmatprep.mubr.bf16.mxu0 0
      %6618 = vmatmul.mubr.bf16.gmra.mrb[0].mxu0 %v6448
      %v6619 = vpop.f32.mrb[0].mxu0
      %v6620 = vadd.f32 0.0, %v6619
      %v6621 = vpop.f32.mrb[0].mxu0
      %v6622 = vpop.f32.mrb[0].mxu0
      %v6623 = vadd.f32 0.0, %v6622
      %v6624 = vpop.f32.mrb[0].mxu0
      %6625 = vmatprep.mubr.bf16.mxu0 0
      %6626 = vmatmul.mubr.bf16.gmra.mrb[0].mxu0 %v6450
      %v6627 = vpop.f32.mrb[0].mxu0
      %v6628 = vadd.f32 0.0, %v6627
      %v6629 = vpop.f32.mrb[0].mxu0
      %v6630 = vpop.f32.mrb[0].mxu0
      %v6631 = vadd.f32 0.0, %v6630
      %v6632 = vpop.f32.mrb[0].mxu0
      %6633 = vmatprep.mubr.bf16.mxu0 0
      %6634 = vmatmul.mubr.bf16.gmra.mrb[0].mxu0 %v6452
      %v6635 = vpop.f32.mrb[0].mxu0
      %v6636 = vadd.f32 0.0, %v6635
      %v6637 = vpop.f32.mrb[0].mxu0
      %v6638 = vpop.f32.mrb[0].mxu0
      %v6639 = vadd.f32 0.0, %v6638
      %v6640 = vpop.f32.mrb[0].mxu0
      %6641 = vmatprep.mubr.bf16.mxu0 0
      %6642 = vmatmul.mubr.bf16.gmra.mrb[0].mxu0 %v6454
      %v6643 = vpop.f32.mrb[0].mxu0
      %v6644 = vadd.f32 0.0, %v6643
      %v6645 = vpop.f32.mrb[0].mxu0
      %v6646 = vpop.f32.mrb[0].mxu0
      %v6647 = vadd.f32 0.0, %v6646
      %v6648 = vpop.f32.mrb[0].mxu0
      %6649 = vmatprep.mubr.bf16.mxu0 0
      %6650 = vmatmul.mubr.bf16.gmra.mrb[0].mxu0 %v6456
      %v6651 = vpop.f32.mrb[0].mxu0
      %v6652 = vadd.f32 0.0, %v6651
      %v6653 = vpop.f32.mrb[0].mxu0
      %v6654 = vpop.f32.mrb[0].mxu0
      %v6655 = vadd.f32 0.0, %v6654
      %v6656 = vpop.f32.mrb[0].mxu0
      %6657 = vmatprep.mubr.bf16.mxu0 0
      %6658 = vmatmul.mubr.bf16.gmra.mrb[0].mxu0 %v6458
      %v6659 = vpop.f32.mrb[0].mxu0
      %v6660 = vadd.f32 0.0, %v6659
      %v6661 = vpop.f32.mrb[0].mxu0
      %v6662 = vpop.f32.mrb[0].mxu0
      %v6663 = vadd.f32 0.0, %v6662
      %v6664 = vpop.f32.mrb[0].mxu0
      %6665 = vmatprep.mubr.bf16.mxu0 0
      %6666 = vmatmul.mubr.bf16.gmra.mrb[0].mxu0 %v6460
      %v6667 = vpop.f32.mrb[0].mxu0
      %v6668 = vadd.f32 0.0, %v6667
      %v6669 = vpop.f32.mrb[0].mxu0
      %v6670 = vpop.f32.mrb[0].mxu0
      %v6671 = vadd.f32 0.0, %v6670
      %v6672 = vpop.f32.mrb[0].mxu0
      %6673 = vmatprep.mubr.bf16.mxu0 0
      %6674 = vmatmul.mubr.bf16.gmra.mrb[0].mxu0 %v6462
      %v6675 = vpop.f32.mrb[0].mxu0
      %v6676 = vadd.f32 0.0, %v6675
      %v6677 = vpop.f32.mrb[0].mxu0
      %v6678 = vpop.f32.mrb[0].mxu0
      %v6679 = vadd.f32 0.0, %v6678
      %v6680 = vpop.f32.mrb[0].mxu0
      %6681 = vmatprep.mubr.bf16.mxu0 0
      %6682 = vmatmul.mubr.bf16.gmra.mrb[0].mxu0 %v6464
      %v6683 = vpop.f32.mrb[0].mxu0
      %v6684 = vadd.f32 0.0, %v6683
      %v6685 = vpop.f32.mrb[0].mxu0
      %v6686 = vpop.f32.mrb[0].mxu0
      %v6687 = vadd.f32 0.0, %v6686
      %v6688 = vpop.f32.mrb[0].mxu0
      %6689 = vmatprep.mubr.bf16.mxu0 0
      %6690 = vmatmul.mubr.bf16.gmra.mrb[0].mxu0 %v6466
      %v6691 = vpop.f32.mrb[0].mxu0
      %v6692 = vadd.f32 0.0, %v6691
      %v6693 = vpop.f32.mrb[0].mxu0
      %v6694 = vpop.f32.mrb[0].mxu0
      %v6695 = vadd.f32 0.0, %v6694
      %v6696 = vpop.f32.mrb[0].mxu0
      %6697 = vmatprep.mubr.bf16.mxu0 0
      %6698 = vmatmul.mubr.bf16.gmra.mrb[0].mxu0 %v6468
      %v6699 = vpop.f32.mrb[0].mxu0
      %v6700 = vadd.f32 0.0, %v6699
      %v6701 = vpop.f32.mrb[0].mxu0
      %v6702 = vpop.f32.mrb[0].mxu0
      %v6703 = vadd.f32 0.0, %v6702
      %v6704 = vpop.f32.mrb[0].mxu0
      %6705 = vmatprep.mubr.bf16.mxu0 0
      %6706 = vmatmul.mubr.bf16.gmra.mrb[0].mxu0 %v6470
      %v6707 = vpop.f32.mrb[0].mxu0
      %v6708 = vadd.f32 0.0, %v6707
      %v6709 = vpop.f32.mrb[0].mxu0
      %v6710 = vpop.f32.mrb[0].mxu0
      %v6711 = vadd.f32 0.0, %v6710
      %v6712 = vpop.f32.mrb[0].mxu0
      %6713 = vdwg.mxu0
      %v6714 = vadd.f32 %v6361, %v6572
      %v6715 = vadd.f32 %v6362, %v6575
      %v6716 = vadd.f32 %v6363, %v6580
      %v6717 = vadd.f32 %v6364, %v6583
      %v6718 = vadd.f32 %v6365, %v6588
      %v6719 = vadd.f32 %v6366, %v6591
      %v6720 = vadd.f32 %v6367, %v6596
      %v6721 = vadd.f32 %v6368, %v6599
      %v6722 = vadd.f32 %v6369, %v6604
      %v6723 = vadd.f32 %v6370, %v6607
      %v6724 = vadd.f32 %v6371, %v6612
      %v6725 = vadd.f32 %v6372, %v6615
      %v6726 = vadd.f32 %v6373, %v6620
      %v6727 = vadd.f32 %v6374, %v6623
      %v6728 = vadd.f32 %v6375, %v6628
      %v6729 = vadd.f32 %v6376, %v6631
      %v6730 = vadd.f32 %v6377, %v6636
      %v6731 = vadd.f32 %v6378, %v6639
      %v6732 = vadd.f32 %v6379, %v6644
      %v6733 = vadd.f32 %v6380, %v6647
      %v6734 = vadd.f32 %v6381, %v6652
      %v6735 = vadd.f32 %v6382, %v6655
      %v6736 = vadd.f32 %v6383, %v6660
      %v6737 = vadd.f32 %v6384, %v6663
      %v6738 = vadd.f32 %v6385, %v6668
      %v6739 = vadd.f32 %v6386, %v6671
      %v6740 = vadd.f32 %v6387, %v6676
      %v6741 = vadd.f32 %v6388, %v6679
      %v6742 = vadd.f32 %v6389, %v6684
      %v6743 = vadd.f32 %v6390, %v6687
      %v6744 = vadd.f32 %v6391, %v6692
      %v6745 = vadd.f32 %v6392, %v6695
      %v6746 = vadd.f32 %v6393, %v6700
      %v6747 = vadd.f32 %v6394, %v6703
      %v6748 = vadd.f32 %v6395, %v6708
      %v6749 = vadd.f32 %v6396, %v6711
      %v6750 = vld [vmem:[#allocation2 + $0x98] sm:$0x1f]
      %s6751 = scalar_lea.vmem %s2, 320
      %v6752 = vld [vmem:[%s6751] sm:$0xf]
      %v6753 = vld [vmem:[%s6751 + $0x4] sm:$0xf]
      %v6754 = vld [vmem:[%s6751 + $0x8] sm:$0xf]
      %v6755 = vld [vmem:[%s6751 + $0xc] sm:$0xf]
      %v6756 = vld [vmem:[%s6751 + $0x10] sm:$0xf]
      %v6757 = vld [vmem:[%s6751 + $0x14] sm:$0xf]
      %v6758 = vld [vmem:[%s6751 + $0x18] sm:$0xf]
      %v6759 = vld [vmem:[%s6751 + $0x1c] sm:$0xf]
      %v6760 = vld [vmem:[%s6751 + $0x20] sm:$0xf]
      %v6761 = vld [vmem:[%s6751 + $0x24] sm:$0xf]
      %v6762 = vld [vmem:[%s6751 + $0x28] sm:$0xf]
      %v6763 = vld [vmem:[%s6751 + $0x2c] sm:$0xf]
      %v6764 = vld [vmem:[%s6751 + $0x30] sm:$0xf]
      %v6765 = vld [vmem:[%s6751 + $0x34] sm:$0xf]
      %v6766 = vld [vmem:[%s6751 + $0x38] sm:$0xf]
      %v6767 = vld [vmem:[%s6751 + $0x3c] sm:$0xf]
      %vm6768 = vsmask.f32 3328
      %v6770 = vshrl.u32 %v6397, 16
      %v6772 = vrot.slane %v6770, 4
      %v6773 = vshll.u32 %v6397, 16
      %v6775 = vrot.slane %v6773, 5
      %v6776 = vor.u32 %v6772, %v6775
      %v6777 = vrot.slane %v5957, 4
      %v6778 = vrot.slane %v5960, 5
      %v6779 = vor.u32 %v6777, %v6778
      %v6780 = vsel %vm6768, %v6776, %v6779
      %v6781 = vrot.slane %v5966, 4
      %v6782 = vrot.slane %v5969, 5
      %v6783 = vor.u32 %v6781, %v6782
      %v6784 = vsel %vm6768, %v6779, %v6783
      %v6785 = vrot.slane %v5975, 4
      %v6786 = vrot.slane %v5978, 5
      %v6787 = vor.u32 %v6785, %v6786
      %v6788 = vsel %vm6768, %v6783, %v6787
      %v6789 = vrot.slane %v5984, 4
      %v6790 = vrot.slane %v5987, 5
      %v6791 = vor.u32 %v6789, %v6790
      %v6792 = vsel %vm6768, %v6787, %v6791
      %v6793 = vrot.slane %v5993, 4
      %v6794 = vrot.slane %v5996, 5
      %v6795 = vor.u32 %v6793, %v6794
      %v6796 = vsel %vm6768, %v6791, %v6795
      %v6797 = vrot.slane %v6002, 4
      %v6798 = vrot.slane %v6005, 5
      %v6799 = vor.u32 %v6797, %v6798
      %v6800 = vsel %vm6768, %v6795, %v6799
      %v6801 = vrot.slane %v6011, 4
      %v6802 = vrot.slane %v6014, 5
      %v6803 = vor.u32 %v6801, %v6802
      %v6804 = vsel %vm6768, %v6799, %v6803
      %v6805 = vrot.slane %v6020, 4
      %v6806 = vrot.slane %v6023, 5
      %v6807 = vor.u32 %v6805, %v6806
      %v6808 = vsel %vm6768, %v6803, %v6807
      %v6809 = vrot.slane %v6029, 4
      %v6810 = vrot.slane %v6032, 5
      %v6811 = vor.u32 %v6809, %v6810
      %v6812 = vsel %vm6768, %v6807, %v6811
      %v6813 = vrot.slane %v6038, 4
      %v6814 = vrot.slane %v6041, 5
      %v6815 = vor.u32 %v6813, %v6814
      %v6816 = vsel %vm6768, %v6811, %v6815
      %v6817 = vrot.slane %v6047, 4
      %v6818 = vrot.slane %v6050, 5
      %v6819 = vor.u32 %v6817, %v6818
      %v6820 = vsel %vm6768, %v6815, %v6819
      %v6821 = vrot.slane %v6056, 4
      %v6822 = vrot.slane %v6059, 5
      %v6823 = vor.u32 %v6821, %v6822
      %v6824 = vsel %vm6768, %v6819, %v6823
      %v6825 = vrot.slane %v6065, 4
      %v6826 = vrot.slane %v6068, 5
      %v6827 = vor.u32 %v6825, %v6826
      %v6828 = vsel %vm6768, %v6823, %v6827
      %v6829 = vrot.slane %v6074, 4
      %v6830 = vrot.slane %v6077, 5
      %v6831 = vor.u32 %v6829, %v6830
      %v6832 = vsel %vm6768, %v6827, %v6831
      %v6833 = vrot.slane %v6083, 4
      %v6834 = vrot.slane %v6086, 5
      %v6835 = vor.u32 %v6833, %v6834
      %v6836 = vsel %vm6768, %v6831, %v6835
      %v6837 = vrot.slane %v6092, 4
      %v6838 = vrot.slane %v6095, 5
      %v6839 = vor.u32 %v6837, %v6838
      %v6840 = vsel %vm6768, %v6835, %v6839
      %v6841 = vrot.slane %v6101, 4
      %v6842 = vrot.slane %v6104, 5
      %v6843 = vor.u32 %v6841, %v6842
      %v6844 = vsel %vm6768, %v6839, %v6843
      %v6846 = vshrl.u32 %v6750, 16
      %v6848 = vrot.slane %v6846, 4
      %v6849 = vshll.u32 %v6750, 16
      %v6851 = vrot.slane %v6849, 5
      %v6852 = vor.u32 %v6848, %v6851
      %v6853 = vsel %vm6768, %v6843, %v6852
      %v6888 = vunpack.c.l.b16 %v6752
      %v6889 = vunpack.c.l.b16 %v6753
      %v6890 = vunpack.c.l.b16 %v6754
      %v6891 = vunpack.c.l.b16 %v6755
      %v6892 = vunpack.c.l.b16 %v6756
      %v6893 = vunpack.c.l.b16 %v6757
      %v6894 = vunpack.c.l.b16 %v6758
      %v6895 = vunpack.c.l.b16 %v6759
      %v6896 = vunpack.c.l.b16 %v6760
      %v6897 = vunpack.c.l.b16 %v6761
      %v6898 = vunpack.c.l.b16 %v6762
      %v6899 = vunpack.c.l.b16 %v6763
      %v6900 = vunpack.c.l.b16 %v6764
      %v6901 = vunpack.c.l.b16 %v6765
      %v6902 = vunpack.c.l.b16 %v6766
      %v6903 = vunpack.c.l.b16 %v6767
      %v6904 = vpack.c.b16 %v6889, %v6888
      %v6905 = vpack.c.b16 %v6891, %v6890
      %v6906 = vpack.c.b16 %v6893, %v6892
      %v6907 = vpack.c.b16 %v6895, %v6894
      %v6908 = vpack.c.b16 %v6897, %v6896
      %v6909 = vpack.c.b16 %v6899, %v6898
      %v6910 = vpack.c.b16 %v6901, %v6900
      %v6911 = vpack.c.b16 %v6903, %v6902
      %6920 = vmatprep.subr.bf16.mxu0 0
      %6921 = vmatpush1.bf16.msra.mxu0 %v6904
      %6922 = vmatprep.subr.bf16.mxu0 0
      %6923 = vmatpush1.bf16.msra.mxu0 %v6905
      %6924 = vmatprep.subr.bf16.mxu0 0
      %6925 = vmatpush1.bf16.msra.mxu0 %v6906
      %6926 = vmatprep.subr.bf16.mxu0 0
      %6927 = vmatpush1.bf16.msra.mxu0 %v6907
      %6928 = vmatprep.subr.bf16.mxu0 0
      %6929 = vmatpush1.bf16.msra.mxu0 %v6908
      %6930 = vmatprep.subr.bf16.mxu0 0
      %6931 = vmatpush1.bf16.msra.mxu0 %v6909
      %6932 = vmatprep.subr.bf16.mxu0 0
      %6933 = vmatpush1.bf16.msra.mxu0 %v6910
      %6934 = vmatprep.subr.bf16.mxu0 0
      %6935 = vmatpush1.bf16.msra.mxu0 %v6911
      %6936 = vmatprep.subr.bf16.mxu0 0
      %6937 = vmatpush1.bf16.msra.mxu0 0
      %6938 = vmatprep.subr.bf16.mxu0 0
      %6939 = vmatpush1.bf16.msra.mxu0 0
      %6940 = vmatprep.subr.bf16.mxu0 0
      %6941 = vmatpush1.bf16.msra.mxu0 0
      %6942 = vmatprep.subr.bf16.mxu0 0
      %6943 = vmatpush1.bf16.msra.mxu0 0
      %6944 = vmatprep.subr.bf16.mxu0 0
      %6945 = vmatpush1.bf16.msra.mxu0 0
      %6946 = vmatprep.subr.bf16.mxu0 0
      %6947 = vmatpush1.bf16.msra.mxu0 0
      %6948 = vmatprep.subr.bf16.mxu0 0
      %6949 = vmatpush1.bf16.msra.mxu0 0
      %6950 = vmatprep.subr.bf16.mxu0 0
      %6951 = vmatpush1.bf16.msra.mxu0 0
      %6952 = vmatprep.mubr.bf16.mxu0 0
      %6953 = vmatmul.mubr.bf16.gmra.mrb[0].mxu0 %v6780
      %v6954 = vpop.f32.mrb[0].mxu0
      %v6955 = vadd.f32 0.0, %v6954
      %v6956 = vpop.f32.mrb[0].mxu0
      %v6957 = vpop.f32.mrb[0].mxu0
      %v6958 = vadd.f32 0.0, %v6957
      %v6959 = vpop.f32.mrb[0].mxu0
      %6960 = vmatprep.mubr.bf16.mxu0 0
      %6961 = vmatmul.mubr.bf16.gmra.mrb[0].mxu0 %v6784
      %v6962 = vpop.f32.mrb[0].mxu0
      %v6963 = vadd.f32 0.0, %v6962
      %v6964 = vpop.f32.mrb[0].mxu0
      %v6965 = vpop.f32.mrb[0].mxu0
      %v6966 = vadd.f32 0.0, %v6965
      %v6967 = vpop.f32.mrb[0].mxu0
      %6968 = vmatprep.mubr.bf16.mxu0 0
      %6969 = vmatmul.mubr.bf16.gmra.mrb[0].mxu0 %v6788
      %v6970 = vpop.f32.mrb[0].mxu0
      %v6971 = vadd.f32 0.0, %v6970
      %v6972 = vpop.f32.mrb[0].mxu0
      %v6973 = vpop.f32.mrb[0].mxu0
      %v6974 = vadd.f32 0.0, %v6973
      %v6975 = vpop.f32.mrb[0].mxu0
      %6976 = vmatprep.mubr.bf16.mxu0 0
      %6977 = vmatmul.mubr.bf16.gmra.mrb[0].mxu0 %v6792
      %v6978 = vpop.f32.mrb[0].mxu0
      %v6979 = vadd.f32 0.0, %v6978
      %v6980 = vpop.f32.mrb[0].mxu0
      %v6981 = vpop.f32.mrb[0].mxu0
      %v6982 = vadd.f32 0.0, %v6981
      %v6983 = vpop.f32.mrb[0].mxu0
      %6984 = vmatprep.mubr.bf16.mxu0 0
      %6985 = vmatmul.mubr.bf16.gmra.mrb[0].mxu0 %v6796
      %v6986 = vpop.f32.mrb[0].mxu0
      %v6987 = vadd.f32 0.0, %v6986
      %v6988 = vpop.f32.mrb[0].mxu0
      %v6989 = vpop.f32.mrb[0].mxu0
      %v6990 = vadd.f32 0.0, %v6989
      %v6991 = vpop.f32.mrb[0].mxu0
      %6992 = vmatprep.mubr.bf16.mxu0 0
      %6993 = vmatmul.mubr.bf16.gmra.mrb[0].mxu0 %v6800
      %v6994 = vpop.f32.mrb[0].mxu0
      %v6995 = vadd.f32 0.0, %v6994
      %v6996 = vpop.f32.mrb[0].mxu0
      %v6997 = vpop.f32.mrb[0].mxu0
      %v6998 = vadd.f32 0.0, %v6997
      %v6999 = vpop.f32.mrb[0].mxu0
      %7000 = vmatprep.mubr.bf16.mxu0 0
      %7001 = vmatmul.mubr.bf16.gmra.mrb[0].mxu0 %v6804
      %v7002 = vpop.f32.mrb[0].mxu0
      %v7003 = vadd.f32 0.0, %v7002
      %v7004 = vpop.f32.mrb[0].mxu0
      %v7005 = vpop.f32.mrb[0].mxu0
      %v7006 = vadd.f32 0.0, %v7005
      %v7007 = vpop.f32.mrb[0].mxu0
      %7008 = vmatprep.mubr.bf16.mxu0 0
      %7009 = vmatmul.mubr.bf16.gmra.mrb[0].mxu0 %v6808
      %v7010 = vpop.f32.mrb[0].mxu0
      %v7011 = vadd.f32 0.0, %v7010
      %v7012 = vpop.f32.mrb[0].mxu0
      %v7013 = vpop.f32.mrb[0].mxu0
      %v7014 = vadd.f32 0.0, %v7013
      %v7015 = vpop.f32.mrb[0].mxu0
      %7016 = vmatprep.mubr.bf16.mxu0 0
      %7017 = vmatmul.mubr.bf16.gmra.mrb[0].mxu0 %v6812
      %v7018 = vpop.f32.mrb[0].mxu0
      %v7019 = vadd.f32 0.0, %v7018
      %v7020 = vpop.f32.mrb[0].mxu0
      %v7021 = vpop.f32.mrb[0].mxu0
      %v7022 = vadd.f32 0.0, %v7021
      %v7023 = vpop.f32.mrb[0].mxu0
      %7024 = vmatprep.mubr.bf16.mxu0 0
      %7025 = vmatmul.mubr.bf16.gmra.mrb[0].mxu0 %v6816
      %v7026 = vpop.f32.mrb[0].mxu0
      %v7027 = vadd.f32 0.0, %v7026
      %v7028 = vpop.f32.mrb[0].mxu0
      %v7029 = vpop.f32.mrb[0].mxu0
      %v7030 = vadd.f32 0.0, %v7029
      %v7031 = vpop.f32.mrb[0].mxu0
      %7032 = vmatprep.mubr.bf16.mxu0 0
      %7033 = vmatmul.mubr.bf16.gmra.mrb[0].mxu0 %v6820
      %v7034 = vpop.f32.mrb[0].mxu0
      %v7035 = vadd.f32 0.0, %v7034
      %v7036 = vpop.f32.mrb[0].mxu0
      %v7037 = vpop.f32.mrb[0].mxu0
      %v7038 = vadd.f32 0.0, %v7037
      %v7039 = vpop.f32.mrb[0].mxu0
      %7040 = vmatprep.mubr.bf16.mxu0 0
      %7041 = vmatmul.mubr.bf16.gmra.mrb[0].mxu0 %v6824
      %v7042 = vpop.f32.mrb[0].mxu0
      %v7043 = vadd.f32 0.0, %v7042
      %v7044 = vpop.f32.mrb[0].mxu0
      %v7045 = vpop.f32.mrb[0].mxu0
      %v7046 = vadd.f32 0.0, %v7045
      %v7047 = vpop.f32.mrb[0].mxu0
      %7048 = vmatprep.mubr.bf16.mxu0 0
      %7049 = vmatmul.mubr.bf16.gmra.mrb[0].mxu0 %v6828
      %v7050 = vpop.f32.mrb[0].mxu0
      %v7051 = vadd.f32 0.0, %v7050
      %v7052 = vpop.f32.mrb[0].mxu0
      %v7053 = vpop.f32.mrb[0].mxu0
      %v7054 = vadd.f32 0.0, %v7053
      %v7055 = vpop.f32.mrb[0].mxu0
      %7056 = vmatprep.mubr.bf16.mxu0 0
      %7057 = vmatmul.mubr.bf16.gmra.mrb[0].mxu0 %v6832
      %v7058 = vpop.f32.mrb[0].mxu0
      %v7059 = vadd.f32 0.0, %v7058
      %v7060 = vpop.f32.mrb[0].mxu0
      %v7061 = vpop.f32.mrb[0].mxu0
      %v7062 = vadd.f32 0.0, %v7061
      %v7063 = vpop.f32.mrb[0].mxu0
      %7064 = vmatprep.mubr.bf16.mxu0 0
      %7065 = vmatmul.mubr.bf16.gmra.mrb[0].mxu0 %v6836
      %v7066 = vpop.f32.mrb[0].mxu0
      %v7067 = vadd.f32 0.0, %v7066
      %v7068 = vpop.f32.mrb[0].mxu0
      %v7069 = vpop.f32.mrb[0].mxu0
      %v7070 = vadd.f32 0.0, %v7069
      %v7071 = vpop.f32.mrb[0].mxu0
      %7072 = vmatprep.mubr.bf16.mxu0 0
      %7073 = vmatmul.mubr.bf16.gmra.mrb[0].mxu0 %v6840
      %v7074 = vpop.f32.mrb[0].mxu0
      %v7075 = vadd.f32 0.0, %v7074
      %v7076 = vpop.f32.mrb[0].mxu0
      %v7077 = vpop.f32.mrb[0].mxu0
      %v7078 = vadd.f32 0.0, %v7077
      %v7079 = vpop.f32.mrb[0].mxu0
      %7080 = vmatprep.mubr.bf16.mxu0 0
      %7081 = vmatmul.mubr.bf16.gmra.mrb[0].mxu0 %v6844
      %v7082 = vpop.f32.mrb[0].mxu0
      %v7083 = vadd.f32 0.0, %v7082
      %v7084 = vpop.f32.mrb[0].mxu0
      %v7085 = vpop.f32.mrb[0].mxu0
      %v7086 = vadd.f32 0.0, %v7085
      %v7087 = vpop.f32.mrb[0].mxu0
      %7088 = vmatprep.mubr.bf16.mxu0 0
      %7089 = vmatmul.mubr.bf16.gmra.mrb[0].mxu0 %v6853
      %v7090 = vpop.f32.mrb[0].mxu0
      %v7091 = vadd.f32 0.0, %v7090
      %v7092 = vpop.f32.mrb[0].mxu0
      %v7093 = vpop.f32.mrb[0].mxu0
      %v7094 = vadd.f32 0.0, %v7093
      %v7095 = vpop.f32.mrb[0].mxu0
      %7096 = vdwg.mxu0
      %v7097 = vadd.f32 %v6714, %v6955
      %v7098 = vadd.f32 %v6715, %v6958
      %v7099 = vadd.f32 %v6716, %v6963
      %v7100 = vadd.f32 %v6717, %v6966
      %v7101 = vadd.f32 %v6718, %v6971
      %v7102 = vadd.f32 %v6719, %v6974
      %v7103 = vadd.f32 %v6720, %v6979
      %v7104 = vadd.f32 %v6721, %v6982
      %v7105 = vadd.f32 %v6722, %v6987
      %v7106 = vadd.f32 %v6723, %v6990
      %v7107 = vadd.f32 %v6724, %v6995
      %v7108 = vadd.f32 %v6725, %v6998
      %v7109 = vadd.f32 %v6726, %v7003
      %v7110 = vadd.f32 %v6727, %v7006
      %v7111 = vadd.f32 %v6728, %v7011
      %v7112 = vadd.f32 %v6729, %v7014
      %v7113 = vadd.f32 %v6730, %v7019
      %v7114 = vadd.f32 %v6731, %v7022
      %v7115 = vadd.f32 %v6732, %v7027
      %v7116 = vadd.f32 %v6733, %v7030
      %v7117 = vadd.f32 %v6734, %v7035
      %v7118 = vadd.f32 %v6735, %v7038
      %v7119 = vadd.f32 %v6736, %v7043
      %v7120 = vadd.f32 %v6737, %v7046
      %v7121 = vadd.f32 %v6738, %v7051
      %v7122 = vadd.f32 %v6739, %v7054
      %v7123 = vadd.f32 %v6740, %v7059
      %v7124 = vadd.f32 %v6741, %v7062
      %v7125 = vadd.f32 %v6742, %v7067
      %v7126 = vadd.f32 %v6743, %v7070
      %v7127 = vadd.f32 %v6744, %v7075
      %v7128 = vadd.f32 %v6745, %v7078
      %v7129 = vadd.f32 %v6746, %v7083
      %v7130 = vadd.f32 %v6747, %v7086
      %v7131 = vadd.f32 %v6748, %v7091
      %v7132 = vadd.f32 %v6749, %v7094
      %v7133 = vld [vmem:[#allocation2 + $0x10] sm:$0xf0]
      %v7134 = vld [vmem:[#allocation2 + $0x18] sm:$0xff]
      %v7135 = vld [vmem:[#allocation2 + $0x20] sm:$0xff]
      %v7136 = vld [vmem:[#allocation2 + $0x28] sm:$0xff]
      %v7137 = vld [vmem:[#allocation2 + $0x30] sm:$0xff]
      %v7138 = vld [vmem:[#allocation2 + $0x38] sm:$0xff]
      %v7139 = vld [vmem:[#allocation2 + $0x40] sm:$0xff]
      %v7140 = vld [vmem:[#allocation2 + $0x48] sm:$0xff]
      %v7141 = vld [vmem:[#allocation2 + $0x50] sm:$0xff]
      %v7142 = vld [vmem:[#allocation2 + $0x58] sm:$0xff]
      %v7143 = vld [vmem:[#allocation2 + $0x60] sm:$0xff]
      %v7144 = vld [vmem:[#allocation2 + $0x68] sm:$0xff]
      %v7145 = vld [vmem:[#allocation2 + $0x70] sm:$0xff]
      %v7146 = vld [vmem:[#allocation2 + $0x78] sm:$0xff]
      %v7147 = vld [vmem:[#allocation2 + $0x80] sm:$0xff]
      %v7148 = vld [vmem:[#allocation2 + $0x88] sm:$0xff]
      %v7149 = vld [vmem:[#allocation2 + $0x90] sm:$0xff]
      %v7150 = vld [vmem:[#allocation2 + $0x98] sm:$0xff]
      %v7151 = vld [vmem:[#allocation2 + $0xa0] sm:$0x1f]
      %s7152 = scalar_lea.vmem %s2, 384
      %v7153 = vld [vmem:[%s7152] sm:$0xf]
      %v7154 = vld [vmem:[%s7152 + $0x4] sm:$0xf]
      %v7155 = vld [vmem:[%s7152 + $0x8] sm:$0xf]
      %v7156 = vld [vmem:[%s7152 + $0xc] sm:$0xf]
      %v7157 = vld [vmem:[%s7152 + $0x10] sm:$0xf]
      %v7158 = vld [vmem:[%s7152 + $0x14] sm:$0xf]
      %v7159 = vld [vmem:[%s7152 + $0x18] sm:$0xf]
      %v7160 = vld [vmem:[%s7152 + $0x1c] sm:$0xf]
      %v7161 = vld [vmem:[%s7152 + $0x20] sm:$0xf]
      %v7162 = vld [vmem:[%s7152 + $0x24] sm:$0xf]
      %v7163 = vld [vmem:[%s7152 + $0x28] sm:$0xf]
      %v7164 = vld [vmem:[%s7152 + $0x2c] sm:$0xf]
      %v7165 = vld [vmem:[%s7152 + $0x30] sm:$0xf]
      %v7166 = vld [vmem:[%s7152 + $0x34] sm:$0xf]
      %v7167 = vld [vmem:[%s7152 + $0x38] sm:$0xf]
      %v7168 = vld [vmem:[%s7152 + $0x3c] sm:$0xf]
      %v7170 = vshrl.u32 %v7133, 16
      %v7172 = vrot.slane %v7170, 4
      %v7173 = vshll.u32 %v7133, 16
      %v7175 = vrot.slane %v7173, 5
      %v7176 = vor.u32 %v7172, %v7175
      %v7178 = vshrl.u32 %v7134, 16
      %v7180 = vrot.slane %v7178, 4
      %v7181 = vshll.u32 %v7134, 16
      %v7183 = vrot.slane %v7181, 5
      %v7184 = vor.u32 %v7180, %v7183
      %v7185 = vsel %vm6768, %v7176, %v7184
      %v7187 = vshrl.u32 %v7135, 16
      %v7189 = vrot.slane %v7187, 4
      %v7190 = vshll.u32 %v7135, 16
      %v7192 = vrot.slane %v7190, 5
      %v7193 = vor.u32 %v7189, %v7192
      %v7194 = vsel %vm6768, %v7184, %v7193
      %v7196 = vshrl.u32 %v7136, 16
      %v7198 = vrot.slane %v7196, 4
      %v7199 = vshll.u32 %v7136, 16
      %v7201 = vrot.slane %v7199, 5
      %v7202 = vor.u32 %v7198, %v7201
      %v7203 = vsel %vm6768, %v7193, %v7202
      %v7205 = vshrl.u32 %v7137, 16
      %v7207 = vrot.slane %v7205, 4
      %v7208 = vshll.u32 %v7137, 16
      %v7210 = vrot.slane %v7208, 5
      %v7211 = vor.u32 %v7207, %v7210
      %v7212 = vsel %vm6768, %v7202, %v7211
      %v7214 = vshrl.u32 %v7138, 16
      %v7216 = vrot.slane %v7214, 4
      %v7217 = vshll.u32 %v7138, 16
      %v7219 = vrot.slane %v7217, 5
      %v7220 = vor.u32 %v7216, %v7219
      %v7221 = vsel %vm6768, %v7211, %v7220
      %v7223 = vshrl.u32 %v7139, 16
      %v7225 = vrot.slane %v7223, 4
      %v7226 = vshll.u32 %v7139, 16
      %v7228 = vrot.slane %v7226, 5
      %v7229 = vor.u32 %v7225, %v7228
      %v7230 = vsel %vm6768, %v7220, %v7229
      %v7232 = vshrl.u32 %v7140, 16
      %v7234 = vrot.slane %v7232, 4
      %v7235 = vshll.u32 %v7140, 16
      %v7237 = vrot.slane %v7235, 5
      %v7238 = vor.u32 %v7234, %v7237
      %v7239 = vsel %vm6768, %v7229, %v7238
      %v7241 = vshrl.u32 %v7141, 16
      %v7243 = vrot.slane %v7241, 4
      %v7244 = vshll.u32 %v7141, 16
      %v7246 = vrot.slane %v7244, 5
      %v7247 = vor.u32 %v7243, %v7246
      %v7248 = vsel %vm6768, %v7238, %v7247
      %v7250 = vshrl.u32 %v7142, 16
      %v7252 = vrot.slane %v7250, 4
      %v7253 = vshll.u32 %v7142, 16
      %v7255 = vrot.slane %v7253, 5
      %v7256 = vor.u32 %v7252, %v7255
      %v7257 = vsel %vm6768, %v7247, %v7256
      %v7259 = vshrl.u32 %v7143, 16
      %v7261 = vrot.slane %v7259, 4
      %v7262 = vshll.u32 %v7143, 16
      %v7264 = vrot.slane %v7262, 5
      %v7265 = vor.u32 %v7261, %v7264
      %v7266 = vsel %vm6768, %v7256, %v7265
      %v7268 = vshrl.u32 %v7144, 16
      %v7270 = vrot.slane %v7268, 4
      %v7271 = vshll.u32 %v7144, 16
      %v7273 = vrot.slane %v7271, 5
      %v7274 = vor.u32 %v7270, %v7273
      %v7275 = vsel %vm6768, %v7265, %v7274
      %v7277 = vshrl.u32 %v7145, 16
      %v7279 = vrot.slane %v7277, 4
      %v7280 = vshll.u32 %v7145, 16
      %v7282 = vrot.slane %v7280, 5
      %v7283 = vor.u32 %v7279, %v7282
      %v7284 = vsel %vm6768, %v7274, %v7283
      %v7286 = vshrl.u32 %v7146, 16
      %v7288 = vrot.slane %v7286, 4
      %v7289 = vshll.u32 %v7146, 16
      %v7291 = vrot.slane %v7289, 5
      %v7292 = vor.u32 %v7288, %v7291
      %v7293 = vsel %vm6768, %v7283, %v7292
      %v7295 = vshrl.u32 %v7147, 16
      %v7297 = vrot.slane %v7295, 4
      %v7298 = vshll.u32 %v7147, 16
      %v7300 = vrot.slane %v7298, 5
      %v7301 = vor.u32 %v7297, %v7300
      %v7302 = vsel %vm6768, %v7292, %v7301
      %v7304 = vshrl.u32 %v7148, 16
      %v7306 = vrot.slane %v7304, 4
      %v7307 = vshll.u32 %v7148, 16
      %v7309 = vrot.slane %v7307, 5
      %v7310 = vor.u32 %v7306, %v7309
      %v7311 = vsel %vm6768, %v7301, %v7310
      %v7313 = vshrl.u32 %v7149, 16
      %v7315 = vrot.slane %v7313, 4
      %v7316 = vshll.u32 %v7149, 16
      %v7318 = vrot.slane %v7316, 5
      %v7319 = vor.u32 %v7315, %v7318
      %v7320 = vsel %vm6768, %v7310, %v7319
      %v7322 = vshrl.u32 %v7150, 16
      %v7324 = vrot.slane %v7322, 4
      %v7325 = vshll.u32 %v7150, 16
      %v7327 = vrot.slane %v7325, 5
      %v7328 = vor.u32 %v7324, %v7327
      %v7329 = vsel %vm6768, %v7319, %v7328
      %v7331 = vshrl.u32 %v7151, 16
      %v7333 = vrot.slane %v7331, 4
      %v7334 = vshll.u32 %v7151, 16
      %v7336 = vrot.slane %v7334, 5
      %v7337 = vor.u32 %v7333, %v7336
      %v7338 = vsel %vm6768, %v7328, %v7337
      %v7373 = vunpack.c.l.b16 %v7153
      %v7374 = vunpack.c.l.b16 %v7154
      %v7375 = vunpack.c.l.b16 %v7155
      %v7376 = vunpack.c.l.b16 %v7156
      %v7377 = vunpack.c.l.b16 %v7157
      %v7378 = vunpack.c.l.b16 %v7158
      %v7379 = vunpack.c.l.b16 %v7159
      %v7380 = vunpack.c.l.b16 %v7160
      %v7381 = vunpack.c.l.b16 %v7161
      %v7382 = vunpack.c.l.b16 %v7162
      %v7383 = vunpack.c.l.b16 %v7163
      %v7384 = vunpack.c.l.b16 %v7164
      %v7385 = vunpack.c.l.b16 %v7165
      %v7386 = vunpack.c.l.b16 %v7166
      %v7387 = vunpack.c.l.b16 %v7167
      %v7388 = vunpack.c.l.b16 %v7168
      %v7389 = vpack.c.b16 %v7374, %v7373
      %v7390 = vpack.c.b16 %v7376, %v7375
      %v7391 = vpack.c.b16 %v7378, %v7377
      %v7392 = vpack.c.b16 %v7380, %v7379
      %v7393 = vpack.c.b16 %v7382, %v7381
      %v7394 = vpack.c.b16 %v7384, %v7383
      %v7395 = vpack.c.b16 %v7386, %v7385
      %v7396 = vpack.c.b16 %v7388, %v7387
      %7405 = vmatprep.subr.bf16.mxu0 0
      %7406 = vmatpush1.bf16.msra.mxu0 %v7389
      %7407 = vmatprep.subr.bf16.mxu0 0
      %7408 = vmatpush1.bf16.msra.mxu0 %v7390
      %7409 = vmatprep.subr.bf16.mxu0 0
      %7410 = vmatpush1.bf16.msra.mxu0 %v7391
      %7411 = vmatprep.subr.bf16.mxu0 0
      %7412 = vmatpush1.bf16.msra.mxu0 %v7392
      %7413 = vmatprep.subr.bf16.mxu0 0
      %7414 = vmatpush1.bf16.msra.mxu0 %v7393
      %7415 = vmatprep.subr.bf16.mxu0 0
      %7416 = vmatpush1.bf16.msra.mxu0 %v7394
      %7417 = vmatprep.subr.bf16.mxu0 0
      %7418 = vmatpush1.bf16.msra.mxu0 %v7395
      %7419 = vmatprep.subr.bf16.mxu0 0
      %7420 = vmatpush1.bf16.msra.mxu0 %v7396
      %7421 = vmatprep.subr.bf16.mxu0 0
      %7422 = vmatpush1.bf16.msra.mxu0 0
      %7423 = vmatprep.subr.bf16.mxu0 0
      %7424 = vmatpush1.bf16.msra.mxu0 0
      %7425 = vmatprep.subr.bf16.mxu0 0
      %7426 = vmatpush1.bf16.msra.mxu0 0
      %7427 = vmatprep.subr.bf16.mxu0 0
      %7428 = vmatpush1.bf16.msra.mxu0 0
      %7429 = vmatprep.subr.bf16.mxu0 0
      %7430 = vmatpush1.bf16.msra.mxu0 0
      %7431 = vmatprep.subr.bf16.mxu0 0
      %7432 = vmatpush1.bf16.msra.mxu0 0
      %7433 = vmatprep.subr.bf16.mxu0 0
      %7434 = vmatpush1.bf16.msra.mxu0 0
      %7435 = vmatprep.subr.bf16.mxu0 0
      %7436 = vmatpush1.bf16.msra.mxu0 0
      %7437 = vmatprep.mubr.bf16.mxu0 0
      %7438 = vmatmul.mubr.bf16.gmra.mrb[0].mxu0 %v7185
      %v7439 = vpop.f32.mrb[0].mxu0
      %v7440 = vadd.f32 0.0, %v7439
      %v7441 = vpop.f32.mrb[0].mxu0
      %v7442 = vpop.f32.mrb[0].mxu0
      %v7443 = vadd.f32 0.0, %v7442
      %v7444 = vpop.f32.mrb[0].mxu0
      %7445 = vmatprep.mubr.bf16.mxu0 0
      %7446 = vmatmul.mubr.bf16.gmra.mrb[0].mxu0 %v7194
      %v7447 = vpop.f32.mrb[0].mxu0
      %v7448 = vadd.f32 0.0, %v7447
      %v7449 = vpop.f32.mrb[0].mxu0
      %v7450 = vpop.f32.mrb[0].mxu0
      %v7451 = vadd.f32 0.0, %v7450
      %v7452 = vpop.f32.mrb[0].mxu0
      %7453 = vmatprep.mubr.bf16.mxu0 0
      %7454 = vmatmul.mubr.bf16.gmra.mrb[0].mxu0 %v7203
      %v7455 = vpop.f32.mrb[0].mxu0
      %v7456 = vadd.f32 0.0, %v7455
      %v7457 = vpop.f32.mrb[0].mxu0
      %v7458 = vpop.f32.mrb[0].mxu0
      %v7459 = vadd.f32 0.0, %v7458
      %v7460 = vpop.f32.mrb[0].mxu0
      %7461 = vmatprep.mubr.bf16.mxu0 0
      %7462 = vmatmul.mubr.bf16.gmra.mrb[0].mxu0 %v7212
      %v7463 = vpop.f32.mrb[0].mxu0
      %v7464 = vadd.f32 0.0, %v7463
      %v7465 = vpop.f32.mrb[0].mxu0
      %v7466 = vpop.f32.mrb[0].mxu0
      %v7467 = vadd.f32 0.0, %v7466
      %v7468 = vpop.f32.mrb[0].mxu0
      %7469 = vmatprep.mubr.bf16.mxu0 0
      %7470 = vmatmul.mubr.bf16.gmra.mrb[0].mxu0 %v7221
      %v7471 = vpop.f32.mrb[0].mxu0
      %v7472 = vadd.f32 0.0, %v7471
      %v7473 = vpop.f32.mrb[0].mxu0
      %v7474 = vpop.f32.mrb[0].mxu0
      %v7475 = vadd.f32 0.0, %v7474
      %v7476 = vpop.f32.mrb[0].mxu0
      %7477 = vmatprep.mubr.bf16.mxu0 0
      %7478 = vmatmul.mubr.bf16.gmra.mrb[0].mxu0 %v7230
      %v7479 = vpop.f32.mrb[0].mxu0
      %v7480 = vadd.f32 0.0, %v7479
      %v7481 = vpop.f32.mrb[0].mxu0
      %v7482 = vpop.f32.mrb[0].mxu0
      %v7483 = vadd.f32 0.0, %v7482
      %v7484 = vpop.f32.mrb[0].mxu0
      %7485 = vmatprep.mubr.bf16.mxu0 0
      %7486 = vmatmul.mubr.bf16.gmra.mrb[0].mxu0 %v7239
      %v7487 = vpop.f32.mrb[0].mxu0
      %v7488 = vadd.f32 0.0, %v7487
      %v7489 = vpop.f32.mrb[0].mxu0
      %v7490 = vpop.f32.mrb[0].mxu0
      %v7491 = vadd.f32 0.0, %v7490
      %v7492 = vpop.f32.mrb[0].mxu0
      %7493 = vmatprep.mubr.bf16.mxu0 0
      %7494 = vmatmul.mubr.bf16.gmra.mrb[0].mxu0 %v7248
      %v7495 = vpop.f32.mrb[0].mxu0
      %v7496 = vadd.f32 0.0, %v7495
      %v7497 = vpop.f32.mrb[0].mxu0
      %v7498 = vpop.f32.mrb[0].mxu0
      %v7499 = vadd.f32 0.0, %v7498
      %v7500 = vpop.f32.mrb[0].mxu0
      %7501 = vmatprep.mubr.bf16.mxu0 0
      %7502 = vmatmul.mubr.bf16.gmra.mrb[0].mxu0 %v7257
      %v7503 = vpop.f32.mrb[0].mxu0
      %v7504 = vadd.f32 0.0, %v7503
      %v7505 = vpop.f32.mrb[0].mxu0
      %v7506 = vpop.f32.mrb[0].mxu0
      %v7507 = vadd.f32 0.0, %v7506
      %v7508 = vpop.f32.mrb[0].mxu0
      %7509 = vmatprep.mubr.bf16.mxu0 0
      %7510 = vmatmul.mubr.bf16.gmra.mrb[0].mxu0 %v7266
      %v7511 = vpop.f32.mrb[0].mxu0
      %v7512 = vadd.f32 0.0, %v7511
      %v7513 = vpop.f32.mrb[0].mxu0
      %v7514 = vpop.f32.mrb[0].mxu0
      %v7515 = vadd.f32 0.0, %v7514
      %v7516 = vpop.f32.mrb[0].mxu0
      %7517 = vmatprep.mubr.bf16.mxu0 0
      %7518 = vmatmul.mubr.bf16.gmra.mrb[0].mxu0 %v7275
      %v7519 = vpop.f32.mrb[0].mxu0
      %v7520 = vadd.f32 0.0, %v7519
      %v7521 = vpop.f32.mrb[0].mxu0
      %v7522 = vpop.f32.mrb[0].mxu0
      %v7523 = vadd.f32 0.0, %v7522
      %v7524 = vpop.f32.mrb[0].mxu0
      %7525 = vmatprep.mubr.bf16.mxu0 0
      %7526 = vmatmul.mubr.bf16.gmra.mrb[0].mxu0 %v7284
      %v7527 = vpop.f32.mrb[0].mxu0
      %v7528 = vadd.f32 0.0, %v7527
      %v7529 = vpop.f32.mrb[0].mxu0
      %v7530 = vpop.f32.mrb[0].mxu0
      %v7531 = vadd.f32 0.0, %v7530
      %v7532 = vpop.f32.mrb[0].mxu0
      %7533 = vmatprep.mubr.bf16.mxu0 0
      %7534 = vmatmul.mubr.bf16.gmra.mrb[0].mxu0 %v7293
      %v7535 = vpop.f32.mrb[0].mxu0
      %v7536 = vadd.f32 0.0, %v7535
      %v7537 = vpop.f32.mrb[0].mxu0
      %v7538 = vpop.f32.mrb[0].mxu0
      %v7539 = vadd.f32 0.0, %v7538
      %v7540 = vpop.f32.mrb[0].mxu0
      %7541 = vmatprep.mubr.bf16.mxu0 0
      %7542 = vmatmul.mubr.bf16.gmra.mrb[0].mxu0 %v7302
      %v7543 = vpop.f32.mrb[0].mxu0
      %v7544 = vadd.f32 0.0, %v7543
      %v7545 = vpop.f32.mrb[0].mxu0
      %v7546 = vpop.f32.mrb[0].mxu0
      %v7547 = vadd.f32 0.0, %v7546
      %v7548 = vpop.f32.mrb[0].mxu0
      %7549 = vmatprep.mubr.bf16.mxu0 0
      %7550 = vmatmul.mubr.bf16.gmra.mrb[0].mxu0 %v7311
      %v7551 = vpop.f32.mrb[0].mxu0
      %v7552 = vadd.f32 0.0, %v7551
      %v7553 = vpop.f32.mrb[0].mxu0
      %v7554 = vpop.f32.mrb[0].mxu0
      %v7555 = vadd.f32 0.0, %v7554
      %v7556 = vpop.f32.mrb[0].mxu0
      %7557 = vmatprep.mubr.bf16.mxu0 0
      %7558 = vmatmul.mubr.bf16.gmra.mrb[0].mxu0 %v7320
      %v7559 = vpop.f32.mrb[0].mxu0
      %v7560 = vadd.f32 0.0, %v7559
      %v7561 = vpop.f32.mrb[0].mxu0
      %v7562 = vpop.f32.mrb[0].mxu0
      %v7563 = vadd.f32 0.0, %v7562
      %v7564 = vpop.f32.mrb[0].mxu0
      %7565 = vmatprep.mubr.bf16.mxu0 0
      %7566 = vmatmul.mubr.bf16.gmra.mrb[0].mxu0 %v7329
      %v7567 = vpop.f32.mrb[0].mxu0
      %v7568 = vadd.f32 0.0, %v7567
      %v7569 = vpop.f32.mrb[0].mxu0
      %v7570 = vpop.f32.mrb[0].mxu0
      %v7571 = vadd.f32 0.0, %v7570
      %v7572 = vpop.f32.mrb[0].mxu0
      %7573 = vmatprep.mubr.bf16.mxu0 0
      %7574 = vmatmul.mubr.bf16.gmra.mrb[0].mxu0 %v7338
      %v7575 = vpop.f32.mrb[0].mxu0
      %v7576 = vadd.f32 0.0, %v7575
      %v7577 = vpop.f32.mrb[0].mxu0
      %v7578 = vpop.f32.mrb[0].mxu0
      %v7579 = vadd.f32 0.0, %v7578
      %v7580 = vpop.f32.mrb[0].mxu0
      %7581 = vdwg.mxu0
      %v7582 = vadd.f32 %v7097, %v7440
      %v7583 = vadd.f32 %v7098, %v7443
      %v7584 = vadd.f32 %v7099, %v7448
      %v7585 = vadd.f32 %v7100, %v7451
      %v7586 = vadd.f32 %v7101, %v7456
      %v7587 = vadd.f32 %v7102, %v7459
      %v7588 = vadd.f32 %v7103, %v7464
      %v7589 = vadd.f32 %v7104, %v7467
      %v7590 = vadd.f32 %v7105, %v7472
      %v7591 = vadd.f32 %v7106, %v7475
      %v7592 = vadd.f32 %v7107, %v7480
      %v7593 = vadd.f32 %v7108, %v7483
      %v7594 = vadd.f32 %v7109, %v7488
      %v7595 = vadd.f32 %v7110, %v7491
      %v7596 = vadd.f32 %v7111, %v7496
      %v7597 = vadd.f32 %v7112, %v7499
      %v7598 = vadd.f32 %v7113, %v7504
      %v7599 = vadd.f32 %v7114, %v7507
      %v7600 = vadd.f32 %v7115, %v7512
      %v7601 = vadd.f32 %v7116, %v7515
      %v7602 = vadd.f32 %v7117, %v7520
      %v7603 = vadd.f32 %v7118, %v7523
      %v7604 = vadd.f32 %v7119, %v7528
      %v7605 = vadd.f32 %v7120, %v7531
      %v7606 = vadd.f32 %v7121, %v7536
      %v7607 = vadd.f32 %v7122, %v7539
      %v7608 = vadd.f32 %v7123, %v7544
      %v7609 = vadd.f32 %v7124, %v7547
      %v7610 = vadd.f32 %v7125, %v7552
      %v7611 = vadd.f32 %v7126, %v7555
      %v7612 = vadd.f32 %v7127, %v7560
      %v7613 = vadd.f32 %v7128, %v7563
      %v7614 = vadd.f32 %v7129, %v7568
      %v7615 = vadd.f32 %v7130, %v7571
      %v7616 = vadd.f32 %v7131, %v7576
      %v7617 = vadd.f32 %v7132, %v7579
      %v7618 = vld [vmem:[#allocation2 + $0x10] sm:$0xe0]
      %s7619 = scalar_lea.vmem %s2, 448
      %v7620 = vld [vmem:[%s7619] sm:$0xf]
      %v7621 = vld [vmem:[%s7619 + $0x4] sm:$0xf]
      %v7622 = vld [vmem:[%s7619 + $0x8] sm:$0xf]
      %v7623 = vld [vmem:[%s7619 + $0xc] sm:$0xf]
      %v7624 = vld [vmem:[%s7619 + $0x10] sm:$0xf]
      %v7625 = vld [vmem:[%s7619 + $0x14] sm:$0xf]
      %v7626 = vld [vmem:[%s7619 + $0x18] sm:$0xf]
      %v7627 = vld [vmem:[%s7619 + $0x1c] sm:$0xf]
      %v7628 = vld [vmem:[%s7619 + $0x20] sm:$0xf]
      %v7629 = vld [vmem:[%s7619 + $0x24] sm:$0xf]
      %v7630 = vld [vmem:[%s7619 + $0x28] sm:$0xf]
      %v7631 = vld [vmem:[%s7619 + $0x2c] sm:$0xf]
      %v7632 = vld [vmem:[%s7619 + $0x30] sm:$0xf]
      %v7633 = vld [vmem:[%s7619 + $0x34] sm:$0xf]
      %v7634 = vld [vmem:[%s7619 + $0x38] sm:$0xf]
      %v7635 = vld [vmem:[%s7619 + $0x3c] sm:$0xf]
      %vm7655 = vcmask 1042432
      %v7656 = vrot.slane %v7618, 5
      %v7657 = vrot.slane %v7134, 5
      %v7658 = vsel %vm7655, %v7656, %v7657
      %v7659 = vrot.slane %v7135, 5
      %v7660 = vsel %vm7655, %v7657, %v7659
      %v7661 = vrot.slane %v7136, 5
      %v7662 = vsel %vm7655, %v7659, %v7661
      %v7663 = vrot.slane %v7137, 5
      %v7664 = vsel %vm7655, %v7661, %v7663
      %v7665 = vrot.slane %v7138, 5
      %v7666 = vsel %vm7655, %v7663, %v7665
      %v7667 = vrot.slane %v7139, 5
      %v7668 = vsel %vm7655, %v7665, %v7667
      %v7669 = vrot.slane %v7140, 5
      %v7670 = vsel %vm7655, %v7667, %v7669
      %v7671 = vrot.slane %v7141, 5
      %v7672 = vsel %vm7655, %v7669, %v7671
      %v7673 = vrot.slane %v7142, 5
      %v7674 = vsel %vm7655, %v7671, %v7673
      %v7675 = vrot.slane %v7143, 5
      %v7676 = vsel %vm7655, %v7673, %v7675
      %v7677 = vrot.slane %v7144, 5
      %v7678 = vsel %vm7655, %v7675, %v7677
      %v7679 = vrot.slane %v7145, 5
      %v7680 = vsel %vm7655, %v7677, %v7679
      %v7681 = vrot.slane %v7146, 5
      %v7682 = vsel %vm7655, %v7679, %v7681
      %v7683 = vrot.slane %v7147, 5
      %v7684 = vsel %vm7655, %v7681, %v7683
      %v7685 = vrot.slane %v7148, 5
      %v7686 = vsel %vm7655, %v7683, %v7685
      %v7687 = vrot.slane %v7149, 5
      %v7688 = vsel %vm7655, %v7685, %v7687
      %v7689 = vrot.slane %v7150, 5
      %v7690 = vsel %vm7655, %v7687, %v7689
      %v7691 = vrot.slane %v7151, 5
      %v7692 = vsel %vm7655, %v7689, %v7691
      %v7727 = vunpack.c.l.b16 %v7620
      %v7728 = vunpack.c.l.b16 %v7621
      %v7729 = vunpack.c.l.b16 %v7622
      %v7730 = vunpack.c.l.b16 %v7623
      %v7731 = vunpack.c.l.b16 %v7624
      %v7732 = vunpack.c.l.b16 %v7625
      %v7733 = vunpack.c.l.b16 %v7626
      %v7734 = vunpack.c.l.b16 %v7627
      %v7735 = vunpack.c.l.b16 %v7628
      %v7736 = vunpack.c.l.b16 %v7629
      %v7737 = vunpack.c.l.b16 %v7630
      %v7738 = vunpack.c.l.b16 %v7631
      %v7739 = vunpack.c.l.b16 %v7632
      %v7740 = vunpack.c.l.b16 %v7633
      %v7741 = vunpack.c.l.b16 %v7634
      %v7742 = vunpack.c.l.b16 %v7635
      %v7743 = vpack.c.b16 %v7728, %v7727
      %v7744 = vpack.c.b16 %v7730, %v7729
      %v7745 = vpack.c.b16 %v7732, %v7731
      %v7746 = vpack.c.b16 %v7734, %v7733
      %v7747 = vpack.c.b16 %v7736, %v7735
      %v7748 = vpack.c.b16 %v7738, %v7737
      %v7749 = vpack.c.b16 %v7740, %v7739
      %v7750 = vpack.c.b16 %v7742, %v7741
      %7759 = vmatprep.subr.bf16.mxu0 0
      %7760 = vmatpush1.bf16.msra.mxu0 %v7743
      %7761 = vmatprep.subr.bf16.mxu0 0
      %7762 = vmatpush1.bf16.msra.mxu0 %v7744
      %7763 = vmatprep.subr.bf16.mxu0 0
      %7764 = vmatpush1.bf16.msra.mxu0 %v7745
      %7765 = vmatprep.subr.bf16.mxu0 0
      %7766 = vmatpush1.bf16.msra.mxu0 %v7746
      %7767 = vmatprep.subr.bf16.mxu0 0
      %7768 = vmatpush1.bf16.msra.mxu0 %v7747
      %7769 = vmatprep.subr.bf16.mxu0 0
      %7770 = vmatpush1.bf16.msra.mxu0 %v7748
      %7771 = vmatprep.subr.bf16.mxu0 0
      %7772 = vmatpush1.bf16.msra.mxu0 %v7749
      %7773 = vmatprep.subr.bf16.mxu0 0
      %7774 = vmatpush1.bf16.msra.mxu0 %v7750
      %7775 = vmatprep.subr.bf16.mxu0 0
      %7776 = vmatpush1.bf16.msra.mxu0 0
      %7777 = vmatprep.subr.bf16.mxu0 0
      %7778 = vmatpush1.bf16.msra.mxu0 0
      %7779 = vmatprep.subr.bf16.mxu0 0
      %7780 = vmatpush1.bf16.msra.mxu0 0
      %7781 = vmatprep.subr.bf16.mxu0 0
      %7782 = vmatpush1.bf16.msra.mxu0 0
      %7783 = vmatprep.subr.bf16.mxu0 0
      %7784 = vmatpush1.bf16.msra.mxu0 0
      %7785 = vmatprep.subr.bf16.mxu0 0
      %7786 = vmatpush1.bf16.msra.mxu0 0
      %7787 = vmatprep.subr.bf16.mxu0 0
      %7788 = vmatpush1.bf16.msra.mxu0 0
      %7789 = vmatprep.subr.bf16.mxu0 0
      %7790 = vmatpush1.bf16.msra.mxu0 0
      %7791 = vmatprep.mubr.bf16.mxu0 0
      %7792 = vmatmul.mubr.bf16.gmra.mrb[0].mxu0 %v7658
      %v7793 = vpop.f32.mrb[0].mxu0
      %v7794 = vadd.f32 0.0, %v7793
      %v7795 = vpop.f32.mrb[0].mxu0
      %v7796 = vpop.f32.mrb[0].mxu0
      %v7797 = vadd.f32 0.0, %v7796
      %v7798 = vpop.f32.mrb[0].mxu0
      %7799 = vmatprep.mubr.bf16.mxu0 0
      %7800 = vmatmul.mubr.bf16.gmra.mrb[0].mxu0 %v7660
      %v7801 = vpop.f32.mrb[0].mxu0
      %v7802 = vadd.f32 0.0, %v7801
      %v7803 = vpop.f32.mrb[0].mxu0
      %v7804 = vpop.f32.mrb[0].mxu0
      %v7805 = vadd.f32 0.0, %v7804
      %v7806 = vpop.f32.mrb[0].mxu0
      %7807 = vmatprep.mubr.bf16.mxu0 0
      %7808 = vmatmul.mubr.bf16.gmra.mrb[0].mxu0 %v7662
      %v7809 = vpop.f32.mrb[0].mxu0
      %v7810 = vadd.f32 0.0, %v7809
      %v7811 = vpop.f32.mrb[0].mxu0
      %v7812 = vpop.f32.mrb[0].mxu0
      %v7813 = vadd.f32 0.0, %v7812
      %v7814 = vpop.f32.mrb[0].mxu0
      %7815 = vmatprep.mubr.bf16.mxu0 0
      %7816 = vmatmul.mubr.bf16.gmra.mrb[0].mxu0 %v7664
      %v7817 = vpop.f32.mrb[0].mxu0
      %v7818 = vadd.f32 0.0, %v7817
      %v7819 = vpop.f32.mrb[0].mxu0
      %v7820 = vpop.f32.mrb[0].mxu0
      %v7821 = vadd.f32 0.0, %v7820
      %v7822 = vpop.f32.mrb[0].mxu0
      %7823 = vmatprep.mubr.bf16.mxu0 0
      %7824 = vmatmul.mubr.bf16.gmra.mrb[0].mxu0 %v7666
      %v7825 = vpop.f32.mrb[0].mxu0
      %v7826 = vadd.f32 0.0, %v7825
      %v7827 = vpop.f32.mrb[0].mxu0
      %v7828 = vpop.f32.mrb[0].mxu0
      %v7829 = vadd.f32 0.0, %v7828
      %v7830 = vpop.f32.mrb[0].mxu0
      %7831 = vmatprep.mubr.bf16.mxu0 0
      %7832 = vmatmul.mubr.bf16.gmra.mrb[0].mxu0 %v7668
      %v7833 = vpop.f32.mrb[0].mxu0
      %v7834 = vadd.f32 0.0, %v7833
      %v7835 = vpop.f32.mrb[0].mxu0
      %v7836 = vpop.f32.mrb[0].mxu0
      %v7837 = vadd.f32 0.0, %v7836
      %v7838 = vpop.f32.mrb[0].mxu0
      %7839 = vmatprep.mubr.bf16.mxu0 0
      %7840 = vmatmul.mubr.bf16.gmra.mrb[0].mxu0 %v7670
      %v7841 = vpop.f32.mrb[0].mxu0
      %v7842 = vadd.f32 0.0, %v7841
      %v7843 = vpop.f32.mrb[0].mxu0
      %v7844 = vpop.f32.mrb[0].mxu0
      %v7845 = vadd.f32 0.0, %v7844
      %v7846 = vpop.f32.mrb[0].mxu0
      %7847 = vmatprep.mubr.bf16.mxu0 0
      %7848 = vmatmul.mubr.bf16.gmra.mrb[0].mxu0 %v7672
      %v7849 = vpop.f32.mrb[0].mxu0
      %v7850 = vadd.f32 0.0, %v7849
      %v7851 = vpop.f32.mrb[0].mxu0
      %v7852 = vpop.f32.mrb[0].mxu0
      %v7853 = vadd.f32 0.0, %v7852
      %v7854 = vpop.f32.mrb[0].mxu0
      %7855 = vmatprep.mubr.bf16.mxu0 0
      %7856 = vmatmul.mubr.bf16.gmra.mrb[0].mxu0 %v7674
      %v7857 = vpop.f32.mrb[0].mxu0
      %v7858 = vadd.f32 0.0, %v7857
      %v7859 = vpop.f32.mrb[0].mxu0
      %v7860 = vpop.f32.mrb[0].mxu0
      %v7861 = vadd.f32 0.0, %v7860
      %v7862 = vpop.f32.mrb[0].mxu0
      %7863 = vmatprep.mubr.bf16.mxu0 0
      %7864 = vmatmul.mubr.bf16.gmra.mrb[0].mxu0 %v7676
      %v7865 = vpop.f32.mrb[0].mxu0
      %v7866 = vadd.f32 0.0, %v7865
      %v7867 = vpop.f32.mrb[0].mxu0
      %v7868 = vpop.f32.mrb[0].mxu0
      %v7869 = vadd.f32 0.0, %v7868
      %v7870 = vpop.f32.mrb[0].mxu0
      %7871 = vmatprep.mubr.bf16.mxu0 0
      %7872 = vmatmul.mubr.bf16.gmra.mrb[0].mxu0 %v7678
      %v7873 = vpop.f32.mrb[0].mxu0
      %v7874 = vadd.f32 0.0, %v7873
      %v7875 = vpop.f32.mrb[0].mxu0
      %v7876 = vpop.f32.mrb[0].mxu0
      %v7877 = vadd.f32 0.0, %v7876
      %v7878 = vpop.f32.mrb[0].mxu0
      %7879 = vmatprep.mubr.bf16.mxu0 0
      %7880 = vmatmul.mubr.bf16.gmra.mrb[0].mxu0 %v7680
      %v7881 = vpop.f32.mrb[0].mxu0
      %v7882 = vadd.f32 0.0, %v7881
      %v7883 = vpop.f32.mrb[0].mxu0
      %v7884 = vpop.f32.mrb[0].mxu0
      %v7885 = vadd.f32 0.0, %v7884
      %v7886 = vpop.f32.mrb[0].mxu0
      %7887 = vmatprep.mubr.bf16.mxu0 0
      %7888 = vmatmul.mubr.bf16.gmra.mrb[0].mxu0 %v7682
      %v7889 = vpop.f32.mrb[0].mxu0
      %v7890 = vadd.f32 0.0, %v7889
      %v7891 = vpop.f32.mrb[0].mxu0
      %v7892 = vpop.f32.mrb[0].mxu0
      %v7893 = vadd.f32 0.0, %v7892
      %v7894 = vpop.f32.mrb[0].mxu0
      %7895 = vmatprep.mubr.bf16.mxu0 0
      %7896 = vmatmul.mubr.bf16.gmra.mrb[0].mxu0 %v7684
      %v7897 = vpop.f32.mrb[0].mxu0
      %v7898 = vadd.f32 0.0, %v7897
      %v7899 = vpop.f32.mrb[0].mxu0
      %v7900 = vpop.f32.mrb[0].mxu0
      %v7901 = vadd.f32 0.0, %v7900
      %v7902 = vpop.f32.mrb[0].mxu0
      %7903 = vmatprep.mubr.bf16.mxu0 0
      %7904 = vmatmul.mubr.bf16.gmra.mrb[0].mxu0 %v7686
      %v7905 = vpop.f32.mrb[0].mxu0
      %v7906 = vadd.f32 0.0, %v7905
      %v7907 = vpop.f32.mrb[0].mxu0
      %v7908 = vpop.f32.mrb[0].mxu0
      %v7909 = vadd.f32 0.0, %v7908
      %v7910 = vpop.f32.mrb[0].mxu0
      %7911 = vmatprep.mubr.bf16.mxu0 0
      %7912 = vmatmul.mubr.bf16.gmra.mrb[0].mxu0 %v7688
      %v7913 = vpop.f32.mrb[0].mxu0
      %v7914 = vadd.f32 0.0, %v7913
      %v7915 = vpop.f32.mrb[0].mxu0
      %v7916 = vpop.f32.mrb[0].mxu0
      %v7917 = vadd.f32 0.0, %v7916
      %v7918 = vpop.f32.mrb[0].mxu0
      %7919 = vmatprep.mubr.bf16.mxu0 0
      %7920 = vmatmul.mubr.bf16.gmra.mrb[0].mxu0 %v7690
      %v7921 = vpop.f32.mrb[0].mxu0
      %v7922 = vadd.f32 0.0, %v7921
      %v7923 = vpop.f32.mrb[0].mxu0
      %v7924 = vpop.f32.mrb[0].mxu0
      %v7925 = vadd.f32 0.0, %v7924
      %v7926 = vpop.f32.mrb[0].mxu0
      %7927 = vmatprep.mubr.bf16.mxu0 0
      %7928 = vmatmul.mubr.bf16.gmra.mrb[0].mxu0 %v7692
      %v7929 = vpop.f32.mrb[0].mxu0
      %v7930 = vadd.f32 0.0, %v7929
      %v7931 = vpop.f32.mrb[0].mxu0
      %v7932 = vpop.f32.mrb[0].mxu0
      %v7933 = vadd.f32 0.0, %v7932
      %v7934 = vpop.f32.mrb[0].mxu0
      %7935 = vdwg.mxu0
      %v7936 = vadd.f32 %v7582, %v7794
      %v7937 = vadd.f32 %v7583, %v7797
      %v7938 = vadd.f32 %v7584, %v7802
      %v7939 = vadd.f32 %v7585, %v7805
      %v7940 = vadd.f32 %v7586, %v7810
      %v7941 = vadd.f32 %v7587, %v7813
      %v7942 = vadd.f32 %v7588, %v7818
      %v7943 = vadd.f32 %v7589, %v7821
      %v7944 = vadd.f32 %v7590, %v7826
      %v7945 = vadd.f32 %v7591, %v7829
      %v7946 = vadd.f32 %v7592, %v7834
      %v7947 = vadd.f32 %v7593, %v7837
      %v7948 = vadd.f32 %v7594, %v7842
      %v7949 = vadd.f32 %v7595, %v7845
      %v7950 = vadd.f32 %v7596, %v7850
      %v7951 = vadd.f32 %v7597, %v7853
      %v7952 = vadd.f32 %v7598, %v7858
      %v7953 = vadd.f32 %v7599, %v7861
      %v7954 = vadd.f32 %v7600, %v7866
      %v7955 = vadd.f32 %v7601, %v7869
      %v7956 = vadd.f32 %v7602, %v7874
      %v7957 = vadd.f32 %v7603, %v7877
      %v7958 = vadd.f32 %v7604, %v7882
      %v7959 = vadd.f32 %v7605, %v7885
      %v7960 = vadd.f32 %v7606, %v7890
      %v7961 = vadd.f32 %v7607, %v7893
      %v7962 = vadd.f32 %v7608, %v7898
      %v7963 = vadd.f32 %v7609, %v7901
      %v7964 = vadd.f32 %v7610, %v7906
      %v7965 = vadd.f32 %v7611, %v7909
      %v7966 = vadd.f32 %v7612, %v7914
      %v7967 = vadd.f32 %v7613, %v7917
      %v7968 = vadd.f32 %v7614, %v7922
      %v7969 = vadd.f32 %v7615, %v7925
      %v7970 = vadd.f32 %v7616, %v7930
      %v7971 = vadd.f32 %v7617, %v7933
      %v7972 = vld [vmem:[#allocation2 + $0xa0] sm:$0x3f]
      %s7973 = scalar_lea.vmem %s2, 512
      %v7974 = vld [vmem:[%s7973] sm:$0xf]
      %v7975 = vld [vmem:[%s7973 + $0x4] sm:$0xf]
      %v7976 = vld [vmem:[%s7973 + $0x8] sm:$0xf]
      %v7977 = vld [vmem:[%s7973 + $0xc] sm:$0xf]
      %v7978 = vld [vmem:[%s7973 + $0x10] sm:$0xf]
      %v7979 = vld [vmem:[%s7973 + $0x14] sm:$0xf]
      %v7980 = vld [vmem:[%s7973 + $0x18] sm:$0xf]
      %v7981 = vld [vmem:[%s7973 + $0x1c] sm:$0xf]
      %v7982 = vld [vmem:[%s7973 + $0x20] sm:$0xf]
      %v7983 = vld [vmem:[%s7973 + $0x24] sm:$0xf]
      %v7984 = vld [vmem:[%s7973 + $0x28] sm:$0xf]
      %v7985 = vld [vmem:[%s7973 + $0x2c] sm:$0xf]
      %v7986 = vld [vmem:[%s7973 + $0x30] sm:$0xf]
      %v7987 = vld [vmem:[%s7973 + $0x34] sm:$0xf]
      %v7988 = vld [vmem:[%s7973 + $0x38] sm:$0xf]
      %v7989 = vld [vmem:[%s7973 + $0x3c] sm:$0xf]
      %vm7990 = vsmask.f32 2304
      %v7992 = vshrl.u32 %v7618, 16
      %v7994 = vrot.slane %v7992, 5
      %v7995 = vshll.u32 %v7618, 16
      %v7997 = vrot.slane %v7995, 6
      %v7998 = vor.u32 %v7994, %v7997
      %v7999 = vrot.slane %v7178, 5
      %v8000 = vrot.slane %v7181, 6
      %v8001 = vor.u32 %v7999, %v8000
      %v8002 = vsel %vm7990, %v7998, %v8001
      %v8003 = vrot.slane %v7187, 5
      %v8004 = vrot.slane %v7190, 6
      %v8005 = vor.u32 %v8003, %v8004
      %v8006 = vsel %vm7990, %v8001, %v8005
      %v8007 = vrot.slane %v7196, 5
      %v8008 = vrot.slane %v7199, 6
      %v8009 = vor.u32 %v8007, %v8008
      %v8010 = vsel %vm7990, %v8005, %v8009
      %v8011 = vrot.slane %v7205, 5
      %v8012 = vrot.slane %v7208, 6
      %v8013 = vor.u32 %v8011, %v8012
      %v8014 = vsel %vm7990, %v8009, %v8013
      %v8015 = vrot.slane %v7214, 5
      %v8016 = vrot.slane %v7217, 6
      %v8017 = vor.u32 %v8015, %v8016
      %v8018 = vsel %vm7990, %v8013, %v8017
      %v8019 = vrot.slane %v7223, 5
      %v8020 = vrot.slane %v7226, 6
      %v8021 = vor.u32 %v8019, %v8020
      %v8022 = vsel %vm7990, %v8017, %v8021
      %v8023 = vrot.slane %v7232, 5
      %v8024 = vrot.slane %v7235, 6
      %v8025 = vor.u32 %v8023, %v8024
      %v8026 = vsel %vm7990, %v8021, %v8025
      %v8027 = vrot.slane %v7241, 5
      %v8028 = vrot.slane %v7244, 6
      %v8029 = vor.u32 %v8027, %v8028
      %v8030 = vsel %vm7990, %v8025, %v8029
      %v8031 = vrot.slane %v7250, 5
      %v8032 = vrot.slane %v7253, 6
      %v8033 = vor.u32 %v8031, %v8032
      %v8034 = vsel %vm7990, %v8029, %v8033
      %v8035 = vrot.slane %v7259, 5
      %v8036 = vrot.slane %v7262, 6
      %v8037 = vor.u32 %v8035, %v8036
      %v8038 = vsel %vm7990, %v8033, %v8037
      %v8039 = vrot.slane %v7268, 5
      %v8040 = vrot.slane %v7271, 6
      %v8041 = vor.u32 %v8039, %v8040
      %v8042 = vsel %vm7990, %v8037, %v8041
      %v8043 = vrot.slane %v7277, 5
      %v8044 = vrot.slane %v7280, 6
      %v8045 = vor.u32 %v8043, %v8044
      %v8046 = vsel %vm7990, %v8041, %v8045
      %v8047 = vrot.slane %v7286, 5
      %v8048 = vrot.slane %v7289, 6
      %v8049 = vor.u32 %v8047, %v8048
      %v8050 = vsel %vm7990, %v8045, %v8049
      %v8051 = vrot.slane %v7295, 5
      %v8052 = vrot.slane %v7298, 6
      %v8053 = vor.u32 %v8051, %v8052
      %v8054 = vsel %vm7990, %v8049, %v8053
      %v8055 = vrot.slane %v7304, 5
      %v8056 = vrot.slane %v7307, 6
      %v8057 = vor.u32 %v8055, %v8056
      %v8058 = vsel %vm7990, %v8053, %v8057
      %v8059 = vrot.slane %v7313, 5
      %v8060 = vrot.slane %v7316, 6
      %v8061 = vor.u32 %v8059, %v8060
      %v8062 = vsel %vm7990, %v8057, %v8061
      %v8063 = vrot.slane %v7322, 5
      %v8064 = vrot.slane %v7325, 6
      %v8065 = vor.u32 %v8063, %v8064
      %v8066 = vsel %vm7990, %v8061, %v8065
      %v8068 = vshrl.u32 %v7972, 16
      %v8070 = vrot.slane %v8068, 5
      %v8071 = vshll.u32 %v7972, 16
      %v8073 = vrot.slane %v8071, 6
      %v8074 = vor.u32 %v8070, %v8073
      %v8075 = vsel %vm7990, %v8065, %v8074
      %v8110 = vunpack.c.l.b16 %v7974
      %v8111 = vunpack.c.l.b16 %v7975
      %v8112 = vunpack.c.l.b16 %v7976
      %v8113 = vunpack.c.l.b16 %v7977
      %v8114 = vunpack.c.l.b16 %v7978
      %v8115 = vunpack.c.l.b16 %v7979
      %v8116 = vunpack.c.l.b16 %v7980
      %v8117 = vunpack.c.l.b16 %v7981
      %v8118 = vunpack.c.l.b16 %v7982
      %v8119 = vunpack.c.l.b16 %v7983
      %v8120 = vunpack.c.l.b16 %v7984
      %v8121 = vunpack.c.l.b16 %v7985
      %v8122 = vunpack.c.l.b16 %v7986
      %v8123 = vunpack.c.l.b16 %v7987
      %v8124 = vunpack.c.l.b16 %v7988
      %v8125 = vunpack.c.l.b16 %v7989
      %v8126 = vpack.c.b16 %v8111, %v8110
      %v8127 = vpack.c.b16 %v8113, %v8112
      %v8128 = vpack.c.b16 %v8115, %v8114
      %v8129 = vpack.c.b16 %v8117, %v8116
      %v8130 = vpack.c.b16 %v8119, %v8118
      %v8131 = vpack.c.b16 %v8121, %v8120
      %v8132 = vpack.c.b16 %v8123, %v8122
      %v8133 = vpack.c.b16 %v8125, %v8124
      %8142 = vmatprep.subr.bf16.mxu0 0
      %8143 = vmatpush1.bf16.msra.mxu0 %v8126
      %8144 = vmatprep.subr.bf16.mxu0 0
      %8145 = vmatpush1.bf16.msra.mxu0 %v8127
      %8146 = vmatprep.subr.bf16.mxu0 0
      %8147 = vmatpush1.bf16.msra.mxu0 %v8128
      %8148 = vmatprep.subr.bf16.mxu0 0
      %8149 = vmatpush1.bf16.msra.mxu0 %v8129
      %8150 = vmatprep.subr.bf16.mxu0 0
      %8151 = vmatpush1.bf16.msra.mxu0 %v8130
      %8152 = vmatprep.subr.bf16.mxu0 0
      %8153 = vmatpush1.bf16.msra.mxu0 %v8131
      %8154 = vmatprep.subr.bf16.mxu0 0
      %8155 = vmatpush1.bf16.msra.mxu0 %v8132
      %8156 = vmatprep.subr.bf16.mxu0 0
      %8157 = vmatpush1.bf16.msra.mxu0 %v8133
      %8158 = vmatprep.subr.bf16.mxu0 0
      %8159 = vmatpush1.bf16.msra.mxu0 0
      %8160 = vmatprep.subr.bf16.mxu0 0
      %8161 = vmatpush1.bf16.msra.mxu0 0
      %8162 = vmatprep.subr.bf16.mxu0 0
      %8163 = vmatpush1.bf16.msra.mxu0 0
      %8164 = vmatprep.subr.bf16.mxu0 0
      %8165 = vmatpush1.bf16.msra.mxu0 0
      %8166 = vmatprep.subr.bf16.mxu0 0
      %8167 = vmatpush1.bf16.msra.mxu0 0
      %8168 = vmatprep.subr.bf16.mxu0 0
      %8169 = vmatpush1.bf16.msra.mxu0 0
      %8170 = vmatprep.subr.bf16.mxu0 0
      %8171 = vmatpush1.bf16.msra.mxu0 0
      %8172 = vmatprep.subr.bf16.mxu0 0
      %8173 = vmatpush1.bf16.msra.mxu0 0
      %8174 = vmatprep.mubr.bf16.mxu0 0
      %8175 = vmatmul.mubr.bf16.gmra.mrb[0].mxu0 %v8002
      %v8176 = vpop.f32.mrb[0].mxu0
      %v8177 = vadd.f32 0.0, %v8176
      %v8178 = vpop.f32.mrb[0].mxu0
      %v8179 = vpop.f32.mrb[0].mxu0
      %v8180 = vadd.f32 0.0, %v8179
      %v8181 = vpop.f32.mrb[0].mxu0
      %8182 = vmatprep.mubr.bf16.mxu0 0
      %8183 = vmatmul.mubr.bf16.gmra.mrb[0].mxu0 %v8006
      %v8184 = vpop.f32.mrb[0].mxu0
      %v8185 = vadd.f32 0.0, %v8184
      %v8186 = vpop.f32.mrb[0].mxu0
      %v8187 = vpop.f32.mrb[0].mxu0
      %v8188 = vadd.f32 0.0, %v8187
      %v8189 = vpop.f32.mrb[0].mxu0
      %8190 = vmatprep.mubr.bf16.mxu0 0
      %8191 = vmatmul.mubr.bf16.gmra.mrb[0].mxu0 %v8010
      %v8192 = vpop.f32.mrb[0].mxu0
      %v8193 = vadd.f32 0.0, %v8192
      %v8194 = vpop.f32.mrb[0].mxu0
      %v8195 = vpop.f32.mrb[0].mxu0
      %v8196 = vadd.f32 0.0, %v8195
      %v8197 = vpop.f32.mrb[0].mxu0
      %8198 = vmatprep.mubr.bf16.mxu0 0
      %8199 = vmatmul.mubr.bf16.gmra.mrb[0].mxu0 %v8014
      %v8200 = vpop.f32.mrb[0].mxu0
      %v8201 = vadd.f32 0.0, %v8200
      %v8202 = vpop.f32.mrb[0].mxu0
      %v8203 = vpop.f32.mrb[0].mxu0
      %v8204 = vadd.f32 0.0, %v8203
      %v8205 = vpop.f32.mrb[0].mxu0
      %8206 = vmatprep.mubr.bf16.mxu0 0
      %8207 = vmatmul.mubr.bf16.gmra.mrb[0].mxu0 %v8018
      %v8208 = vpop.f32.mrb[0].mxu0
      %v8209 = vadd.f32 0.0, %v8208
      %v8210 = vpop.f32.mrb[0].mxu0
      %v8211 = vpop.f32.mrb[0].mxu0
      %v8212 = vadd.f32 0.0, %v8211
      %v8213 = vpop.f32.mrb[0].mxu0
      %8214 = vmatprep.mubr.bf16.mxu0 0
      %8215 = vmatmul.mubr.bf16.gmra.mrb[0].mxu0 %v8022
      %v8216 = vpop.f32.mrb[0].mxu0
      %v8217 = vadd.f32 0.0, %v8216
      %v8218 = vpop.f32.mrb[0].mxu0
      %v8219 = vpop.f32.mrb[0].mxu0
      %v8220 = vadd.f32 0.0, %v8219
      %v8221 = vpop.f32.mrb[0].mxu0
      %8222 = vmatprep.mubr.bf16.mxu0 0
      %8223 = vmatmul.mubr.bf16.gmra.mrb[0].mxu0 %v8026
      %v8224 = vpop.f32.mrb[0].mxu0
      %v8225 = vadd.f32 0.0, %v8224
      %v8226 = vpop.f32.mrb[0].mxu0
      %v8227 = vpop.f32.mrb[0].mxu0
      %v8228 = vadd.f32 0.0, %v8227
      %v8229 = vpop.f32.mrb[0].mxu0
      %8230 = vmatprep.mubr.bf16.mxu0 0
      %8231 = vmatmul.mubr.bf16.gmra.mrb[0].mxu0 %v8030
      %v8232 = vpop.f32.mrb[0].mxu0
      %v8233 = vadd.f32 0.0, %v8232
      %v8234 = vpop.f32.mrb[0].mxu0
      %v8235 = vpop.f32.mrb[0].mxu0
      %v8236 = vadd.f32 0.0, %v8235
      %v8237 = vpop.f32.mrb[0].mxu0
      %8238 = vmatprep.mubr.bf16.mxu0 0
      %8239 = vmatmul.mubr.bf16.gmra.mrb[0].mxu0 %v8034
      %v8240 = vpop.f32.mrb[0].mxu0
      %v8241 = vadd.f32 0.0, %v8240
      %v8242 = vpop.f32.mrb[0].mxu0
      %v8243 = vpop.f32.mrb[0].mxu0
      %v8244 = vadd.f32 0.0, %v8243
      %v8245 = vpop.f32.mrb[0].mxu0
      %8246 = vmatprep.mubr.bf16.mxu0 0
      %8247 = vmatmul.mubr.bf16.gmra.mrb[0].mxu0 %v8038
      %v8248 = vpop.f32.mrb[0].mxu0
      %v8249 = vadd.f32 0.0, %v8248
      %v8250 = vpop.f32.mrb[0].mxu0
      %v8251 = vpop.f32.mrb[0].mxu0
      %v8252 = vadd.f32 0.0, %v8251
      %v8253 = vpop.f32.mrb[0].mxu0
      %8254 = vmatprep.mubr.bf16.mxu0 0
      %8255 = vmatmul.mubr.bf16.gmra.mrb[0].mxu0 %v8042
      %v8256 = vpop.f32.mrb[0].mxu0
      %v8257 = vadd.f32 0.0, %v8256
      %v8258 = vpop.f32.mrb[0].mxu0
      %v8259 = vpop.f32.mrb[0].mxu0
      %v8260 = vadd.f32 0.0, %v8259
      %v8261 = vpop.f32.mrb[0].mxu0
      %8262 = vmatprep.mubr.bf16.mxu0 0
      %8263 = vmatmul.mubr.bf16.gmra.mrb[0].mxu0 %v8046
      %v8264 = vpop.f32.mrb[0].mxu0
      %v8265 = vadd.f32 0.0, %v8264
      %v8266 = vpop.f32.mrb[0].mxu0
      %v8267 = vpop.f32.mrb[0].mxu0
      %v8268 = vadd.f32 0.0, %v8267
      %v8269 = vpop.f32.mrb[0].mxu0
      %8270 = vmatprep.mubr.bf16.mxu0 0
      %8271 = vmatmul.mubr.bf16.gmra.mrb[0].mxu0 %v8050
      %v8272 = vpop.f32.mrb[0].mxu0
      %v8273 = vadd.f32 0.0, %v8272
      %v8274 = vpop.f32.mrb[0].mxu0
      %v8275 = vpop.f32.mrb[0].mxu0
      %v8276 = vadd.f32 0.0, %v8275
      %v8277 = vpop.f32.mrb[0].mxu0
      %8278 = vmatprep.mubr.bf16.mxu0 0
      %8279 = vmatmul.mubr.bf16.gmra.mrb[0].mxu0 %v8054
      %v8280 = vpop.f32.mrb[0].mxu0
      %v8281 = vadd.f32 0.0, %v8280
      %v8282 = vpop.f32.mrb[0].mxu0
      %v8283 = vpop.f32.mrb[0].mxu0
      %v8284 = vadd.f32 0.0, %v8283
      %v8285 = vpop.f32.mrb[0].mxu0
      %8286 = vmatprep.mubr.bf16.mxu0 0
      %8287 = vmatmul.mubr.bf16.gmra.mrb[0].mxu0 %v8058
      %v8288 = vpop.f32.mrb[0].mxu0
      %v8289 = vadd.f32 0.0, %v8288
      %v8290 = vpop.f32.mrb[0].mxu0
      %v8291 = vpop.f32.mrb[0].mxu0
      %v8292 = vadd.f32 0.0, %v8291
      %v8293 = vpop.f32.mrb[0].mxu0
      %8294 = vmatprep.mubr.bf16.mxu0 0
      %8295 = vmatmul.mubr.bf16.gmra.mrb[0].mxu0 %v8062
      %v8296 = vpop.f32.mrb[0].mxu0
      %v8297 = vadd.f32 0.0, %v8296
      %v8298 = vpop.f32.mrb[0].mxu0
      %v8299 = vpop.f32.mrb[0].mxu0
      %v8300 = vadd.f32 0.0, %v8299
      %v8301 = vpop.f32.mrb[0].mxu0
      %8302 = vmatprep.mubr.bf16.mxu0 0
      %8303 = vmatmul.mubr.bf16.gmra.mrb[0].mxu0 %v8066
      %v8304 = vpop.f32.mrb[0].mxu0
      %v8305 = vadd.f32 0.0, %v8304
      %v8306 = vpop.f32.mrb[0].mxu0
      %v8307 = vpop.f32.mrb[0].mxu0
      %v8308 = vadd.f32 0.0, %v8307
      %v8309 = vpop.f32.mrb[0].mxu0
      %8310 = vmatprep.mubr.bf16.mxu0 0
      %8311 = vmatmul.mubr.bf16.gmra.mrb[0].mxu0 %v8075
      %v8312 = vpop.f32.mrb[0].mxu0
      %v8313 = vadd.f32 0.0, %v8312
      %v8314 = vpop.f32.mrb[0].mxu0
      %v8315 = vpop.f32.mrb[0].mxu0
      %v8316 = vadd.f32 0.0, %v8315
      %v8317 = vpop.f32.mrb[0].mxu0
      %8318 = vdwg.mxu0
      %v8319 = vadd.f32 %v7936, %v8177
      %v8320 = vadd.f32 %v7937, %v8180
      %v8321 = vadd.f32 %v7938, %v8185
      %v8322 = vadd.f32 %v7939, %v8188
      %v8323 = vadd.f32 %v7940, %v8193
      %v8324 = vadd.f32 %v7941, %v8196
      %v8325 = vadd.f32 %v7942, %v8201
      %v8326 = vadd.f32 %v7943, %v8204
      %v8327 = vadd.f32 %v7944, %v8209
      %v8328 = vadd.f32 %v7945, %v8212
      %v8329 = vadd.f32 %v7946, %v8217
      %v8330 = vadd.f32 %v7947, %v8220
      %v8331 = vadd.f32 %v7948, %v8225
      %v8332 = vadd.f32 %v7949, %v8228
      %v8333 = vadd.f32 %v7950, %v8233
      %v8334 = vadd.f32 %v7951, %v8236
      %v8335 = vadd.f32 %v7952, %v8241
      %v8336 = vadd.f32 %v7953, %v8244
      %v8337 = vadd.f32 %v7954, %v8249
      %v8338 = vadd.f32 %v7955, %v8252
      %v8339 = vadd.f32 %v7956, %v8257
      %v8340 = vadd.f32 %v7957, %v8260
      %v8341 = vadd.f32 %v7958, %v8265
      %v8342 = vadd.f32 %v7959, %v8268
      %v8343 = vadd.f32 %v7960, %v8273
      %v8344 = vadd.f32 %v7961, %v8276
      %v8345 = vadd.f32 %v7962, %v8281
      %v8346 = vadd.f32 %v7963, %v8284
      %v8347 = vadd.f32 %v7964, %v8289
      %v8348 = vadd.f32 %v7965, %v8292
      %v8349 = vadd.f32 %v7966, %v8297
      %v8350 = vadd.f32 %v7967, %v8300
      %v8351 = vadd.f32 %v7968, %v8305
      %v8352 = vadd.f32 %v7969, %v8308
      %v8353 = vadd.f32 %v7970, %v8313
      %v8354 = vadd.f32 %v7971, %v8316
      %v8355 = vld [vmem:[%s4] sm:$0x1]
      %v8357 = vlaneseq
      %v8358 = vshrl.u32 %v8357, 7
      %v8359 = vsub.s32 0, %v8358
      %v8360 = vrot.slane %v8355, %v8359
      %v8362 = vadd.f32 %v8319, %v8360
      %v8363 = vadd.f32 %v8320, %v8360
      %v8364 = vadd.f32 %v8321, %v8360
      %v8365 = vadd.f32 %v8322, %v8360
      %v8366 = vadd.f32 %v8323, %v8360
      %v8367 = vadd.f32 %v8324, %v8360
      %v8368 = vadd.f32 %v8325, %v8360
      %v8369 = vadd.f32 %v8326, %v8360
      %v8370 = vadd.f32 %v8327, %v8360
      %v8371 = vadd.f32 %v8328, %v8360
      %v8372 = vadd.f32 %v8329, %v8360
      %v8373 = vadd.f32 %v8330, %v8360
      %v8374 = vadd.f32 %v8331, %v8360
      %v8375 = vadd.f32 %v8332, %v8360
      %v8376 = vadd.f32 %v8333, %v8360
      %v8377 = vadd.f32 %v8334, %v8360
      %v8378 = vadd.f32 %v8335, %v8360
      %v8379 = vadd.f32 %v8336, %v8360
      %v8380 = vadd.f32 %v8337, %v8360
      %v8381 = vadd.f32 %v8338, %v8360
      %v8382 = vadd.f32 %v8339, %v8360
      %v8383 = vadd.f32 %v8340, %v8360
      %v8384 = vadd.f32 %v8341, %v8360
      %v8385 = vadd.f32 %v8342, %v8360
      %v8386 = vadd.f32 %v8343, %v8360
      %v8387 = vadd.f32 %v8344, %v8360
      %v8388 = vadd.f32 %v8345, %v8360
      %v8389 = vadd.f32 %v8346, %v8360
      %v8390 = vadd.f32 %v8347, %v8360
      %v8391 = vadd.f32 %v8348, %v8360
      %v8392 = vadd.f32 %v8349, %v8360
      %v8393 = vadd.f32 %v8350, %v8360
      %v8394 = vadd.f32 %v8351, %v8360
      %v8395 = vadd.f32 %v8352, %v8360
      %v8396 = vadd.f32 %v8353, %v8360
      %v8397 = vadd.f32 %v8354, %v8360
      %v8398 = vld [vmem:[%s246 + $0xc] sm:$0xf]
      %v8399 = vld [vmem:[%s246 + $0x10] sm:$0xf]
      %v8400 = vld [vmem:[%s246 + $0x14] sm:$0xf]
      %v8401 = vld [vmem:[%s246 + $0x18] sm:$0xf]
      %v8402 = vld [vmem:[%s246 + $0x1c] sm:$0xf]
      %v8403 = vld [vmem:[%s246 + $0x20] sm:$0xf]
      %v8404 = vld [vmem:[%s246 + $0x24] sm:$0xf]
      %v8405 = vld [vmem:[%s246 + $0x28] sm:$0xf]
      %v8406 = vld [vmem:[%s246 + $0x2c] sm:$0xf]
      %v8407 = vld [vmem:[%s246 + $0x30] sm:$0xf]
      %v8408 = vld [vmem:[%s246 + $0x34] sm:$0xf]
      %v8409 = vld [vmem:[%s246 + $0x38] sm:$0xf]
      %v8410 = vld [vmem:[%s246 + $0x3c] sm:$0xf]
      %v8411 = vld [vmem:[%s246 + $0x40] sm:$0xf]
      %v8412 = vld [vmem:[%s246 + $0x44] sm:$0xf]
      %v8413 = vld [vmem:[%s246 + $0x48] sm:$0xf]
      %v8414 = vld [vmem:[%s246 + $0x4c] sm:$0xf]
      %v8415 = vld [vmem:[%s246 + $0x50] sm:$0xf]
      %v8416 = vld [vmem:[%s246 + $0x54] sm:$0xf]
      %v8417 = vld [vmem:[%s246 + $0x58] sm:$0xf]
      %v8418 = vld [vmem:[%s246 + $0x5c] sm:$0xf]
      %v8419 = vld [vmem:[%s246 + $0x60] sm:$0xf]
      %v8420 = vld [vmem:[%s246 + $0x64] sm:$0xf]
      %v8421 = vld [vmem:[%s246 + $0x68] sm:$0xf]
      %v8422 = vld [vmem:[%s246 + $0x6c] sm:$0xf]
      %v8423 = vld [vmem:[%s246 + $0x70] sm:$0xf]
      %v8424 = vld [vmem:[%s246 + $0x74] sm:$0xf]
      %v8425 = vld [vmem:[%s246 + $0x78] sm:$0xf]
      %v8426 = vld [vmem:[%s246 + $0x7c] sm:$0xf]
      %v8427 = vld [vmem:[%s246 + $0x80] sm:$0xf]
      %v8428 = vld [vmem:[%s246 + $0x84] sm:$0xf]
      %v8429 = vld [vmem:[%s246 + $0x88] sm:$0xf]
      %v8430 = vld [vmem:[%s246 + $0x8c] sm:$0xf]
      %v8431 = vld [vmem:[%s246 + $0x90] sm:$0xf]
      %v8432 = vld [vmem:[%s246 + $0x94] sm:$0xf]
      %v8433 = vld [vmem:[%s246 + $0x98] sm:$0xf]
      %v8434 = vunpack.c.l.bf16 %v8398
      %v8435 = vunpack.c.l.bf16 %v8399
      %v8436 = vunpack.c.l.bf16 %v8400
      %v8437 = vunpack.c.l.bf16 %v8401
      %v8438 = vunpack.c.l.bf16 %v8402
      %v8439 = vunpack.c.l.bf16 %v8403
      %v8440 = vunpack.c.l.bf16 %v8404
      %v8441 = vunpack.c.l.bf16 %v8405
      %v8442 = vunpack.c.l.bf16 %v8406
      %v8443 = vunpack.c.l.bf16 %v8407
      %v8444 = vunpack.c.l.bf16 %v8408
      %v8445 = vunpack.c.l.bf16 %v8409
      %v8446 = vunpack.c.l.bf16 %v8410
      %v8447 = vunpack.c.l.bf16 %v8411
      %v8448 = vunpack.c.l.bf16 %v8412
      %v8449 = vunpack.c.l.bf16 %v8413
      %v8450 = vunpack.c.l.bf16 %v8414
      %v8451 = vunpack.c.l.bf16 %v8415
      %v8452 = vunpack.c.l.bf16 %v8416
      %v8453 = vunpack.c.l.bf16 %v8417
      %v8454 = vunpack.c.l.bf16 %v8418
      %v8455 = vunpack.c.l.bf16 %v8419
      %v8456 = vunpack.c.l.bf16 %v8420
      %v8457 = vunpack.c.l.bf16 %v8421
      %v8458 = vunpack.c.l.bf16 %v8422
      %v8459 = vunpack.c.l.bf16 %v8423
      %v8460 = vunpack.c.l.bf16 %v8424
      %v8461 = vunpack.c.l.bf16 %v8425
      %v8462 = vunpack.c.l.bf16 %v8426
      %v8463 = vunpack.c.l.bf16 %v8427
      %v8464 = vunpack.c.l.bf16 %v8428
      %v8465 = vunpack.c.l.bf16 %v8429
      %v8466 = vunpack.c.l.bf16 %v8430
      %v8467 = vunpack.c.l.bf16 %v8431
      %v8468 = vunpack.c.l.bf16 %v8432
      %v8469 = vunpack.c.l.bf16 %v8433
      %v8470 = vadd.f32 %v8362, %v8434
      %v8471 = vadd.f32 %v8363, %v8435
      %v8472 = vadd.f32 %v8364, %v8436
      %v8473 = vadd.f32 %v8365, %v8437
      %v8474 = vadd.f32 %v8366, %v8438
      %v8475 = vadd.f32 %v8367, %v8439
      %v8476 = vadd.f32 %v8368, %v8440
      %v8477 = vadd.f32 %v8369, %v8441
      %v8478 = vadd.f32 %v8370, %v8442
      %v8479 = vadd.f32 %v8371, %v8443
      %v8480 = vadd.f32 %v8372, %v8444
      %v8481 = vadd.f32 %v8373, %v8445
      %v8482 = vadd.f32 %v8374, %v8446
      %v8483 = vadd.f32 %v8375, %v8447
      %v8484 = vadd.f32 %v8376, %v8448
      %v8485 = vadd.f32 %v8377, %v8449
      %v8486 = vadd.f32 %v8378, %v8450
      %v8487 = vadd.f32 %v8379, %v8451
      %v8488 = vadd.f32 %v8380, %v8452
      %v8489 = vadd.f32 %v8381, %v8453
      %v8490 = vadd.f32 %v8382, %v8454
      %v8491 = vadd.f32 %v8383, %v8455
      %v8492 = vadd.f32 %v8384, %v8456
      %v8493 = vadd.f32 %v8385, %v8457
      %v8494 = vadd.f32 %v8386, %v8458
      %v8495 = vadd.f32 %v8387, %v8459
      %v8496 = vadd.f32 %v8388, %v8460
      %v8497 = vadd.f32 %v8389, %v8461
      %v8498 = vadd.f32 %v8390, %v8462
      %v8499 = vadd.f32 %v8391, %v8463
      %v8500 = vadd.f32 %v8392, %v8464
      %v8501 = vadd.f32 %v8393, %v8465
      %v8502 = vadd.f32 %v8394, %v8466
      %v8503 = vadd.f32 %v8395, %v8467
      %v8504 = vadd.f32 %v8396, %v8468
      %v8505 = vadd.f32 %v8397, %v8469
      %v8506 = vmul.f32 %v8470, 0.2
      %v8507 = vmul.f32 %v8471, 0.2
      %v8508 = vmul.f32 %v8472, 0.2
      %v8509 = vmul.f32 %v8473, 0.2
      %v8510 = vmul.f32 %v8474, 0.2
      %v8511 = vmul.f32 %v8475, 0.2
      %v8512 = vmul.f32 %v8476, 0.2
      %v8513 = vmul.f32 %v8477, 0.2
      %v8514 = vmul.f32 %v8478, 0.2
      %v8515 = vmul.f32 %v8479, 0.2
      %v8516 = vmul.f32 %v8480, 0.2
      %v8517 = vmul.f32 %v8481, 0.2
      %v8518 = vmul.f32 %v8482, 0.2
      %v8519 = vmul.f32 %v8483, 0.2
      %v8520 = vmul.f32 %v8484, 0.2
      %v8521 = vmul.f32 %v8485, 0.2
      %v8522 = vmul.f32 %v8486, 0.2
      %v8523 = vmul.f32 %v8487, 0.2
      %v8524 = vmul.f32 %v8488, 0.2
      %v8525 = vmul.f32 %v8489, 0.2
      %v8526 = vmul.f32 %v8490, 0.2
      %v8527 = vmul.f32 %v8491, 0.2
      %v8528 = vmul.f32 %v8492, 0.2
      %v8529 = vmul.f32 %v8493, 0.2
      %v8530 = vmul.f32 %v8494, 0.2
      %v8531 = vmul.f32 %v8495, 0.2
      %v8532 = vmul.f32 %v8496, 0.2
      %v8533 = vmul.f32 %v8497, 0.2
      %v8534 = vmul.f32 %v8498, 0.2
      %v8535 = vmul.f32 %v8499, 0.2
      %v8536 = vmul.f32 %v8500, 0.2
      %v8537 = vmul.f32 %v8501, 0.2
      %v8538 = vmul.f32 %v8502, 0.2
      %v8539 = vmul.f32 %v8503, 0.2
      %v8540 = vmul.f32 %v8504, 0.2
      %v8541 = vmul.f32 %v8505, 0.2
      %v8542 = vmax.f32 %v8470, %v8506
      %v8543 = vmax.f32 %v8471, %v8507
      %v8544 = vmax.f32 %v8472, %v8508
      %v8545 = vmax.f32 %v8473, %v8509
      %v8546 = vmax.f32 %v8474, %v8510
      %v8547 = vmax.f32 %v8475, %v8511
      %v8548 = vmax.f32 %v8476, %v8512
      %v8549 = vmax.f32 %v8477, %v8513
      %v8550 = vmax.f32 %v8478, %v8514
      %v8551 = vmax.f32 %v8479, %v8515
      %v8552 = vmax.f32 %v8480, %v8516
      %v8553 = vmax.f32 %v8481, %v8517
      %v8554 = vmax.f32 %v8482, %v8518
      %v8555 = vmax.f32 %v8483, %v8519
      %v8556 = vmax.f32 %v8484, %v8520
      %v8557 = vmax.f32 %v8485, %v8521
      %v8558 = vmax.f32 %v8486, %v8522
      %v8559 = vmax.f32 %v8487, %v8523
      %v8560 = vmax.f32 %v8488, %v8524
      %v8561 = vmax.f32 %v8489, %v8525
      %v8562 = vmax.f32 %v8490, %v8526
      %v8563 = vmax.f32 %v8491, %v8527
      %v8564 = vmax.f32 %v8492, %v8528
      %v8565 = vmax.f32 %v8493, %v8529
      %v8566 = vmax.f32 %v8494, %v8530
      %v8567 = vmax.f32 %v8495, %v8531
      %v8568 = vmax.f32 %v8496, %v8532
      %v8569 = vmax.f32 %v8497, %v8533
      %v8570 = vmax.f32 %v8498, %v8534
      %v8571 = vmax.f32 %v8499, %v8535
      %v8572 = vmax.f32 %v8500, %v8536
      %v8573 = vmax.f32 %v8501, %v8537
      %v8574 = vmax.f32 %v8502, %v8538
      %v8575 = vmax.f32 %v8503, %v8539
      %v8576 = vmax.f32 %v8504, %v8540
      %v8577 = vmax.f32 %v8505, %v8541
      %v8578 = vpack.c.bf16 %v8543, %v8542
      %v8579 = vpack.c.bf16 %v8545, %v8544
      %v8580 = vpack.c.bf16 %v8547, %v8546
      %v8581 = vpack.c.bf16 %v8549, %v8548
      %v8582 = vpack.c.bf16 %v8551, %v8550
      %v8583 = vpack.c.bf16 %v8553, %v8552
      %v8584 = vpack.c.bf16 %v8555, %v8554
      %v8585 = vpack.c.bf16 %v8557, %v8556
      %v8586 = vpack.c.bf16 %v8559, %v8558
      %v8587 = vpack.c.bf16 %v8561, %v8560
      %v8588 = vpack.c.bf16 %v8563, %v8562
      %v8589 = vpack.c.bf16 %v8565, %v8564
      %v8590 = vpack.c.bf16 %v8567, %v8566
      %v8591 = vpack.c.bf16 %v8569, %v8568
      %v8592 = vpack.c.bf16 %v8571, %v8570
      %v8593 = vpack.c.bf16 %v8573, %v8572
      %v8594 = vpack.c.bf16 %v8575, %v8574
      %v8595 = vpack.c.bf16 %v8577, %v8576
      %v8614 = vunpack.c.l.b16 %v8578
      %v8615 = vunpack.c.h.b16 %v8578
      %v8616 = vunpack.c.l.b16 %v8579
      %v8617 = vunpack.c.h.b16 %v8579
      %v8618 = vunpack.c.l.b16 %v8580
      %v8619 = vunpack.c.h.b16 %v8580
      %v8620 = vunpack.c.l.b16 %v8581
      %v8621 = vunpack.c.h.b16 %v8581
      %v8622 = vunpack.c.l.b16 %v8582
      %v8623 = vunpack.c.h.b16 %v8582
      %v8624 = vunpack.c.l.b16 %v8583
      %v8625 = vunpack.c.h.b16 %v8583
      %v8626 = vunpack.c.l.b16 %v8584
      %v8627 = vunpack.c.h.b16 %v8584
      %v8628 = vunpack.c.l.b16 %v8585
      %v8629 = vunpack.c.h.b16 %v8585
      %v8630 = vunpack.c.l.b16 %v8586
      %v8631 = vunpack.c.h.b16 %v8586
      %v8632 = vunpack.c.l.b16 %v8587
      %v8633 = vunpack.c.h.b16 %v8587
      %v8634 = vunpack.c.l.b16 %v8588
      %v8635 = vunpack.c.h.b16 %v8588
      %v8636 = vunpack.c.l.b16 %v8589
      %v8637 = vunpack.c.h.b16 %v8589
      %v8638 = vunpack.c.l.b16 %v8590
      %v8639 = vunpack.c.h.b16 %v8590
      %v8640 = vunpack.c.l.b16 %v8591
      %v8641 = vunpack.c.h.b16 %v8591
      %v8642 = vunpack.c.l.b16 %v8592
      %v8643 = vunpack.c.h.b16 %v8592
      %v8644 = vunpack.c.l.b16 %v8593
      %v8645 = vunpack.c.h.b16 %v8593
      %v8646 = vunpack.c.l.b16 %v8594
      %v8647 = vunpack.c.h.b16 %v8594
      %v8648 = vunpack.c.l.b16 %v8595
      %v8649 = vunpack.c.h.b16 %v8595
      %v8650 = vpack.c.b16 %v8614, %v8614
      %v8651 = vpack.c.b16 %v8615, %v8615
      %v8652 = vpack.c.b16 %v8616, %v8616
      %v8653 = vpack.c.b16 %v8617, %v8617
      %v8654 = vpack.c.b16 %v8618, %v8618
      %v8655 = vpack.c.b16 %v8619, %v8619
      %v8656 = vpack.c.b16 %v8620, %v8620
      %v8657 = vpack.c.b16 %v8621, %v8621
      %v8658 = vpack.c.b16 %v8622, %v8622
      %v8659 = vpack.c.b16 %v8623, %v8623
      %v8660 = vpack.c.b16 %v8624, %v8624
      %v8661 = vpack.c.b16 %v8625, %v8625
      %v8662 = vpack.c.b16 %v8626, %v8626
      %v8663 = vpack.c.b16 %v8627, %v8627
      %v8664 = vpack.c.b16 %v8628, %v8628
      %v8665 = vpack.c.b16 %v8629, %v8629
      %v8666 = vpack.c.b16 %v8630, %v8630
      %v8667 = vpack.c.b16 %v8631, %v8631
      %v8668 = vpack.c.b16 %v8632, %v8632
      %v8669 = vpack.c.b16 %v8633, %v8633
      %v8670 = vpack.c.b16 %v8634, %v8634
      %v8671 = vpack.c.b16 %v8635, %v8635
      %v8672 = vpack.c.b16 %v8636, %v8636
      %v8673 = vpack.c.b16 %v8637, %v8637
      %v8674 = vpack.c.b16 %v8638, %v8638
      %v8675 = vpack.c.b16 %v8639, %v8639
      %v8676 = vpack.c.b16 %v8640, %v8640
      %v8677 = vpack.c.b16 %v8641, %v8641
      %v8678 = vpack.c.b16 %v8642, %v8642
      %v8679 = vpack.c.b16 %v8643, %v8643
      %v8680 = vpack.c.b16 %v8644, %v8644
      %v8681 = vpack.c.b16 %v8645, %v8645
      %v8682 = vpack.c.b16 %v8646, %v8646
      %v8683 = vpack.c.b16 %v8647, %v8647
      %v8684 = vpack.c.b16 %v8648, %v8648
      %v8685 = vpack.c.b16 %v8649, %v8649
      %8722 = vst [vmem:[%s251] sm:$0xf] %v8650
      %8723 = vst [vmem:[%s251 + $0x4] sm:$0xf] %v8651
      %8724 = vst [vmem:[%s251 + $0x8] sm:$0xf] %v8652
      %8725 = vst [vmem:[%s251 + $0xc] sm:$0xf] %v8653
      %8726 = vst [vmem:[%s251 + $0x10] sm:$0xf] %v8654
      %8727 = vst [vmem:[%s251 + $0x14] sm:$0xf] %v8655
      %8728 = vst [vmem:[%s251 + $0x18] sm:$0xf] %v8656
      %8729 = vst [vmem:[%s251 + $0x1c] sm:$0xf] %v8657
      %8730 = vst [vmem:[%s251 + $0x20] sm:$0xf] %v8658
      %8731 = vst [vmem:[%s251 + $0x24] sm:$0xf] %v8659
      %8732 = vst [vmem:[%s251 + $0x28] sm:$0xf] %v8660
      %8733 = vst [vmem:[%s251 + $0x2c] sm:$0xf] %v8661
      %8734 = vst [vmem:[%s251 + $0x30] sm:$0xf] %v8662
      %8735 = vst [vmem:[%s251 + $0x34] sm:$0xf] %v8663
      %8736 = vst [vmem:[%s251 + $0x38] sm:$0xf] %v8664
      %8737 = vst [vmem:[%s251 + $0x3c] sm:$0xf] %v8665
      %8738 = vst [vmem:[%s251 + $0x40] sm:$0xf] %v8666
      %8739 = vst [vmem:[%s251 + $0x44] sm:$0xf] %v8667
      %8740 = vst [vmem:[%s251 + $0x48] sm:$0xf] %v8668
      %8741 = vst [vmem:[%s251 + $0x4c] sm:$0xf] %v8669
      %8742 = vst [vmem:[%s251 + $0x50] sm:$0xf] %v8670
      %8743 = vst [vmem:[%s251 + $0x54] sm:$0xf] %v8671
      %8744 = vst [vmem:[%s251 + $0x58] sm:$0xf] %v8672
      %8745 = vst [vmem:[%s251 + $0x5c] sm:$0xf] %v8673
      %8746 = vst [vmem:[%s251 + $0x60] sm:$0xf] %v8674
      %8747 = vst [vmem:[%s251 + $0x64] sm:$0xf] %v8675
      %8748 = vst [vmem:[%s251 + $0x68] sm:$0xf] %v8676
      %8749 = vst [vmem:[%s251 + $0x6c] sm:$0xf] %v8677
      %8750 = vst [vmem:[%s251 + $0x70] sm:$0xf] %v8678
      %8751 = vst [vmem:[%s251 + $0x74] sm:$0xf] %v8679
      %8752 = vst [vmem:[%s251 + $0x78] sm:$0xf] %v8680
      %8753 = vst [vmem:[%s251 + $0x7c] sm:$0xf] %v8681
      %8754 = vst [vmem:[%s251 + $0x80] sm:$0xf] %v8682
      %8755 = vst [vmem:[%s251 + $0x84] sm:$0xf] %v8683
      %8756 = vst [vmem:[%s251 + $0x88] sm:$0xf] %v8684
      %8757 = vst [vmem:[%s251 + $0x8c] sm:$0xf] %v8685
      %p8758 = scmp.lt.s32.totalorder %s17, 1
      %s8759 = scalar_select %p8758, %s17, 1
      %s8760 = smul.addr %s8759, 36
      %s8761 = smul.addr %s8760, 4
      %s8762 = scalar_lea.vmem %s6, %s8761
      // Predicated region
      $region45: #{dis_res_block.1} parent=43 // pred_check
        %p8763 = pneg %p166
      $region46: #{dis_res_block.1} parent=43 // pred_check_branch
        %8765 = sbr.rel (%p8763) target = $region48
      $region47: #{dis_res_block.1} parent=43 // pred_region
        _
      $region48: #{dis_res_block.1} parent=43 // pred_fallthru
        _
    $region44: #{dis_res_block.1} parent=5 // pred_fallthru
      _
    %p8766 = scmp.le.s32.totalorder 2, %s12
    // Predicated region
    $region49: #{dis_res_block.1} parent=5 // pred_check
      %p8767 = pneg %p8766
    $region50: #{dis_res_block.1} parent=5 // pred_check_branch
      %8769 = sbr.rel (%p8767) target = $region52
    $region51: #{dis_res_block.1} parent=5 // pred_region
      %s8770 = ssub.s32 %s12, 2
      // Predicated region
      $region53: #{dis_res_block.1} parent=51 // pred_check
        %p8771 = pneg %p172
      $region54: #{dis_res_block.1} parent=51 // pred_check_branch
        %8773 = sbr.rel (%p8771) target = $region56
      $region55: #{dis_res_block.1} parent=51 // pred_region
        %p8774 = scmp.lt.s32.totalorder %s18, 1
        %s8775 = scalar_select %p8774, %s18, 1
        %s8776 = smul.addr %s8775, 36
        %s8777 = smul.addr %s8776, 4
        %s8778 = scalar_lea.vmem %s6, %s8777
      $region56: #{dis_res_block.1} parent=51 // pred_fallthru
        _
    $region52: #{dis_res_block.1} parent=5 // pred_fallthru
      _
  $region6: #{dis_res_block.1} parent=0 // loop_footer
    %s16 = sadd.s32 1, %s12
  $region7: #{dis_res_block.1} parent=0 // loop_footer_branch
    %11 = sbr.rel target = $region3
  $region8: #{dis_res_block.1} parent=0 // loop_exit
    _

</llo_original>
